<compile_context>
chip_gen: v5e
topology: v5e:2x2
jax: 0.10.0
libtpu: 0.0.40
codegen_flags: <defaults>
</compile_context>

<pallas_src>
import functools

import jax
import jax.numpy as jnp
from jax import lax
from jax.experimental import pallas as pl
from jax.experimental.pallas import tpu as pltpu


def _round_up(x, m):
    return ((x + m - 1) // m) * m


def _pick_k_chunk(enc_ch, max_chunk=512):
    """Largest multiple of 128 that divides enc_ch and is <= max_chunk."""
    best = None
    for c in range(128, max_chunk + 1, 128):
        if enc_ch % c == 0:
            best = c
    return best if best is not None else enc_ch


# ---------------------------------------------------------------------------
# Fused Pallas kernel: per M-tile, run
#   enc = tok @ W_enc + b_enc            (chunked over the 2816 channel axis)
#   h   = relu(enc @ W_d1 + b_d1)        (same chunk loop, f32 VMEM accumulator)
#   rec = h @ W_d2 + b_d2
# All intermediates stay in VMEM / vregs; MXU matmuls take bf16 inputs and
# accumulate in f32. `encoded` is written back in bf16.
# ---------------------------------------------------------------------------
def _fused_ae_kernel(tok_ref, we_ref, be_ref, wd1_ref, bd1_ref, wd2_ref,
                     bd2_ref, enc_ref, rec_ref, h_ref, *, n_chunk):
    enc_ch = enc_ref.shape[1]
    kc = enc_ch // n_chunk                          # static, multiple of 128

    tok = tok_ref[...]                              # bf16 (TM, K_enc)
    h_ref[...] = jnp.zeros_like(h_ref)              # f32 (TM, HID) accumulator

    def chunk_body(c, carry):
        k0 = pl.multiple_of(c * kc, kc)
        # encoder patch-embed, one channel chunk
        e = jnp.dot(tok, we_ref[:, pl.ds(k0, kc)],
                    preferred_element_type=jnp.float32)
        e = e + be_ref[:, pl.ds(k0, kc)]
        e16 = e.astype(jnp.bfloat16)
        enc_ref[:, pl.ds(k0, kc)] = e16             # bf16 encoded writeback
        # decoder layer 1 partial contraction over this chunk
        h_ref[...] += jnp.dot(e16, wd1_ref[pl.ds(k0, kc), :],
                              preferred_element_type=jnp.float32)
        return carry

    lax.fori_loop(0, n_chunk, chunk_body, 0, unroll=True)

    # decoder layer 1 bias + ReLU, then layer 2 projection (padded pixel width)
    h = jnp.maximum(h_ref[...] + bd1_ref[...], 0.0).astype(jnp.bfloat16)
    rec = jnp.dot(h, wd2_ref[...], preferred_element_type=jnp.float32)
    rec_ref[...] = (rec + bd2_ref[...]).astype(rec_ref.dtype)


def fused_ae_pallas(tokens, w_enc, b_enc, w_d1, b_d1, w_d2, b_d2, *, tm,
                    n_chunk, vmem_limit_bytes=48 * 1024 * 1024):
    """tokens: (Mp, K_enc) bf16, M padded to a multiple of tm.

    Returns (encoded (Mp, ENC_CH) bf16, rec (Mp, Np_out) f32).
    """
    Mp, k_enc = tokens.shape
    enc_ch = w_enc.shape[1]
    hid = w_d1.shape[1]
    np_out = w_d2.shape[1]
    assert Mp % tm == 0 and enc_ch % n_chunk == 0

    def resident(shape):
        # Constant block index -> fetched once, VMEM-resident; single-buffered
        # to save ~half the resident-weight VMEM (matters on v7x's 64 MiB/TC).
        return pl.BlockSpec(shape, lambda i: (0, 0),
                            pipeline_mode=pl.Buffered(1))

    kernel = functools.partial(_fused_ae_kernel, n_chunk=n_chunk)

    return pl.pallas_call(
        kernel,
        out_shape=(jax.ShapeDtypeStruct((Mp, enc_ch), jnp.bfloat16),
                   jax.ShapeDtypeStruct((Mp, np_out), jnp.float32)),
        grid_spec=pltpu.PrefetchScalarGridSpec(
            num_scalar_prefetch=0,
            grid=(Mp // tm,),
            in_specs=[
                # tokens: tiled over M -> pipelined load per grid step
                pl.BlockSpec((tm, k_enc), lambda i: (i, 0)),
                # weights / biases: VMEM-resident, single-buffered
                resident((k_enc, enc_ch)),
                resident((1, enc_ch)),
                resident((enc_ch, hid)),
                resident((1, hid)),
                resident((hid, np_out)),
                resident((1, np_out)),
            ],
            out_specs=[
                pl.BlockSpec((tm, enc_ch), lambda i: (i, 0)),
                pl.BlockSpec((tm, np_out), lambda i: (i, 0)),
            ],
            scratch_shapes=[pltpu.VMEM((tm, hid), jnp.float32)],
        ),
        compiler_params=pltpu.CompilerParams(
            dimension_semantics=("parallel",),   # shards M across v7x's 2 TCs
            vmem_limit_bytes=vmem_limit_bytes,   # re-derived for 64 MiB/TC v7x
        ),
    )(tokens, w_enc, b_enc, w_d1, b_d1, w_d2, b_d2)


# ---------------------------------------------------------------------------
# Parameter init (kaiming-normal weights, zero biases, like the PyTorch module)
# Weights are stored bf16. Only the decoder output width is padded to a
# multiple of 128 (keeps the rec store lane-dense / unmasked); the encoder K
# (p*p*Cin = 192) stays un-padded — full-dim blocks are legal and the MXU pads
# lanes internally.
# ---------------------------------------------------------------------------
def _kaiming_normal(key, shape, fan_in):
    std = (2.0 / fan_in) ** 0.5
    return std * jax.random.normal(key, shape, dtype=jnp.float32)


def init_params(key, *, in_ch, patch, enc_ch, dec_hidden, out_ch):
    k1, k2, k3 = jax.random.split(key, 3)
    k_enc = patch * patch * in_ch
    n_out = patch * patch * out_ch
    n_out_pad = _round_up(n_out, 128)

    w_enc = _kaiming_normal(k1, (k_enc, enc_ch), k_enc).astype(jnp.bfloat16)
    w_d1 = _kaiming_normal(k2, (enc_ch, dec_hidden), enc_ch).astype(jnp.bfloat16)
    w_d2 = _kaiming_normal(k3, (dec_hidden, n_out), dec_hidden).astype(jnp.bfloat16)
    w_d2_p = jnp.pad(w_d2, ((0, 0), (0, n_out_pad - n_out)))

    return {
        "w_enc": w_enc,                                     # (192, 2816) bf16
        "b_enc": jnp.zeros((1, enc_ch), jnp.float32),
        "w_d1": w_d1,                                       # (2816, hid) bf16
        "b_d1": jnp.zeros((1, dec_hidden), jnp.float32),
        "w_d2": w_d2_p,                                     # (hid, Np) bf16
        "b_d2": jnp.zeros((1, n_out_pad), jnp.float32),
    }


# ---------------------------------------------------------------------------
# VH_AE forward
# ---------------------------------------------------------------------------
def vh_ae_forward(params, x_nchw, *, patch, out_ch, tm=512):
    """x_nchw: (B, Cin, H, W) float32.

    Returns (encoded, recons) mirroring the PyTorch module:
      encoded: (B, 2816, H/patch, W/patch)   NCHW, f32
      recons : (B, Cout, H, W)               NCHW, f32
    """
    B, Cin, H, W = x_nchw.shape
    p = patch
    assert H % p == 0 and W % p == 0
    Hp, Wp = H // p, W // p
    M = B * Hp * Wp
    K_enc = p * p * Cin
    N_out = p * p * out_ch
    enc_ch = params["w_enc"].shape[1]

    # NCHW -> channels-last patch tokens (glue in plain JAX)
    x_nhwc = jnp.transpose(x_nchw, (0, 2, 3, 1))                       # (B,H,W,C)
    patches = x_nhwc.reshape(B, Hp, p, Wp, p, Cin)
    patches = jnp.transpose(patches, (0, 1, 3, 2, 4, 5))               # (B,Hp,Wp,p,p,C)
    tokens = patches.reshape(M, K_enc).astype(jnp.bfloat16)            # (M, K_enc)

    # M tiling: tm=512 amortizes per-grid-step overhead; on real workloads keep
    # grid = Mp/tm >= 2 so the 'parallel' axis uses both v7x TensorCores.
    # Small-M fallback keeps the block sublane a multiple of 16 (bf16 packing).
    tm_eff = tm if M >= tm else _round_up(M, 16)
    mp = _round_up(M, tm_eff)
    if mp != M:
        tokens = jnp.pad(tokens, ((0, mp - M), (0, 0)))

    n_chunk = enc_ch // _pick_k_chunk(enc_ch)
    enc_p, rec_p = fused_ae_pallas(
        tokens, params["w_enc"], params["b_enc"],
        params["w_d1"], params["b_d1"],
        params["w_d2"], params["b_d2"],
        tm=tm_eff, n_chunk=n_chunk)

    encoded_flat = enc_p[:M]                                           # (M, 2816) bf16
    rec_flat = rec_p[:M, :N_out]                                       # (M, p*p*Cout) f32

    # pixel un-shuffle back to image space
    rec = rec_flat.reshape(B, Hp, Wp, p, p, out_ch)
    rec = jnp.transpose(rec, (0, 1, 3, 2, 4, 5)).reshape(B, H, W, out_ch)

    # NCHW / f32 to match the PyTorch module's output convention. The f32 cast
    # is fused into the (already HBM-bound) relayout.
    # TODO(synk): for realistic shapes prefer keeping channels-last bf16 and
    #             skipping these relayouts if the consumer allows.
    encoded = jnp.transpose(encoded_flat.reshape(B, Hp, Wp, enc_ch),
                            (0, 3, 1, 2)).astype(jnp.float32)
    recons = jnp.transpose(rec, (0, 3, 1, 2))
    return encoded, recons


# ---------------------------------------------------------------------------
if __name__ == "__main__":
    B, Cin, H, W = 2, 3, 16, 16
    PATCH = 8
    ENC_CH = 2816          # matches decoder2(in_channels=2816)
    DEC_HIDDEN = 512
    OUT_CH = 3

    key = jax.random.PRNGKey(0)
    kx, kp = jax.random.split(key)
    x = jax.random.normal(kx, (B, Cin, H, W), dtype=jnp.float32)
    params = init_params(kp, in_ch=Cin, patch=PATCH, enc_ch=ENC_CH,
                         dec_hidden=DEC_HIDDEN, out_ch=OUT_CH)

    fwd = jax.jit(functools.partial(vh_ae_forward, patch=PATCH, out_ch=OUT_CH))
    encoded, recons = fwd(params, x)
    jax.block_until_ready((encoded, recons))

    assert encoded.shape == (B, ENC_CH, H // PATCH, W // PATCH)
    assert recons.shape == (B, OUT_CH, H, W)
    assert bool(jnp.all(jnp.isfinite(encoded)))
    assert bool(jnp.all(jnp.isfinite(recons)))
    print("KERNEL_OK")
</pallas_src>

<mosaic_0001>
module attributes {stable_mosaic.version = 11 : i64} {
  func.func @_fused_ae_kernel(%arg0: i32, %arg1: memref<16x192xbf16, #tpu.memory_space<vmem>>, %arg2: memref<192x2816xbf16, #tpu.memory_space<vmem>>, %arg3: memref<1x2816xf32, #tpu.memory_space<vmem>>, %arg4: memref<2816x512xbf16, #tpu.memory_space<vmem>>, %arg5: memref<1x512xf32, #tpu.memory_space<vmem>>, %arg6: memref<512x256xbf16, #tpu.memory_space<vmem>>, %arg7: memref<1x256xf32, #tpu.memory_space<vmem>>, %arg8: memref<16x2816xbf16, #tpu.memory_space<vmem>>, %arg9: memref<16x256xf32, #tpu.memory_space<vmem>>, %arg10: memref<16x512xf32, #tpu.memory_space<vmem>>) attributes {dimension_semantics = [#tpu.dimension_semantics<parallel>], iteration_bounds = array<i64: 1>, scalar_prefetch = 0 : i64, scratch_operands = 1 : i64, tpu.core_type = #tpu.core_type<tc>, window_params = [{transform_indices = @transform_0, window_bounds = array<i64: 16, 192>}, {pipeline_mode = #tpu.pipeline_mode<synchronous>, transform_indices = @transform_1, window_bounds = array<i64: 192, 2816>}, {pipeline_mode = #tpu.pipeline_mode<synchronous>, transform_indices = @transform_2, window_bounds = array<i64: 1, 2816>}, {pipeline_mode = #tpu.pipeline_mode<synchronous>, transform_indices = @transform_3, window_bounds = array<i64: 2816, 512>}, {pipeline_mode = #tpu.pipeline_mode<synchronous>, transform_indices = @transform_4, window_bounds = array<i64: 1, 512>}, {pipeline_mode = #tpu.pipeline_mode<synchronous>, transform_indices = @transform_5, window_bounds = array<i64: 512, 256>}, {pipeline_mode = #tpu.pipeline_mode<synchronous>, transform_indices = @transform_6, window_bounds = array<i64: 1, 256>}, {transform_indices = @transform_7, window_bounds = array<i64: 16, 2816>}, {transform_indices = @transform_8, window_bounds = array<i64: 16, 256>}]} {
    %c0 = arith.constant 0 : index
    %c0_0 = arith.constant 0 : index
    %0 = vector.load %arg1[%c0, %c0_0] : memref<16x192xbf16, #tpu.memory_space<vmem>>, vector<16x192xbf16>
    %cst = arith.constant 0.000000e+00 : f32
    %1 = vector.broadcast %cst : f32 to vector<16x512xf32>
    %c0_1 = arith.constant 0 : index
    %c0_2 = arith.constant 0 : index
    %2 = vector.load %arg10[%c0_1, %c0_2] : memref<16x512xf32, #tpu.memory_space<vmem>>, vector<16x512xf32>
    tpu.vector_store %arg10[%c0_1, %c0_2], %1 {strides = array<i32>} : memref<16x512xf32, #tpu.memory_space<vmem>>, vector<16x512xf32>,
    %c0_i32 = arith.constant 0 : i32
    %c256_i32 = arith.constant 256 : i32
    %3 = arith.muli %c0_i32, %c256_i32 : i32
    %4 = tpu.assume_multiple %3, 256 : i32
    %c0_3 = arith.constant 0 : index
    %5 = arith.index_cast %4 : i32 to index
    %6 = vector.load %arg2[%c0_3, %5] : memref<192x2816xbf16, #tpu.memory_space<vmem>>, vector<192x256xbf16>
    %cst_4 = arith.constant dense<0.000000e+00> : vector<16x256xf32>
    %7 = tpu.matmul %0, %6, %cst_4 {dimension_numbers = #tpu.dot_dimension_numbers<[1], [0], [0], [1], [0, 0, 1, 1], [], []>} : vector<16x192xbf16>, vector<192x256xbf16>, vector<16x256xf32> -> vector<16x256xf32>
    %c0_5 = arith.constant 0 : index
    %8 = arith.index_cast %4 : i32 to index
    %9 = vector.load %arg3[%c0_5, %8] : memref<1x2816xf32, #tpu.memory_space<vmem>>, vector<1x256xf32>
    %10 = vector.broadcast %9 : vector<1x256xf32> to vector<16x256xf32>
    %11 = arith.addf %7, %10 : vector<16x256xf32>
    %12 = arith.truncf %11 : vector<16x256xf32> to vector<16x256xbf16>
    %c0_6 = arith.constant 0 : index
    %13 = arith.index_cast %4 : i32 to index
    %14 = vector.load %arg8[%c0_6, %13] : memref<16x2816xbf16, #tpu.memory_space<vmem>>, vector<16x256xbf16>
    tpu.vector_store %arg8[%c0_6, %13], %12 {strides = array<i32>} : memref<16x2816xbf16, #tpu.memory_space<vmem>>, vector<16x256xbf16>,
    %c0_7 = arith.constant 0 : index
    %c0_8 = arith.constant 0 : index
    %15 = vector.load %arg10[%c0_7, %c0_8] : memref<16x512xf32, #tpu.memory_space<vmem>>, vector<16x512xf32>
    %16 = arith.index_cast %4 : i32 to index
    %c0_9 = arith.constant 0 : index
    %17 = vector.load %arg4[%16, %c0_9] : memref<2816x512xbf16, #tpu.memory_space<vmem>>, vector<256x512xbf16>
    %cst_10 = arith.constant dense<0.000000e+00> : vector<16x512xf32>
    %18 = tpu.matmul %12, %17, %cst_10 {dimension_numbers = #tpu.dot_dimension_numbers<[1], [0], [0], [1], [0, 0, 1, 1], [], []>} : vector<16x256xbf16>, vector<256x512xbf16>, vector<16x512xf32> -> vector<16x512xf32>
    %19 = arith.addf %15, %18 : vector<16x512xf32>
    %c0_11 = arith.constant 0 : index
    %c0_12 = arith.constant 0 : index
    %20 = vector.load %arg10[%c0_11, %c0_12] : memref<16x512xf32, #tpu.memory_space<vmem>>, vector<16x512xf32>
    tpu.vector_store %arg10[%c0_11, %c0_12], %19 {strides = array<i32>} : memref<16x512xf32, #tpu.memory_space<vmem>>, vector<16x512xf32>,
    %c1_i32 = arith.constant 1 : i32
    %c256_i32_13 = arith.constant 256 : i32
    %21 = arith.muli %c1_i32, %c256_i32_13 : i32
    %22 = tpu.assume_multiple %21, 256 : i32
    %c0_14 = arith.constant 0 : index
    %23 = arith.index_cast %22 : i32 to index
    %24 = vector.load %arg2[%c0_14, %23] : memref<192x2816xbf16, #tpu.memory_space<vmem>>, vector<192x256xbf16>
    %cst_15 = arith.constant dense<0.000000e+00> : vector<16x256xf32>
    %25 = tpu.matmul %0, %24, %cst_15 {dimension_numbers = #tpu.dot_dimension_numbers<[1], [0], [0], [1], [0, 0, 1, 1], [], []>} : vector<16x192xbf16>, vector<192x256xbf16>, vector<16x256xf32> -> vector<16x256xf32>
    %c0_16 = arith.constant 0 : index
    %26 = arith.index_cast %22 : i32 to index
    %27 = vector.load %arg3[%c0_16, %26] : memref<1x2816xf32, #tpu.memory_space<vmem>>, vector<1x256xf32>
    %28 = vector.broadcast %27 : vector<1x256xf32> to vector<16x256xf32>
    %29 = arith.addf %25, %28 : vector<16x256xf32>
    %30 = arith.truncf %29 : vector<16x256xf32> to vector<16x256xbf16>
    %c0_17 = arith.constant 0 : index
    %31 = arith.index_cast %22 : i32 to index
    %32 = vector.load %arg8[%c0_17, %31] : memref<16x2816xbf16, #tpu.memory_space<vmem>>, vector<16x256xbf16>
    tpu.vector_store %arg8[%c0_17, %31], %30 {strides = array<i32>} : memref<16x2816xbf16, #tpu.memory_space<vmem>>, vector<16x256xbf16>,
    %c0_18 = arith.constant 0 : index
    %c0_19 = arith.constant 0 : index
    %33 = vector.load %arg10[%c0_18, %c0_19] : memref<16x512xf32, #tpu.memory_space<vmem>>, vector<16x512xf32>
    %34 = arith.index_cast %22 : i32 to index
    %c0_20 = arith.constant 0 : index
    %35 = vector.load %arg4[%34, %c0_20] : memref<2816x512xbf16, #tpu.memory_space<vmem>>, vector<256x512xbf16>
    %cst_21 = arith.constant dense<0.000000e+00> : vector<16x512xf32>
    %36 = tpu.matmul %30, %35, %cst_21 {dimension_numbers = #tpu.dot_dimension_numbers<[1], [0], [0], [1], [0, 0, 1, 1], [], []>} : vector<16x256xbf16>, vector<256x512xbf16>, vector<16x512xf32> -> vector<16x512xf32>
    %37 = arith.addf %33, %36 : vector<16x512xf32>
    %c0_22 = arith.constant 0 : index
    %c0_23 = arith.constant 0 : index
    %38 = vector.load %arg10[%c0_22, %c0_23] : memref<16x512xf32, #tpu.memory_space<vmem>>, vector<16x512xf32>
    tpu.vector_store %arg10[%c0_22, %c0_23], %37 {strides = array<i32>} : memref<16x512xf32, #tpu.memory_space<vmem>>, vector<16x512xf32>,
    %c2_i32 = arith.constant 2 : i32
    %c256_i32_24 = arith.constant 256 : i32
    %39 = arith.muli %c2_i32, %c256_i32_24 : i32
    %40 = tpu.assume_multiple %39, 256 : i32
    %c0_25 = arith.constant 0 : index
    %41 = arith.index_cast %40 : i32 to index
    %42 = vector.load %arg2[%c0_25, %41] : memref<192x2816xbf16, #tpu.memory_space<vmem>>, vector<192x256xbf16>
    %cst_26 = arith.constant dense<0.000000e+00> : vector<16x256xf32>
    %43 = tpu.matmul %0, %42, %cst_26 {dimension_numbers = #tpu.dot_dimension_numbers<[1], [0], [0], [1], [0, 0, 1, 1], [], []>} : vector<16x192xbf16>, vector<192x256xbf16>, vector<16x256xf32> -> vector<16x256xf32>
    %c0_27 = arith.constant 0 : index
    %44 = arith.index_cast %40 : i32 to index
    %45 = vector.load %arg3[%c0_27, %44] : memref<1x2816xf32, #tpu.memory_space<vmem>>, vector<1x256xf32>
    %46 = vector.broadcast %45 : vector<1x256xf32> to vector<16x256xf32>
    %47 = arith.addf %43, %46 : vector<16x256xf32>
    %48 = arith.truncf %47 : vector<16x256xf32> to vector<16x256xbf16>
    %c0_28 = arith.constant 0 : index
    %49 = arith.index_cast %40 : i32 to index
    %50 = vector.load %arg8[%c0_28, %49] : memref<16x2816xbf16, #tpu.memory_space<vmem>>, vector<16x256xbf16>
    tpu.vector_store %arg8[%c0_28, %49], %48 {strides = array<i32>} : memref<16x2816xbf16, #tpu.memory_space<vmem>>, vector<16x256xbf16>,
    %c0_29 = arith.constant 0 : index
    %c0_30 = arith.constant 0 : index
    %51 = vector.load %arg10[%c0_29, %c0_30] : memref<16x512xf32, #tpu.memory_space<vmem>>, vector<16x512xf32>
    %52 = arith.index_cast %40 : i32 to index
    %c0_31 = arith.constant 0 : index
    %53 = vector.load %arg4[%52, %c0_31] : memref<2816x512xbf16, #tpu.memory_space<vmem>>, vector<256x512xbf16>
    %cst_32 = arith.constant dense<0.000000e+00> : vector<16x512xf32>
    %54 = tpu.matmul %48, %53, %cst_32 {dimension_numbers = #tpu.dot_dimension_numbers<[1], [0], [0], [1], [0, 0, 1, 1], [], []>} : vector<16x256xbf16>, vector<256x512xbf16>, vector<16x512xf32> -> vector<16x512xf32>
    %55 = arith.addf %51, %54 : vector<16x512xf32>
    %c0_33 = arith.constant 0 : index
    %c0_34 = arith.constant 0 : index
    %56 = vector.load %arg10[%c0_33, %c0_34] : memref<16x512xf32, #tpu.memory_space<vmem>>, vector<16x512xf32>
    tpu.vector_store %arg10[%c0_33, %c0_34], %55 {strides = array<i32>} : memref<16x512xf32, #tpu.memory_space<vmem>>, vector<16x512xf32>,
    %c3_i32 = arith.constant 3 : i32
    %c256_i32_35 = arith.constant 256 : i32
    %57 = arith.muli %c3_i32, %c256_i32_35 : i32
    %58 = tpu.assume_multiple %57, 256 : i32
    %c0_36 = arith.constant 0 : index
    %59 = arith.index_cast %58 : i32 to index
    %60 = vector.load %arg2[%c0_36, %59] : memref<192x2816xbf16, #tpu.memory_space<vmem>>, vector<192x256xbf16>
    %cst_37 = arith.constant dense<0.000000e+00> : vector<16x256xf32>
    %61 = tpu.matmul %0, %60, %cst_37 {dimension_numbers = #tpu.dot_dimension_numbers<[1], [0], [0], [1], [0, 0, 1, 1], [], []>} : vector<16x192xbf16>, vector<192x256xbf16>, vector<16x256xf32> -> vector<16x256xf32>
    %c0_38 = arith.constant 0 : index
    %62 = arith.index_cast %58 : i32 to index
    %63 = vector.load %arg3[%c0_38, %62] : memref<1x2816xf32, #tpu.memory_space<vmem>>, vector<1x256xf32>
    %64 = vector.broadcast %63 : vector<1x256xf32> to vector<16x256xf32>
    %65 = arith.addf %61, %64 : vector<16x256xf32>
    %66 = arith.truncf %65 : vector<16x256xf32> to vector<16x256xbf16>
    %c0_39 = arith.constant 0 : index
    %67 = arith.index_cast %58 : i32 to index
    %68 = vector.load %arg8[%c0_39, %67] : memref<16x2816xbf16, #tpu.memory_space<vmem>>, vector<16x256xbf16>
    tpu.vector_store %arg8[%c0_39, %67], %66 {strides = array<i32>} : memref<16x2816xbf16, #tpu.memory_space<vmem>>, vector<16x256xbf16>,
    %c0_40 = arith.constant 0 : index
    %c0_41 = arith.constant 0 : index
    %69 = vector.load %arg10[%c0_40, %c0_41] : memref<16x512xf32, #tpu.memory_space<vmem>>, vector<16x512xf32>
    %70 = arith.index_cast %58 : i32 to index
    %c0_42 = arith.constant 0 : index
    %71 = vector.load %arg4[%70, %c0_42] : memref<2816x512xbf16, #tpu.memory_space<vmem>>, vector<256x512xbf16>
    %cst_43 = arith.constant dense<0.000000e+00> : vector<16x512xf32>
    %72 = tpu.matmul %66, %71, %cst_43 {dimension_numbers = #tpu.dot_dimension_numbers<[1], [0], [0], [1], [0, 0, 1, 1], [], []>} : vector<16x256xbf16>, vector<256x512xbf16>, vector<16x512xf32> -> vector<16x512xf32>
    %73 = arith.addf %69, %72 : vector<16x512xf32>
    %c0_44 = arith.constant 0 : index
    %c0_45 = arith.constant 0 : index
    %74 = vector.load %arg10[%c0_44, %c0_45] : memref<16x512xf32, #tpu.memory_space<vmem>>, vector<16x512xf32>
    tpu.vector_store %arg10[%c0_44, %c0_45], %73 {strides = array<i32>} : memref<16x512xf32, #tpu.memory_space<vmem>>, vector<16x512xf32>,
    %c4_i32 = arith.constant 4 : i32
    %c256_i32_46 = arith.constant 256 : i32
    %75 = arith.muli %c4_i32, %c256_i32_46 : i32
    %76 = tpu.assume_multiple %75, 256 : i32
    %c0_47 = arith.constant 0 : index
    %77 = arith.index_cast %76 : i32 to index
    %78 = vector.load %arg2[%c0_47, %77] : memref<192x2816xbf16, #tpu.memory_space<vmem>>, vector<192x256xbf16>
    %cst_48 = arith.constant dense<0.000000e+00> : vector<16x256xf32>
    %79 = tpu.matmul %0, %78, %cst_48 {dimension_numbers = #tpu.dot_dimension_numbers<[1], [0], [0], [1], [0, 0, 1, 1], [], []>} : vector<16x192xbf16>, vector<192x256xbf16>, vector<16x256xf32> -> vector<16x256xf32>
    %c0_49 = arith.constant 0 : index
    %80 = arith.index_cast %76 : i32 to index
    %81 = vector.load %arg3[%c0_49, %80] : memref<1x2816xf32, #tpu.memory_space<vmem>>, vector<1x256xf32>
    %82 = vector.broadcast %81 : vector<1x256xf32> to vector<16x256xf32>
    %83 = arith.addf %79, %82 : vector<16x256xf32>
    %84 = arith.truncf %83 : vector<16x256xf32> to vector<16x256xbf16>
    %c0_50 = arith.constant 0 : index
    %85 = arith.index_cast %76 : i32 to index
    %86 = vector.load %arg8[%c0_50, %85] : memref<16x2816xbf16, #tpu.memory_space<vmem>>, vector<16x256xbf16>
    tpu.vector_store %arg8[%c0_50, %85], %84 {strides = array<i32>} : memref<16x2816xbf16, #tpu.memory_space<vmem>>, vector<16x256xbf16>,
    %c0_51 = arith.constant 0 : index
    %c0_52 = arith.constant 0 : index
    %87 = vector.load %arg10[%c0_51, %c0_52] : memref<16x512xf32, #tpu.memory_space<vmem>>, vector<16x512xf32>
    %88 = arith.index_cast %76 : i32 to index
    %c0_53 = arith.constant 0 : index
    %89 = vector.load %arg4[%88, %c0_53] : memref<2816x512xbf16, #tpu.memory_space<vmem>>, vector<256x512xbf16>
    %cst_54 = arith.constant dense<0.000000e+00> : vector<16x512xf32>
    %90 = tpu.matmul %84, %89, %cst_54 {dimension_numbers = #tpu.dot_dimension_numbers<[1], [0], [0], [1], [0, 0, 1, 1], [], []>} : vector<16x256xbf16>, vector<256x512xbf16>, vector<16x512xf32> -> vector<16x512xf32>
    %91 = arith.addf %87, %90 : vector<16x512xf32>
    %c0_55 = arith.constant 0 : index
    %c0_56 = arith.constant 0 : index
    %92 = vector.load %arg10[%c0_55, %c0_56] : memref<16x512xf32, #tpu.memory_space<vmem>>, vector<16x512xf32>
    tpu.vector_store %arg10[%c0_55, %c0_56], %91 {strides = array<i32>} : memref<16x512xf32, #tpu.memory_space<vmem>>, vector<16x512xf32>,
    %c5_i32 = arith.constant 5 : i32
    %c256_i32_57 = arith.constant 256 : i32
    %93 = arith.muli %c5_i32, %c256_i32_57 : i32
    %94 = tpu.assume_multiple %93, 256 : i32
    %c0_58 = arith.constant 0 : index
    %95 = arith.index_cast %94 : i32 to index
    %96 = vector.load %arg2[%c0_58, %95] : memref<192x2816xbf16, #tpu.memory_space<vmem>>, vector<192x256xbf16>
    %cst_59 = arith.constant dense<0.000000e+00> : vector<16x256xf32>
    %97 = tpu.matmul %0, %96, %cst_59 {dimension_numbers = #tpu.dot_dimension_numbers<[1], [0], [0], [1], [0, 0, 1, 1], [], []>} : vector<16x192xbf16>, vector<192x256xbf16>, vector<16x256xf32> -> vector<16x256xf32>
    %c0_60 = arith.constant 0 : index
    %98 = arith.index_cast %94 : i32 to index
    %99 = vector.load %arg3[%c0_60, %98] : memref<1x2816xf32, #tpu.memory_space<vmem>>, vector<1x256xf32>
    %100 = vector.broadcast %99 : vector<1x256xf32> to vector<16x256xf32>
    %101 = arith.addf %97, %100 : vector<16x256xf32>
    %102 = arith.truncf %101 : vector<16x256xf32> to vector<16x256xbf16>
    %c0_61 = arith.constant 0 : index
    %103 = arith.index_cast %94 : i32 to index
    %104 = vector.load %arg8[%c0_61, %103] : memref<16x2816xbf16, #tpu.memory_space<vmem>>, vector<16x256xbf16>
    tpu.vector_store %arg8[%c0_61, %103], %102 {strides = array<i32>} : memref<16x2816xbf16, #tpu.memory_space<vmem>>, vector<16x256xbf16>,
    %c0_62 = arith.constant 0 : index
    %c0_63 = arith.constant 0 : index
    %105 = vector.load %arg10[%c0_62, %c0_63] : memref<16x512xf32, #tpu.memory_space<vmem>>, vector<16x512xf32>
    %106 = arith.index_cast %94 : i32 to index
    %c0_64 = arith.constant 0 : index
    %107 = vector.load %arg4[%106, %c0_64] : memref<2816x512xbf16, #tpu.memory_space<vmem>>, vector<256x512xbf16>
    %cst_65 = arith.constant dense<0.000000e+00> : vector<16x512xf32>
    %108 = tpu.matmul %102, %107, %cst_65 {dimension_numbers = #tpu.dot_dimension_numbers<[1], [0], [0], [1], [0, 0, 1, 1], [], []>} : vector<16x256xbf16>, vector<256x512xbf16>, vector<16x512xf32> -> vector<16x512xf32>
    %109 = arith.addf %105, %108 : vector<16x512xf32>
    %c0_66 = arith.constant 0 : index
    %c0_67 = arith.constant 0 : index
    %110 = vector.load %arg10[%c0_66, %c0_67] : memref<16x512xf32, #tpu.memory_space<vmem>>, vector<16x512xf32>
    tpu.vector_store %arg10[%c0_66, %c0_67], %109 {strides = array<i32>} : memref<16x512xf32, #tpu.memory_space<vmem>>, vector<16x512xf32>,
    %c6_i32 = arith.constant 6 : i32
    %c256_i32_68 = arith.constant 256 : i32
    %111 = arith.muli %c6_i32, %c256_i32_68 : i32
    %112 = tpu.assume_multiple %111, 256 : i32
    %c0_69 = arith.constant 0 : index
    %113 = arith.index_cast %112 : i32 to index
    %114 = vector.load %arg2[%c0_69, %113] : memref<192x2816xbf16, #tpu.memory_space<vmem>>, vector<192x256xbf16>
    %cst_70 = arith.constant dense<0.000000e+00> : vector<16x256xf32>
    %115 = tpu.matmul %0, %114, %cst_70 {dimension_numbers = #tpu.dot_dimension_numbers<[1], [0], [0], [1], [0, 0, 1, 1], [], []>} : vector<16x192xbf16>, vector<192x256xbf16>, vector<16x256xf32> -> vector<16x256xf32>
    %c0_71 = arith.constant 0 : index
    %116 = arith.index_cast %112 : i32 to index
    %117 = vector.load %arg3[%c0_71, %116] : memref<1x2816xf32, #tpu.memory_space<vmem>>, vector<1x256xf32>
    %118 = vector.broadcast %117 : vector<1x256xf32> to vector<16x256xf32>
    %119 = arith.addf %115, %118 : vector<16x256xf32>
    %120 = arith.truncf %119 : vector<16x256xf32> to vector<16x256xbf16>
    %c0_72 = arith.constant 0 : index
    %121 = arith.index_cast %112 : i32 to index
    %122 = vector.load %arg8[%c0_72, %121] : memref<16x2816xbf16, #tpu.memory_space<vmem>>, vector<16x256xbf16>
    tpu.vector_store %arg8[%c0_72, %121], %120 {strides = array<i32>} : memref<16x2816xbf16, #tpu.memory_space<vmem>>, vector<16x256xbf16>,
    %c0_73 = arith.constant 0 : index
    %c0_74 = arith.constant 0 : index
    %123 = vector.load %arg10[%c0_73, %c0_74] : memref<16x512xf32, #tpu.memory_space<vmem>>, vector<16x512xf32>
    %124 = arith.index_cast %112 : i32 to index
    %c0_75 = arith.constant 0 : index
    %125 = vector.load %arg4[%124, %c0_75] : memref<2816x512xbf16, #tpu.memory_space<vmem>>, vector<256x512xbf16>
    %cst_76 = arith.constant dense<0.000000e+00> : vector<16x512xf32>
    %126 = tpu.matmul %120, %125, %cst_76 {dimension_numbers = #tpu.dot_dimension_numbers<[1], [0], [0], [1], [0, 0, 1, 1], [], []>} : vector<16x256xbf16>, vector<256x512xbf16>, vector<16x512xf32> -> vector<16x512xf32>
    %127 = arith.addf %123, %126 : vector<16x512xf32>
    %c0_77 = arith.constant 0 : index
    %c0_78 = arith.constant 0 : index
    %128 = vector.load %arg10[%c0_77, %c0_78] : memref<16x512xf32, #tpu.memory_space<vmem>>, vector<16x512xf32>
    tpu.vector_store %arg10[%c0_77, %c0_78], %127 {strides = array<i32>} : memref<16x512xf32, #tpu.memory_space<vmem>>, vector<16x512xf32>,
    %c7_i32 = arith.constant 7 : i32
    %c256_i32_79 = arith.constant 256 : i32
    %129 = arith.muli %c7_i32, %c256_i32_79 : i32
    %130 = tpu.assume_multiple %129, 256 : i32
    %c0_80 = arith.constant 0 : index
    %131 = arith.index_cast %130 : i32 to index
    %132 = vector.load %arg2[%c0_80, %131] : memref<192x2816xbf16, #tpu.memory_space<vmem>>, vector<192x256xbf16>
    %cst_81 = arith.constant dense<0.000000e+00> : vector<16x256xf32>
    %133 = tpu.matmul %0, %132, %cst_81 {dimension_numbers = #tpu.dot_dimension_numbers<[1], [0], [0], [1], [0, 0, 1, 1], [], []>} : vector<16x192xbf16>, vector<192x256xbf16>, vector<16x256xf32> -> vector<16x256xf32>
    %c0_82 = arith.constant 0 : index
    %134 = arith.index_cast %130 : i32 to index
    %135 = vector.load %arg3[%c0_82, %134] : memref<1x2816xf32, #tpu.memory_space<vmem>>, vector<1x256xf32>
    %136 = vector.broadcast %135 : vector<1x256xf32> to vector<16x256xf32>
    %137 = arith.addf %133, %136 : vector<16x256xf32>
    %138 = arith.truncf %137 : vector<16x256xf32> to vector<16x256xbf16>
    %c0_83 = arith.constant 0 : index
    %139 = arith.index_cast %130 : i32 to index
    %140 = vector.load %arg8[%c0_83, %139] : memref<16x2816xbf16, #tpu.memory_space<vmem>>, vector<16x256xbf16>
    tpu.vector_store %arg8[%c0_83, %139], %138 {strides = array<i32>} : memref<16x2816xbf16, #tpu.memory_space<vmem>>, vector<16x256xbf16>,
    %c0_84 = arith.constant 0 : index
    %c0_85 = arith.constant 0 : index
    %141 = vector.load %arg10[%c0_84, %c0_85] : memref<16x512xf32, #tpu.memory_space<vmem>>, vector<16x512xf32>
    %142 = arith.index_cast %130 : i32 to index
    %c0_86 = arith.constant 0 : index
    %143 = vector.load %arg4[%142, %c0_86] : memref<2816x512xbf16, #tpu.memory_space<vmem>>, vector<256x512xbf16>
    %cst_87 = arith.constant dense<0.000000e+00> : vector<16x512xf32>
    %144 = tpu.matmul %138, %143, %cst_87 {dimension_numbers = #tpu.dot_dimension_numbers<[1], [0], [0], [1], [0, 0, 1, 1], [], []>} : vector<16x256xbf16>, vector<256x512xbf16>, vector<16x512xf32> -> vector<16x512xf32>
    %145 = arith.addf %141, %144 : vector<16x512xf32>
    %c0_88 = arith.constant 0 : index
    %c0_89 = arith.constant 0 : index
    %146 = vector.load %arg10[%c0_88, %c0_89] : memref<16x512xf32, #tpu.memory_space<vmem>>, vector<16x512xf32>
    tpu.vector_store %arg10[%c0_88, %c0_89], %145 {strides = array<i32>} : memref<16x512xf32, #tpu.memory_space<vmem>>, vector<16x512xf32>,
    %c8_i32 = arith.constant 8 : i32
    %c256_i32_90 = arith.constant 256 : i32
    %147 = arith.muli %c8_i32, %c256_i32_90 : i32
    %148 = tpu.assume_multiple %147, 256 : i32
    %c0_91 = arith.constant 0 : index
    %149 = arith.index_cast %148 : i32 to index
    %150 = vector.load %arg2[%c0_91, %149] : memref<192x2816xbf16, #tpu.memory_space<vmem>>, vector<192x256xbf16>
    %cst_92 = arith.constant dense<0.000000e+00> : vector<16x256xf32>
    %151 = tpu.matmul %0, %150, %cst_92 {dimension_numbers = #tpu.dot_dimension_numbers<[1], [0], [0], [1], [0, 0, 1, 1], [], []>} : vector<16x192xbf16>, vector<192x256xbf16>, vector<16x256xf32> -> vector<16x256xf32>
    %c0_93 = arith.constant 0 : index
    %152 = arith.index_cast %148 : i32 to index
    %153 = vector.load %arg3[%c0_93, %152] : memref<1x2816xf32, #tpu.memory_space<vmem>>, vector<1x256xf32>
    %154 = vector.broadcast %153 : vector<1x256xf32> to vector<16x256xf32>
    %155 = arith.addf %151, %154 : vector<16x256xf32>
    %156 = arith.truncf %155 : vector<16x256xf32> to vector<16x256xbf16>
    %c0_94 = arith.constant 0 : index
    %157 = arith.index_cast %148 : i32 to index
    %158 = vector.load %arg8[%c0_94, %157] : memref<16x2816xbf16, #tpu.memory_space<vmem>>, vector<16x256xbf16>
    tpu.vector_store %arg8[%c0_94, %157], %156 {strides = array<i32>} : memref<16x2816xbf16, #tpu.memory_space<vmem>>, vector<16x256xbf16>,
    %c0_95 = arith.constant 0 : index
    %c0_96 = arith.constant 0 : index
    %159 = vector.load %arg10[%c0_95, %c0_96] : memref<16x512xf32, #tpu.memory_space<vmem>>, vector<16x512xf32>
    %160 = arith.index_cast %148 : i32 to index
    %c0_97 = arith.constant 0 : index
    %161 = vector.load %arg4[%160, %c0_97] : memref<2816x512xbf16, #tpu.memory_space<vmem>>, vector<256x512xbf16>
    %cst_98 = arith.constant dense<0.000000e+00> : vector<16x512xf32>
    %162 = tpu.matmul %156, %161, %cst_98 {dimension_numbers = #tpu.dot_dimension_numbers<[1], [0], [0], [1], [0, 0, 1, 1], [], []>} : vector<16x256xbf16>, vector<256x512xbf16>, vector<16x512xf32> -> vector<16x512xf32>
    %163 = arith.addf %159, %162 : vector<16x512xf32>
    %c0_99 = arith.constant 0 : index
    %c0_100 = arith.constant 0 : index
    %164 = vector.load %arg10[%c0_99, %c0_100] : memref<16x512xf32, #tpu.memory_space<vmem>>, vector<16x512xf32>
    tpu.vector_store %arg10[%c0_99, %c0_100], %163 {strides = array<i32>} : memref<16x512xf32, #tpu.memory_space<vmem>>, vector<16x512xf32>,
    %c9_i32 = arith.constant 9 : i32
    %c256_i32_101 = arith.constant 256 : i32
    %165 = arith.muli %c9_i32, %c256_i32_101 : i32
    %166 = tpu.assume_multiple %165, 256 : i32
    %c0_102 = arith.constant 0 : index
    %167 = arith.index_cast %166 : i32 to index
    %168 = vector.load %arg2[%c0_102, %167] : memref<192x2816xbf16, #tpu.memory_space<vmem>>, vector<192x256xbf16>
    %cst_103 = arith.constant dense<0.000000e+00> : vector<16x256xf32>
    %169 = tpu.matmul %0, %168, %cst_103 {dimension_numbers = #tpu.dot_dimension_numbers<[1], [0], [0], [1], [0, 0, 1, 1], [], []>} : vector<16x192xbf16>, vector<192x256xbf16>, vector<16x256xf32> -> vector<16x256xf32>
    %c0_104 = arith.constant 0 : index
    %170 = arith.index_cast %166 : i32 to index
    %171 = vector.load %arg3[%c0_104, %170] : memref<1x2816xf32, #tpu.memory_space<vmem>>, vector<1x256xf32>
    %172 = vector.broadcast %171 : vector<1x256xf32> to vector<16x256xf32>
    %173 = arith.addf %169, %172 : vector<16x256xf32>
    %174 = arith.truncf %173 : vector<16x256xf32> to vector<16x256xbf16>
    %c0_105 = arith.constant 0 : index
    %175 = arith.index_cast %166 : i32 to index
    %176 = vector.load %arg8[%c0_105, %175] : memref<16x2816xbf16, #tpu.memory_space<vmem>>, vector<16x256xbf16>
    tpu.vector_store %arg8[%c0_105, %175], %174 {strides = array<i32>} : memref<16x2816xbf16, #tpu.memory_space<vmem>>, vector<16x256xbf16>,
    %c0_106 = arith.constant 0 : index
    %c0_107 = arith.constant 0 : index
    %177 = vector.load %arg10[%c0_106, %c0_107] : memref<16x512xf32, #tpu.memory_space<vmem>>, vector<16x512xf32>
    %178 = arith.index_cast %166 : i32 to index
    %c0_108 = arith.constant 0 : index
    %179 = vector.load %arg4[%178, %c0_108] : memref<2816x512xbf16, #tpu.memory_space<vmem>>, vector<256x512xbf16>
    %cst_109 = arith.constant dense<0.000000e+00> : vector<16x512xf32>
    %180 = tpu.matmul %174, %179, %cst_109 {dimension_numbers = #tpu.dot_dimension_numbers<[1], [0], [0], [1], [0, 0, 1, 1], [], []>} : vector<16x256xbf16>, vector<256x512xbf16>, vector<16x512xf32> -> vector<16x512xf32>
    %181 = arith.addf %177, %180 : vector<16x512xf32>
    %c0_110 = arith.constant 0 : index
    %c0_111 = arith.constant 0 : index
    %182 = vector.load %arg10[%c0_110, %c0_111] : memref<16x512xf32, #tpu.memory_space<vmem>>, vector<16x512xf32>
    tpu.vector_store %arg10[%c0_110, %c0_111], %181 {strides = array<i32>} : memref<16x512xf32, #tpu.memory_space<vmem>>, vector<16x512xf32>,
    %c10_i32 = arith.constant 10 : i32
    %c256_i32_112 = arith.constant 256 : i32
    %183 = arith.muli %c10_i32, %c256_i32_112 : i32
    %184 = tpu.assume_multiple %183, 256 : i32
    %c0_113 = arith.constant 0 : index
    %185 = arith.index_cast %184 : i32 to index
    %186 = vector.load %arg2[%c0_113, %185] : memref<192x2816xbf16, #tpu.memory_space<vmem>>, vector<192x256xbf16>
    %cst_114 = arith.constant dense<0.000000e+00> : vector<16x256xf32>
    %187 = tpu.matmul %0, %186, %cst_114 {dimension_numbers = #tpu.dot_dimension_numbers<[1], [0], [0], [1], [0, 0, 1, 1], [], []>} : vector<16x192xbf16>, vector<192x256xbf16>, vector<16x256xf32> -> vector<16x256xf32>
    %c0_115 = arith.constant 0 : index
    %188 = arith.index_cast %184 : i32 to index
    %189 = vector.load %arg3[%c0_115, %188] : memref<1x2816xf32, #tpu.memory_space<vmem>>, vector<1x256xf32>
    %190 = vector.broadcast %189 : vector<1x256xf32> to vector<16x256xf32>
    %191 = arith.addf %187, %190 : vector<16x256xf32>
    %192 = arith.truncf %191 : vector<16x256xf32> to vector<16x256xbf16>
    %c0_116 = arith.constant 0 : index
    %193 = arith.index_cast %184 : i32 to index
    %194 = vector.load %arg8[%c0_116, %193] : memref<16x2816xbf16, #tpu.memory_space<vmem>>, vector<16x256xbf16>
    tpu.vector_store %arg8[%c0_116, %193], %192 {strides = array<i32>} : memref<16x2816xbf16, #tpu.memory_space<vmem>>, vector<16x256xbf16>,
    %c0_117 = arith.constant 0 : index
    %c0_118 = arith.constant 0 : index
    %195 = vector.load %arg10[%c0_117, %c0_118] : memref<16x512xf32, #tpu.memory_space<vmem>>, vector<16x512xf32>
    %196 = arith.index_cast %184 : i32 to index
    %c0_119 = arith.constant 0 : index
    %197 = vector.load %arg4[%196, %c0_119] : memref<2816x512xbf16, #tpu.memory_space<vmem>>, vector<256x512xbf16>
    %cst_120 = arith.constant dense<0.000000e+00> : vector<16x512xf32>
    %198 = tpu.matmul %192, %197, %cst_120 {dimension_numbers = #tpu.dot_dimension_numbers<[1], [0], [0], [1], [0, 0, 1, 1], [], []>} : vector<16x256xbf16>, vector<256x512xbf16>, vector<16x512xf32> -> vector<16x512xf32>
    %199 = arith.addf %195, %198 : vector<16x512xf32>
    %c0_121 = arith.constant 0 : index
    %c0_122 = arith.constant 0 : index
    %200 = vector.load %arg10[%c0_121, %c0_122] : memref<16x512xf32, #tpu.memory_space<vmem>>, vector<16x512xf32>
    tpu.vector_store %arg10[%c0_121, %c0_122], %199 {strides = array<i32>} : memref<16x512xf32, #tpu.memory_space<vmem>>, vector<16x512xf32>,
    %c11_i32 = arith.constant 11 : i32
    %c0_123 = arith.constant 0 : index
    %c0_124 = arith.constant 0 : index
    %201 = vector.load %arg10[%c0_123, %c0_124] : memref<16x512xf32, #tpu.memory_space<vmem>>, vector<16x512xf32>
    %c0_125 = arith.constant 0 : index
    %c0_126 = arith.constant 0 : index
    %202 = vector.load %arg5[%c0_125, %c0_126] : memref<1x512xf32, #tpu.memory_space<vmem>>, vector<1x512xf32>
    %203 = vector.broadcast %202 : vector<1x512xf32> to vector<16x512xf32>
    %204 = arith.addf %201, %203 : vector<16x512xf32>
    %cst_127 = arith.constant 0.000000e+00 : f32
    %205 = vector.broadcast %cst_127 : f32 to vector<16x512xf32>
    %206 = arith.maximumf %204, %205 : vector<16x512xf32>
    %207 = arith.truncf %206 : vector<16x512xf32> to vector<16x512xbf16>
    %c0_128 = arith.constant 0 : index
    %c0_129 = arith.constant 0 : index
    %208 = vector.load %arg6[%c0_128, %c0_129] : memref<512x256xbf16, #tpu.memory_space<vmem>>, vector<512x256xbf16>
    %cst_130 = arith.constant dense<0.000000e+00> : vector<16x256xf32>
    %209 = tpu.matmul %207, %208, %cst_130 {dimension_numbers = #tpu.dot_dimension_numbers<[1], [0], [0], [1], [0, 0, 1, 1], [], []>} : vector<16x512xbf16>, vector<512x256xbf16>, vector<16x256xf32> -> vector<16x256xf32>
    %c0_131 = arith.constant 0 : index
    %c0_132 = arith.constant 0 : index
    %210 = vector.load %arg7[%c0_131, %c0_132] : memref<1x256xf32, #tpu.memory_space<vmem>>, vector<1x256xf32>
    %211 = vector.broadcast %210 : vector<1x256xf32> to vector<16x256xf32>
    %212 = arith.addf %209, %211 : vector<16x256xf32>
    %c0_133 = arith.constant 0 : index
    %c0_134 = arith.constant 0 : index
    %213 = vector.load %arg9[%c0_133, %c0_134] : memref<16x256xf32, #tpu.memory_space<vmem>>, vector<16x256xf32>
    tpu.vector_store %arg9[%c0_133, %c0_134], %212 {strides = array<i32>} : memref<16x256xf32, #tpu.memory_space<vmem>>, vector<16x256xf32>,
    return
  }
  func.func @transform_0(%arg0: i32) -> (i32, i32) {
    %c0_i32 = arith.constant 0 : i32
    %c0_i32_0 = arith.constant 0 : i32
    return %arg0, %c0_i32 : i32, i32
  }
  func.func @transform_1(%arg0: i32) -> (i32, i32) {
    %c0_i32 = arith.constant 0 : i32
    %c0_i32_0 = arith.constant 0 : i32
    %c0_i32_1 = arith.constant 0 : i32
    return %c0_i32, %c0_i32_0 : i32, i32
  }
  func.func @transform_2(%arg0: i32) -> (i32, i32) {
    %c0_i32 = arith.constant 0 : i32
    %c0_i32_0 = arith.constant 0 : i32
    %c0_i32_1 = arith.constant 0 : i32
    return %c0_i32, %c0_i32_0 : i32, i32
  }
  func.func @transform_3(%arg0: i32) -> (i32, i32) {
    %c0_i32 = arith.constant 0 : i32
    %c0_i32_0 = arith.constant 0 : i32
    %c0_i32_1 = arith.constant 0 : i32
    return %c0_i32, %c0_i32_0 : i32, i32
  }
  func.func @transform_4(%arg0: i32) -> (i32, i32) {
    %c0_i32 = arith.constant 0 : i32
    %c0_i32_0 = arith.constant 0 : i32
    %c0_i32_1 = arith.constant 0 : i32
    return %c0_i32, %c0_i32_0 : i32, i32
  }
  func.func @transform_5(%arg0: i32) -> (i32, i32) {
    %c0_i32 = arith.constant 0 : i32
    %c0_i32_0 = arith.constant 0 : i32
    %c0_i32_1 = arith.constant 0 : i32
    return %c0_i32, %c0_i32_0 : i32, i32
  }
  func.func @transform_6(%arg0: i32) -> (i32, i32) {
    %c0_i32 = arith.constant 0 : i32
    %c0_i32_0 = arith.constant 0 : i32
    %c0_i32_1 = arith.constant 0 : i32
    return %c0_i32, %c0_i32_0 : i32, i32
  }
  func.func @transform_7(%arg0: i32) -> (i32, i32) {
    %c0_i32 = arith.constant 0 : i32
    %c0_i32_0 = arith.constant 0 : i32
    return %arg0, %c0_i32 : i32, i32
  }
  func.func @transform_8(%arg0: i32) -> (i32, i32) {
    %c0_i32 = arith.constant 0 : i32
    %c0_i32_0 = arith.constant 0 : i32
    return %arg0, %c0_i32 : i32, i32
  }
}

</mosaic_0001>

<llo_original>
// kernel: vh_ae_forward.1
$region0: #{vh_ae_forward.1}
  #allocation0 [shape = 'u32[]', space=smem, size = 0x4, offset = 0x4, fixed_abs, tag = 'smem constant byte address 0x4 - core index']
  #allocation1 [shape = 'u32[72,128]{1,0:T(1,128)}', space=vmem, size = 0x9000, scoped, tag = 'internal scratch']
  #allocation2 [shape = 'f32[16,512]{1,0:T(8,128)}', space=vmem, size = 0x8000, scoped, tag = 'scratch operand']
  %s0 = inlined_call_operand.vmem [shape: bf16[16,192], index: 0, kind: input, shape index: {}]
  %s1 = inlined_call_operand.hbm [shape: bf16[192,2816], index: 1, kind: input, shape index: {}]
  %s2 = inlined_call_operand.hbm [shape: f32[1,2816], index: 2, kind: input, shape index: {}]
  %s3 = inlined_call_operand.hbm [shape: bf16[2816,512], index: 3, kind: input, shape index: {}]
  %s4 = inlined_call_operand.hbm [shape: f32[1,512], index: 4, kind: input, shape index: {}]
  %s5 = inlined_call_operand.hbm [shape: bf16[512,256], index: 5, kind: input, shape index: {}]
  %s6 = inlined_call_operand.hbm [shape: f32[1,256], index: 6, kind: input, shape index: {}]
  %s7 = inlined_call_operand.vmem [shape: bf16[16,2816], index: 7, kind: output, shape index: {0}]
  %s8 = inlined_call_operand.vmem [shape: f32[16,256], index: 8, kind: output, shape index: {1}]
  %9 = xla_tuple %s7, %s8
  %s10 = sld [smem:[#allocation0]]
  $region70: #{vh_ae_forward.1} parent=0
    _
  %s12 = ssub.s32 1, %s10
  %s13 = scalar_select 0, %s12, %s10
  $region1: #{vh_ae_forward.1} parent=0
    #allocation3 [shape = 'u8[1081344]{0}', space=vmem, size = 0x108000, scoped, tag = 'input window, operand 1, single buffered']
    #allocation4 [shape = 's32[1]{0}', space=sflag, size = 0x4, scoped, tag = 'scoped memory for vh_ae_forward.1']
    #allocation5 [shape = 'u8[11264]{0}', space=vmem, size = 0x2c00, scoped, tag = 'input window, operand 2, single buffered']
    #allocation6 [shape = 's32[1]{0}', space=sflag, size = 0x4, scoped, tag = 'scoped memory for vh_ae_forward.1']
    #allocation7 [shape = 'u8[2883584]{0}', space=vmem, size = 0x2c0000, scoped, tag = 'input window, operand 3, single buffered']
    #allocation8 [shape = 'u8[2048]{0}', space=vmem, size = 0x800, scoped, tag = 'input window, operand 4, single buffered']
    #allocation9 [shape = 's32[1]{0}', space=sflag, size = 0x4, scoped, tag = 'scoped memory for vh_ae_forward.1']
    #allocation10 [shape = 'u8[262144]{0}', space=vmem, size = 0x40000, scoped, tag = 'input window, operand 5, single buffered']
    #allocation11 [shape = 'u8[1024]{0}', space=vmem, size = 0x400, scoped, tag = 'input window, operand 6, single buffered']
    #allocation12 [shape = 's32[1]{0}', space=sflag, size = 0x4, scoped, tag = 'scoped memory for vh_ae_forward.1']
    %14 = vsyncpa [#allocation4], 0
    %15 = vsyncpa [#allocation6], 0
    %16 = vsyncpa [#allocation9], 0
    %17 = vsyncpa [#allocation12], 0
    // Predicated region
    $region2: #{vh_ae_forward.1} parent=1 // pred_check
      _
    $region3: #{vh_ae_forward.1} parent=1 // pred_check_branch
      %19 = sbr.rel (0) target = $region5
    $region4: #{vh_ae_forward.1} parent=1 // pred_region
      _
    $region5: #{vh_ae_forward.1} parent=1 // pred_fallthru
      _
    // Predicated region
    $region6: #{vh_ae_forward.1} parent=1 // pred_check
      _
    $region7: #{vh_ae_forward.1} parent=1 // pred_check_branch
      %21 = sbr.rel (0) target = $region9
    $region8: #{vh_ae_forward.1} parent=1 // pred_region
      %23 = vsyncadd [#allocation4], 0
      %s24 = sshll.u32 %s1, 4
      %s25 = int_to_ptr.hbm [resolvable:$true] %s24
      %s26 = sshll.u32 [#allocation3], 4
      %s27 = int_to_ptr.vmem [resolvable:$true] %s26
      %32 = dma.hbm_to_vmem [thread:$0]  %s25, 33792, %s27, [#allocation4], 1408, 1408, 88
    $region9: #{vh_ae_forward.1} parent=1 // pred_fallthru
      _
    // Predicated region
    $region10: #{vh_ae_forward.1} parent=1 // pred_check
      _
    $region11: #{vh_ae_forward.1} parent=1 // pred_check_branch
      %34 = sbr.rel (0) target = $region13
    $region12: #{vh_ae_forward.1} parent=1 // pred_region
      %36 = vsyncadd [#allocation6], 0
      %s38 = sshll.u32 %s2, 4
      %s39 = int_to_ptr.hbm [resolvable:$true] %s38
      %s40 = sshll.u32 [#allocation5], 4
      %s41 = int_to_ptr.vmem [resolvable:$true] %s40
      %43 = dma.hbm_to_vmem [thread:$0]  %s39, 352, %s41, [#allocation6]
    $region13: #{vh_ae_forward.1} parent=1 // pred_fallthru
      _
    // Predicated region
    $region14: #{vh_ae_forward.1} parent=1 // pred_check
      _
    $region15: #{vh_ae_forward.1} parent=1 // pred_check_branch
      %45 = sbr.rel (0) target = $region17
    $region16: #{vh_ae_forward.1} parent=1 // pred_region
      %47 = vsyncadd [#allocation6], 0
      %s48 = sshll.u32 %s3, 4
      %s49 = int_to_ptr.hbm [resolvable:$true] %s48
      %s50 = sshll.u32 [#allocation7], 4
      %s51 = int_to_ptr.vmem [resolvable:$true] %s50
      %56 = dma.hbm_to_vmem [thread:$0]  %s49, 90112, %s51, [#allocation6], 256, 256, 16
    $region17: #{vh_ae_forward.1} parent=1 // pred_fallthru
      _
    // Predicated region
    $region18: #{vh_ae_forward.1} parent=1 // pred_check
      _
    $region19: #{vh_ae_forward.1} parent=1 // pred_check_branch
      %58 = sbr.rel (0) target = $region21
    $region20: #{vh_ae_forward.1} parent=1 // pred_region
      %60 = vsyncadd [#allocation9], 0
      %s62 = sshll.u32 %s4, 4
      %s63 = int_to_ptr.hbm [resolvable:$true] %s62
      %s64 = sshll.u32 [#allocation8], 4
      %s65 = int_to_ptr.vmem [resolvable:$true] %s64
      %67 = dma.hbm_to_vmem [thread:$0]  %s63, 64, %s65, [#allocation9]
    $region21: #{vh_ae_forward.1} parent=1 // pred_fallthru
      _
    // Predicated region
    $region22: #{vh_ae_forward.1} parent=1 // pred_check
      _
    $region23: #{vh_ae_forward.1} parent=1 // pred_check_branch
      %69 = sbr.rel (0) target = $region25
    $region24: #{vh_ae_forward.1} parent=1 // pred_region
      %71 = vsyncadd [#allocation9], 0
      %s72 = sshll.u32 %s5, 4
      %s73 = int_to_ptr.hbm [resolvable:$true] %s72
      %s74 = sshll.u32 [#allocation10], 4
      %s75 = int_to_ptr.vmem [resolvable:$true] %s74
      %80 = dma.hbm_to_vmem [thread:$0]  %s73, 8192, %s75, [#allocation9], 128, 128, 8
    $region25: #{vh_ae_forward.1} parent=1 // pred_fallthru
      _
    // Predicated region
    $region26: #{vh_ae_forward.1} parent=1 // pred_check
      _
    $region27: #{vh_ae_forward.1} parent=1 // pred_check_branch
      %82 = sbr.rel (0) target = $region29
    $region28: #{vh_ae_forward.1} parent=1 // pred_region
      %84 = vsyncadd [#allocation12], 0
      %s86 = sshll.u32 %s6, 4
      %s87 = int_to_ptr.hbm [resolvable:$true] %s86
      %s88 = sshll.u32 [#allocation11], 4
      %s89 = int_to_ptr.vmem [resolvable:$true] %s88
      %91 = dma.hbm_to_vmem [thread:$0]  %s87, 32, %s89, [#allocation12]
    $region29: #{vh_ae_forward.1} parent=1 // pred_fallthru
      _
    // Predicated region
    $region30: #{vh_ae_forward.1} parent=1 // pred_check
      _
    $region31: #{vh_ae_forward.1} parent=1 // pred_check_branch
      %93 = sbr.rel (0) target = $region33
    $region32: #{vh_ae_forward.1} parent=1 // pred_region
      %95 = dma.done [#allocation4], 33792
    $region33: #{vh_ae_forward.1} parent=1 // pred_fallthru
      _
    // Predicated region
    $region34: #{vh_ae_forward.1} parent=1 // pred_check
      _
    $region35: #{vh_ae_forward.1} parent=1 // pred_check_branch
      %97 = sbr.rel (0) target = $region37
    $region36: #{vh_ae_forward.1} parent=1 // pred_region
      %99 = dma.done [#allocation6], 352
    $region37: #{vh_ae_forward.1} parent=1 // pred_fallthru
      _
    // Predicated region
    $region38: #{vh_ae_forward.1} parent=1 // pred_check
      _
    $region39: #{vh_ae_forward.1} parent=1 // pred_check_branch
      %101 = sbr.rel (0) target = $region41
    $region40: #{vh_ae_forward.1} parent=1 // pred_region
      %103 = dma.done [#allocation6], 90112
    $region41: #{vh_ae_forward.1} parent=1 // pred_fallthru
      _
    // Predicated region
    $region42: #{vh_ae_forward.1} parent=1 // pred_check
      _
    $region43: #{vh_ae_forward.1} parent=1 // pred_check_branch
      %105 = sbr.rel (0) target = $region45
    $region44: #{vh_ae_forward.1} parent=1 // pred_region
      %107 = dma.done [#allocation9], 64
    $region45: #{vh_ae_forward.1} parent=1 // pred_fallthru
      _
    // Predicated region
    $region46: #{vh_ae_forward.1} parent=1 // pred_check
      _
    $region47: #{vh_ae_forward.1} parent=1 // pred_check_branch
      %109 = sbr.rel (0) target = $region49
    $region48: #{vh_ae_forward.1} parent=1 // pred_region
      %111 = dma.done [#allocation9], 8192
    $region49: #{vh_ae_forward.1} parent=1 // pred_fallthru
      _
    // Predicated region
    $region50: #{vh_ae_forward.1} parent=1 // pred_check
      _
    $region51: #{vh_ae_forward.1} parent=1 // pred_check_branch
      %113 = sbr.rel (0) target = $region53
    $region52: #{vh_ae_forward.1} parent=1 // pred_region
      %115 = dma.done [#allocation12], 32
    $region53: #{vh_ae_forward.1} parent=1 // pred_fallthru
      _
    %v117 = vld [vmem:[%s0] sm:$0xff]
    %v118 = vld [vmem:[%s0 + $0x8] sm:$0xff]
    %119 = vst [vmem:[#allocation2] sm:$0xff] 0.0
    %120 = vst [vmem:[#allocation2 + $0x8] sm:$0xff] 0.0
    %121 = vst [vmem:[#allocation2 + $0x10] sm:$0xff] 0.0
    %122 = vst [vmem:[#allocation2 + $0x18] sm:$0xff] 0.0
    %123 = vst [vmem:[#allocation2 + $0x20] sm:$0xff] 0.0
    %124 = vst [vmem:[#allocation2 + $0x28] sm:$0xff] 0.0
    %125 = vst [vmem:[#allocation2 + $0x30] sm:$0xff] 0.0
    %126 = vst [vmem:[#allocation2 + $0x38] sm:$0xff] 0.0
    %v127 = vld [vmem:[#allocation3] sm:$0xff]
    %v128 = vld [vmem:[#allocation3 + $0x58] sm:$0xff]
    %v129 = vld [vmem:[#allocation3 + $0xb0] sm:$0xff]
    %v130 = vld [vmem:[#allocation3 + $0x108] sm:$0xff]
    %v131 = vld [vmem:[#allocation3 + $0x160] sm:$0xff]
    %v132 = vld [vmem:[#allocation3 + $0x1b8] sm:$0xff]
    %v133 = vld [vmem:[#allocation3 + $0x210] sm:$0xff]
    %v134 = vld [vmem:[#allocation3 + $0x268] sm:$0xff]
    %v135 = vld [vmem:[#allocation3 + $0x2c0] sm:$0xff]
    %v136 = vld [vmem:[#allocation3 + $0x318] sm:$0xff]
    %v137 = vld [vmem:[#allocation3 + $0x370] sm:$0xff]
    %v138 = vld [vmem:[#allocation3 + $0x3c8] sm:$0xff]
    %v139 = vld [vmem:[#allocation3 + $0x420] sm:$0xff]
    %v140 = vld [vmem:[#allocation3 + $0x478] sm:$0xff]
    %v141 = vld [vmem:[#allocation3 + $0x4d0] sm:$0xff]
    %v142 = vld [vmem:[#allocation3 + $0x528] sm:$0xff]
    %v143 = vld [vmem:[#allocation3 + $0x580] sm:$0xff]
    %v144 = vld [vmem:[#allocation3 + $0x5d8] sm:$0xff]
    %v145 = vld [vmem:[#allocation3 + $0x630] sm:$0xff]
    %v146 = vld [vmem:[#allocation3 + $0x688] sm:$0xff]
    %v147 = vld [vmem:[#allocation3 + $0x6e0] sm:$0xff]
    %v148 = vld [vmem:[#allocation3 + $0x738] sm:$0xff]
    %v149 = vld [vmem:[#allocation3 + $0x790] sm:$0xff]
    %v150 = vld [vmem:[#allocation3 + $0x7e8] sm:$0xff]
    %v151 = vld [vmem:[#allocation5] sm:$0x3]
    %v153 = vperm.slane %v151, 0
    %v154 = vperm.slane %v151, 1
    %v159 = vunpack.c.l.b16 %v117
    %v160 = vunpack.c.h.b16 %v117
    %v161 = vunpack.c.l.b16 %v118
    %v162 = vunpack.c.h.b16 %v118
    %v163 = vpack.c.b16 %v161, %v159
    %v164 = vpack.c.b16 %v162, %v160
    %v190 = vunpack.c.l.b16 %v127
    %v191 = vunpack.c.h.b16 %v127
    %v192 = vunpack.c.l.b16 %v128
    %v193 = vunpack.c.h.b16 %v128
    %v194 = vunpack.c.l.b16 %v129
    %v195 = vunpack.c.h.b16 %v129
    %v196 = vunpack.c.l.b16 %v130
    %v197 = vunpack.c.h.b16 %v130
    %v198 = vunpack.c.l.b16 %v131
    %v199 = vunpack.c.h.b16 %v131
    %v200 = vunpack.c.l.b16 %v132
    %v201 = vunpack.c.h.b16 %v132
    %v202 = vunpack.c.l.b16 %v133
    %v203 = vunpack.c.h.b16 %v133
    %v204 = vunpack.c.l.b16 %v134
    %v205 = vunpack.c.h.b16 %v134
    %v206 = vunpack.c.l.b16 %v135
    %v207 = vunpack.c.h.b16 %v135
    %v208 = vunpack.c.l.b16 %v136
    %v209 = vunpack.c.h.b16 %v136
    %v210 = vunpack.c.l.b16 %v137
    %v211 = vunpack.c.h.b16 %v137
    %v212 = vunpack.c.l.b16 %v138
    %v213 = vunpack.c.h.b16 %v138
    %v214 = vunpack.c.l.b16 %v139
    %v215 = vunpack.c.h.b16 %v139
    %v216 = vunpack.c.l.b16 %v140
    %v217 = vunpack.c.h.b16 %v140
    %v218 = vunpack.c.l.b16 %v141
    %v219 = vunpack.c.h.b16 %v141
    %v220 = vunpack.c.l.b16 %v142
    %v221 = vunpack.c.h.b16 %v142
    %v222 = vunpack.c.l.b16 %v143
    %v223 = vunpack.c.h.b16 %v143
    %v224 = vunpack.c.l.b16 %v144
    %v225 = vunpack.c.h.b16 %v144
    %v226 = vunpack.c.l.b16 %v145
    %v227 = vunpack.c.h.b16 %v145
    %v228 = vunpack.c.l.b16 %v146
    %v229 = vunpack.c.h.b16 %v146
    %v230 = vunpack.c.l.b16 %v147
    %v231 = vunpack.c.h.b16 %v147
    %v232 = vunpack.c.l.b16 %v148
    %v233 = vunpack.c.h.b16 %v148
    %v234 = vunpack.c.l.b16 %v149
    %v235 = vunpack.c.h.b16 %v149
    %v236 = vunpack.c.l.b16 %v150
    %v237 = vunpack.c.h.b16 %v150
    %v238 = vpack.c.b16 %v192, %v190
    %v239 = vpack.c.b16 %v193, %v191
    %v240 = vpack.c.b16 %v196, %v194
    %v241 = vpack.c.b16 %v197, %v195
    %v242 = vpack.c.b16 %v200, %v198
    %v243 = vpack.c.b16 %v201, %v199
    %v244 = vpack.c.b16 %v204, %v202
    %v245 = vpack.c.b16 %v205, %v203
    %v246 = vpack.c.b16 %v208, %v206
    %v247 = vpack.c.b16 %v209, %v207
    %v248 = vpack.c.b16 %v212, %v210
    %v249 = vpack.c.b16 %v213, %v211
    %v250 = vpack.c.b16 %v216, %v214
    %v251 = vpack.c.b16 %v217, %v215
    %v252 = vpack.c.b16 %v220, %v218
    %v253 = vpack.c.b16 %v221, %v219
    %v254 = vpack.c.b16 %v224, %v222
    %v255 = vpack.c.b16 %v225, %v223
    %v256 = vpack.c.b16 %v228, %v226
    %v257 = vpack.c.b16 %v229, %v227
    %v258 = vpack.c.b16 %v232, %v230
    %v259 = vpack.c.b16 %v233, %v231
    %v260 = vpack.c.b16 %v236, %v234
    %v261 = vpack.c.b16 %v237, %v235
    %vm286 = vcmask 523264
    %v288 = vsel %vm286, %v164, 0
    %290 = vmatpush.bf16.msra.mxu0 %v252
    %291 = vmatpush.bf16.msra.mxu0 %v250
    %292 = vmatpush.bf16.msra.mxu0 %v248
    %293 = vmatpush.bf16.msra.mxu0 %v246
    %294 = vmatpush.bf16.msra.mxu0 %v244
    %295 = vmatpush.bf16.msra.mxu0 %v242
    %296 = vmatpush.bf16.msra.mxu0 %v240
    %297 = vmatpush.bf16.msra.mxu0 %v238
    %298 = vmatmul.bf16.gmra.mxu0 %v163
    %v299 = vpop.f32.mrf.mxu0
    %v300 = vadd.f32 %v153, %v299
    %v301 = vpop.f32.mrf.mxu0
    %v302 = vadd.f32 %v153, %v301
    %303 = vdwg.mxu0
    %304 = vmatpush.bf16.msra.mxu0 0
    %305 = vmatpush.bf16.msra.mxu0 0
    %306 = vmatpush.bf16.msra.mxu0 0
    %307 = vmatpush.bf16.msra.mxu0 0
    %308 = vmatpush.bf16.msra.mxu0 %v260
    %309 = vmatpush.bf16.msra.mxu0 %v258
    %310 = vmatpush.bf16.msra.mxu0 %v256
    %311 = vmatpush.bf16.msra.mxu0 %v254
    %312 = vmatmul.bf16.gmra.mxu0 %v288
    %v313 = vpop.f32.mrf.mxu0
    %v314 = vadd.f32 %v300, %v313
    %v315 = vpop.f32.mrf.mxu0
    %v316 = vadd.f32 %v302, %v315
    %317 = vdwg.mxu0
    %318 = vmatpush.bf16.msra.mxu0 %v253
    %319 = vmatpush.bf16.msra.mxu0 %v251
    %320 = vmatpush.bf16.msra.mxu0 %v249
    %321 = vmatpush.bf16.msra.mxu0 %v247
    %322 = vmatpush.bf16.msra.mxu0 %v245
    %323 = vmatpush.bf16.msra.mxu0 %v243
    %324 = vmatpush.bf16.msra.mxu0 %v241
    %325 = vmatpush.bf16.msra.mxu0 %v239
    %326 = vmatmul.bf16.gmra.mxu0 %v163
    %v327 = vpop.f32.mrf.mxu0
    %v328 = vadd.f32 %v154, %v327
    %v329 = vpop.f32.mrf.mxu0
    %v330 = vadd.f32 %v154, %v329
    %331 = vdwg.mxu0
    %332 = vmatpush.bf16.msra.mxu0 0
    %333 = vmatpush.bf16.msra.mxu0 0
    %334 = vmatpush.bf16.msra.mxu0 0
    %335 = vmatpush.bf16.msra.mxu0 0
    %336 = vmatpush.bf16.msra.mxu0 %v261
    %337 = vmatpush.bf16.msra.mxu0 %v259
    %338 = vmatpush.bf16.msra.mxu0 %v257
    %339 = vmatpush.bf16.msra.mxu0 %v255
    %340 = vmatmul.bf16.gmra.mxu0 %v288
    %v341 = vpop.f32.mrf.mxu0
    %v342 = vadd.f32 %v328, %v341
    %v343 = vpop.f32.mrf.mxu0
    %v344 = vadd.f32 %v330, %v343
    %345 = vdwg.mxu0
    %v346 = vpack.c.bf16 %v342, %v314
    %v347 = vpack.c.bf16 %v344, %v316
    %348 = vst [vmem:[%s7] sm:$0xff] %v346
    %349 = vst [vmem:[%s7 + $0x58] sm:$0xff] %v347
    %v350 = vld [vmem:[#allocation2] sm:$0xff]
    %v351 = vld [vmem:[#allocation2 + $0x8] sm:$0xff]
    %v352 = vld [vmem:[#allocation2 + $0x10] sm:$0xff]
    %v353 = vld [vmem:[#allocation2 + $0x18] sm:$0xff]
    %v354 = vld [vmem:[#allocation2 + $0x20] sm:$0xff]
    %v355 = vld [vmem:[#allocation2 + $0x28] sm:$0xff]
    %v356 = vld [vmem:[#allocation2 + $0x30] sm:$0xff]
    %v357 = vld [vmem:[#allocation2 + $0x38] sm:$0xff]
    %s358 = smul.u32 0, 4
    %s359 = smul.addr %s358, 4
    %s360 = scalar_lea.vmem [#allocation7], %s359
    %v361 = vld [vmem:[%s360] sm:$0xff]
    %v362 = vld [vmem:[%s360 + $0x8] sm:$0xff]
    %v363 = vld [vmem:[%s360 + $0x10] sm:$0xff]
    %v364 = vld [vmem:[%s360 + $0x18] sm:$0xff]
    %v365 = vld [vmem:[%s360 + $0x20] sm:$0xff]
    %v366 = vld [vmem:[%s360 + $0x28] sm:$0xff]
    %v367 = vld [vmem:[%s360 + $0x30] sm:$0xff]
    %v368 = vld [vmem:[%s360 + $0x38] sm:$0xff]
    %v369 = vld [vmem:[%s360 + $0x40] sm:$0xff]
    %v370 = vld [vmem:[%s360 + $0x48] sm:$0xff]
    %v371 = vld [vmem:[%s360 + $0x50] sm:$0xff]
    %v372 = vld [vmem:[%s360 + $0x58] sm:$0xff]
    %v373 = vld [vmem:[%s360 + $0x60] sm:$0xff]
    %v374 = vld [vmem:[%s360 + $0x68] sm:$0xff]
    %v375 = vld [vmem:[%s360 + $0x70] sm:$0xff]
    %v376 = vld [vmem:[%s360 + $0x78] sm:$0xff]
    %v377 = vld [vmem:[%s360 + $0x80] sm:$0xff]
    %v378 = vld [vmem:[%s360 + $0x88] sm:$0xff]
    %v379 = vld [vmem:[%s360 + $0x90] sm:$0xff]
    %v380 = vld [vmem:[%s360 + $0x98] sm:$0xff]
    %v381 = vld [vmem:[%s360 + $0xa0] sm:$0xff]
    %v382 = vld [vmem:[%s360 + $0xa8] sm:$0xff]
    %v383 = vld [vmem:[%s360 + $0xb0] sm:$0xff]
    %v384 = vld [vmem:[%s360 + $0xb8] sm:$0xff]
    %v385 = vld [vmem:[%s360 + $0xc0] sm:$0xff]
    %v386 = vld [vmem:[%s360 + $0xc8] sm:$0xff]
    %v387 = vld [vmem:[%s360 + $0xd0] sm:$0xff]
    %v388 = vld [vmem:[%s360 + $0xd8] sm:$0xff]
    %v389 = vld [vmem:[%s360 + $0xe0] sm:$0xff]
    %v390 = vld [vmem:[%s360 + $0xe8] sm:$0xff]
    %v391 = vld [vmem:[%s360 + $0xf0] sm:$0xff]
    %v392 = vld [vmem:[%s360 + $0xf8] sm:$0xff]
    %v393 = vld [vmem:[%s360 + $0x100] sm:$0xff]
    %v394 = vld [vmem:[%s360 + $0x108] sm:$0xff]
    %v395 = vld [vmem:[%s360 + $0x110] sm:$0xff]
    %v396 = vld [vmem:[%s360 + $0x118] sm:$0xff]
    %v397 = vld [vmem:[%s360 + $0x120] sm:$0xff]
    %v398 = vld [vmem:[%s360 + $0x128] sm:$0xff]
    %v399 = vld [vmem:[%s360 + $0x130] sm:$0xff]
    %v400 = vld [vmem:[%s360 + $0x138] sm:$0xff]
    %v401 = vld [vmem:[%s360 + $0x140] sm:$0xff]
    %v402 = vld [vmem:[%s360 + $0x148] sm:$0xff]
    %v403 = vld [vmem:[%s360 + $0x150] sm:$0xff]
    %v404 = vld [vmem:[%s360 + $0x158] sm:$0xff]
    %v405 = vld [vmem:[%s360 + $0x160] sm:$0xff]
    %v406 = vld [vmem:[%s360 + $0x168] sm:$0xff]
    %v407 = vld [vmem:[%s360 + $0x170] sm:$0xff]
    %v408 = vld [vmem:[%s360 + $0x178] sm:$0xff]
    %v409 = vld [vmem:[%s360 + $0x180] sm:$0xff]
    %v410 = vld [vmem:[%s360 + $0x188] sm:$0xff]
    %v411 = vld [vmem:[%s360 + $0x190] sm:$0xff]
    %v412 = vld [vmem:[%s360 + $0x198] sm:$0xff]
    %v413 = vld [vmem:[%s360 + $0x1a0] sm:$0xff]
    %v414 = vld [vmem:[%s360 + $0x1a8] sm:$0xff]
    %v415 = vld [vmem:[%s360 + $0x1b0] sm:$0xff]
    %v416 = vld [vmem:[%s360 + $0x1b8] sm:$0xff]
    %v417 = vld [vmem:[%s360 + $0x1c0] sm:$0xff]
    %v418 = vld [vmem:[%s360 + $0x1c8] sm:$0xff]
    %v419 = vld [vmem:[%s360 + $0x1d0] sm:$0xff]
    %v420 = vld [vmem:[%s360 + $0x1d8] sm:$0xff]
    %v421 = vld [vmem:[%s360 + $0x1e0] sm:$0xff]
    %v422 = vld [vmem:[%s360 + $0x1e8] sm:$0xff]
    %v423 = vld [vmem:[%s360 + $0x1f0] sm:$0xff]
    %v424 = vld [vmem:[%s360 + $0x1f8] sm:$0xff]
    %v427 = vunpack.c.l.b16 %v346
    %v428 = vunpack.c.h.b16 %v346
    %v429 = vunpack.c.l.b16 %v347
    %v430 = vunpack.c.h.b16 %v347
    %v431 = vpack.c.b16 %v429, %v427
    %v432 = vpack.c.b16 %v430, %v428
    %v499 = vunpack.c.l.b16 %v361
    %v500 = vunpack.c.h.b16 %v361
    %v501 = vunpack.c.l.b16 %v362
    %v502 = vunpack.c.h.b16 %v362
    %v503 = vunpack.c.l.b16 %v363
    %v504 = vunpack.c.h.b16 %v363
    %v505 = vunpack.c.l.b16 %v364
    %v506 = vunpack.c.h.b16 %v364
    %v507 = vunpack.c.l.b16 %v365
    %v508 = vunpack.c.h.b16 %v365
    %v509 = vunpack.c.l.b16 %v366
    %v510 = vunpack.c.h.b16 %v366
    %v511 = vunpack.c.l.b16 %v367
    %v512 = vunpack.c.h.b16 %v367
    %v513 = vunpack.c.l.b16 %v368
    %v514 = vunpack.c.h.b16 %v368
    %v515 = vunpack.c.l.b16 %v369
    %v516 = vunpack.c.h.b16 %v369
    %v517 = vunpack.c.l.b16 %v370
    %v518 = vunpack.c.h.b16 %v370
    %v519 = vunpack.c.l.b16 %v371
    %v520 = vunpack.c.h.b16 %v371
    %v521 = vunpack.c.l.b16 %v372
    %v522 = vunpack.c.h.b16 %v372
    %v523 = vunpack.c.l.b16 %v373
    %v524 = vunpack.c.h.b16 %v373
    %v525 = vunpack.c.l.b16 %v374
    %v526 = vunpack.c.h.b16 %v374
    %v527 = vunpack.c.l.b16 %v375
    %v528 = vunpack.c.h.b16 %v375
    %v529 = vunpack.c.l.b16 %v376
    %v530 = vunpack.c.h.b16 %v376
    %v531 = vunpack.c.l.b16 %v377
    %v532 = vunpack.c.h.b16 %v377
    %v533 = vunpack.c.l.b16 %v378
    %v534 = vunpack.c.h.b16 %v378
    %v535 = vunpack.c.l.b16 %v379
    %v536 = vunpack.c.h.b16 %v379
    %v537 = vunpack.c.l.b16 %v380
    %v538 = vunpack.c.h.b16 %v380
    %v539 = vunpack.c.l.b16 %v381
    %v540 = vunpack.c.h.b16 %v381
    %v541 = vunpack.c.l.b16 %v382
    %v542 = vunpack.c.h.b16 %v382
    %v543 = vunpack.c.l.b16 %v383
    %v544 = vunpack.c.h.b16 %v383
    %v545 = vunpack.c.l.b16 %v384
    %v546 = vunpack.c.h.b16 %v384
    %v547 = vunpack.c.l.b16 %v385
    %v548 = vunpack.c.h.b16 %v385
    %v549 = vunpack.c.l.b16 %v386
    %v550 = vunpack.c.h.b16 %v386
    %v551 = vunpack.c.l.b16 %v387
    %v552 = vunpack.c.h.b16 %v387
    %v553 = vunpack.c.l.b16 %v388
    %v554 = vunpack.c.h.b16 %v388
    %v555 = vunpack.c.l.b16 %v389
    %v556 = vunpack.c.h.b16 %v389
    %v557 = vunpack.c.l.b16 %v390
    %v558 = vunpack.c.h.b16 %v390
    %v559 = vunpack.c.l.b16 %v391
    %v560 = vunpack.c.h.b16 %v391
    %v561 = vunpack.c.l.b16 %v392
    %v562 = vunpack.c.h.b16 %v392
    %v563 = vunpack.c.l.b16 %v393
    %v564 = vunpack.c.h.b16 %v393
    %v565 = vunpack.c.l.b16 %v394
    %v566 = vunpack.c.h.b16 %v394
    %v567 = vunpack.c.l.b16 %v395
    %v568 = vunpack.c.h.b16 %v395
    %v569 = vunpack.c.l.b16 %v396
    %v570 = vunpack.c.h.b16 %v396
    %v571 = vunpack.c.l.b16 %v397
    %v572 = vunpack.c.h.b16 %v397
    %v573 = vunpack.c.l.b16 %v398
    %v574 = vunpack.c.h.b16 %v398
    %v575 = vunpack.c.l.b16 %v399
    %v576 = vunpack.c.h.b16 %v399
    %v577 = vunpack.c.l.b16 %v400
    %v578 = vunpack.c.h.b16 %v400
    %v579 = vunpack.c.l.b16 %v401
    %v580 = vunpack.c.h.b16 %v401
    %v581 = vunpack.c.l.b16 %v402
    %v582 = vunpack.c.h.b16 %v402
    %v583 = vunpack.c.l.b16 %v403
    %v584 = vunpack.c.h.b16 %v403
    %v585 = vunpack.c.l.b16 %v404
    %v586 = vunpack.c.h.b16 %v404
    %v587 = vunpack.c.l.b16 %v405
    %v588 = vunpack.c.h.b16 %v405
    %v589 = vunpack.c.l.b16 %v406
    %v590 = vunpack.c.h.b16 %v406
    %v591 = vunpack.c.l.b16 %v407
    %v592 = vunpack.c.h.b16 %v407
    %v593 = vunpack.c.l.b16 %v408
    %v594 = vunpack.c.h.b16 %v408
    %v595 = vunpack.c.l.b16 %v409
    %v596 = vunpack.c.h.b16 %v409
    %v597 = vunpack.c.l.b16 %v410
    %v598 = vunpack.c.h.b16 %v410
    %v599 = vunpack.c.l.b16 %v411
    %v600 = vunpack.c.h.b16 %v411
    %v601 = vunpack.c.l.b16 %v412
    %v602 = vunpack.c.h.b16 %v412
    %v603 = vunpack.c.l.b16 %v413
    %v604 = vunpack.c.h.b16 %v413
    %v605 = vunpack.c.l.b16 %v414
    %v606 = vunpack.c.h.b16 %v414
    %v607 = vunpack.c.l.b16 %v415
    %v608 = vunpack.c.h.b16 %v415
    %v609 = vunpack.c.l.b16 %v416
    %v610 = vunpack.c.h.b16 %v416
    %v611 = vunpack.c.l.b16 %v417
    %v612 = vunpack.c.h.b16 %v417
    %v613 = vunpack.c.l.b16 %v418
    %v614 = vunpack.c.h.b16 %v418
    %v615 = vunpack.c.l.b16 %v419
    %v616 = vunpack.c.h.b16 %v419
    %v617 = vunpack.c.l.b16 %v420
    %v618 = vunpack.c.h.b16 %v420
    %v619 = vunpack.c.l.b16 %v421
    %v620 = vunpack.c.h.b16 %v421
    %v621 = vunpack.c.l.b16 %v422
    %v622 = vunpack.c.h.b16 %v422
    %v623 = vunpack.c.l.b16 %v423
    %v624 = vunpack.c.h.b16 %v423
    %v625 = vunpack.c.l.b16 %v424
    %v626 = vunpack.c.h.b16 %v424
    %v627 = vpack.c.b16 %v503, %v499
    %v628 = vpack.c.b16 %v504, %v500
    %v629 = vpack.c.b16 %v505, %v501
    %v630 = vpack.c.b16 %v506, %v502
    %v631 = vpack.c.b16 %v511, %v507
    %v632 = vpack.c.b16 %v512, %v508
    %v633 = vpack.c.b16 %v513, %v509
    %v634 = vpack.c.b16 %v514, %v510
    %v635 = vpack.c.b16 %v519, %v515
    %v636 = vpack.c.b16 %v520, %v516
    %v637 = vpack.c.b16 %v521, %v517
    %v638 = vpack.c.b16 %v522, %v518
    %v639 = vpack.c.b16 %v527, %v523
    %v640 = vpack.c.b16 %v528, %v524
    %v641 = vpack.c.b16 %v529, %v525
    %v642 = vpack.c.b16 %v530, %v526
    %v643 = vpack.c.b16 %v535, %v531
    %v644 = vpack.c.b16 %v536, %v532
    %v645 = vpack.c.b16 %v537, %v533
    %v646 = vpack.c.b16 %v538, %v534
    %v647 = vpack.c.b16 %v543, %v539
    %v648 = vpack.c.b16 %v544, %v540
    %v649 = vpack.c.b16 %v545, %v541
    %v650 = vpack.c.b16 %v546, %v542
    %v651 = vpack.c.b16 %v551, %v547
    %v652 = vpack.c.b16 %v552, %v548
    %v653 = vpack.c.b16 %v553, %v549
    %v654 = vpack.c.b16 %v554, %v550
    %v655 = vpack.c.b16 %v559, %v555
    %v656 = vpack.c.b16 %v560, %v556
    %v657 = vpack.c.b16 %v561, %v557
    %v658 = vpack.c.b16 %v562, %v558
    %v659 = vpack.c.b16 %v567, %v563
    %v660 = vpack.c.b16 %v568, %v564
    %v661 = vpack.c.b16 %v569, %v565
    %v662 = vpack.c.b16 %v570, %v566
    %v663 = vpack.c.b16 %v575, %v571
    %v664 = vpack.c.b16 %v576, %v572
    %v665 = vpack.c.b16 %v577, %v573
    %v666 = vpack.c.b16 %v578, %v574
    %v667 = vpack.c.b16 %v583, %v579
    %v668 = vpack.c.b16 %v584, %v580
    %v669 = vpack.c.b16 %v585, %v581
    %v670 = vpack.c.b16 %v586, %v582
    %v671 = vpack.c.b16 %v591, %v587
    %v672 = vpack.c.b16 %v592, %v588
    %v673 = vpack.c.b16 %v593, %v589
    %v674 = vpack.c.b16 %v594, %v590
    %v675 = vpack.c.b16 %v599, %v595
    %v676 = vpack.c.b16 %v600, %v596
    %v677 = vpack.c.b16 %v601, %v597
    %v678 = vpack.c.b16 %v602, %v598
    %v679 = vpack.c.b16 %v607, %v603
    %v680 = vpack.c.b16 %v608, %v604
    %v681 = vpack.c.b16 %v609, %v605
    %v682 = vpack.c.b16 %v610, %v606
    %v683 = vpack.c.b16 %v615, %v611
    %v684 = vpack.c.b16 %v616, %v612
    %v685 = vpack.c.b16 %v617, %v613
    %v686 = vpack.c.b16 %v618, %v614
    %v687 = vpack.c.b16 %v623, %v619
    %v688 = vpack.c.b16 %v624, %v620
    %v689 = vpack.c.b16 %v625, %v621
    %v690 = vpack.c.b16 %v626, %v622
    %755 = vmatpush.bf16.msra.mxu0 %v655
    %756 = vmatpush.bf16.msra.mxu0 %v651
    %757 = vmatpush.bf16.msra.mxu0 %v647
    %758 = vmatpush.bf16.msra.mxu0 %v643
    %759 = vmatpush.bf16.msra.mxu0 %v639
    %760 = vmatpush.bf16.msra.mxu0 %v635
    %761 = vmatpush.bf16.msra.mxu0 %v631
    %762 = vmatpush.bf16.msra.mxu0 %v627
    %763 = vmatmul.bf16.gmra.mxu0 %v431
    %v764 = vpop.f32.mrf.mxu0
    %v765 = vadd.f32 0.0, %v764
    %v766 = vpop.f32.mrf.mxu0
    %v767 = vadd.f32 0.0, %v766
    %768 = vdwg.mxu0
    %769 = vmatpush.bf16.msra.mxu0 %v687
    %770 = vmatpush.bf16.msra.mxu0 %v683
    %771 = vmatpush.bf16.msra.mxu0 %v679
    %772 = vmatpush.bf16.msra.mxu0 %v675
    %773 = vmatpush.bf16.msra.mxu0 %v671
    %774 = vmatpush.bf16.msra.mxu0 %v667
    %775 = vmatpush.bf16.msra.mxu0 %v663
    %776 = vmatpush.bf16.msra.mxu0 %v659
    %777 = vmatmul.bf16.gmra.mxu0 %v432
    %v778 = vpop.f32.mrf.mxu0
    %v779 = vadd.f32 %v765, %v778
    %v780 = vpop.f32.mrf.mxu0
    %v781 = vadd.f32 %v767, %v780
    %782 = vdwg.mxu0
    %783 = vmatpush.bf16.msra.mxu0 %v656
    %784 = vmatpush.bf16.msra.mxu0 %v652
    %785 = vmatpush.bf16.msra.mxu0 %v648
    %786 = vmatpush.bf16.msra.mxu0 %v644
    %787 = vmatpush.bf16.msra.mxu0 %v640
    %788 = vmatpush.bf16.msra.mxu0 %v636
    %789 = vmatpush.bf16.msra.mxu0 %v632
    %790 = vmatpush.bf16.msra.mxu0 %v628
    %791 = vmatmul.bf16.gmra.mxu0 %v431
    %v792 = vpop.f32.mrf.mxu0
    %v793 = vadd.f32 0.0, %v792
    %v794 = vpop.f32.mrf.mxu0
    %v795 = vadd.f32 0.0, %v794
    %796 = vdwg.mxu0
    %797 = vmatpush.bf16.msra.mxu0 %v688
    %798 = vmatpush.bf16.msra.mxu0 %v684
    %799 = vmatpush.bf16.msra.mxu0 %v680
    %800 = vmatpush.bf16.msra.mxu0 %v676
    %801 = vmatpush.bf16.msra.mxu0 %v672
    %802 = vmatpush.bf16.msra.mxu0 %v668
    %803 = vmatpush.bf16.msra.mxu0 %v664
    %804 = vmatpush.bf16.msra.mxu0 %v660
    %805 = vmatmul.bf16.gmra.mxu0 %v432
    %v806 = vpop.f32.mrf.mxu0
    %v807 = vadd.f32 %v793, %v806
    %v808 = vpop.f32.mrf.mxu0
    %v809 = vadd.f32 %v795, %v808
    %810 = vdwg.mxu0
    %811 = vmatpush.bf16.msra.mxu0 %v657
    %812 = vmatpush.bf16.msra.mxu0 %v653
    %813 = vmatpush.bf16.msra.mxu0 %v649
    %814 = vmatpush.bf16.msra.mxu0 %v645
    %815 = vmatpush.bf16.msra.mxu0 %v641
    %816 = vmatpush.bf16.msra.mxu0 %v637
    %817 = vmatpush.bf16.msra.mxu0 %v633
    %818 = vmatpush.bf16.msra.mxu0 %v629
    %819 = vmatmul.bf16.gmra.mxu0 %v431
    %v820 = vpop.f32.mrf.mxu0
    %v821 = vadd.f32 0.0, %v820
    %v822 = vpop.f32.mrf.mxu0
    %v823 = vadd.f32 0.0, %v822
    %824 = vdwg.mxu0
    %825 = vmatpush.bf16.msra.mxu0 %v689
    %826 = vmatpush.bf16.msra.mxu0 %v685
    %827 = vmatpush.bf16.msra.mxu0 %v681
    %828 = vmatpush.bf16.msra.mxu0 %v677
    %829 = vmatpush.bf16.msra.mxu0 %v673
    %830 = vmatpush.bf16.msra.mxu0 %v669
    %831 = vmatpush.bf16.msra.mxu0 %v665
    %832 = vmatpush.bf16.msra.mxu0 %v661
    %833 = vmatmul.bf16.gmra.mxu0 %v432
    %v834 = vpop.f32.mrf.mxu0
    %v835 = vadd.f32 %v821, %v834
    %v836 = vpop.f32.mrf.mxu0
    %v837 = vadd.f32 %v823, %v836
    %838 = vdwg.mxu0
    %839 = vmatpush.bf16.msra.mxu0 %v658
    %840 = vmatpush.bf16.msra.mxu0 %v654
    %841 = vmatpush.bf16.msra.mxu0 %v650
    %842 = vmatpush.bf16.msra.mxu0 %v646
    %843 = vmatpush.bf16.msra.mxu0 %v642
    %844 = vmatpush.bf16.msra.mxu0 %v638
    %845 = vmatpush.bf16.msra.mxu0 %v634
    %846 = vmatpush.bf16.msra.mxu0 %v630
    %847 = vmatmul.bf16.gmra.mxu0 %v431
    %v848 = vpop.f32.mrf.mxu0
    %v849 = vadd.f32 0.0, %v848
    %v850 = vpop.f32.mrf.mxu0
    %v851 = vadd.f32 0.0, %v850
    %852 = vdwg.mxu0
    %853 = vmatpush.bf16.msra.mxu0 %v690
    %854 = vmatpush.bf16.msra.mxu0 %v686
    %855 = vmatpush.bf16.msra.mxu0 %v682
    %856 = vmatpush.bf16.msra.mxu0 %v678
    %857 = vmatpush.bf16.msra.mxu0 %v674
    %858 = vmatpush.bf16.msra.mxu0 %v670
    %859 = vmatpush.bf16.msra.mxu0 %v666
    %860 = vmatpush.bf16.msra.mxu0 %v662
    %861 = vmatmul.bf16.gmra.mxu0 %v432
    %v862 = vpop.f32.mrf.mxu0
    %v863 = vadd.f32 %v849, %v862
    %v864 = vpop.f32.mrf.mxu0
    %v865 = vadd.f32 %v851, %v864
    %866 = vdwg.mxu0
    %v867 = vadd.f32 %v350, %v779
    %v868 = vadd.f32 %v351, %v807
    %v869 = vadd.f32 %v352, %v835
    %v870 = vadd.f32 %v353, %v863
    %v871 = vadd.f32 %v354, %v781
    %v872 = vadd.f32 %v355, %v809
    %v873 = vadd.f32 %v356, %v837
    %v874 = vadd.f32 %v357, %v865
    %875 = vst [vmem:[#allocation2] sm:$0xff] %v867
    %876 = vst [vmem:[#allocation2 + $0x8] sm:$0xff] %v868
    %877 = vst [vmem:[#allocation2 + $0x10] sm:$0xff] %v869
    %878 = vst [vmem:[#allocation2 + $0x18] sm:$0xff] %v870
    %879 = vst [vmem:[#allocation2 + $0x20] sm:$0xff] %v871
    %880 = vst [vmem:[#allocation2 + $0x28] sm:$0xff] %v872
    %881 = vst [vmem:[#allocation2 + $0x30] sm:$0xff] %v873
    %882 = vst [vmem:[#allocation2 + $0x38] sm:$0xff] %v874
    %s883 = scalar_lea.vmem [#allocation3], 8
    %v884 = vld [vmem:[%s883] sm:$0xff]
    %v885 = vld [vmem:[%s883 + $0x58] sm:$0xff]
    %v886 = vld [vmem:[%s883 + $0xb0] sm:$0xff]
    %v887 = vld [vmem:[%s883 + $0x108] sm:$0xff]
    %v888 = vld [vmem:[%s883 + $0x160] sm:$0xff]
    %v889 = vld [vmem:[%s883 + $0x1b8] sm:$0xff]
    %v890 = vld [vmem:[%s883 + $0x210] sm:$0xff]
    %v891 = vld [vmem:[%s883 + $0x268] sm:$0xff]
    %v892 = vld [vmem:[%s883 + $0x2c0] sm:$0xff]
    %v893 = vld [vmem:[%s883 + $0x318] sm:$0xff]
    %v894 = vld [vmem:[%s883 + $0x370] sm:$0xff]
    %v895 = vld [vmem:[%s883 + $0x3c8] sm:$0xff]
    %v896 = vld [vmem:[%s883 + $0x420] sm:$0xff]
    %v897 = vld [vmem:[%s883 + $0x478] sm:$0xff]
    %v898 = vld [vmem:[%s883 + $0x4d0] sm:$0xff]
    %v899 = vld [vmem:[%s883 + $0x528] sm:$0xff]
    %v900 = vld [vmem:[%s883 + $0x580] sm:$0xff]
    %v901 = vld [vmem:[%s883 + $0x5d8] sm:$0xff]
    %v902 = vld [vmem:[%s883 + $0x630] sm:$0xff]
    %v903 = vld [vmem:[%s883 + $0x688] sm:$0xff]
    %v904 = vld [vmem:[%s883 + $0x6e0] sm:$0xff]
    %v905 = vld [vmem:[%s883 + $0x738] sm:$0xff]
    %v906 = vld [vmem:[%s883 + $0x790] sm:$0xff]
    %v907 = vld [vmem:[%s883 + $0x7e8] sm:$0xff]
    %s908 = scalar_lea.vmem [#allocation5], 2
    %v909 = vld [vmem:[%s908] sm:$0x3]
    %v911 = vperm.slane %v909, 0
    %v912 = vperm.slane %v909, 1
    %v939 = vunpack.c.l.b16 %v884
    %v940 = vunpack.c.h.b16 %v884
    %v941 = vunpack.c.l.b16 %v885
    %v942 = vunpack.c.h.b16 %v885
    %v943 = vunpack.c.l.b16 %v886
    %v944 = vunpack.c.h.b16 %v886
    %v945 = vunpack.c.l.b16 %v887
    %v946 = vunpack.c.h.b16 %v887
    %v947 = vunpack.c.l.b16 %v888
    %v948 = vunpack.c.h.b16 %v888
    %v949 = vunpack.c.l.b16 %v889
    %v950 = vunpack.c.h.b16 %v889
    %v951 = vunpack.c.l.b16 %v890
    %v952 = vunpack.c.h.b16 %v890
    %v953 = vunpack.c.l.b16 %v891
    %v954 = vunpack.c.h.b16 %v891
    %v955 = vunpack.c.l.b16 %v892
    %v956 = vunpack.c.h.b16 %v892
    %v957 = vunpack.c.l.b16 %v893
    %v958 = vunpack.c.h.b16 %v893
    %v959 = vunpack.c.l.b16 %v894
    %v960 = vunpack.c.h.b16 %v894
    %v961 = vunpack.c.l.b16 %v895
    %v962 = vunpack.c.h.b16 %v895
    %v963 = vunpack.c.l.b16 %v896
    %v964 = vunpack.c.h.b16 %v896
    %v965 = vunpack.c.l.b16 %v897
    %v966 = vunpack.c.h.b16 %v897
    %v967 = vunpack.c.l.b16 %v898
    %v968 = vunpack.c.h.b16 %v898
    %v969 = vunpack.c.l.b16 %v899
    %v970 = vunpack.c.h.b16 %v899
    %v971 = vunpack.c.l.b16 %v900
    %v972 = vunpack.c.h.b16 %v900
    %v973 = vunpack.c.l.b16 %v901
    %v974 = vunpack.c.h.b16 %v901
    %v975 = vunpack.c.l.b16 %v902
    %v976 = vunpack.c.h.b16 %v902
    %v977 = vunpack.c.l.b16 %v903
    %v978 = vunpack.c.h.b16 %v903
    %v979 = vunpack.c.l.b16 %v904
    %v980 = vunpack.c.h.b16 %v904
    %v981 = vunpack.c.l.b16 %v905
    %v982 = vunpack.c.h.b16 %v905
    %v983 = vunpack.c.l.b16 %v906
    %v984 = vunpack.c.h.b16 %v906
    %v985 = vunpack.c.l.b16 %v907
    %v986 = vunpack.c.h.b16 %v907
    %v987 = vpack.c.b16 %v941, %v939
    %v988 = vpack.c.b16 %v942, %v940
    %v989 = vpack.c.b16 %v945, %v943
    %v990 = vpack.c.b16 %v946, %v944
    %v991 = vpack.c.b16 %v949, %v947
    %v992 = vpack.c.b16 %v950, %v948
    %v993 = vpack.c.b16 %v953, %v951
    %v994 = vpack.c.b16 %v954, %v952
    %v995 = vpack.c.b16 %v957, %v955
    %v996 = vpack.c.b16 %v958, %v956
    %v997 = vpack.c.b16 %v961, %v959
    %v998 = vpack.c.b16 %v962, %v960
    %v999 = vpack.c.b16 %v965, %v963
    %v1000 = vpack.c.b16 %v966, %v964
    %v1001 = vpack.c.b16 %v969, %v967
    %v1002 = vpack.c.b16 %v970, %v968
    %v1003 = vpack.c.b16 %v973, %v971
    %v1004 = vpack.c.b16 %v974, %v972
    %v1005 = vpack.c.b16 %v977, %v975
    %v1006 = vpack.c.b16 %v978, %v976
    %v1007 = vpack.c.b16 %v981, %v979
    %v1008 = vpack.c.b16 %v982, %v980
    %v1009 = vpack.c.b16 %v985, %v983
    %v1010 = vpack.c.b16 %v986, %v984
    %1035 = vmatpush.bf16.msra.mxu0 %v1001
    %1036 = vmatpush.bf16.msra.mxu0 %v999
    %1037 = vmatpush.bf16.msra.mxu0 %v997
    %1038 = vmatpush.bf16.msra.mxu0 %v995
    %1039 = vmatpush.bf16.msra.mxu0 %v993
    %1040 = vmatpush.bf16.msra.mxu0 %v991
    %1041 = vmatpush.bf16.msra.mxu0 %v989
    %1042 = vmatpush.bf16.msra.mxu0 %v987
    %1043 = vmatmul.bf16.gmra.mxu0 %v163
    %v1044 = vpop.f32.mrf.mxu0
    %v1045 = vadd.f32 %v911, %v1044
    %v1046 = vpop.f32.mrf.mxu0
    %v1047 = vadd.f32 %v911, %v1046
    %1048 = vdwg.mxu0
    %1049 = vmatpush.bf16.msra.mxu0 0
    %1050 = vmatpush.bf16.msra.mxu0 0
    %1051 = vmatpush.bf16.msra.mxu0 0
    %1052 = vmatpush.bf16.msra.mxu0 0
    %1053 = vmatpush.bf16.msra.mxu0 %v1009
    %1054 = vmatpush.bf16.msra.mxu0 %v1007
    %1055 = vmatpush.bf16.msra.mxu0 %v1005
    %1056 = vmatpush.bf16.msra.mxu0 %v1003
    %1057 = vmatmul.bf16.gmra.mxu0 %v288
    %v1058 = vpop.f32.mrf.mxu0
    %v1059 = vadd.f32 %v1045, %v1058
    %v1060 = vpop.f32.mrf.mxu0
    %v1061 = vadd.f32 %v1047, %v1060
    %1062 = vdwg.mxu0
    %1063 = vmatpush.bf16.msra.mxu0 %v1002
    %1064 = vmatpush.bf16.msra.mxu0 %v1000
    %1065 = vmatpush.bf16.msra.mxu0 %v998
    %1066 = vmatpush.bf16.msra.mxu0 %v996
    %1067 = vmatpush.bf16.msra.mxu0 %v994
    %1068 = vmatpush.bf16.msra.mxu0 %v992
    %1069 = vmatpush.bf16.msra.mxu0 %v990
    %1070 = vmatpush.bf16.msra.mxu0 %v988
    %1071 = vmatmul.bf16.gmra.mxu0 %v163
    %v1072 = vpop.f32.mrf.mxu0
    %v1073 = vadd.f32 %v912, %v1072
    %v1074 = vpop.f32.mrf.mxu0
    %v1075 = vadd.f32 %v912, %v1074
    %1076 = vdwg.mxu0
    %1077 = vmatpush.bf16.msra.mxu0 0
    %1078 = vmatpush.bf16.msra.mxu0 0
    %1079 = vmatpush.bf16.msra.mxu0 0
    %1080 = vmatpush.bf16.msra.mxu0 0
    %1081 = vmatpush.bf16.msra.mxu0 %v1010
    %1082 = vmatpush.bf16.msra.mxu0 %v1008
    %1083 = vmatpush.bf16.msra.mxu0 %v1006
    %1084 = vmatpush.bf16.msra.mxu0 %v1004
    %1085 = vmatmul.bf16.gmra.mxu0 %v288
    %v1086 = vpop.f32.mrf.mxu0
    %v1087 = vadd.f32 %v1073, %v1086
    %v1088 = vpop.f32.mrf.mxu0
    %v1089 = vadd.f32 %v1075, %v1088
    %1090 = vdwg.mxu0
    %v1091 = vpack.c.bf16 %v1087, %v1059
    %v1092 = vpack.c.bf16 %v1089, %v1061
    %s1093 = scalar_lea.vmem %s7, 8
    %1094 = vst [vmem:[%s1093] sm:$0xff] %v1091
    %1095 = vst [vmem:[%s1093 + $0x58] sm:$0xff] %v1092
    %v1096 = vld [vmem:[#allocation2] sm:$0xff]
    %v1097 = vld [vmem:[#allocation2 + $0x8] sm:$0xff]
    %v1098 = vld [vmem:[#allocation2 + $0x10] sm:$0xff]
    %v1099 = vld [vmem:[#allocation2 + $0x18] sm:$0xff]
    %v1100 = vld [vmem:[#allocation2 + $0x20] sm:$0xff]
    %v1101 = vld [vmem:[#allocation2 + $0x28] sm:$0xff]
    %v1102 = vld [vmem:[#allocation2 + $0x30] sm:$0xff]
    %v1103 = vld [vmem:[#allocation2 + $0x38] sm:$0xff]
    %s1104 = smul.u32 32, 4
    %s1105 = smul.addr %s1104, 4
    %s1106 = scalar_lea.vmem [#allocation7], %s1105
    %v1107 = vld [vmem:[%s1106] sm:$0xff]
    %v1108 = vld [vmem:[%s1106 + $0x8] sm:$0xff]
    %v1109 = vld [vmem:[%s1106 + $0x10] sm:$0xff]
    %v1110 = vld [vmem:[%s1106 + $0x18] sm:$0xff]
    %v1111 = vld [vmem:[%s1106 + $0x20] sm:$0xff]
    %v1112 = vld [vmem:[%s1106 + $0x28] sm:$0xff]
    %v1113 = vld [vmem:[%s1106 + $0x30] sm:$0xff]
    %v1114 = vld [vmem:[%s1106 + $0x38] sm:$0xff]
    %v1115 = vld [vmem:[%s1106 + $0x40] sm:$0xff]
    %v1116 = vld [vmem:[%s1106 + $0x48] sm:$0xff]
    %v1117 = vld [vmem:[%s1106 + $0x50] sm:$0xff]
    %v1118 = vld [vmem:[%s1106 + $0x58] sm:$0xff]
    %v1119 = vld [vmem:[%s1106 + $0x60] sm:$0xff]
    %v1120 = vld [vmem:[%s1106 + $0x68] sm:$0xff]
    %v1121 = vld [vmem:[%s1106 + $0x70] sm:$0xff]
    %v1122 = vld [vmem:[%s1106 + $0x78] sm:$0xff]
    %v1123 = vld [vmem:[%s1106 + $0x80] sm:$0xff]
    %v1124 = vld [vmem:[%s1106 + $0x88] sm:$0xff]
    %v1125 = vld [vmem:[%s1106 + $0x90] sm:$0xff]
    %v1126 = vld [vmem:[%s1106 + $0x98] sm:$0xff]
    %v1127 = vld [vmem:[%s1106 + $0xa0] sm:$0xff]
    %v1128 = vld [vmem:[%s1106 + $0xa8] sm:$0xff]
    %v1129 = vld [vmem:[%s1106 + $0xb0] sm:$0xff]
    %v1130 = vld [vmem:[%s1106 + $0xb8] sm:$0xff]
    %v1131 = vld [vmem:[%s1106 + $0xc0] sm:$0xff]
    %v1132 = vld [vmem:[%s1106 + $0xc8] sm:$0xff]
    %v1133 = vld [vmem:[%s1106 + $0xd0] sm:$0xff]
    %v1134 = vld [vmem:[%s1106 + $0xd8] sm:$0xff]
    %v1135 = vld [vmem:[%s1106 + $0xe0] sm:$0xff]
    %v1136 = vld [vmem:[%s1106 + $0xe8] sm:$0xff]
    %v1137 = vld [vmem:[%s1106 + $0xf0] sm:$0xff]
    %v1138 = vld [vmem:[%s1106 + $0xf8] sm:$0xff]
    %v1139 = vld [vmem:[%s1106 + $0x100] sm:$0xff]
    %v1140 = vld [vmem:[%s1106 + $0x108] sm:$0xff]
    %v1141 = vld [vmem:[%s1106 + $0x110] sm:$0xff]
    %v1142 = vld [vmem:[%s1106 + $0x118] sm:$0xff]
    %v1143 = vld [vmem:[%s1106 + $0x120] sm:$0xff]
    %v1144 = vld [vmem:[%s1106 + $0x128] sm:$0xff]
    %v1145 = vld [vmem:[%s1106 + $0x130] sm:$0xff]
    %v1146 = vld [vmem:[%s1106 + $0x138] sm:$0xff]
    %v1147 = vld [vmem:[%s1106 + $0x140] sm:$0xff]
    %v1148 = vld [vmem:[%s1106 + $0x148] sm:$0xff]
    %v1149 = vld [vmem:[%s1106 + $0x150] sm:$0xff]
    %v1150 = vld [vmem:[%s1106 + $0x158] sm:$0xff]
    %v1151 = vld [vmem:[%s1106 + $0x160] sm:$0xff]
    %v1152 = vld [vmem:[%s1106 + $0x168] sm:$0xff]
    %v1153 = vld [vmem:[%s1106 + $0x170] sm:$0xff]
    %v1154 = vld [vmem:[%s1106 + $0x178] sm:$0xff]
    %v1155 = vld [vmem:[%s1106 + $0x180] sm:$0xff]
    %v1156 = vld [vmem:[%s1106 + $0x188] sm:$0xff]
    %v1157 = vld [vmem:[%s1106 + $0x190] sm:$0xff]
    %v1158 = vld [vmem:[%s1106 + $0x198] sm:$0xff]
    %v1159 = vld [vmem:[%s1106 + $0x1a0] sm:$0xff]
    %v1160 = vld [vmem:[%s1106 + $0x1a8] sm:$0xff]
    %v1161 = vld [vmem:[%s1106 + $0x1b0] sm:$0xff]
    %v1162 = vld [vmem:[%s1106 + $0x1b8] sm:$0xff]
    %v1163 = vld [vmem:[%s1106 + $0x1c0] sm:$0xff]
    %v1164 = vld [vmem:[%s1106 + $0x1c8] sm:$0xff]
    %v1165 = vld [vmem:[%s1106 + $0x1d0] sm:$0xff]
    %v1166 = vld [vmem:[%s1106 + $0x1d8] sm:$0xff]
    %v1167 = vld [vmem:[%s1106 + $0x1e0] sm:$0xff]
    %v1168 = vld [vmem:[%s1106 + $0x1e8] sm:$0xff]
    %v1169 = vld [vmem:[%s1106 + $0x1f0] sm:$0xff]
    %v1170 = vld [vmem:[%s1106 + $0x1f8] sm:$0xff]
    %v1173 = vunpack.c.l.b16 %v1091
    %v1174 = vunpack.c.h.b16 %v1091
    %v1175 = vunpack.c.l.b16 %v1092
    %v1176 = vunpack.c.h.b16 %v1092
    %v1177 = vpack.c.b16 %v1175, %v1173
    %v1178 = vpack.c.b16 %v1176, %v1174
    %v1245 = vunpack.c.l.b16 %v1107
    %v1246 = vunpack.c.h.b16 %v1107
    %v1247 = vunpack.c.l.b16 %v1108
    %v1248 = vunpack.c.h.b16 %v1108
    %v1249 = vunpack.c.l.b16 %v1109
    %v1250 = vunpack.c.h.b16 %v1109
    %v1251 = vunpack.c.l.b16 %v1110
    %v1252 = vunpack.c.h.b16 %v1110
    %v1253 = vunpack.c.l.b16 %v1111
    %v1254 = vunpack.c.h.b16 %v1111
    %v1255 = vunpack.c.l.b16 %v1112
    %v1256 = vunpack.c.h.b16 %v1112
    %v1257 = vunpack.c.l.b16 %v1113
    %v1258 = vunpack.c.h.b16 %v1113
    %v1259 = vunpack.c.l.b16 %v1114
    %v1260 = vunpack.c.h.b16 %v1114
    %v1261 = vunpack.c.l.b16 %v1115
    %v1262 = vunpack.c.h.b16 %v1115
    %v1263 = vunpack.c.l.b16 %v1116
    %v1264 = vunpack.c.h.b16 %v1116
    %v1265 = vunpack.c.l.b16 %v1117
    %v1266 = vunpack.c.h.b16 %v1117
    %v1267 = vunpack.c.l.b16 %v1118
    %v1268 = vunpack.c.h.b16 %v1118
    %v1269 = vunpack.c.l.b16 %v1119
    %v1270 = vunpack.c.h.b16 %v1119
    %v1271 = vunpack.c.l.b16 %v1120
    %v1272 = vunpack.c.h.b16 %v1120
    %v1273 = vunpack.c.l.b16 %v1121
    %v1274 = vunpack.c.h.b16 %v1121
    %v1275 = vunpack.c.l.b16 %v1122
    %v1276 = vunpack.c.h.b16 %v1122
    %v1277 = vunpack.c.l.b16 %v1123
    %v1278 = vunpack.c.h.b16 %v1123
    %v1279 = vunpack.c.l.b16 %v1124
    %v1280 = vunpack.c.h.b16 %v1124
    %v1281 = vunpack.c.l.b16 %v1125
    %v1282 = vunpack.c.h.b16 %v1125
    %v1283 = vunpack.c.l.b16 %v1126
    %v1284 = vunpack.c.h.b16 %v1126
    %v1285 = vunpack.c.l.b16 %v1127
    %v1286 = vunpack.c.h.b16 %v1127
    %v1287 = vunpack.c.l.b16 %v1128
    %v1288 = vunpack.c.h.b16 %v1128
    %v1289 = vunpack.c.l.b16 %v1129
    %v1290 = vunpack.c.h.b16 %v1129
    %v1291 = vunpack.c.l.b16 %v1130
    %v1292 = vunpack.c.h.b16 %v1130
    %v1293 = vunpack.c.l.b16 %v1131
    %v1294 = vunpack.c.h.b16 %v1131
    %v1295 = vunpack.c.l.b16 %v1132
    %v1296 = vunpack.c.h.b16 %v1132
    %v1297 = vunpack.c.l.b16 %v1133
    %v1298 = vunpack.c.h.b16 %v1133
    %v1299 = vunpack.c.l.b16 %v1134
    %v1300 = vunpack.c.h.b16 %v1134
    %v1301 = vunpack.c.l.b16 %v1135
    %v1302 = vunpack.c.h.b16 %v1135
    %v1303 = vunpack.c.l.b16 %v1136
    %v1304 = vunpack.c.h.b16 %v1136
    %v1305 = vunpack.c.l.b16 %v1137
    %v1306 = vunpack.c.h.b16 %v1137
    %v1307 = vunpack.c.l.b16 %v1138
    %v1308 = vunpack.c.h.b16 %v1138
    %v1309 = vunpack.c.l.b16 %v1139
    %v1310 = vunpack.c.h.b16 %v1139
    %v1311 = vunpack.c.l.b16 %v1140
    %v1312 = vunpack.c.h.b16 %v1140
    %v1313 = vunpack.c.l.b16 %v1141
    %v1314 = vunpack.c.h.b16 %v1141
    %v1315 = vunpack.c.l.b16 %v1142
    %v1316 = vunpack.c.h.b16 %v1142
    %v1317 = vunpack.c.l.b16 %v1143
    %v1318 = vunpack.c.h.b16 %v1143
    %v1319 = vunpack.c.l.b16 %v1144
    %v1320 = vunpack.c.h.b16 %v1144
    %v1321 = vunpack.c.l.b16 %v1145
    %v1322 = vunpack.c.h.b16 %v1145
    %v1323 = vunpack.c.l.b16 %v1146
    %v1324 = vunpack.c.h.b16 %v1146
    %v1325 = vunpack.c.l.b16 %v1147
    %v1326 = vunpack.c.h.b16 %v1147
    %v1327 = vunpack.c.l.b16 %v1148
    %v1328 = vunpack.c.h.b16 %v1148
    %v1329 = vunpack.c.l.b16 %v1149
    %v1330 = vunpack.c.h.b16 %v1149
    %v1331 = vunpack.c.l.b16 %v1150
    %v1332 = vunpack.c.h.b16 %v1150
    %v1333 = vunpack.c.l.b16 %v1151
    %v1334 = vunpack.c.h.b16 %v1151
    %v1335 = vunpack.c.l.b16 %v1152
    %v1336 = vunpack.c.h.b16 %v1152
    %v1337 = vunpack.c.l.b16 %v1153
    %v1338 = vunpack.c.h.b16 %v1153
    %v1339 = vunpack.c.l.b16 %v1154
    %v1340 = vunpack.c.h.b16 %v1154
    %v1341 = vunpack.c.l.b16 %v1155
    %v1342 = vunpack.c.h.b16 %v1155
    %v1343 = vunpack.c.l.b16 %v1156
    %v1344 = vunpack.c.h.b16 %v1156
    %v1345 = vunpack.c.l.b16 %v1157
    %v1346 = vunpack.c.h.b16 %v1157
    %v1347 = vunpack.c.l.b16 %v1158
    %v1348 = vunpack.c.h.b16 %v1158
    %v1349 = vunpack.c.l.b16 %v1159
    %v1350 = vunpack.c.h.b16 %v1159
    %v1351 = vunpack.c.l.b16 %v1160
    %v1352 = vunpack.c.h.b16 %v1160
    %v1353 = vunpack.c.l.b16 %v1161
    %v1354 = vunpack.c.h.b16 %v1161
    %v1355 = vunpack.c.l.b16 %v1162
    %v1356 = vunpack.c.h.b16 %v1162
    %v1357 = vunpack.c.l.b16 %v1163
    %v1358 = vunpack.c.h.b16 %v1163
    %v1359 = vunpack.c.l.b16 %v1164
    %v1360 = vunpack.c.h.b16 %v1164
    %v1361 = vunpack.c.l.b16 %v1165
    %v1362 = vunpack.c.h.b16 %v1165
    %v1363 = vunpack.c.l.b16 %v1166
    %v1364 = vunpack.c.h.b16 %v1166
    %v1365 = vunpack.c.l.b16 %v1167
    %v1366 = vunpack.c.h.b16 %v1167
    %v1367 = vunpack.c.l.b16 %v1168
    %v1368 = vunpack.c.h.b16 %v1168
    %v1369 = vunpack.c.l.b16 %v1169
    %v1370 = vunpack.c.h.b16 %v1169
    %v1371 = vunpack.c.l.b16 %v1170
    %v1372 = vunpack.c.h.b16 %v1170
    %v1373 = vpack.c.b16 %v1249, %v1245
    %v1374 = vpack.c.b16 %v1250, %v1246
    %v1375 = vpack.c.b16 %v1251, %v1247
    %v1376 = vpack.c.b16 %v1252, %v1248
    %v1377 = vpack.c.b16 %v1257, %v1253
    %v1378 = vpack.c.b16 %v1258, %v1254
    %v1379 = vpack.c.b16 %v1259, %v1255
    %v1380 = vpack.c.b16 %v1260, %v1256
    %v1381 = vpack.c.b16 %v1265, %v1261
    %v1382 = vpack.c.b16 %v1266, %v1262
    %v1383 = vpack.c.b16 %v1267, %v1263
    %v1384 = vpack.c.b16 %v1268, %v1264
    %v1385 = vpack.c.b16 %v1273, %v1269
    %v1386 = vpack.c.b16 %v1274, %v1270
    %v1387 = vpack.c.b16 %v1275, %v1271
    %v1388 = vpack.c.b16 %v1276, %v1272
    %v1389 = vpack.c.b16 %v1281, %v1277
    %v1390 = vpack.c.b16 %v1282, %v1278
    %v1391 = vpack.c.b16 %v1283, %v1279
    %v1392 = vpack.c.b16 %v1284, %v1280
    %v1393 = vpack.c.b16 %v1289, %v1285
    %v1394 = vpack.c.b16 %v1290, %v1286
    %v1395 = vpack.c.b16 %v1291, %v1287
    %v1396 = vpack.c.b16 %v1292, %v1288
    %v1397 = vpack.c.b16 %v1297, %v1293
    %v1398 = vpack.c.b16 %v1298, %v1294
    %v1399 = vpack.c.b16 %v1299, %v1295
    %v1400 = vpack.c.b16 %v1300, %v1296
    %v1401 = vpack.c.b16 %v1305, %v1301
    %v1402 = vpack.c.b16 %v1306, %v1302
    %v1403 = vpack.c.b16 %v1307, %v1303
    %v1404 = vpack.c.b16 %v1308, %v1304
    %v1405 = vpack.c.b16 %v1313, %v1309
    %v1406 = vpack.c.b16 %v1314, %v1310
    %v1407 = vpack.c.b16 %v1315, %v1311
    %v1408 = vpack.c.b16 %v1316, %v1312
    %v1409 = vpack.c.b16 %v1321, %v1317
    %v1410 = vpack.c.b16 %v1322, %v1318
    %v1411 = vpack.c.b16 %v1323, %v1319
    %v1412 = vpack.c.b16 %v1324, %v1320
    %v1413 = vpack.c.b16 %v1329, %v1325
    %v1414 = vpack.c.b16 %v1330, %v1326
    %v1415 = vpack.c.b16 %v1331, %v1327
    %v1416 = vpack.c.b16 %v1332, %v1328
    %v1417 = vpack.c.b16 %v1337, %v1333
    %v1418 = vpack.c.b16 %v1338, %v1334
    %v1419 = vpack.c.b16 %v1339, %v1335
    %v1420 = vpack.c.b16 %v1340, %v1336
    %v1421 = vpack.c.b16 %v1345, %v1341
    %v1422 = vpack.c.b16 %v1346, %v1342
    %v1423 = vpack.c.b16 %v1347, %v1343
    %v1424 = vpack.c.b16 %v1348, %v1344
    %v1425 = vpack.c.b16 %v1353, %v1349
    %v1426 = vpack.c.b16 %v1354, %v1350
    %v1427 = vpack.c.b16 %v1355, %v1351
    %v1428 = vpack.c.b16 %v1356, %v1352
    %v1429 = vpack.c.b16 %v1361, %v1357
    %v1430 = vpack.c.b16 %v1362, %v1358
    %v1431 = vpack.c.b16 %v1363, %v1359
    %v1432 = vpack.c.b16 %v1364, %v1360
    %v1433 = vpack.c.b16 %v1369, %v1365
    %v1434 = vpack.c.b16 %v1370, %v1366
    %v1435 = vpack.c.b16 %v1371, %v1367
    %v1436 = vpack.c.b16 %v1372, %v1368
    %1501 = vmatpush.bf16.msra.mxu0 %v1401
    %1502 = vmatpush.bf16.msra.mxu0 %v1397
    %1503 = vmatpush.bf16.msra.mxu0 %v1393
    %1504 = vmatpush.bf16.msra.mxu0 %v1389
    %1505 = vmatpush.bf16.msra.mxu0 %v1385
    %1506 = vmatpush.bf16.msra.mxu0 %v1381
    %1507 = vmatpush.bf16.msra.mxu0 %v1377
    %1508 = vmatpush.bf16.msra.mxu0 %v1373
    %1509 = vmatmul.bf16.gmra.mxu0 %v1177
    %v1510 = vpop.f32.mrf.mxu0
    %v1511 = vadd.f32 0.0, %v1510
    %v1512 = vpop.f32.mrf.mxu0
    %v1513 = vadd.f32 0.0, %v1512
    %1514 = vdwg.mxu0
    %1515 = vmatpush.bf16.msra.mxu0 %v1433
    %1516 = vmatpush.bf16.msra.mxu0 %v1429
    %1517 = vmatpush.bf16.msra.mxu0 %v1425
    %1518 = vmatpush.bf16.msra.mxu0 %v1421
    %1519 = vmatpush.bf16.msra.mxu0 %v1417
    %1520 = vmatpush.bf16.msra.mxu0 %v1413
    %1521 = vmatpush.bf16.msra.mxu0 %v1409
    %1522 = vmatpush.bf16.msra.mxu0 %v1405
    %1523 = vmatmul.bf16.gmra.mxu0 %v1178
    %v1524 = vpop.f32.mrf.mxu0
    %v1525 = vadd.f32 %v1511, %v1524
    %v1526 = vpop.f32.mrf.mxu0
    %v1527 = vadd.f32 %v1513, %v1526
    %1528 = vdwg.mxu0
    %1529 = vmatpush.bf16.msra.mxu0 %v1402
    %1530 = vmatpush.bf16.msra.mxu0 %v1398
    %1531 = vmatpush.bf16.msra.mxu0 %v1394
    %1532 = vmatpush.bf16.msra.mxu0 %v1390
    %1533 = vmatpush.bf16.msra.mxu0 %v1386
    %1534 = vmatpush.bf16.msra.mxu0 %v1382
    %1535 = vmatpush.bf16.msra.mxu0 %v1378
    %1536 = vmatpush.bf16.msra.mxu0 %v1374
    %1537 = vmatmul.bf16.gmra.mxu0 %v1177
    %v1538 = vpop.f32.mrf.mxu0
    %v1539 = vadd.f32 0.0, %v1538
    %v1540 = vpop.f32.mrf.mxu0
    %v1541 = vadd.f32 0.0, %v1540
    %1542 = vdwg.mxu0
    %1543 = vmatpush.bf16.msra.mxu0 %v1434
    %1544 = vmatpush.bf16.msra.mxu0 %v1430
    %1545 = vmatpush.bf16.msra.mxu0 %v1426
    %1546 = vmatpush.bf16.msra.mxu0 %v1422
    %1547 = vmatpush.bf16.msra.mxu0 %v1418
    %1548 = vmatpush.bf16.msra.mxu0 %v1414
    %1549 = vmatpush.bf16.msra.mxu0 %v1410
    %1550 = vmatpush.bf16.msra.mxu0 %v1406
    %1551 = vmatmul.bf16.gmra.mxu0 %v1178
    %v1552 = vpop.f32.mrf.mxu0
    %v1553 = vadd.f32 %v1539, %v1552
    %v1554 = vpop.f32.mrf.mxu0
    %v1555 = vadd.f32 %v1541, %v1554
    %1556 = vdwg.mxu0
    %1557 = vmatpush.bf16.msra.mxu0 %v1403
    %1558 = vmatpush.bf16.msra.mxu0 %v1399
    %1559 = vmatpush.bf16.msra.mxu0 %v1395
    %1560 = vmatpush.bf16.msra.mxu0 %v1391
    %1561 = vmatpush.bf16.msra.mxu0 %v1387
    %1562 = vmatpush.bf16.msra.mxu0 %v1383
    %1563 = vmatpush.bf16.msra.mxu0 %v1379
    %1564 = vmatpush.bf16.msra.mxu0 %v1375
    %1565 = vmatmul.bf16.gmra.mxu0 %v1177
    %v1566 = vpop.f32.mrf.mxu0
    %v1567 = vadd.f32 0.0, %v1566
    %v1568 = vpop.f32.mrf.mxu0
    %v1569 = vadd.f32 0.0, %v1568
    %1570 = vdwg.mxu0
    %1571 = vmatpush.bf16.msra.mxu0 %v1435
    %1572 = vmatpush.bf16.msra.mxu0 %v1431
    %1573 = vmatpush.bf16.msra.mxu0 %v1427
    %1574 = vmatpush.bf16.msra.mxu0 %v1423
    %1575 = vmatpush.bf16.msra.mxu0 %v1419
    %1576 = vmatpush.bf16.msra.mxu0 %v1415
    %1577 = vmatpush.bf16.msra.mxu0 %v1411
    %1578 = vmatpush.bf16.msra.mxu0 %v1407
    %1579 = vmatmul.bf16.gmra.mxu0 %v1178
    %v1580 = vpop.f32.mrf.mxu0
    %v1581 = vadd.f32 %v1567, %v1580
    %v1582 = vpop.f32.mrf.mxu0
    %v1583 = vadd.f32 %v1569, %v1582
    %1584 = vdwg.mxu0
    %1585 = vmatpush.bf16.msra.mxu0 %v1404
    %1586 = vmatpush.bf16.msra.mxu0 %v1400
    %1587 = vmatpush.bf16.msra.mxu0 %v1396
    %1588 = vmatpush.bf16.msra.mxu0 %v1392
    %1589 = vmatpush.bf16.msra.mxu0 %v1388
    %1590 = vmatpush.bf16.msra.mxu0 %v1384
    %1591 = vmatpush.bf16.msra.mxu0 %v1380
    %1592 = vmatpush.bf16.msra.mxu0 %v1376
    %1593 = vmatmul.bf16.gmra.mxu0 %v1177
    %v1594 = vpop.f32.mrf.mxu0
    %v1595 = vadd.f32 0.0, %v1594
    %v1596 = vpop.f32.mrf.mxu0
    %v1597 = vadd.f32 0.0, %v1596
    %1598 = vdwg.mxu0
    %1599 = vmatpush.bf16.msra.mxu0 %v1436
    %1600 = vmatpush.bf16.msra.mxu0 %v1432
    %1601 = vmatpush.bf16.msra.mxu0 %v1428
    %1602 = vmatpush.bf16.msra.mxu0 %v1424
    %1603 = vmatpush.bf16.msra.mxu0 %v1420
    %1604 = vmatpush.bf16.msra.mxu0 %v1416
    %1605 = vmatpush.bf16.msra.mxu0 %v1412
    %1606 = vmatpush.bf16.msra.mxu0 %v1408
    %1607 = vmatmul.bf16.gmra.mxu0 %v1178
    %v1608 = vpop.f32.mrf.mxu0
    %v1609 = vadd.f32 %v1595, %v1608
    %v1610 = vpop.f32.mrf.mxu0
    %v1611 = vadd.f32 %v1597, %v1610
    %1612 = vdwg.mxu0
    %v1613 = vadd.f32 %v1096, %v1525
    %v1614 = vadd.f32 %v1097, %v1553
    %v1615 = vadd.f32 %v1098, %v1581
    %v1616 = vadd.f32 %v1099, %v1609
    %v1617 = vadd.f32 %v1100, %v1527
    %v1618 = vadd.f32 %v1101, %v1555
    %v1619 = vadd.f32 %v1102, %v1583
    %v1620 = vadd.f32 %v1103, %v1611
    %1621 = vst [vmem:[#allocation2] sm:$0xff] %v1613
    %1622 = vst [vmem:[#allocation2 + $0x8] sm:$0xff] %v1614
    %1623 = vst [vmem:[#allocation2 + $0x10] sm:$0xff] %v1615
    %1624 = vst [vmem:[#allocation2 + $0x18] sm:$0xff] %v1616
    %1625 = vst [vmem:[#allocation2 + $0x20] sm:$0xff] %v1617
    %1626 = vst [vmem:[#allocation2 + $0x28] sm:$0xff] %v1618
    %1627 = vst [vmem:[#allocation2 + $0x30] sm:$0xff] %v1619
    %1628 = vst [vmem:[#allocation2 + $0x38] sm:$0xff] %v1620
    %s1629 = scalar_lea.vmem [#allocation3], 16
    %v1630 = vld [vmem:[%s1629] sm:$0xff]
    %v1631 = vld [vmem:[%s1629 + $0x58] sm:$0xff]
    %v1632 = vld [vmem:[%s1629 + $0xb0] sm:$0xff]
    %v1633 = vld [vmem:[%s1629 + $0x108] sm:$0xff]
    %v1634 = vld [vmem:[%s1629 + $0x160] sm:$0xff]
    %v1635 = vld [vmem:[%s1629 + $0x1b8] sm:$0xff]
    %v1636 = vld [vmem:[%s1629 + $0x210] sm:$0xff]
    %v1637 = vld [vmem:[%s1629 + $0x268] sm:$0xff]
    %v1638 = vld [vmem:[%s1629 + $0x2c0] sm:$0xff]
    %v1639 = vld [vmem:[%s1629 + $0x318] sm:$0xff]
    %v1640 = vld [vmem:[%s1629 + $0x370] sm:$0xff]
    %v1641 = vld [vmem:[%s1629 + $0x3c8] sm:$0xff]
    %v1642 = vld [vmem:[%s1629 + $0x420] sm:$0xff]
    %v1643 = vld [vmem:[%s1629 + $0x478] sm:$0xff]
    %v1644 = vld [vmem:[%s1629 + $0x4d0] sm:$0xff]
    %v1645 = vld [vmem:[%s1629 + $0x528] sm:$0xff]
    %v1646 = vld [vmem:[%s1629 + $0x580] sm:$0xff]
    %v1647 = vld [vmem:[%s1629 + $0x5d8] sm:$0xff]
    %v1648 = vld [vmem:[%s1629 + $0x630] sm:$0xff]
    %v1649 = vld [vmem:[%s1629 + $0x688] sm:$0xff]
    %v1650 = vld [vmem:[%s1629 + $0x6e0] sm:$0xff]
    %v1651 = vld [vmem:[%s1629 + $0x738] sm:$0xff]
    %v1652 = vld [vmem:[%s1629 + $0x790] sm:$0xff]
    %v1653 = vld [vmem:[%s1629 + $0x7e8] sm:$0xff]
    %s1654 = scalar_lea.vmem [#allocation5], 4
    %v1655 = vld [vmem:[%s1654] sm:$0x3]
    %v1657 = vperm.slane %v1655, 0
    %v1658 = vperm.slane %v1655, 1
    %v1685 = vunpack.c.l.b16 %v1630
    %v1686 = vunpack.c.h.b16 %v1630
    %v1687 = vunpack.c.l.b16 %v1631
    %v1688 = vunpack.c.h.b16 %v1631
    %v1689 = vunpack.c.l.b16 %v1632
    %v1690 = vunpack.c.h.b16 %v1632
    %v1691 = vunpack.c.l.b16 %v1633
    %v1692 = vunpack.c.h.b16 %v1633
    %v1693 = vunpack.c.l.b16 %v1634
    %v1694 = vunpack.c.h.b16 %v1634
    %v1695 = vunpack.c.l.b16 %v1635
    %v1696 = vunpack.c.h.b16 %v1635
    %v1697 = vunpack.c.l.b16 %v1636
    %v1698 = vunpack.c.h.b16 %v1636
    %v1699 = vunpack.c.l.b16 %v1637
    %v1700 = vunpack.c.h.b16 %v1637
    %v1701 = vunpack.c.l.b16 %v1638
    %v1702 = vunpack.c.h.b16 %v1638
    %v1703 = vunpack.c.l.b16 %v1639
    %v1704 = vunpack.c.h.b16 %v1639
    %v1705 = vunpack.c.l.b16 %v1640
    %v1706 = vunpack.c.h.b16 %v1640
    %v1707 = vunpack.c.l.b16 %v1641
    %v1708 = vunpack.c.h.b16 %v1641
    %v1709 = vunpack.c.l.b16 %v1642
    %v1710 = vunpack.c.h.b16 %v1642
    %v1711 = vunpack.c.l.b16 %v1643
    %v1712 = vunpack.c.h.b16 %v1643
    %v1713 = vunpack.c.l.b16 %v1644
    %v1714 = vunpack.c.h.b16 %v1644
    %v1715 = vunpack.c.l.b16 %v1645
    %v1716 = vunpack.c.h.b16 %v1645
    %v1717 = vunpack.c.l.b16 %v1646
    %v1718 = vunpack.c.h.b16 %v1646
    %v1719 = vunpack.c.l.b16 %v1647
    %v1720 = vunpack.c.h.b16 %v1647
    %v1721 = vunpack.c.l.b16 %v1648
    %v1722 = vunpack.c.h.b16 %v1648
    %v1723 = vunpack.c.l.b16 %v1649
    %v1724 = vunpack.c.h.b16 %v1649
    %v1725 = vunpack.c.l.b16 %v1650
    %v1726 = vunpack.c.h.b16 %v1650
    %v1727 = vunpack.c.l.b16 %v1651
    %v1728 = vunpack.c.h.b16 %v1651
    %v1729 = vunpack.c.l.b16 %v1652
    %v1730 = vunpack.c.h.b16 %v1652
    %v1731 = vunpack.c.l.b16 %v1653
    %v1732 = vunpack.c.h.b16 %v1653
    %v1733 = vpack.c.b16 %v1687, %v1685
    %v1734 = vpack.c.b16 %v1688, %v1686
    %v1735 = vpack.c.b16 %v1691, %v1689
    %v1736 = vpack.c.b16 %v1692, %v1690
    %v1737 = vpack.c.b16 %v1695, %v1693
    %v1738 = vpack.c.b16 %v1696, %v1694
    %v1739 = vpack.c.b16 %v1699, %v1697
    %v1740 = vpack.c.b16 %v1700, %v1698
    %v1741 = vpack.c.b16 %v1703, %v1701
    %v1742 = vpack.c.b16 %v1704, %v1702
    %v1743 = vpack.c.b16 %v1707, %v1705
    %v1744 = vpack.c.b16 %v1708, %v1706
    %v1745 = vpack.c.b16 %v1711, %v1709
    %v1746 = vpack.c.b16 %v1712, %v1710
    %v1747 = vpack.c.b16 %v1715, %v1713
    %v1748 = vpack.c.b16 %v1716, %v1714
    %v1749 = vpack.c.b16 %v1719, %v1717
    %v1750 = vpack.c.b16 %v1720, %v1718
    %v1751 = vpack.c.b16 %v1723, %v1721
    %v1752 = vpack.c.b16 %v1724, %v1722
    %v1753 = vpack.c.b16 %v1727, %v1725
    %v1754 = vpack.c.b16 %v1728, %v1726
    %v1755 = vpack.c.b16 %v1731, %v1729
    %v1756 = vpack.c.b16 %v1732, %v1730
    %1781 = vmatpush.bf16.msra.mxu0 %v1747
    %1782 = vmatpush.bf16.msra.mxu0 %v1745
    %1783 = vmatpush.bf16.msra.mxu0 %v1743
    %1784 = vmatpush.bf16.msra.mxu0 %v1741
    %1785 = vmatpush.bf16.msra.mxu0 %v1739
    %1786 = vmatpush.bf16.msra.mxu0 %v1737
    %1787 = vmatpush.bf16.msra.mxu0 %v1735
    %1788 = vmatpush.bf16.msra.mxu0 %v1733
    %1789 = vmatmul.bf16.gmra.mxu0 %v163
    %v1790 = vpop.f32.mrf.mxu0
    %v1791 = vadd.f32 %v1657, %v1790
    %v1792 = vpop.f32.mrf.mxu0
    %v1793 = vadd.f32 %v1657, %v1792
    %1794 = vdwg.mxu0
    %1795 = vmatpush.bf16.msra.mxu0 0
    %1796 = vmatpush.bf16.msra.mxu0 0
    %1797 = vmatpush.bf16.msra.mxu0 0
    %1798 = vmatpush.bf16.msra.mxu0 0
    %1799 = vmatpush.bf16.msra.mxu0 %v1755
    %1800 = vmatpush.bf16.msra.mxu0 %v1753
    %1801 = vmatpush.bf16.msra.mxu0 %v1751
    %1802 = vmatpush.bf16.msra.mxu0 %v1749
    %1803 = vmatmul.bf16.gmra.mxu0 %v288
    %v1804 = vpop.f32.mrf.mxu0
    %v1805 = vadd.f32 %v1791, %v1804
    %v1806 = vpop.f32.mrf.mxu0
    %v1807 = vadd.f32 %v1793, %v1806
    %1808 = vdwg.mxu0
    %1809 = vmatpush.bf16.msra.mxu0 %v1748
    %1810 = vmatpush.bf16.msra.mxu0 %v1746
    %1811 = vmatpush.bf16.msra.mxu0 %v1744
    %1812 = vmatpush.bf16.msra.mxu0 %v1742
    %1813 = vmatpush.bf16.msra.mxu0 %v1740
    %1814 = vmatpush.bf16.msra.mxu0 %v1738
    %1815 = vmatpush.bf16.msra.mxu0 %v1736
    %1816 = vmatpush.bf16.msra.mxu0 %v1734
    %1817 = vmatmul.bf16.gmra.mxu0 %v163
    %v1818 = vpop.f32.mrf.mxu0
    %v1819 = vadd.f32 %v1658, %v1818
    %v1820 = vpop.f32.mrf.mxu0
    %v1821 = vadd.f32 %v1658, %v1820
    %1822 = vdwg.mxu0
    %1823 = vmatpush.bf16.msra.mxu0 0
    %1824 = vmatpush.bf16.msra.mxu0 0
    %1825 = vmatpush.bf16.msra.mxu0 0
    %1826 = vmatpush.bf16.msra.mxu0 0
    %1827 = vmatpush.bf16.msra.mxu0 %v1756
    %1828 = vmatpush.bf16.msra.mxu0 %v1754
    %1829 = vmatpush.bf16.msra.mxu0 %v1752
    %1830 = vmatpush.bf16.msra.mxu0 %v1750
    %1831 = vmatmul.bf16.gmra.mxu0 %v288
    %v1832 = vpop.f32.mrf.mxu0
    %v1833 = vadd.f32 %v1819, %v1832
    %v1834 = vpop.f32.mrf.mxu0
    %v1835 = vadd.f32 %v1821, %v1834
    %1836 = vdwg.mxu0
    %v1837 = vpack.c.bf16 %v1833, %v1805
    %v1838 = vpack.c.bf16 %v1835, %v1807
    %s1839 = scalar_lea.vmem %s7, 16
    %1840 = vst [vmem:[%s1839] sm:$0xff] %v1837
    %1841 = vst [vmem:[%s1839 + $0x58] sm:$0xff] %v1838
    %v1842 = vld [vmem:[#allocation2] sm:$0xff]
    %v1843 = vld [vmem:[#allocation2 + $0x8] sm:$0xff]
    %v1844 = vld [vmem:[#allocation2 + $0x10] sm:$0xff]
    %v1845 = vld [vmem:[#allocation2 + $0x18] sm:$0xff]
    %v1846 = vld [vmem:[#allocation2 + $0x20] sm:$0xff]
    %v1847 = vld [vmem:[#allocation2 + $0x28] sm:$0xff]
    %v1848 = vld [vmem:[#allocation2 + $0x30] sm:$0xff]
    %v1849 = vld [vmem:[#allocation2 + $0x38] sm:$0xff]
    %s1850 = smul.u32 64, 4
    %s1851 = smul.addr %s1850, 4
    %s1852 = scalar_lea.vmem [#allocation7], %s1851
    %v1853 = vld [vmem:[%s1852] sm:$0xff]
    %v1854 = vld [vmem:[%s1852 + $0x8] sm:$0xff]
    %v1855 = vld [vmem:[%s1852 + $0x10] sm:$0xff]
    %v1856 = vld [vmem:[%s1852 + $0x18] sm:$0xff]
    %v1857 = vld [vmem:[%s1852 + $0x20] sm:$0xff]
    %v1858 = vld [vmem:[%s1852 + $0x28] sm:$0xff]
    %v1859 = vld [vmem:[%s1852 + $0x30] sm:$0xff]
    %v1860 = vld [vmem:[%s1852 + $0x38] sm:$0xff]
    %v1861 = vld [vmem:[%s1852 + $0x40] sm:$0xff]
    %v1862 = vld [vmem:[%s1852 + $0x48] sm:$0xff]
    %v1863 = vld [vmem:[%s1852 + $0x50] sm:$0xff]
    %v1864 = vld [vmem:[%s1852 + $0x58] sm:$0xff]
    %v1865 = vld [vmem:[%s1852 + $0x60] sm:$0xff]
    %v1866 = vld [vmem:[%s1852 + $0x68] sm:$0xff]
    %v1867 = vld [vmem:[%s1852 + $0x70] sm:$0xff]
    %v1868 = vld [vmem:[%s1852 + $0x78] sm:$0xff]
    %v1869 = vld [vmem:[%s1852 + $0x80] sm:$0xff]
    %v1870 = vld [vmem:[%s1852 + $0x88] sm:$0xff]
    %v1871 = vld [vmem:[%s1852 + $0x90] sm:$0xff]
    %v1872 = vld [vmem:[%s1852 + $0x98] sm:$0xff]
    %v1873 = vld [vmem:[%s1852 + $0xa0] sm:$0xff]
    %v1874 = vld [vmem:[%s1852 + $0xa8] sm:$0xff]
    %v1875 = vld [vmem:[%s1852 + $0xb0] sm:$0xff]
    %v1876 = vld [vmem:[%s1852 + $0xb8] sm:$0xff]
    %v1877 = vld [vmem:[%s1852 + $0xc0] sm:$0xff]
    %v1878 = vld [vmem:[%s1852 + $0xc8] sm:$0xff]
    %v1879 = vld [vmem:[%s1852 + $0xd0] sm:$0xff]
    %v1880 = vld [vmem:[%s1852 + $0xd8] sm:$0xff]
    %v1881 = vld [vmem:[%s1852 + $0xe0] sm:$0xff]
    %v1882 = vld [vmem:[%s1852 + $0xe8] sm:$0xff]
    %v1883 = vld [vmem:[%s1852 + $0xf0] sm:$0xff]
    %v1884 = vld [vmem:[%s1852 + $0xf8] sm:$0xff]
    %v1885 = vld [vmem:[%s1852 + $0x100] sm:$0xff]
    %v1886 = vld [vmem:[%s1852 + $0x108] sm:$0xff]
    %v1887 = vld [vmem:[%s1852 + $0x110] sm:$0xff]
    %v1888 = vld [vmem:[%s1852 + $0x118] sm:$0xff]
    %v1889 = vld [vmem:[%s1852 + $0x120] sm:$0xff]
    %v1890 = vld [vmem:[%s1852 + $0x128] sm:$0xff]
    %v1891 = vld [vmem:[%s1852 + $0x130] sm:$0xff]
    %v1892 = vld [vmem:[%s1852 + $0x138] sm:$0xff]
    %v1893 = vld [vmem:[%s1852 + $0x140] sm:$0xff]
    %v1894 = vld [vmem:[%s1852 + $0x148] sm:$0xff]
    %v1895 = vld [vmem:[%s1852 + $0x150] sm:$0xff]
    %v1896 = vld [vmem:[%s1852 + $0x158] sm:$0xff]
    %v1897 = vld [vmem:[%s1852 + $0x160] sm:$0xff]
    %v1898 = vld [vmem:[%s1852 + $0x168] sm:$0xff]
    %v1899 = vld [vmem:[%s1852 + $0x170] sm:$0xff]
    %v1900 = vld [vmem:[%s1852 + $0x178] sm:$0xff]
    %v1901 = vld [vmem:[%s1852 + $0x180] sm:$0xff]
    %v1902 = vld [vmem:[%s1852 + $0x188] sm:$0xff]
    %v1903 = vld [vmem:[%s1852 + $0x190] sm:$0xff]
    %v1904 = vld [vmem:[%s1852 + $0x198] sm:$0xff]
    %v1905 = vld [vmem:[%s1852 + $0x1a0] sm:$0xff]
    %v1906 = vld [vmem:[%s1852 + $0x1a8] sm:$0xff]
    %v1907 = vld [vmem:[%s1852 + $0x1b0] sm:$0xff]
    %v1908 = vld [vmem:[%s1852 + $0x1b8] sm:$0xff]
    %v1909 = vld [vmem:[%s1852 + $0x1c0] sm:$0xff]
    %v1910 = vld [vmem:[%s1852 + $0x1c8] sm:$0xff]
    %v1911 = vld [vmem:[%s1852 + $0x1d0] sm:$0xff]
    %v1912 = vld [vmem:[%s1852 + $0x1d8] sm:$0xff]
    %v1913 = vld [vmem:[%s1852 + $0x1e0] sm:$0xff]
    %v1914 = vld [vmem:[%s1852 + $0x1e8] sm:$0xff]
    %v1915 = vld [vmem:[%s1852 + $0x1f0] sm:$0xff]
    %v1916 = vld [vmem:[%s1852 + $0x1f8] sm:$0xff]
    %v1919 = vunpack.c.l.b16 %v1837
    %v1920 = vunpack.c.h.b16 %v1837
    %v1921 = vunpack.c.l.b16 %v1838
    %v1922 = vunpack.c.h.b16 %v1838
    %v1923 = vpack.c.b16 %v1921, %v1919
    %v1924 = vpack.c.b16 %v1922, %v1920
    %v1991 = vunpack.c.l.b16 %v1853
    %v1992 = vunpack.c.h.b16 %v1853
    %v1993 = vunpack.c.l.b16 %v1854
    %v1994 = vunpack.c.h.b16 %v1854
    %v1995 = vunpack.c.l.b16 %v1855
    %v1996 = vunpack.c.h.b16 %v1855
    %v1997 = vunpack.c.l.b16 %v1856
    %v1998 = vunpack.c.h.b16 %v1856
    %v1999 = vunpack.c.l.b16 %v1857
    %v2000 = vunpack.c.h.b16 %v1857
    %v2001 = vunpack.c.l.b16 %v1858
    %v2002 = vunpack.c.h.b16 %v1858
    %v2003 = vunpack.c.l.b16 %v1859
    %v2004 = vunpack.c.h.b16 %v1859
    %v2005 = vunpack.c.l.b16 %v1860
    %v2006 = vunpack.c.h.b16 %v1860
    %v2007 = vunpack.c.l.b16 %v1861
    %v2008 = vunpack.c.h.b16 %v1861
    %v2009 = vunpack.c.l.b16 %v1862
    %v2010 = vunpack.c.h.b16 %v1862
    %v2011 = vunpack.c.l.b16 %v1863
    %v2012 = vunpack.c.h.b16 %v1863
    %v2013 = vunpack.c.l.b16 %v1864
    %v2014 = vunpack.c.h.b16 %v1864
    %v2015 = vunpack.c.l.b16 %v1865
    %v2016 = vunpack.c.h.b16 %v1865
    %v2017 = vunpack.c.l.b16 %v1866
    %v2018 = vunpack.c.h.b16 %v1866
    %v2019 = vunpack.c.l.b16 %v1867
    %v2020 = vunpack.c.h.b16 %v1867
    %v2021 = vunpack.c.l.b16 %v1868
    %v2022 = vunpack.c.h.b16 %v1868
    %v2023 = vunpack.c.l.b16 %v1869
    %v2024 = vunpack.c.h.b16 %v1869
    %v2025 = vunpack.c.l.b16 %v1870
    %v2026 = vunpack.c.h.b16 %v1870
    %v2027 = vunpack.c.l.b16 %v1871
    %v2028 = vunpack.c.h.b16 %v1871
    %v2029 = vunpack.c.l.b16 %v1872
    %v2030 = vunpack.c.h.b16 %v1872
    %v2031 = vunpack.c.l.b16 %v1873
    %v2032 = vunpack.c.h.b16 %v1873
    %v2033 = vunpack.c.l.b16 %v1874
    %v2034 = vunpack.c.h.b16 %v1874
    %v2035 = vunpack.c.l.b16 %v1875
    %v2036 = vunpack.c.h.b16 %v1875
    %v2037 = vunpack.c.l.b16 %v1876
    %v2038 = vunpack.c.h.b16 %v1876
    %v2039 = vunpack.c.l.b16 %v1877
    %v2040 = vunpack.c.h.b16 %v1877
    %v2041 = vunpack.c.l.b16 %v1878
    %v2042 = vunpack.c.h.b16 %v1878
    %v2043 = vunpack.c.l.b16 %v1879
    %v2044 = vunpack.c.h.b16 %v1879
    %v2045 = vunpack.c.l.b16 %v1880
    %v2046 = vunpack.c.h.b16 %v1880
    %v2047 = vunpack.c.l.b16 %v1881
    %v2048 = vunpack.c.h.b16 %v1881
    %v2049 = vunpack.c.l.b16 %v1882
    %v2050 = vunpack.c.h.b16 %v1882
    %v2051 = vunpack.c.l.b16 %v1883
    %v2052 = vunpack.c.h.b16 %v1883
    %v2053 = vunpack.c.l.b16 %v1884
    %v2054 = vunpack.c.h.b16 %v1884
    %v2055 = vunpack.c.l.b16 %v1885
    %v2056 = vunpack.c.h.b16 %v1885
    %v2057 = vunpack.c.l.b16 %v1886
    %v2058 = vunpack.c.h.b16 %v1886
    %v2059 = vunpack.c.l.b16 %v1887
    %v2060 = vunpack.c.h.b16 %v1887
    %v2061 = vunpack.c.l.b16 %v1888
    %v2062 = vunpack.c.h.b16 %v1888
    %v2063 = vunpack.c.l.b16 %v1889
    %v2064 = vunpack.c.h.b16 %v1889
    %v2065 = vunpack.c.l.b16 %v1890
    %v2066 = vunpack.c.h.b16 %v1890
    %v2067 = vunpack.c.l.b16 %v1891
    %v2068 = vunpack.c.h.b16 %v1891
    %v2069 = vunpack.c.l.b16 %v1892
    %v2070 = vunpack.c.h.b16 %v1892
    %v2071 = vunpack.c.l.b16 %v1893
    %v2072 = vunpack.c.h.b16 %v1893
    %v2073 = vunpack.c.l.b16 %v1894
    %v2074 = vunpack.c.h.b16 %v1894
    %v2075 = vunpack.c.l.b16 %v1895
    %v2076 = vunpack.c.h.b16 %v1895
    %v2077 = vunpack.c.l.b16 %v1896
    %v2078 = vunpack.c.h.b16 %v1896
    %v2079 = vunpack.c.l.b16 %v1897
    %v2080 = vunpack.c.h.b16 %v1897
    %v2081 = vunpack.c.l.b16 %v1898
    %v2082 = vunpack.c.h.b16 %v1898
    %v2083 = vunpack.c.l.b16 %v1899
    %v2084 = vunpack.c.h.b16 %v1899
    %v2085 = vunpack.c.l.b16 %v1900
    %v2086 = vunpack.c.h.b16 %v1900
    %v2087 = vunpack.c.l.b16 %v1901
    %v2088 = vunpack.c.h.b16 %v1901
    %v2089 = vunpack.c.l.b16 %v1902
    %v2090 = vunpack.c.h.b16 %v1902
    %v2091 = vunpack.c.l.b16 %v1903
    %v2092 = vunpack.c.h.b16 %v1903
    %v2093 = vunpack.c.l.b16 %v1904
    %v2094 = vunpack.c.h.b16 %v1904
    %v2095 = vunpack.c.l.b16 %v1905
    %v2096 = vunpack.c.h.b16 %v1905
    %v2097 = vunpack.c.l.b16 %v1906
    %v2098 = vunpack.c.h.b16 %v1906
    %v2099 = vunpack.c.l.b16 %v1907
    %v2100 = vunpack.c.h.b16 %v1907
    %v2101 = vunpack.c.l.b16 %v1908
    %v2102 = vunpack.c.h.b16 %v1908
    %v2103 = vunpack.c.l.b16 %v1909
    %v2104 = vunpack.c.h.b16 %v1909
    %v2105 = vunpack.c.l.b16 %v1910
    %v2106 = vunpack.c.h.b16 %v1910
    %v2107 = vunpack.c.l.b16 %v1911
    %v2108 = vunpack.c.h.b16 %v1911
    %v2109 = vunpack.c.l.b16 %v1912
    %v2110 = vunpack.c.h.b16 %v1912
    %v2111 = vunpack.c.l.b16 %v1913
    %v2112 = vunpack.c.h.b16 %v1913
    %v2113 = vunpack.c.l.b16 %v1914
    %v2114 = vunpack.c.h.b16 %v1914
    %v2115 = vunpack.c.l.b16 %v1915
    %v2116 = vunpack.c.h.b16 %v1915
    %v2117 = vunpack.c.l.b16 %v1916
    %v2118 = vunpack.c.h.b16 %v1916
    %v2119 = vpack.c.b16 %v1995, %v1991
    %v2120 = vpack.c.b16 %v1996, %v1992
    %v2121 = vpack.c.b16 %v1997, %v1993
    %v2122 = vpack.c.b16 %v1998, %v1994
    %v2123 = vpack.c.b16 %v2003, %v1999
    %v2124 = vpack.c.b16 %v2004, %v2000
    %v2125 = vpack.c.b16 %v2005, %v2001
    %v2126 = vpack.c.b16 %v2006, %v2002
    %v2127 = vpack.c.b16 %v2011, %v2007
    %v2128 = vpack.c.b16 %v2012, %v2008
    %v2129 = vpack.c.b16 %v2013, %v2009
    %v2130 = vpack.c.b16 %v2014, %v2010
    %v2131 = vpack.c.b16 %v2019, %v2015
    %v2132 = vpack.c.b16 %v2020, %v2016
    %v2133 = vpack.c.b16 %v2021, %v2017
    %v2134 = vpack.c.b16 %v2022, %v2018
    %v2135 = vpack.c.b16 %v2027, %v2023
    %v2136 = vpack.c.b16 %v2028, %v2024
    %v2137 = vpack.c.b16 %v2029, %v2025
    %v2138 = vpack.c.b16 %v2030, %v2026
    %v2139 = vpack.c.b16 %v2035, %v2031
    %v2140 = vpack.c.b16 %v2036, %v2032
    %v2141 = vpack.c.b16 %v2037, %v2033
    %v2142 = vpack.c.b16 %v2038, %v2034
    %v2143 = vpack.c.b16 %v2043, %v2039
    %v2144 = vpack.c.b16 %v2044, %v2040
    %v2145 = vpack.c.b16 %v2045, %v2041
    %v2146 = vpack.c.b16 %v2046, %v2042
    %v2147 = vpack.c.b16 %v2051, %v2047
    %v2148 = vpack.c.b16 %v2052, %v2048
    %v2149 = vpack.c.b16 %v2053, %v2049
    %v2150 = vpack.c.b16 %v2054, %v2050
    %v2151 = vpack.c.b16 %v2059, %v2055
    %v2152 = vpack.c.b16 %v2060, %v2056
    %v2153 = vpack.c.b16 %v2061, %v2057
    %v2154 = vpack.c.b16 %v2062, %v2058
    %v2155 = vpack.c.b16 %v2067, %v2063
    %v2156 = vpack.c.b16 %v2068, %v2064
    %v2157 = vpack.c.b16 %v2069, %v2065
    %v2158 = vpack.c.b16 %v2070, %v2066
    %v2159 = vpack.c.b16 %v2075, %v2071
    %v2160 = vpack.c.b16 %v2076, %v2072
    %v2161 = vpack.c.b16 %v2077, %v2073
    %v2162 = vpack.c.b16 %v2078, %v2074
    %v2163 = vpack.c.b16 %v2083, %v2079
    %v2164 = vpack.c.b16 %v2084, %v2080
    %v2165 = vpack.c.b16 %v2085, %v2081
    %v2166 = vpack.c.b16 %v2086, %v2082
    %v2167 = vpack.c.b16 %v2091, %v2087
    %v2168 = vpack.c.b16 %v2092, %v2088
    %v2169 = vpack.c.b16 %v2093, %v2089
    %v2170 = vpack.c.b16 %v2094, %v2090
    %v2171 = vpack.c.b16 %v2099, %v2095
    %v2172 = vpack.c.b16 %v2100, %v2096
    %v2173 = vpack.c.b16 %v2101, %v2097
    %v2174 = vpack.c.b16 %v2102, %v2098
    %v2175 = vpack.c.b16 %v2107, %v2103
    %v2176 = vpack.c.b16 %v2108, %v2104
    %v2177 = vpack.c.b16 %v2109, %v2105
    %v2178 = vpack.c.b16 %v2110, %v2106
    %v2179 = vpack.c.b16 %v2115, %v2111
    %v2180 = vpack.c.b16 %v2116, %v2112
    %v2181 = vpack.c.b16 %v2117, %v2113
    %v2182 = vpack.c.b16 %v2118, %v2114
    %2247 = vmatpush.bf16.msra.mxu0 %v2147
    %2248 = vmatpush.bf16.msra.mxu0 %v2143
    %2249 = vmatpush.bf16.msra.mxu0 %v2139
    %2250 = vmatpush.bf16.msra.mxu0 %v2135
    %2251 = vmatpush.bf16.msra.mxu0 %v2131
    %2252 = vmatpush.bf16.msra.mxu0 %v2127
    %2253 = vmatpush.bf16.msra.mxu0 %v2123
    %2254 = vmatpush.bf16.msra.mxu0 %v2119
    %2255 = vmatmul.bf16.gmra.mxu0 %v1923
    %v2256 = vpop.f32.mrf.mxu0
    %v2257 = vadd.f32 0.0, %v2256
    %v2258 = vpop.f32.mrf.mxu0
    %v2259 = vadd.f32 0.0, %v2258
    %2260 = vdwg.mxu0
    %2261 = vmatpush.bf16.msra.mxu0 %v2179
    %2262 = vmatpush.bf16.msra.mxu0 %v2175
    %2263 = vmatpush.bf16.msra.mxu0 %v2171
    %2264 = vmatpush.bf16.msra.mxu0 %v2167
    %2265 = vmatpush.bf16.msra.mxu0 %v2163
    %2266 = vmatpush.bf16.msra.mxu0 %v2159
    %2267 = vmatpush.bf16.msra.mxu0 %v2155
    %2268 = vmatpush.bf16.msra.mxu0 %v2151
    %2269 = vmatmul.bf16.gmra.mxu0 %v1924
    %v2270 = vpop.f32.mrf.mxu0
    %v2271 = vadd.f32 %v2257, %v2270
    %v2272 = vpop.f32.mrf.mxu0
    %v2273 = vadd.f32 %v2259, %v2272
    %2274 = vdwg.mxu0
    %2275 = vmatpush.bf16.msra.mxu0 %v2148
    %2276 = vmatpush.bf16.msra.mxu0 %v2144
    %2277 = vmatpush.bf16.msra.mxu0 %v2140
    %2278 = vmatpush.bf16.msra.mxu0 %v2136
    %2279 = vmatpush.bf16.msra.mxu0 %v2132
    %2280 = vmatpush.bf16.msra.mxu0 %v2128
    %2281 = vmatpush.bf16.msra.mxu0 %v2124
    %2282 = vmatpush.bf16.msra.mxu0 %v2120
    %2283 = vmatmul.bf16.gmra.mxu0 %v1923
    %v2284 = vpop.f32.mrf.mxu0
    %v2285 = vadd.f32 0.0, %v2284
    %v2286 = vpop.f32.mrf.mxu0
    %v2287 = vadd.f32 0.0, %v2286
    %2288 = vdwg.mxu0
    %2289 = vmatpush.bf16.msra.mxu0 %v2180
    %2290 = vmatpush.bf16.msra.mxu0 %v2176
    %2291 = vmatpush.bf16.msra.mxu0 %v2172
    %2292 = vmatpush.bf16.msra.mxu0 %v2168
    %2293 = vmatpush.bf16.msra.mxu0 %v2164
    %2294 = vmatpush.bf16.msra.mxu0 %v2160
    %2295 = vmatpush.bf16.msra.mxu0 %v2156
    %2296 = vmatpush.bf16.msra.mxu0 %v2152
    %2297 = vmatmul.bf16.gmra.mxu0 %v1924
    %v2298 = vpop.f32.mrf.mxu0
    %v2299 = vadd.f32 %v2285, %v2298
    %v2300 = vpop.f32.mrf.mxu0
    %v2301 = vadd.f32 %v2287, %v2300
    %2302 = vdwg.mxu0
    %2303 = vmatpush.bf16.msra.mxu0 %v2149
    %2304 = vmatpush.bf16.msra.mxu0 %v2145
    %2305 = vmatpush.bf16.msra.mxu0 %v2141
    %2306 = vmatpush.bf16.msra.mxu0 %v2137
    %2307 = vmatpush.bf16.msra.mxu0 %v2133
    %2308 = vmatpush.bf16.msra.mxu0 %v2129
    %2309 = vmatpush.bf16.msra.mxu0 %v2125
    %2310 = vmatpush.bf16.msra.mxu0 %v2121
    %2311 = vmatmul.bf16.gmra.mxu0 %v1923
    %v2312 = vpop.f32.mrf.mxu0
    %v2313 = vadd.f32 0.0, %v2312
    %v2314 = vpop.f32.mrf.mxu0
    %v2315 = vadd.f32 0.0, %v2314
    %2316 = vdwg.mxu0
    %2317 = vmatpush.bf16.msra.mxu0 %v2181
    %2318 = vmatpush.bf16.msra.mxu0 %v2177
    %2319 = vmatpush.bf16.msra.mxu0 %v2173
    %2320 = vmatpush.bf16.msra.mxu0 %v2169
    %2321 = vmatpush.bf16.msra.mxu0 %v2165
    %2322 = vmatpush.bf16.msra.mxu0 %v2161
    %2323 = vmatpush.bf16.msra.mxu0 %v2157
    %2324 = vmatpush.bf16.msra.mxu0 %v2153
    %2325 = vmatmul.bf16.gmra.mxu0 %v1924
    %v2326 = vpop.f32.mrf.mxu0
    %v2327 = vadd.f32 %v2313, %v2326
    %v2328 = vpop.f32.mrf.mxu0
    %v2329 = vadd.f32 %v2315, %v2328
    %2330 = vdwg.mxu0
    %2331 = vmatpush.bf16.msra.mxu0 %v2150
    %2332 = vmatpush.bf16.msra.mxu0 %v2146
    %2333 = vmatpush.bf16.msra.mxu0 %v2142
    %2334 = vmatpush.bf16.msra.mxu0 %v2138
    %2335 = vmatpush.bf16.msra.mxu0 %v2134
    %2336 = vmatpush.bf16.msra.mxu0 %v2130
    %2337 = vmatpush.bf16.msra.mxu0 %v2126
    %2338 = vmatpush.bf16.msra.mxu0 %v2122
    %2339 = vmatmul.bf16.gmra.mxu0 %v1923
    %v2340 = vpop.f32.mrf.mxu0
    %v2341 = vadd.f32 0.0, %v2340
    %v2342 = vpop.f32.mrf.mxu0
    %v2343 = vadd.f32 0.0, %v2342
    %2344 = vdwg.mxu0
    %2345 = vmatpush.bf16.msra.mxu0 %v2182
    %2346 = vmatpush.bf16.msra.mxu0 %v2178
    %2347 = vmatpush.bf16.msra.mxu0 %v2174
    %2348 = vmatpush.bf16.msra.mxu0 %v2170
    %2349 = vmatpush.bf16.msra.mxu0 %v2166
    %2350 = vmatpush.bf16.msra.mxu0 %v2162
    %2351 = vmatpush.bf16.msra.mxu0 %v2158
    %2352 = vmatpush.bf16.msra.mxu0 %v2154
    %2353 = vmatmul.bf16.gmra.mxu0 %v1924
    %v2354 = vpop.f32.mrf.mxu0
    %v2355 = vadd.f32 %v2341, %v2354
    %v2356 = vpop.f32.mrf.mxu0
    %v2357 = vadd.f32 %v2343, %v2356
    %2358 = vdwg.mxu0
    %v2359 = vadd.f32 %v1842, %v2271
    %v2360 = vadd.f32 %v1843, %v2299
    %v2361 = vadd.f32 %v1844, %v2327
    %v2362 = vadd.f32 %v1845, %v2355
    %v2363 = vadd.f32 %v1846, %v2273
    %v2364 = vadd.f32 %v1847, %v2301
    %v2365 = vadd.f32 %v1848, %v2329
    %v2366 = vadd.f32 %v1849, %v2357
    %2367 = vst [vmem:[#allocation2] sm:$0xff] %v2359
    %2368 = vst [vmem:[#allocation2 + $0x8] sm:$0xff] %v2360
    %2369 = vst [vmem:[#allocation2 + $0x10] sm:$0xff] %v2361
    %2370 = vst [vmem:[#allocation2 + $0x18] sm:$0xff] %v2362
    %2371 = vst [vmem:[#allocation2 + $0x20] sm:$0xff] %v2363
    %2372 = vst [vmem:[#allocation2 + $0x28] sm:$0xff] %v2364
    %2373 = vst [vmem:[#allocation2 + $0x30] sm:$0xff] %v2365
    %2374 = vst [vmem:[#allocation2 + $0x38] sm:$0xff] %v2366
    %s2375 = scalar_lea.vmem [#allocation3], 24
    %v2376 = vld [vmem:[%s2375] sm:$0xff]
    %v2377 = vld [vmem:[%s2375 + $0x58] sm:$0xff]
    %v2378 = vld [vmem:[%s2375 + $0xb0] sm:$0xff]
    %v2379 = vld [vmem:[%s2375 + $0x108] sm:$0xff]
    %v2380 = vld [vmem:[%s2375 + $0x160] sm:$0xff]
    %v2381 = vld [vmem:[%s2375 + $0x1b8] sm:$0xff]
    %v2382 = vld [vmem:[%s2375 + $0x210] sm:$0xff]
    %v2383 = vld [vmem:[%s2375 + $0x268] sm:$0xff]
    %v2384 = vld [vmem:[%s2375 + $0x2c0] sm:$0xff]
    %v2385 = vld [vmem:[%s2375 + $0x318] sm:$0xff]
    %v2386 = vld [vmem:[%s2375 + $0x370] sm:$0xff]
    %v2387 = vld [vmem:[%s2375 + $0x3c8] sm:$0xff]
    %v2388 = vld [vmem:[%s2375 + $0x420] sm:$0xff]
    %v2389 = vld [vmem:[%s2375 + $0x478] sm:$0xff]
    %v2390 = vld [vmem:[%s2375 + $0x4d0] sm:$0xff]
    %v2391 = vld [vmem:[%s2375 + $0x528] sm:$0xff]
    %v2392 = vld [vmem:[%s2375 + $0x580] sm:$0xff]
    %v2393 = vld [vmem:[%s2375 + $0x5d8] sm:$0xff]
    %v2394 = vld [vmem:[%s2375 + $0x630] sm:$0xff]
    %v2395 = vld [vmem:[%s2375 + $0x688] sm:$0xff]
    %v2396 = vld [vmem:[%s2375 + $0x6e0] sm:$0xff]
    %v2397 = vld [vmem:[%s2375 + $0x738] sm:$0xff]
    %v2398 = vld [vmem:[%s2375 + $0x790] sm:$0xff]
    %v2399 = vld [vmem:[%s2375 + $0x7e8] sm:$0xff]
    %s2400 = scalar_lea.vmem [#allocation5], 6
    %v2401 = vld [vmem:[%s2400] sm:$0x3]
    %v2403 = vperm.slane %v2401, 0
    %v2404 = vperm.slane %v2401, 1
    %v2431 = vunpack.c.l.b16 %v2376
    %v2432 = vunpack.c.h.b16 %v2376
    %v2433 = vunpack.c.l.b16 %v2377
    %v2434 = vunpack.c.h.b16 %v2377
    %v2435 = vunpack.c.l.b16 %v2378
    %v2436 = vunpack.c.h.b16 %v2378
    %v2437 = vunpack.c.l.b16 %v2379
    %v2438 = vunpack.c.h.b16 %v2379
    %v2439 = vunpack.c.l.b16 %v2380
    %v2440 = vunpack.c.h.b16 %v2380
    %v2441 = vunpack.c.l.b16 %v2381
    %v2442 = vunpack.c.h.b16 %v2381
    %v2443 = vunpack.c.l.b16 %v2382
    %v2444 = vunpack.c.h.b16 %v2382
    %v2445 = vunpack.c.l.b16 %v2383
    %v2446 = vunpack.c.h.b16 %v2383
    %v2447 = vunpack.c.l.b16 %v2384
    %v2448 = vunpack.c.h.b16 %v2384
    %v2449 = vunpack.c.l.b16 %v2385
    %v2450 = vunpack.c.h.b16 %v2385
    %v2451 = vunpack.c.l.b16 %v2386
    %v2452 = vunpack.c.h.b16 %v2386
    %v2453 = vunpack.c.l.b16 %v2387
    %v2454 = vunpack.c.h.b16 %v2387
    %v2455 = vunpack.c.l.b16 %v2388
    %v2456 = vunpack.c.h.b16 %v2388
    %v2457 = vunpack.c.l.b16 %v2389
    %v2458 = vunpack.c.h.b16 %v2389
    %v2459 = vunpack.c.l.b16 %v2390
    %v2460 = vunpack.c.h.b16 %v2390
    %v2461 = vunpack.c.l.b16 %v2391
    %v2462 = vunpack.c.h.b16 %v2391
    %v2463 = vunpack.c.l.b16 %v2392
    %v2464 = vunpack.c.h.b16 %v2392
    %v2465 = vunpack.c.l.b16 %v2393
    %v2466 = vunpack.c.h.b16 %v2393
    %v2467 = vunpack.c.l.b16 %v2394
    %v2468 = vunpack.c.h.b16 %v2394
    %v2469 = vunpack.c.l.b16 %v2395
    %v2470 = vunpack.c.h.b16 %v2395
    %v2471 = vunpack.c.l.b16 %v2396
    %v2472 = vunpack.c.h.b16 %v2396
    %v2473 = vunpack.c.l.b16 %v2397
    %v2474 = vunpack.c.h.b16 %v2397
    %v2475 = vunpack.c.l.b16 %v2398
    %v2476 = vunpack.c.h.b16 %v2398
    %v2477 = vunpack.c.l.b16 %v2399
    %v2478 = vunpack.c.h.b16 %v2399
    %v2479 = vpack.c.b16 %v2433, %v2431
    %v2480 = vpack.c.b16 %v2434, %v2432
    %v2481 = vpack.c.b16 %v2437, %v2435
    %v2482 = vpack.c.b16 %v2438, %v2436
    %v2483 = vpack.c.b16 %v2441, %v2439
    %v2484 = vpack.c.b16 %v2442, %v2440
    %v2485 = vpack.c.b16 %v2445, %v2443
    %v2486 = vpack.c.b16 %v2446, %v2444
    %v2487 = vpack.c.b16 %v2449, %v2447
    %v2488 = vpack.c.b16 %v2450, %v2448
    %v2489 = vpack.c.b16 %v2453, %v2451
    %v2490 = vpack.c.b16 %v2454, %v2452
    %v2491 = vpack.c.b16 %v2457, %v2455
    %v2492 = vpack.c.b16 %v2458, %v2456
    %v2493 = vpack.c.b16 %v2461, %v2459
    %v2494 = vpack.c.b16 %v2462, %v2460
    %v2495 = vpack.c.b16 %v2465, %v2463
    %v2496 = vpack.c.b16 %v2466, %v2464
    %v2497 = vpack.c.b16 %v2469, %v2467
    %v2498 = vpack.c.b16 %v2470, %v2468
    %v2499 = vpack.c.b16 %v2473, %v2471
    %v2500 = vpack.c.b16 %v2474, %v2472
    %v2501 = vpack.c.b16 %v2477, %v2475
    %v2502 = vpack.c.b16 %v2478, %v2476
    %2527 = vmatpush.bf16.msra.mxu0 %v2493
    %2528 = vmatpush.bf16.msra.mxu0 %v2491
    %2529 = vmatpush.bf16.msra.mxu0 %v2489
    %2530 = vmatpush.bf16.msra.mxu0 %v2487
    %2531 = vmatpush.bf16.msra.mxu0 %v2485
    %2532 = vmatpush.bf16.msra.mxu0 %v2483
    %2533 = vmatpush.bf16.msra.mxu0 %v2481
    %2534 = vmatpush.bf16.msra.mxu0 %v2479
    %2535 = vmatmul.bf16.gmra.mxu0 %v163
    %v2536 = vpop.f32.mrf.mxu0
    %v2537 = vadd.f32 %v2403, %v2536
    %v2538 = vpop.f32.mrf.mxu0
    %v2539 = vadd.f32 %v2403, %v2538
    %2540 = vdwg.mxu0
    %2541 = vmatpush.bf16.msra.mxu0 0
    %2542 = vmatpush.bf16.msra.mxu0 0
    %2543 = vmatpush.bf16.msra.mxu0 0
    %2544 = vmatpush.bf16.msra.mxu0 0
    %2545 = vmatpush.bf16.msra.mxu0 %v2501
    %2546 = vmatpush.bf16.msra.mxu0 %v2499
    %2547 = vmatpush.bf16.msra.mxu0 %v2497
    %2548 = vmatpush.bf16.msra.mxu0 %v2495
    %2549 = vmatmul.bf16.gmra.mxu0 %v288
    %v2550 = vpop.f32.mrf.mxu0
    %v2551 = vadd.f32 %v2537, %v2550
    %v2552 = vpop.f32.mrf.mxu0
    %v2553 = vadd.f32 %v2539, %v2552
    %2554 = vdwg.mxu0
    %2555 = vmatpush.bf16.msra.mxu0 %v2494
    %2556 = vmatpush.bf16.msra.mxu0 %v2492
    %2557 = vmatpush.bf16.msra.mxu0 %v2490
    %2558 = vmatpush.bf16.msra.mxu0 %v2488
    %2559 = vmatpush.bf16.msra.mxu0 %v2486
    %2560 = vmatpush.bf16.msra.mxu0 %v2484
    %2561 = vmatpush.bf16.msra.mxu0 %v2482
    %2562 = vmatpush.bf16.msra.mxu0 %v2480
    %2563 = vmatmul.bf16.gmra.mxu0 %v163
    %v2564 = vpop.f32.mrf.mxu0
    %v2565 = vadd.f32 %v2404, %v2564
    %v2566 = vpop.f32.mrf.mxu0
    %v2567 = vadd.f32 %v2404, %v2566
    %2568 = vdwg.mxu0
    %2569 = vmatpush.bf16.msra.mxu0 0
    %2570 = vmatpush.bf16.msra.mxu0 0
    %2571 = vmatpush.bf16.msra.mxu0 0
    %2572 = vmatpush.bf16.msra.mxu0 0
    %2573 = vmatpush.bf16.msra.mxu0 %v2502
    %2574 = vmatpush.bf16.msra.mxu0 %v2500
    %2575 = vmatpush.bf16.msra.mxu0 %v2498
    %2576 = vmatpush.bf16.msra.mxu0 %v2496
    %2577 = vmatmul.bf16.gmra.mxu0 %v288
    %v2578 = vpop.f32.mrf.mxu0
    %v2579 = vadd.f32 %v2565, %v2578
    %v2580 = vpop.f32.mrf.mxu0
    %v2581 = vadd.f32 %v2567, %v2580
    %2582 = vdwg.mxu0
    %v2583 = vpack.c.bf16 %v2579, %v2551
    %v2584 = vpack.c.bf16 %v2581, %v2553
    %s2585 = scalar_lea.vmem %s7, 24
    %2586 = vst [vmem:[%s2585] sm:$0xff] %v2583
    %2587 = vst [vmem:[%s2585 + $0x58] sm:$0xff] %v2584
    %v2588 = vld [vmem:[#allocation2] sm:$0xff]
    %v2589 = vld [vmem:[#allocation2 + $0x8] sm:$0xff]
    %v2590 = vld [vmem:[#allocation2 + $0x10] sm:$0xff]
    %v2591 = vld [vmem:[#allocation2 + $0x18] sm:$0xff]
    %v2592 = vld [vmem:[#allocation2 + $0x20] sm:$0xff]
    %v2593 = vld [vmem:[#allocation2 + $0x28] sm:$0xff]
    %v2594 = vld [vmem:[#allocation2 + $0x30] sm:$0xff]
    %v2595 = vld [vmem:[#allocation2 + $0x38] sm:$0xff]
    %s2596 = smul.u32 96, 4
    %s2597 = smul.addr %s2596, 4
    %s2598 = scalar_lea.vmem [#allocation7], %s2597
    %v2599 = vld [vmem:[%s2598] sm:$0xff]
    %v2600 = vld [vmem:[%s2598 + $0x8] sm:$0xff]
    %v2601 = vld [vmem:[%s2598 + $0x10] sm:$0xff]
    %v2602 = vld [vmem:[%s2598 + $0x18] sm:$0xff]
    %v2603 = vld [vmem:[%s2598 + $0x20] sm:$0xff]
    %v2604 = vld [vmem:[%s2598 + $0x28] sm:$0xff]
    %v2605 = vld [vmem:[%s2598 + $0x30] sm:$0xff]
    %v2606 = vld [vmem:[%s2598 + $0x38] sm:$0xff]
    %v2607 = vld [vmem:[%s2598 + $0x40] sm:$0xff]
    %v2608 = vld [vmem:[%s2598 + $0x48] sm:$0xff]
    %v2609 = vld [vmem:[%s2598 + $0x50] sm:$0xff]
    %v2610 = vld [vmem:[%s2598 + $0x58] sm:$0xff]
    %v2611 = vld [vmem:[%s2598 + $0x60] sm:$0xff]
    %v2612 = vld [vmem:[%s2598 + $0x68] sm:$0xff]
    %v2613 = vld [vmem:[%s2598 + $0x70] sm:$0xff]
    %v2614 = vld [vmem:[%s2598 + $0x78] sm:$0xff]
    %v2615 = vld [vmem:[%s2598 + $0x80] sm:$0xff]
    %v2616 = vld [vmem:[%s2598 + $0x88] sm:$0xff]
    %v2617 = vld [vmem:[%s2598 + $0x90] sm:$0xff]
    %v2618 = vld [vmem:[%s2598 + $0x98] sm:$0xff]
    %v2619 = vld [vmem:[%s2598 + $0xa0] sm:$0xff]
    %v2620 = vld [vmem:[%s2598 + $0xa8] sm:$0xff]
    %v2621 = vld [vmem:[%s2598 + $0xb0] sm:$0xff]
    %v2622 = vld [vmem:[%s2598 + $0xb8] sm:$0xff]
    %v2623 = vld [vmem:[%s2598 + $0xc0] sm:$0xff]
    %v2624 = vld [vmem:[%s2598 + $0xc8] sm:$0xff]
    %v2625 = vld [vmem:[%s2598 + $0xd0] sm:$0xff]
    %v2626 = vld [vmem:[%s2598 + $0xd8] sm:$0xff]
    %v2627 = vld [vmem:[%s2598 + $0xe0] sm:$0xff]
    %v2628 = vld [vmem:[%s2598 + $0xe8] sm:$0xff]
    %v2629 = vld [vmem:[%s2598 + $0xf0] sm:$0xff]
    %v2630 = vld [vmem:[%s2598 + $0xf8] sm:$0xff]
    %v2631 = vld [vmem:[%s2598 + $0x100] sm:$0xff]
    %v2632 = vld [vmem:[%s2598 + $0x108] sm:$0xff]
    %v2633 = vld [vmem:[%s2598 + $0x110] sm:$0xff]
    %v2634 = vld [vmem:[%s2598 + $0x118] sm:$0xff]
    %v2635 = vld [vmem:[%s2598 + $0x120] sm:$0xff]
    %v2636 = vld [vmem:[%s2598 + $0x128] sm:$0xff]
    %v2637 = vld [vmem:[%s2598 + $0x130] sm:$0xff]
    %v2638 = vld [vmem:[%s2598 + $0x138] sm:$0xff]
    %v2639 = vld [vmem:[%s2598 + $0x140] sm:$0xff]
    %v2640 = vld [vmem:[%s2598 + $0x148] sm:$0xff]
    %v2641 = vld [vmem:[%s2598 + $0x150] sm:$0xff]
    %v2642 = vld [vmem:[%s2598 + $0x158] sm:$0xff]
    %v2643 = vld [vmem:[%s2598 + $0x160] sm:$0xff]
    %v2644 = vld [vmem:[%s2598 + $0x168] sm:$0xff]
    %v2645 = vld [vmem:[%s2598 + $0x170] sm:$0xff]
    %v2646 = vld [vmem:[%s2598 + $0x178] sm:$0xff]
    %v2647 = vld [vmem:[%s2598 + $0x180] sm:$0xff]
    %v2648 = vld [vmem:[%s2598 + $0x188] sm:$0xff]
    %v2649 = vld [vmem:[%s2598 + $0x190] sm:$0xff]
    %v2650 = vld [vmem:[%s2598 + $0x198] sm:$0xff]
    %v2651 = vld [vmem:[%s2598 + $0x1a0] sm:$0xff]
    %v2652 = vld [vmem:[%s2598 + $0x1a8] sm:$0xff]
    %v2653 = vld [vmem:[%s2598 + $0x1b0] sm:$0xff]
    %v2654 = vld [vmem:[%s2598 + $0x1b8] sm:$0xff]
    %v2655 = vld [vmem:[%s2598 + $0x1c0] sm:$0xff]
    %v2656 = vld [vmem:[%s2598 + $0x1c8] sm:$0xff]
    %v2657 = vld [vmem:[%s2598 + $0x1d0] sm:$0xff]
    %v2658 = vld [vmem:[%s2598 + $0x1d8] sm:$0xff]
    %v2659 = vld [vmem:[%s2598 + $0x1e0] sm:$0xff]
    %v2660 = vld [vmem:[%s2598 + $0x1e8] sm:$0xff]
    %v2661 = vld [vmem:[%s2598 + $0x1f0] sm:$0xff]
    %v2662 = vld [vmem:[%s2598 + $0x1f8] sm:$0xff]
    %v2665 = vunpack.c.l.b16 %v2583
    %v2666 = vunpack.c.h.b16 %v2583
    %v2667 = vunpack.c.l.b16 %v2584
    %v2668 = vunpack.c.h.b16 %v2584
    %v2669 = vpack.c.b16 %v2667, %v2665
    %v2670 = vpack.c.b16 %v2668, %v2666
    %v2737 = vunpack.c.l.b16 %v2599
    %v2738 = vunpack.c.h.b16 %v2599
    %v2739 = vunpack.c.l.b16 %v2600
    %v2740 = vunpack.c.h.b16 %v2600
    %v2741 = vunpack.c.l.b16 %v2601
    %v2742 = vunpack.c.h.b16 %v2601
    %v2743 = vunpack.c.l.b16 %v2602
    %v2744 = vunpack.c.h.b16 %v2602
    %v2745 = vunpack.c.l.b16 %v2603
    %v2746 = vunpack.c.h.b16 %v2603
    %v2747 = vunpack.c.l.b16 %v2604
    %v2748 = vunpack.c.h.b16 %v2604
    %v2749 = vunpack.c.l.b16 %v2605
    %v2750 = vunpack.c.h.b16 %v2605
    %v2751 = vunpack.c.l.b16 %v2606
    %v2752 = vunpack.c.h.b16 %v2606
    %v2753 = vunpack.c.l.b16 %v2607
    %v2754 = vunpack.c.h.b16 %v2607
    %v2755 = vunpack.c.l.b16 %v2608
    %v2756 = vunpack.c.h.b16 %v2608
    %v2757 = vunpack.c.l.b16 %v2609
    %v2758 = vunpack.c.h.b16 %v2609
    %v2759 = vunpack.c.l.b16 %v2610
    %v2760 = vunpack.c.h.b16 %v2610
    %v2761 = vunpack.c.l.b16 %v2611
    %v2762 = vunpack.c.h.b16 %v2611
    %v2763 = vunpack.c.l.b16 %v2612
    %v2764 = vunpack.c.h.b16 %v2612
    %v2765 = vunpack.c.l.b16 %v2613
    %v2766 = vunpack.c.h.b16 %v2613
    %v2767 = vunpack.c.l.b16 %v2614
    %v2768 = vunpack.c.h.b16 %v2614
    %v2769 = vunpack.c.l.b16 %v2615
    %v2770 = vunpack.c.h.b16 %v2615
    %v2771 = vunpack.c.l.b16 %v2616
    %v2772 = vunpack.c.h.b16 %v2616
    %v2773 = vunpack.c.l.b16 %v2617
    %v2774 = vunpack.c.h.b16 %v2617
    %v2775 = vunpack.c.l.b16 %v2618
    %v2776 = vunpack.c.h.b16 %v2618
    %v2777 = vunpack.c.l.b16 %v2619
    %v2778 = vunpack.c.h.b16 %v2619
    %v2779 = vunpack.c.l.b16 %v2620
    %v2780 = vunpack.c.h.b16 %v2620
    %v2781 = vunpack.c.l.b16 %v2621
    %v2782 = vunpack.c.h.b16 %v2621
    %v2783 = vunpack.c.l.b16 %v2622
    %v2784 = vunpack.c.h.b16 %v2622
    %v2785 = vunpack.c.l.b16 %v2623
    %v2786 = vunpack.c.h.b16 %v2623
    %v2787 = vunpack.c.l.b16 %v2624
    %v2788 = vunpack.c.h.b16 %v2624
    %v2789 = vunpack.c.l.b16 %v2625
    %v2790 = vunpack.c.h.b16 %v2625
    %v2791 = vunpack.c.l.b16 %v2626
    %v2792 = vunpack.c.h.b16 %v2626
    %v2793 = vunpack.c.l.b16 %v2627
    %v2794 = vunpack.c.h.b16 %v2627
    %v2795 = vunpack.c.l.b16 %v2628
    %v2796 = vunpack.c.h.b16 %v2628
    %v2797 = vunpack.c.l.b16 %v2629
    %v2798 = vunpack.c.h.b16 %v2629
    %v2799 = vunpack.c.l.b16 %v2630
    %v2800 = vunpack.c.h.b16 %v2630
    %v2801 = vunpack.c.l.b16 %v2631
    %v2802 = vunpack.c.h.b16 %v2631
    %v2803 = vunpack.c.l.b16 %v2632
    %v2804 = vunpack.c.h.b16 %v2632
    %v2805 = vunpack.c.l.b16 %v2633
    %v2806 = vunpack.c.h.b16 %v2633
    %v2807 = vunpack.c.l.b16 %v2634
    %v2808 = vunpack.c.h.b16 %v2634
    %v2809 = vunpack.c.l.b16 %v2635
    %v2810 = vunpack.c.h.b16 %v2635
    %v2811 = vunpack.c.l.b16 %v2636
    %v2812 = vunpack.c.h.b16 %v2636
    %v2813 = vunpack.c.l.b16 %v2637
    %v2814 = vunpack.c.h.b16 %v2637
    %v2815 = vunpack.c.l.b16 %v2638
    %v2816 = vunpack.c.h.b16 %v2638
    %v2817 = vunpack.c.l.b16 %v2639
    %v2818 = vunpack.c.h.b16 %v2639
    %v2819 = vunpack.c.l.b16 %v2640
    %v2820 = vunpack.c.h.b16 %v2640
    %v2821 = vunpack.c.l.b16 %v2641
    %v2822 = vunpack.c.h.b16 %v2641
    %v2823 = vunpack.c.l.b16 %v2642
    %v2824 = vunpack.c.h.b16 %v2642
    %v2825 = vunpack.c.l.b16 %v2643
    %v2826 = vunpack.c.h.b16 %v2643
    %v2827 = vunpack.c.l.b16 %v2644
    %v2828 = vunpack.c.h.b16 %v2644
    %v2829 = vunpack.c.l.b16 %v2645
    %v2830 = vunpack.c.h.b16 %v2645
    %v2831 = vunpack.c.l.b16 %v2646
    %v2832 = vunpack.c.h.b16 %v2646
    %v2833 = vunpack.c.l.b16 %v2647
    %v2834 = vunpack.c.h.b16 %v2647
    %v2835 = vunpack.c.l.b16 %v2648
    %v2836 = vunpack.c.h.b16 %v2648
    %v2837 = vunpack.c.l.b16 %v2649
    %v2838 = vunpack.c.h.b16 %v2649
    %v2839 = vunpack.c.l.b16 %v2650
    %v2840 = vunpack.c.h.b16 %v2650
    %v2841 = vunpack.c.l.b16 %v2651
    %v2842 = vunpack.c.h.b16 %v2651
    %v2843 = vunpack.c.l.b16 %v2652
    %v2844 = vunpack.c.h.b16 %v2652
    %v2845 = vunpack.c.l.b16 %v2653
    %v2846 = vunpack.c.h.b16 %v2653
    %v2847 = vunpack.c.l.b16 %v2654
    %v2848 = vunpack.c.h.b16 %v2654
    %v2849 = vunpack.c.l.b16 %v2655
    %v2850 = vunpack.c.h.b16 %v2655
    %v2851 = vunpack.c.l.b16 %v2656
    %v2852 = vunpack.c.h.b16 %v2656
    %v2853 = vunpack.c.l.b16 %v2657
    %v2854 = vunpack.c.h.b16 %v2657
    %v2855 = vunpack.c.l.b16 %v2658
    %v2856 = vunpack.c.h.b16 %v2658
    %v2857 = vunpack.c.l.b16 %v2659
    %v2858 = vunpack.c.h.b16 %v2659
    %v2859 = vunpack.c.l.b16 %v2660
    %v2860 = vunpack.c.h.b16 %v2660
    %v2861 = vunpack.c.l.b16 %v2661
    %v2862 = vunpack.c.h.b16 %v2661
    %v2863 = vunpack.c.l.b16 %v2662
    %v2864 = vunpack.c.h.b16 %v2662
    %v2865 = vpack.c.b16 %v2741, %v2737
    %v2866 = vpack.c.b16 %v2742, %v2738
    %v2867 = vpack.c.b16 %v2743, %v2739
    %v2868 = vpack.c.b16 %v2744, %v2740
    %v2869 = vpack.c.b16 %v2749, %v2745
    %v2870 = vpack.c.b16 %v2750, %v2746
    %v2871 = vpack.c.b16 %v2751, %v2747
    %v2872 = vpack.c.b16 %v2752, %v2748
    %v2873 = vpack.c.b16 %v2757, %v2753
    %v2874 = vpack.c.b16 %v2758, %v2754
    %v2875 = vpack.c.b16 %v2759, %v2755
    %v2876 = vpack.c.b16 %v2760, %v2756
    %v2877 = vpack.c.b16 %v2765, %v2761
    %v2878 = vpack.c.b16 %v2766, %v2762
    %v2879 = vpack.c.b16 %v2767, %v2763
    %v2880 = vpack.c.b16 %v2768, %v2764
    %v2881 = vpack.c.b16 %v2773, %v2769
    %v2882 = vpack.c.b16 %v2774, %v2770
    %v2883 = vpack.c.b16 %v2775, %v2771
    %v2884 = vpack.c.b16 %v2776, %v2772
    %v2885 = vpack.c.b16 %v2781, %v2777
    %v2886 = vpack.c.b16 %v2782, %v2778
    %v2887 = vpack.c.b16 %v2783, %v2779
    %v2888 = vpack.c.b16 %v2784, %v2780
    %v2889 = vpack.c.b16 %v2789, %v2785
    %v2890 = vpack.c.b16 %v2790, %v2786
    %v2891 = vpack.c.b16 %v2791, %v2787
    %v2892 = vpack.c.b16 %v2792, %v2788
    %v2893 = vpack.c.b16 %v2797, %v2793
    %v2894 = vpack.c.b16 %v2798, %v2794
    %v2895 = vpack.c.b16 %v2799, %v2795
    %v2896 = vpack.c.b16 %v2800, %v2796
    %v2897 = vpack.c.b16 %v2805, %v2801
    %v2898 = vpack.c.b16 %v2806, %v2802
    %v2899 = vpack.c.b16 %v2807, %v2803
    %v2900 = vpack.c.b16 %v2808, %v2804
    %v2901 = vpack.c.b16 %v2813, %v2809
    %v2902 = vpack.c.b16 %v2814, %v2810
    %v2903 = vpack.c.b16 %v2815, %v2811
    %v2904 = vpack.c.b16 %v2816, %v2812
    %v2905 = vpack.c.b16 %v2821, %v2817
    %v2906 = vpack.c.b16 %v2822, %v2818
    %v2907 = vpack.c.b16 %v2823, %v2819
    %v2908 = vpack.c.b16 %v2824, %v2820
    %v2909 = vpack.c.b16 %v2829, %v2825
    %v2910 = vpack.c.b16 %v2830, %v2826
    %v2911 = vpack.c.b16 %v2831, %v2827
    %v2912 = vpack.c.b16 %v2832, %v2828
    %v2913 = vpack.c.b16 %v2837, %v2833
    %v2914 = vpack.c.b16 %v2838, %v2834
    %v2915 = vpack.c.b16 %v2839, %v2835
    %v2916 = vpack.c.b16 %v2840, %v2836
    %v2917 = vpack.c.b16 %v2845, %v2841
    %v2918 = vpack.c.b16 %v2846, %v2842
    %v2919 = vpack.c.b16 %v2847, %v2843
    %v2920 = vpack.c.b16 %v2848, %v2844
    %v2921 = vpack.c.b16 %v2853, %v2849
    %v2922 = vpack.c.b16 %v2854, %v2850
    %v2923 = vpack.c.b16 %v2855, %v2851
    %v2924 = vpack.c.b16 %v2856, %v2852
    %v2925 = vpack.c.b16 %v2861, %v2857
    %v2926 = vpack.c.b16 %v2862, %v2858
    %v2927 = vpack.c.b16 %v2863, %v2859
    %v2928 = vpack.c.b16 %v2864, %v2860
    %2993 = vmatpush.bf16.msra.mxu0 %v2893
    %2994 = vmatpush.bf16.msra.mxu0 %v2889
    %2995 = vmatpush.bf16.msra.mxu0 %v2885
    %2996 = vmatpush.bf16.msra.mxu0 %v2881
    %2997 = vmatpush.bf16.msra.mxu0 %v2877
    %2998 = vmatpush.bf16.msra.mxu0 %v2873
    %2999 = vmatpush.bf16.msra.mxu0 %v2869
    %3000 = vmatpush.bf16.msra.mxu0 %v2865
    %3001 = vmatmul.bf16.gmra.mxu0 %v2669
    %v3002 = vpop.f32.mrf.mxu0
    %v3003 = vadd.f32 0.0, %v3002
    %v3004 = vpop.f32.mrf.mxu0
    %v3005 = vadd.f32 0.0, %v3004
    %3006 = vdwg.mxu0
    %3007 = vmatpush.bf16.msra.mxu0 %v2925
    %3008 = vmatpush.bf16.msra.mxu0 %v2921
    %3009 = vmatpush.bf16.msra.mxu0 %v2917
    %3010 = vmatpush.bf16.msra.mxu0 %v2913
    %3011 = vmatpush.bf16.msra.mxu0 %v2909
    %3012 = vmatpush.bf16.msra.mxu0 %v2905
    %3013 = vmatpush.bf16.msra.mxu0 %v2901
    %3014 = vmatpush.bf16.msra.mxu0 %v2897
    %3015 = vmatmul.bf16.gmra.mxu0 %v2670
    %v3016 = vpop.f32.mrf.mxu0
    %v3017 = vadd.f32 %v3003, %v3016
    %v3018 = vpop.f32.mrf.mxu0
    %v3019 = vadd.f32 %v3005, %v3018
    %3020 = vdwg.mxu0
    %3021 = vmatpush.bf16.msra.mxu0 %v2894
    %3022 = vmatpush.bf16.msra.mxu0 %v2890
    %3023 = vmatpush.bf16.msra.mxu0 %v2886
    %3024 = vmatpush.bf16.msra.mxu0 %v2882
    %3025 = vmatpush.bf16.msra.mxu0 %v2878
    %3026 = vmatpush.bf16.msra.mxu0 %v2874
    %3027 = vmatpush.bf16.msra.mxu0 %v2870
    %3028 = vmatpush.bf16.msra.mxu0 %v2866
    %3029 = vmatmul.bf16.gmra.mxu0 %v2669
    %v3030 = vpop.f32.mrf.mxu0
    %v3031 = vadd.f32 0.0, %v3030
    %v3032 = vpop.f32.mrf.mxu0
    %v3033 = vadd.f32 0.0, %v3032
    %3034 = vdwg.mxu0
    %3035 = vmatpush.bf16.msra.mxu0 %v2926
    %3036 = vmatpush.bf16.msra.mxu0 %v2922
    %3037 = vmatpush.bf16.msra.mxu0 %v2918
    %3038 = vmatpush.bf16.msra.mxu0 %v2914
    %3039 = vmatpush.bf16.msra.mxu0 %v2910
    %3040 = vmatpush.bf16.msra.mxu0 %v2906
    %3041 = vmatpush.bf16.msra.mxu0 %v2902
    %3042 = vmatpush.bf16.msra.mxu0 %v2898
    %3043 = vmatmul.bf16.gmra.mxu0 %v2670
    %v3044 = vpop.f32.mrf.mxu0
    %v3045 = vadd.f32 %v3031, %v3044
    %v3046 = vpop.f32.mrf.mxu0
    %v3047 = vadd.f32 %v3033, %v3046
    %3048 = vdwg.mxu0
    %3049 = vmatpush.bf16.msra.mxu0 %v2895
    %3050 = vmatpush.bf16.msra.mxu0 %v2891
    %3051 = vmatpush.bf16.msra.mxu0 %v2887
    %3052 = vmatpush.bf16.msra.mxu0 %v2883
    %3053 = vmatpush.bf16.msra.mxu0 %v2879
    %3054 = vmatpush.bf16.msra.mxu0 %v2875
    %3055 = vmatpush.bf16.msra.mxu0 %v2871
    %3056 = vmatpush.bf16.msra.mxu0 %v2867
    %3057 = vmatmul.bf16.gmra.mxu0 %v2669
    %v3058 = vpop.f32.mrf.mxu0
    %v3059 = vadd.f32 0.0, %v3058
    %v3060 = vpop.f32.mrf.mxu0
    %v3061 = vadd.f32 0.0, %v3060
    %3062 = vdwg.mxu0
    %3063 = vmatpush.bf16.msra.mxu0 %v2927
    %3064 = vmatpush.bf16.msra.mxu0 %v2923
    %3065 = vmatpush.bf16.msra.mxu0 %v2919
    %3066 = vmatpush.bf16.msra.mxu0 %v2915
    %3067 = vmatpush.bf16.msra.mxu0 %v2911
    %3068 = vmatpush.bf16.msra.mxu0 %v2907
    %3069 = vmatpush.bf16.msra.mxu0 %v2903
    %3070 = vmatpush.bf16.msra.mxu0 %v2899
    %3071 = vmatmul.bf16.gmra.mxu0 %v2670
    %v3072 = vpop.f32.mrf.mxu0
    %v3073 = vadd.f32 %v3059, %v3072
    %v3074 = vpop.f32.mrf.mxu0
    %v3075 = vadd.f32 %v3061, %v3074
    %3076 = vdwg.mxu0
    %3077 = vmatpush.bf16.msra.mxu0 %v2896
    %3078 = vmatpush.bf16.msra.mxu0 %v2892
    %3079 = vmatpush.bf16.msra.mxu0 %v2888
    %3080 = vmatpush.bf16.msra.mxu0 %v2884
    %3081 = vmatpush.bf16.msra.mxu0 %v2880
    %3082 = vmatpush.bf16.msra.mxu0 %v2876
    %3083 = vmatpush.bf16.msra.mxu0 %v2872
    %3084 = vmatpush.bf16.msra.mxu0 %v2868
    %3085 = vmatmul.bf16.gmra.mxu0 %v2669
    %v3086 = vpop.f32.mrf.mxu0
    %v3087 = vadd.f32 0.0, %v3086
    %v3088 = vpop.f32.mrf.mxu0
    %v3089 = vadd.f32 0.0, %v3088
    %3090 = vdwg.mxu0
    %3091 = vmatpush.bf16.msra.mxu0 %v2928
    %3092 = vmatpush.bf16.msra.mxu0 %v2924
    %3093 = vmatpush.bf16.msra.mxu0 %v2920
    %3094 = vmatpush.bf16.msra.mxu0 %v2916
    %3095 = vmatpush.bf16.msra.mxu0 %v2912
    %3096 = vmatpush.bf16.msra.mxu0 %v2908
    %3097 = vmatpush.bf16.msra.mxu0 %v2904
    %3098 = vmatpush.bf16.msra.mxu0 %v2900
    %3099 = vmatmul.bf16.gmra.mxu0 %v2670
    %v3100 = vpop.f32.mrf.mxu0
    %v3101 = vadd.f32 %v3087, %v3100
    %v3102 = vpop.f32.mrf.mxu0
    %v3103 = vadd.f32 %v3089, %v3102
    %3104 = vdwg.mxu0
    %v3105 = vadd.f32 %v2588, %v3017
    %v3106 = vadd.f32 %v2589, %v3045
    %v3107 = vadd.f32 %v2590, %v3073
    %v3108 = vadd.f32 %v2591, %v3101
    %v3109 = vadd.f32 %v2592, %v3019
    %v3110 = vadd.f32 %v2593, %v3047
    %v3111 = vadd.f32 %v2594, %v3075
    %v3112 = vadd.f32 %v2595, %v3103
    %3113 = vst [vmem:[#allocation2] sm:$0xff] %v3105
    %3114 = vst [vmem:[#allocation2 + $0x8] sm:$0xff] %v3106
    %3115 = vst [vmem:[#allocation2 + $0x10] sm:$0xff] %v3107
    %3116 = vst [vmem:[#allocation2 + $0x18] sm:$0xff] %v3108
    %3117 = vst [vmem:[#allocation2 + $0x20] sm:$0xff] %v3109
    %3118 = vst [vmem:[#allocation2 + $0x28] sm:$0xff] %v3110
    %3119 = vst [vmem:[#allocation2 + $0x30] sm:$0xff] %v3111
    %3120 = vst [vmem:[#allocation2 + $0x38] sm:$0xff] %v3112
    %s3121 = scalar_lea.vmem [#allocation3], 32
    %v3122 = vld [vmem:[%s3121] sm:$0xff]
    %v3123 = vld [vmem:[%s3121 + $0x58] sm:$0xff]
    %v3124 = vld [vmem:[%s3121 + $0xb0] sm:$0xff]
    %v3125 = vld [vmem:[%s3121 + $0x108] sm:$0xff]
    %v3126 = vld [vmem:[%s3121 + $0x160] sm:$0xff]
    %v3127 = vld [vmem:[%s3121 + $0x1b8] sm:$0xff]
    %v3128 = vld [vmem:[%s3121 + $0x210] sm:$0xff]
    %v3129 = vld [vmem:[%s3121 + $0x268] sm:$0xff]
    %v3130 = vld [vmem:[%s3121 + $0x2c0] sm:$0xff]
    %v3131 = vld [vmem:[%s3121 + $0x318] sm:$0xff]
    %v3132 = vld [vmem:[%s3121 + $0x370] sm:$0xff]
    %v3133 = vld [vmem:[%s3121 + $0x3c8] sm:$0xff]
    %v3134 = vld [vmem:[%s3121 + $0x420] sm:$0xff]
    %v3135 = vld [vmem:[%s3121 + $0x478] sm:$0xff]
    %v3136 = vld [vmem:[%s3121 + $0x4d0] sm:$0xff]
    %v3137 = vld [vmem:[%s3121 + $0x528] sm:$0xff]
    %v3138 = vld [vmem:[%s3121 + $0x580] sm:$0xff]
    %v3139 = vld [vmem:[%s3121 + $0x5d8] sm:$0xff]
    %v3140 = vld [vmem:[%s3121 + $0x630] sm:$0xff]
    %v3141 = vld [vmem:[%s3121 + $0x688] sm:$0xff]
    %v3142 = vld [vmem:[%s3121 + $0x6e0] sm:$0xff]
    %v3143 = vld [vmem:[%s3121 + $0x738] sm:$0xff]
    %v3144 = vld [vmem:[%s3121 + $0x790] sm:$0xff]
    %v3145 = vld [vmem:[%s3121 + $0x7e8] sm:$0xff]
    %s3146 = scalar_lea.vmem [#allocation5], 8
    %v3147 = vld [vmem:[%s3146] sm:$0x3]
    %v3149 = vperm.slane %v3147, 0
    %v3150 = vperm.slane %v3147, 1
    %v3177 = vunpack.c.l.b16 %v3122
    %v3178 = vunpack.c.h.b16 %v3122
    %v3179 = vunpack.c.l.b16 %v3123
    %v3180 = vunpack.c.h.b16 %v3123
    %v3181 = vunpack.c.l.b16 %v3124
    %v3182 = vunpack.c.h.b16 %v3124
    %v3183 = vunpack.c.l.b16 %v3125
    %v3184 = vunpack.c.h.b16 %v3125
    %v3185 = vunpack.c.l.b16 %v3126
    %v3186 = vunpack.c.h.b16 %v3126
    %v3187 = vunpack.c.l.b16 %v3127
    %v3188 = vunpack.c.h.b16 %v3127
    %v3189 = vunpack.c.l.b16 %v3128
    %v3190 = vunpack.c.h.b16 %v3128
    %v3191 = vunpack.c.l.b16 %v3129
    %v3192 = vunpack.c.h.b16 %v3129
    %v3193 = vunpack.c.l.b16 %v3130
    %v3194 = vunpack.c.h.b16 %v3130
    %v3195 = vunpack.c.l.b16 %v3131
    %v3196 = vunpack.c.h.b16 %v3131
    %v3197 = vunpack.c.l.b16 %v3132
    %v3198 = vunpack.c.h.b16 %v3132
    %v3199 = vunpack.c.l.b16 %v3133
    %v3200 = vunpack.c.h.b16 %v3133
    %v3201 = vunpack.c.l.b16 %v3134
    %v3202 = vunpack.c.h.b16 %v3134
    %v3203 = vunpack.c.l.b16 %v3135
    %v3204 = vunpack.c.h.b16 %v3135
    %v3205 = vunpack.c.l.b16 %v3136
    %v3206 = vunpack.c.h.b16 %v3136
    %v3207 = vunpack.c.l.b16 %v3137
    %v3208 = vunpack.c.h.b16 %v3137
    %v3209 = vunpack.c.l.b16 %v3138
    %v3210 = vunpack.c.h.b16 %v3138
    %v3211 = vunpack.c.l.b16 %v3139
    %v3212 = vunpack.c.h.b16 %v3139
    %v3213 = vunpack.c.l.b16 %v3140
    %v3214 = vunpack.c.h.b16 %v3140
    %v3215 = vunpack.c.l.b16 %v3141
    %v3216 = vunpack.c.h.b16 %v3141
    %v3217 = vunpack.c.l.b16 %v3142
    %v3218 = vunpack.c.h.b16 %v3142
    %v3219 = vunpack.c.l.b16 %v3143
    %v3220 = vunpack.c.h.b16 %v3143
    %v3221 = vunpack.c.l.b16 %v3144
    %v3222 = vunpack.c.h.b16 %v3144
    %v3223 = vunpack.c.l.b16 %v3145
    %v3224 = vunpack.c.h.b16 %v3145
    %v3225 = vpack.c.b16 %v3179, %v3177
    %v3226 = vpack.c.b16 %v3180, %v3178
    %v3227 = vpack.c.b16 %v3183, %v3181
    %v3228 = vpack.c.b16 %v3184, %v3182
    %v3229 = vpack.c.b16 %v3187, %v3185
    %v3230 = vpack.c.b16 %v3188, %v3186
    %v3231 = vpack.c.b16 %v3191, %v3189
    %v3232 = vpack.c.b16 %v3192, %v3190
    %v3233 = vpack.c.b16 %v3195, %v3193
    %v3234 = vpack.c.b16 %v3196, %v3194
    %v3235 = vpack.c.b16 %v3199, %v3197
    %v3236 = vpack.c.b16 %v3200, %v3198
    %v3237 = vpack.c.b16 %v3203, %v3201
    %v3238 = vpack.c.b16 %v3204, %v3202
    %v3239 = vpack.c.b16 %v3207, %v3205
    %v3240 = vpack.c.b16 %v3208, %v3206
    %v3241 = vpack.c.b16 %v3211, %v3209
    %v3242 = vpack.c.b16 %v3212, %v3210
    %v3243 = vpack.c.b16 %v3215, %v3213
    %v3244 = vpack.c.b16 %v3216, %v3214
    %v3245 = vpack.c.b16 %v3219, %v3217
    %v3246 = vpack.c.b16 %v3220, %v3218
    %v3247 = vpack.c.b16 %v3223, %v3221
    %v3248 = vpack.c.b16 %v3224, %v3222
    %3273 = vmatpush.bf16.msra.mxu0 %v3239
    %3274 = vmatpush.bf16.msra.mxu0 %v3237
    %3275 = vmatpush.bf16.msra.mxu0 %v3235
    %3276 = vmatpush.bf16.msra.mxu0 %v3233
    %3277 = vmatpush.bf16.msra.mxu0 %v3231
    %3278 = vmatpush.bf16.msra.mxu0 %v3229
    %3279 = vmatpush.bf16.msra.mxu0 %v3227
    %3280 = vmatpush.bf16.msra.mxu0 %v3225
    %3281 = vmatmul.bf16.gmra.mxu0 %v163
    %v3282 = vpop.f32.mrf.mxu0
    %v3283 = vadd.f32 %v3149, %v3282
    %v3284 = vpop.f32.mrf.mxu0
    %v3285 = vadd.f32 %v3149, %v3284
    %3286 = vdwg.mxu0
    %3287 = vmatpush.bf16.msra.mxu0 0
    %3288 = vmatpush.bf16.msra.mxu0 0
    %3289 = vmatpush.bf16.msra.mxu0 0
    %3290 = vmatpush.bf16.msra.mxu0 0
    %3291 = vmatpush.bf16.msra.mxu0 %v3247
    %3292 = vmatpush.bf16.msra.mxu0 %v3245
    %3293 = vmatpush.bf16.msra.mxu0 %v3243
    %3294 = vmatpush.bf16.msra.mxu0 %v3241
    %3295 = vmatmul.bf16.gmra.mxu0 %v288
    %v3296 = vpop.f32.mrf.mxu0
    %v3297 = vadd.f32 %v3283, %v3296
    %v3298 = vpop.f32.mrf.mxu0
    %v3299 = vadd.f32 %v3285, %v3298
    %3300 = vdwg.mxu0
    %3301 = vmatpush.bf16.msra.mxu0 %v3240
    %3302 = vmatpush.bf16.msra.mxu0 %v3238
    %3303 = vmatpush.bf16.msra.mxu0 %v3236
    %3304 = vmatpush.bf16.msra.mxu0 %v3234
    %3305 = vmatpush.bf16.msra.mxu0 %v3232
    %3306 = vmatpush.bf16.msra.mxu0 %v3230
    %3307 = vmatpush.bf16.msra.mxu0 %v3228
    %3308 = vmatpush.bf16.msra.mxu0 %v3226
    %3309 = vmatmul.bf16.gmra.mxu0 %v163
    %v3310 = vpop.f32.mrf.mxu0
    %v3311 = vadd.f32 %v3150, %v3310
    %v3312 = vpop.f32.mrf.mxu0
    %v3313 = vadd.f32 %v3150, %v3312
    %3314 = vdwg.mxu0
    %3315 = vmatpush.bf16.msra.mxu0 0
    %3316 = vmatpush.bf16.msra.mxu0 0
    %3317 = vmatpush.bf16.msra.mxu0 0
    %3318 = vmatpush.bf16.msra.mxu0 0
    %3319 = vmatpush.bf16.msra.mxu0 %v3248
    %3320 = vmatpush.bf16.msra.mxu0 %v3246
    %3321 = vmatpush.bf16.msra.mxu0 %v3244
    %3322 = vmatpush.bf16.msra.mxu0 %v3242
    %3323 = vmatmul.bf16.gmra.mxu0 %v288
    %v3324 = vpop.f32.mrf.mxu0
    %v3325 = vadd.f32 %v3311, %v3324
    %v3326 = vpop.f32.mrf.mxu0
    %v3327 = vadd.f32 %v3313, %v3326
    %3328 = vdwg.mxu0
    %v3329 = vpack.c.bf16 %v3325, %v3297
    %v3330 = vpack.c.bf16 %v3327, %v3299
    %s3331 = scalar_lea.vmem %s7, 32
    %3332 = vst [vmem:[%s3331] sm:$0xff] %v3329
    %3333 = vst [vmem:[%s3331 + $0x58] sm:$0xff] %v3330
    %v3334 = vld [vmem:[#allocation2] sm:$0xff]
    %v3335 = vld [vmem:[#allocation2 + $0x8] sm:$0xff]
    %v3336 = vld [vmem:[#allocation2 + $0x10] sm:$0xff]
    %v3337 = vld [vmem:[#allocation2 + $0x18] sm:$0xff]
    %v3338 = vld [vmem:[#allocation2 + $0x20] sm:$0xff]
    %v3339 = vld [vmem:[#allocation2 + $0x28] sm:$0xff]
    %v3340 = vld [vmem:[#allocation2 + $0x30] sm:$0xff]
    %v3341 = vld [vmem:[#allocation2 + $0x38] sm:$0xff]
    %s3342 = smul.u32 128, 4
    %s3343 = smul.addr %s3342, 4
    %s3344 = scalar_lea.vmem [#allocation7], %s3343
    %v3345 = vld [vmem:[%s3344] sm:$0xff]
    %v3346 = vld [vmem:[%s3344 + $0x8] sm:$0xff]
    %v3347 = vld [vmem:[%s3344 + $0x10] sm:$0xff]
    %v3348 = vld [vmem:[%s3344 + $0x18] sm:$0xff]
    %v3349 = vld [vmem:[%s3344 + $0x20] sm:$0xff]
    %v3350 = vld [vmem:[%s3344 + $0x28] sm:$0xff]
    %v3351 = vld [vmem:[%s3344 + $0x30] sm:$0xff]
    %v3352 = vld [vmem:[%s3344 + $0x38] sm:$0xff]
    %v3353 = vld [vmem:[%s3344 + $0x40] sm:$0xff]
    %v3354 = vld [vmem:[%s3344 + $0x48] sm:$0xff]
    %v3355 = vld [vmem:[%s3344 + $0x50] sm:$0xff]
    %v3356 = vld [vmem:[%s3344 + $0x58] sm:$0xff]
    %v3357 = vld [vmem:[%s3344 + $0x60] sm:$0xff]
    %v3358 = vld [vmem:[%s3344 + $0x68] sm:$0xff]
    %v3359 = vld [vmem:[%s3344 + $0x70] sm:$0xff]
    %v3360 = vld [vmem:[%s3344 + $0x78] sm:$0xff]
    %v3361 = vld [vmem:[%s3344 + $0x80] sm:$0xff]
    %v3362 = vld [vmem:[%s3344 + $0x88] sm:$0xff]
    %v3363 = vld [vmem:[%s3344 + $0x90] sm:$0xff]
    %v3364 = vld [vmem:[%s3344 + $0x98] sm:$0xff]
    %v3365 = vld [vmem:[%s3344 + $0xa0] sm:$0xff]
    %v3366 = vld [vmem:[%s3344 + $0xa8] sm:$0xff]
    %v3367 = vld [vmem:[%s3344 + $0xb0] sm:$0xff]
    %v3368 = vld [vmem:[%s3344 + $0xb8] sm:$0xff]
    %v3369 = vld [vmem:[%s3344 + $0xc0] sm:$0xff]
    %v3370 = vld [vmem:[%s3344 + $0xc8] sm:$0xff]
    %v3371 = vld [vmem:[%s3344 + $0xd0] sm:$0xff]
    %v3372 = vld [vmem:[%s3344 + $0xd8] sm:$0xff]
    %v3373 = vld [vmem:[%s3344 + $0xe0] sm:$0xff]
    %v3374 = vld [vmem:[%s3344 + $0xe8] sm:$0xff]
    %v3375 = vld [vmem:[%s3344 + $0xf0] sm:$0xff]
    %v3376 = vld [vmem:[%s3344 + $0xf8] sm:$0xff]
    %v3377 = vld [vmem:[%s3344 + $0x100] sm:$0xff]
    %v3378 = vld [vmem:[%s3344 + $0x108] sm:$0xff]
    %v3379 = vld [vmem:[%s3344 + $0x110] sm:$0xff]
    %v3380 = vld [vmem:[%s3344 + $0x118] sm:$0xff]
    %v3381 = vld [vmem:[%s3344 + $0x120] sm:$0xff]
    %v3382 = vld [vmem:[%s3344 + $0x128] sm:$0xff]
    %v3383 = vld [vmem:[%s3344 + $0x130] sm:$0xff]
    %v3384 = vld [vmem:[%s3344 + $0x138] sm:$0xff]
    %v3385 = vld [vmem:[%s3344 + $0x140] sm:$0xff]
    %v3386 = vld [vmem:[%s3344 + $0x148] sm:$0xff]
    %v3387 = vld [vmem:[%s3344 + $0x150] sm:$0xff]
    %v3388 = vld [vmem:[%s3344 + $0x158] sm:$0xff]
    %v3389 = vld [vmem:[%s3344 + $0x160] sm:$0xff]
    %v3390 = vld [vmem:[%s3344 + $0x168] sm:$0xff]
    %v3391 = vld [vmem:[%s3344 + $0x170] sm:$0xff]
    %v3392 = vld [vmem:[%s3344 + $0x178] sm:$0xff]
    %v3393 = vld [vmem:[%s3344 + $0x180] sm:$0xff]
    %v3394 = vld [vmem:[%s3344 + $0x188] sm:$0xff]
    %v3395 = vld [vmem:[%s3344 + $0x190] sm:$0xff]
    %v3396 = vld [vmem:[%s3344 + $0x198] sm:$0xff]
    %v3397 = vld [vmem:[%s3344 + $0x1a0] sm:$0xff]
    %v3398 = vld [vmem:[%s3344 + $0x1a8] sm:$0xff]
    %v3399 = vld [vmem:[%s3344 + $0x1b0] sm:$0xff]
    %v3400 = vld [vmem:[%s3344 + $0x1b8] sm:$0xff]
    %v3401 = vld [vmem:[%s3344 + $0x1c0] sm:$0xff]
    %v3402 = vld [vmem:[%s3344 + $0x1c8] sm:$0xff]
    %v3403 = vld [vmem:[%s3344 + $0x1d0] sm:$0xff]
    %v3404 = vld [vmem:[%s3344 + $0x1d8] sm:$0xff]
    %v3405 = vld [vmem:[%s3344 + $0x1e0] sm:$0xff]
    %v3406 = vld [vmem:[%s3344 + $0x1e8] sm:$0xff]
    %v3407 = vld [vmem:[%s3344 + $0x1f0] sm:$0xff]
    %v3408 = vld [vmem:[%s3344 + $0x1f8] sm:$0xff]
    %v3411 = vunpack.c.l.b16 %v3329
    %v3412 = vunpack.c.h.b16 %v3329
    %v3413 = vunpack.c.l.b16 %v3330
    %v3414 = vunpack.c.h.b16 %v3330
    %v3415 = vpack.c.b16 %v3413, %v3411
    %v3416 = vpack.c.b16 %v3414, %v3412
    %v3483 = vunpack.c.l.b16 %v3345
    %v3484 = vunpack.c.h.b16 %v3345
    %v3485 = vunpack.c.l.b16 %v3346
    %v3486 = vunpack.c.h.b16 %v3346
    %v3487 = vunpack.c.l.b16 %v3347
    %v3488 = vunpack.c.h.b16 %v3347
    %v3489 = vunpack.c.l.b16 %v3348
    %v3490 = vunpack.c.h.b16 %v3348
    %v3491 = vunpack.c.l.b16 %v3349
    %v3492 = vunpack.c.h.b16 %v3349
    %v3493 = vunpack.c.l.b16 %v3350
    %v3494 = vunpack.c.h.b16 %v3350
    %v3495 = vunpack.c.l.b16 %v3351
    %v3496 = vunpack.c.h.b16 %v3351
    %v3497 = vunpack.c.l.b16 %v3352
    %v3498 = vunpack.c.h.b16 %v3352
    %v3499 = vunpack.c.l.b16 %v3353
    %v3500 = vunpack.c.h.b16 %v3353
    %v3501 = vunpack.c.l.b16 %v3354
    %v3502 = vunpack.c.h.b16 %v3354
    %v3503 = vunpack.c.l.b16 %v3355
    %v3504 = vunpack.c.h.b16 %v3355
    %v3505 = vunpack.c.l.b16 %v3356
    %v3506 = vunpack.c.h.b16 %v3356
    %v3507 = vunpack.c.l.b16 %v3357
    %v3508 = vunpack.c.h.b16 %v3357
    %v3509 = vunpack.c.l.b16 %v3358
    %v3510 = vunpack.c.h.b16 %v3358
    %v3511 = vunpack.c.l.b16 %v3359
    %v3512 = vunpack.c.h.b16 %v3359
    %v3513 = vunpack.c.l.b16 %v3360
    %v3514 = vunpack.c.h.b16 %v3360
    %v3515 = vunpack.c.l.b16 %v3361
    %v3516 = vunpack.c.h.b16 %v3361
    %v3517 = vunpack.c.l.b16 %v3362
    %v3518 = vunpack.c.h.b16 %v3362
    %v3519 = vunpack.c.l.b16 %v3363
    %v3520 = vunpack.c.h.b16 %v3363
    %v3521 = vunpack.c.l.b16 %v3364
    %v3522 = vunpack.c.h.b16 %v3364
    %v3523 = vunpack.c.l.b16 %v3365
    %v3524 = vunpack.c.h.b16 %v3365
    %v3525 = vunpack.c.l.b16 %v3366
    %v3526 = vunpack.c.h.b16 %v3366
    %v3527 = vunpack.c.l.b16 %v3367
    %v3528 = vunpack.c.h.b16 %v3367
    %v3529 = vunpack.c.l.b16 %v3368
    %v3530 = vunpack.c.h.b16 %v3368
    %v3531 = vunpack.c.l.b16 %v3369
    %v3532 = vunpack.c.h.b16 %v3369
    %v3533 = vunpack.c.l.b16 %v3370
    %v3534 = vunpack.c.h.b16 %v3370
    %v3535 = vunpack.c.l.b16 %v3371
    %v3536 = vunpack.c.h.b16 %v3371
    %v3537 = vunpack.c.l.b16 %v3372
    %v3538 = vunpack.c.h.b16 %v3372
    %v3539 = vunpack.c.l.b16 %v3373
    %v3540 = vunpack.c.h.b16 %v3373
    %v3541 = vunpack.c.l.b16 %v3374
    %v3542 = vunpack.c.h.b16 %v3374
    %v3543 = vunpack.c.l.b16 %v3375
    %v3544 = vunpack.c.h.b16 %v3375
    %v3545 = vunpack.c.l.b16 %v3376
    %v3546 = vunpack.c.h.b16 %v3376
    %v3547 = vunpack.c.l.b16 %v3377
    %v3548 = vunpack.c.h.b16 %v3377
    %v3549 = vunpack.c.l.b16 %v3378
    %v3550 = vunpack.c.h.b16 %v3378
    %v3551 = vunpack.c.l.b16 %v3379
    %v3552 = vunpack.c.h.b16 %v3379
    %v3553 = vunpack.c.l.b16 %v3380
    %v3554 = vunpack.c.h.b16 %v3380
    %v3555 = vunpack.c.l.b16 %v3381
    %v3556 = vunpack.c.h.b16 %v3381
    %v3557 = vunpack.c.l.b16 %v3382
    %v3558 = vunpack.c.h.b16 %v3382
    %v3559 = vunpack.c.l.b16 %v3383
    %v3560 = vunpack.c.h.b16 %v3383
    %v3561 = vunpack.c.l.b16 %v3384
    %v3562 = vunpack.c.h.b16 %v3384
    %v3563 = vunpack.c.l.b16 %v3385
    %v3564 = vunpack.c.h.b16 %v3385
    %v3565 = vunpack.c.l.b16 %v3386
    %v3566 = vunpack.c.h.b16 %v3386
    %v3567 = vunpack.c.l.b16 %v3387
    %v3568 = vunpack.c.h.b16 %v3387
    %v3569 = vunpack.c.l.b16 %v3388
    %v3570 = vunpack.c.h.b16 %v3388
    %v3571 = vunpack.c.l.b16 %v3389
    %v3572 = vunpack.c.h.b16 %v3389
    %v3573 = vunpack.c.l.b16 %v3390
    %v3574 = vunpack.c.h.b16 %v3390
    %v3575 = vunpack.c.l.b16 %v3391
    %v3576 = vunpack.c.h.b16 %v3391
    %v3577 = vunpack.c.l.b16 %v3392
    %v3578 = vunpack.c.h.b16 %v3392
    %v3579 = vunpack.c.l.b16 %v3393
    %v3580 = vunpack.c.h.b16 %v3393
    %v3581 = vunpack.c.l.b16 %v3394
    %v3582 = vunpack.c.h.b16 %v3394
    %v3583 = vunpack.c.l.b16 %v3395
    %v3584 = vunpack.c.h.b16 %v3395
    %v3585 = vunpack.c.l.b16 %v3396
    %v3586 = vunpack.c.h.b16 %v3396
    %v3587 = vunpack.c.l.b16 %v3397
    %v3588 = vunpack.c.h.b16 %v3397
    %v3589 = vunpack.c.l.b16 %v3398
    %v3590 = vunpack.c.h.b16 %v3398
    %v3591 = vunpack.c.l.b16 %v3399
    %v3592 = vunpack.c.h.b16 %v3399
    %v3593 = vunpack.c.l.b16 %v3400
    %v3594 = vunpack.c.h.b16 %v3400
    %v3595 = vunpack.c.l.b16 %v3401
    %v3596 = vunpack.c.h.b16 %v3401
    %v3597 = vunpack.c.l.b16 %v3402
    %v3598 = vunpack.c.h.b16 %v3402
    %v3599 = vunpack.c.l.b16 %v3403
    %v3600 = vunpack.c.h.b16 %v3403
    %v3601 = vunpack.c.l.b16 %v3404
    %v3602 = vunpack.c.h.b16 %v3404
    %v3603 = vunpack.c.l.b16 %v3405
    %v3604 = vunpack.c.h.b16 %v3405
    %v3605 = vunpack.c.l.b16 %v3406
    %v3606 = vunpack.c.h.b16 %v3406
    %v3607 = vunpack.c.l.b16 %v3407
    %v3608 = vunpack.c.h.b16 %v3407
    %v3609 = vunpack.c.l.b16 %v3408
    %v3610 = vunpack.c.h.b16 %v3408
    %v3611 = vpack.c.b16 %v3487, %v3483
    %v3612 = vpack.c.b16 %v3488, %v3484
    %v3613 = vpack.c.b16 %v3489, %v3485
    %v3614 = vpack.c.b16 %v3490, %v3486
    %v3615 = vpack.c.b16 %v3495, %v3491
    %v3616 = vpack.c.b16 %v3496, %v3492
    %v3617 = vpack.c.b16 %v3497, %v3493
    %v3618 = vpack.c.b16 %v3498, %v3494
    %v3619 = vpack.c.b16 %v3503, %v3499
    %v3620 = vpack.c.b16 %v3504, %v3500
    %v3621 = vpack.c.b16 %v3505, %v3501
    %v3622 = vpack.c.b16 %v3506, %v3502
    %v3623 = vpack.c.b16 %v3511, %v3507
    %v3624 = vpack.c.b16 %v3512, %v3508
    %v3625 = vpack.c.b16 %v3513, %v3509
    %v3626 = vpack.c.b16 %v3514, %v3510
    %v3627 = vpack.c.b16 %v3519, %v3515
    %v3628 = vpack.c.b16 %v3520, %v3516
    %v3629 = vpack.c.b16 %v3521, %v3517
    %v3630 = vpack.c.b16 %v3522, %v3518
    %v3631 = vpack.c.b16 %v3527, %v3523
    %v3632 = vpack.c.b16 %v3528, %v3524
    %v3633 = vpack.c.b16 %v3529, %v3525
    %v3634 = vpack.c.b16 %v3530, %v3526
    %v3635 = vpack.c.b16 %v3535, %v3531
    %v3636 = vpack.c.b16 %v3536, %v3532
    %v3637 = vpack.c.b16 %v3537, %v3533
    %v3638 = vpack.c.b16 %v3538, %v3534
    %v3639 = vpack.c.b16 %v3543, %v3539
    %v3640 = vpack.c.b16 %v3544, %v3540
    %v3641 = vpack.c.b16 %v3545, %v3541
    %v3642 = vpack.c.b16 %v3546, %v3542
    %v3643 = vpack.c.b16 %v3551, %v3547
    %v3644 = vpack.c.b16 %v3552, %v3548
    %v3645 = vpack.c.b16 %v3553, %v3549
    %v3646 = vpack.c.b16 %v3554, %v3550
    %v3647 = vpack.c.b16 %v3559, %v3555
    %v3648 = vpack.c.b16 %v3560, %v3556
    %v3649 = vpack.c.b16 %v3561, %v3557
    %v3650 = vpack.c.b16 %v3562, %v3558
    %v3651 = vpack.c.b16 %v3567, %v3563
    %v3652 = vpack.c.b16 %v3568, %v3564
    %v3653 = vpack.c.b16 %v3569, %v3565
    %v3654 = vpack.c.b16 %v3570, %v3566
    %v3655 = vpack.c.b16 %v3575, %v3571
    %v3656 = vpack.c.b16 %v3576, %v3572
    %v3657 = vpack.c.b16 %v3577, %v3573
    %v3658 = vpack.c.b16 %v3578, %v3574
    %v3659 = vpack.c.b16 %v3583, %v3579
    %v3660 = vpack.c.b16 %v3584, %v3580
    %v3661 = vpack.c.b16 %v3585, %v3581
    %v3662 = vpack.c.b16 %v3586, %v3582
    %v3663 = vpack.c.b16 %v3591, %v3587
    %v3664 = vpack.c.b16 %v3592, %v3588
    %v3665 = vpack.c.b16 %v3593, %v3589
    %v3666 = vpack.c.b16 %v3594, %v3590
    %v3667 = vpack.c.b16 %v3599, %v3595
    %v3668 = vpack.c.b16 %v3600, %v3596
    %v3669 = vpack.c.b16 %v3601, %v3597
    %v3670 = vpack.c.b16 %v3602, %v3598
    %v3671 = vpack.c.b16 %v3607, %v3603
    %v3672 = vpack.c.b16 %v3608, %v3604
    %v3673 = vpack.c.b16 %v3609, %v3605
    %v3674 = vpack.c.b16 %v3610, %v3606
    %3739 = vmatpush.bf16.msra.mxu0 %v3639
    %3740 = vmatpush.bf16.msra.mxu0 %v3635
    %3741 = vmatpush.bf16.msra.mxu0 %v3631
    %3742 = vmatpush.bf16.msra.mxu0 %v3627
    %3743 = vmatpush.bf16.msra.mxu0 %v3623
    %3744 = vmatpush.bf16.msra.mxu0 %v3619
    %3745 = vmatpush.bf16.msra.mxu0 %v3615
    %3746 = vmatpush.bf16.msra.mxu0 %v3611
    %3747 = vmatmul.bf16.gmra.mxu0 %v3415
    %v3748 = vpop.f32.mrf.mxu0
    %v3749 = vadd.f32 0.0, %v3748
    %v3750 = vpop.f32.mrf.mxu0
    %v3751 = vadd.f32 0.0, %v3750
    %3752 = vdwg.mxu0
    %3753 = vmatpush.bf16.msra.mxu0 %v3671
    %3754 = vmatpush.bf16.msra.mxu0 %v3667
    %3755 = vmatpush.bf16.msra.mxu0 %v3663
    %3756 = vmatpush.bf16.msra.mxu0 %v3659
    %3757 = vmatpush.bf16.msra.mxu0 %v3655
    %3758 = vmatpush.bf16.msra.mxu0 %v3651
    %3759 = vmatpush.bf16.msra.mxu0 %v3647
    %3760 = vmatpush.bf16.msra.mxu0 %v3643
    %3761 = vmatmul.bf16.gmra.mxu0 %v3416
    %v3762 = vpop.f32.mrf.mxu0
    %v3763 = vadd.f32 %v3749, %v3762
    %v3764 = vpop.f32.mrf.mxu0
    %v3765 = vadd.f32 %v3751, %v3764
    %3766 = vdwg.mxu0
    %3767 = vmatpush.bf16.msra.mxu0 %v3640
    %3768 = vmatpush.bf16.msra.mxu0 %v3636
    %3769 = vmatpush.bf16.msra.mxu0 %v3632
    %3770 = vmatpush.bf16.msra.mxu0 %v3628
    %3771 = vmatpush.bf16.msra.mxu0 %v3624
    %3772 = vmatpush.bf16.msra.mxu0 %v3620
    %3773 = vmatpush.bf16.msra.mxu0 %v3616
    %3774 = vmatpush.bf16.msra.mxu0 %v3612
    %3775 = vmatmul.bf16.gmra.mxu0 %v3415
    %v3776 = vpop.f32.mrf.mxu0
    %v3777 = vadd.f32 0.0, %v3776
    %v3778 = vpop.f32.mrf.mxu0
    %v3779 = vadd.f32 0.0, %v3778
    %3780 = vdwg.mxu0
    %3781 = vmatpush.bf16.msra.mxu0 %v3672
    %3782 = vmatpush.bf16.msra.mxu0 %v3668
    %3783 = vmatpush.bf16.msra.mxu0 %v3664
    %3784 = vmatpush.bf16.msra.mxu0 %v3660
    %3785 = vmatpush.bf16.msra.mxu0 %v3656
    %3786 = vmatpush.bf16.msra.mxu0 %v3652
    %3787 = vmatpush.bf16.msra.mxu0 %v3648
    %3788 = vmatpush.bf16.msra.mxu0 %v3644
    %3789 = vmatmul.bf16.gmra.mxu0 %v3416
    %v3790 = vpop.f32.mrf.mxu0
    %v3791 = vadd.f32 %v3777, %v3790
    %v3792 = vpop.f32.mrf.mxu0
    %v3793 = vadd.f32 %v3779, %v3792
    %3794 = vdwg.mxu0
    %3795 = vmatpush.bf16.msra.mxu0 %v3641
    %3796 = vmatpush.bf16.msra.mxu0 %v3637
    %3797 = vmatpush.bf16.msra.mxu0 %v3633
    %3798 = vmatpush.bf16.msra.mxu0 %v3629
    %3799 = vmatpush.bf16.msra.mxu0 %v3625
    %3800 = vmatpush.bf16.msra.mxu0 %v3621
    %3801 = vmatpush.bf16.msra.mxu0 %v3617
    %3802 = vmatpush.bf16.msra.mxu0 %v3613
    %3803 = vmatmul.bf16.gmra.mxu0 %v3415
    %v3804 = vpop.f32.mrf.mxu0
    %v3805 = vadd.f32 0.0, %v3804
    %v3806 = vpop.f32.mrf.mxu0
    %v3807 = vadd.f32 0.0, %v3806
    %3808 = vdwg.mxu0
    %3809 = vmatpush.bf16.msra.mxu0 %v3673
    %3810 = vmatpush.bf16.msra.mxu0 %v3669
    %3811 = vmatpush.bf16.msra.mxu0 %v3665
    %3812 = vmatpush.bf16.msra.mxu0 %v3661
    %3813 = vmatpush.bf16.msra.mxu0 %v3657
    %3814 = vmatpush.bf16.msra.mxu0 %v3653
    %3815 = vmatpush.bf16.msra.mxu0 %v3649
    %3816 = vmatpush.bf16.msra.mxu0 %v3645
    %3817 = vmatmul.bf16.gmra.mxu0 %v3416
    %v3818 = vpop.f32.mrf.mxu0
    %v3819 = vadd.f32 %v3805, %v3818
    %v3820 = vpop.f32.mrf.mxu0
    %v3821 = vadd.f32 %v3807, %v3820
    %3822 = vdwg.mxu0
    %3823 = vmatpush.bf16.msra.mxu0 %v3642
    %3824 = vmatpush.bf16.msra.mxu0 %v3638
    %3825 = vmatpush.bf16.msra.mxu0 %v3634
    %3826 = vmatpush.bf16.msra.mxu0 %v3630
    %3827 = vmatpush.bf16.msra.mxu0 %v3626
    %3828 = vmatpush.bf16.msra.mxu0 %v3622
    %3829 = vmatpush.bf16.msra.mxu0 %v3618
    %3830 = vmatpush.bf16.msra.mxu0 %v3614
    %3831 = vmatmul.bf16.gmra.mxu0 %v3415
    %v3832 = vpop.f32.mrf.mxu0
    %v3833 = vadd.f32 0.0, %v3832
    %v3834 = vpop.f32.mrf.mxu0
    %v3835 = vadd.f32 0.0, %v3834
    %3836 = vdwg.mxu0
    %3837 = vmatpush.bf16.msra.mxu0 %v3674
    %3838 = vmatpush.bf16.msra.mxu0 %v3670
    %3839 = vmatpush.bf16.msra.mxu0 %v3666
    %3840 = vmatpush.bf16.msra.mxu0 %v3662
    %3841 = vmatpush.bf16.msra.mxu0 %v3658
    %3842 = vmatpush.bf16.msra.mxu0 %v3654
    %3843 = vmatpush.bf16.msra.mxu0 %v3650
    %3844 = vmatpush.bf16.msra.mxu0 %v3646
    %3845 = vmatmul.bf16.gmra.mxu0 %v3416
    %v3846 = vpop.f32.mrf.mxu0
    %v3847 = vadd.f32 %v3833, %v3846
    %v3848 = vpop.f32.mrf.mxu0
    %v3849 = vadd.f32 %v3835, %v3848
    %3850 = vdwg.mxu0
    %v3851 = vadd.f32 %v3334, %v3763
    %v3852 = vadd.f32 %v3335, %v3791
    %v3853 = vadd.f32 %v3336, %v3819
    %v3854 = vadd.f32 %v3337, %v3847
    %v3855 = vadd.f32 %v3338, %v3765
    %v3856 = vadd.f32 %v3339, %v3793
    %v3857 = vadd.f32 %v3340, %v3821
    %v3858 = vadd.f32 %v3341, %v3849
    %3859 = vst [vmem:[#allocation2] sm:$0xff] %v3851
    %3860 = vst [vmem:[#allocation2 + $0x8] sm:$0xff] %v3852
    %3861 = vst [vmem:[#allocation2 + $0x10] sm:$0xff] %v3853
    %3862 = vst [vmem:[#allocation2 + $0x18] sm:$0xff] %v3854
    %3863 = vst [vmem:[#allocation2 + $0x20] sm:$0xff] %v3855
    %3864 = vst [vmem:[#allocation2 + $0x28] sm:$0xff] %v3856
    %3865 = vst [vmem:[#allocation2 + $0x30] sm:$0xff] %v3857
    %3866 = vst [vmem:[#allocation2 + $0x38] sm:$0xff] %v3858
    %s3867 = scalar_lea.vmem [#allocation3], 40
    %v3868 = vld [vmem:[%s3867] sm:$0xff]
    %v3869 = vld [vmem:[%s3867 + $0x58] sm:$0xff]
    %v3870 = vld [vmem:[%s3867 + $0xb0] sm:$0xff]
    %v3871 = vld [vmem:[%s3867 + $0x108] sm:$0xff]
    %v3872 = vld [vmem:[%s3867 + $0x160] sm:$0xff]
    %v3873 = vld [vmem:[%s3867 + $0x1b8] sm:$0xff]
    %v3874 = vld [vmem:[%s3867 + $0x210] sm:$0xff]
    %v3875 = vld [vmem:[%s3867 + $0x268] sm:$0xff]
    %v3876 = vld [vmem:[%s3867 + $0x2c0] sm:$0xff]
    %v3877 = vld [vmem:[%s3867 + $0x318] sm:$0xff]
    %v3878 = vld [vmem:[%s3867 + $0x370] sm:$0xff]
    %v3879 = vld [vmem:[%s3867 + $0x3c8] sm:$0xff]
    %v3880 = vld [vmem:[%s3867 + $0x420] sm:$0xff]
    %v3881 = vld [vmem:[%s3867 + $0x478] sm:$0xff]
    %v3882 = vld [vmem:[%s3867 + $0x4d0] sm:$0xff]
    %v3883 = vld [vmem:[%s3867 + $0x528] sm:$0xff]
    %v3884 = vld [vmem:[%s3867 + $0x580] sm:$0xff]
    %v3885 = vld [vmem:[%s3867 + $0x5d8] sm:$0xff]
    %v3886 = vld [vmem:[%s3867 + $0x630] sm:$0xff]
    %v3887 = vld [vmem:[%s3867 + $0x688] sm:$0xff]
    %v3888 = vld [vmem:[%s3867 + $0x6e0] sm:$0xff]
    %v3889 = vld [vmem:[%s3867 + $0x738] sm:$0xff]
    %v3890 = vld [vmem:[%s3867 + $0x790] sm:$0xff]
    %v3891 = vld [vmem:[%s3867 + $0x7e8] sm:$0xff]
    %s3892 = scalar_lea.vmem [#allocation5], 10
    %v3893 = vld [vmem:[%s3892] sm:$0x3]
    %v3895 = vperm.slane %v3893, 0
    %v3896 = vperm.slane %v3893, 1
    %v3923 = vunpack.c.l.b16 %v3868
    %v3924 = vunpack.c.h.b16 %v3868
    %v3925 = vunpack.c.l.b16 %v3869
    %v3926 = vunpack.c.h.b16 %v3869
    %v3927 = vunpack.c.l.b16 %v3870
    %v3928 = vunpack.c.h.b16 %v3870
    %v3929 = vunpack.c.l.b16 %v3871
    %v3930 = vunpack.c.h.b16 %v3871
    %v3931 = vunpack.c.l.b16 %v3872
    %v3932 = vunpack.c.h.b16 %v3872
    %v3933 = vunpack.c.l.b16 %v3873
    %v3934 = vunpack.c.h.b16 %v3873
    %v3935 = vunpack.c.l.b16 %v3874
    %v3936 = vunpack.c.h.b16 %v3874
    %v3937 = vunpack.c.l.b16 %v3875
    %v3938 = vunpack.c.h.b16 %v3875
    %v3939 = vunpack.c.l.b16 %v3876
    %v3940 = vunpack.c.h.b16 %v3876
    %v3941 = vunpack.c.l.b16 %v3877
    %v3942 = vunpack.c.h.b16 %v3877
    %v3943 = vunpack.c.l.b16 %v3878
    %v3944 = vunpack.c.h.b16 %v3878
    %v3945 = vunpack.c.l.b16 %v3879
    %v3946 = vunpack.c.h.b16 %v3879
    %v3947 = vunpack.c.l.b16 %v3880
    %v3948 = vunpack.c.h.b16 %v3880
    %v3949 = vunpack.c.l.b16 %v3881
    %v3950 = vunpack.c.h.b16 %v3881
    %v3951 = vunpack.c.l.b16 %v3882
    %v3952 = vunpack.c.h.b16 %v3882
    %v3953 = vunpack.c.l.b16 %v3883
    %v3954 = vunpack.c.h.b16 %v3883
    %v3955 = vunpack.c.l.b16 %v3884
    %v3956 = vunpack.c.h.b16 %v3884
    %v3957 = vunpack.c.l.b16 %v3885
    %v3958 = vunpack.c.h.b16 %v3885
    %v3959 = vunpack.c.l.b16 %v3886
    %v3960 = vunpack.c.h.b16 %v3886
    %v3961 = vunpack.c.l.b16 %v3887
    %v3962 = vunpack.c.h.b16 %v3887
    %v3963 = vunpack.c.l.b16 %v3888
    %v3964 = vunpack.c.h.b16 %v3888
    %v3965 = vunpack.c.l.b16 %v3889
    %v3966 = vunpack.c.h.b16 %v3889
    %v3967 = vunpack.c.l.b16 %v3890
    %v3968 = vunpack.c.h.b16 %v3890
    %v3969 = vunpack.c.l.b16 %v3891
    %v3970 = vunpack.c.h.b16 %v3891
    %v3971 = vpack.c.b16 %v3925, %v3923
    %v3972 = vpack.c.b16 %v3926, %v3924
    %v3973 = vpack.c.b16 %v3929, %v3927
    %v3974 = vpack.c.b16 %v3930, %v3928
    %v3975 = vpack.c.b16 %v3933, %v3931
    %v3976 = vpack.c.b16 %v3934, %v3932
    %v3977 = vpack.c.b16 %v3937, %v3935
    %v3978 = vpack.c.b16 %v3938, %v3936
    %v3979 = vpack.c.b16 %v3941, %v3939
    %v3980 = vpack.c.b16 %v3942, %v3940
    %v3981 = vpack.c.b16 %v3945, %v3943
    %v3982 = vpack.c.b16 %v3946, %v3944
    %v3983 = vpack.c.b16 %v3949, %v3947
    %v3984 = vpack.c.b16 %v3950, %v3948
    %v3985 = vpack.c.b16 %v3953, %v3951
    %v3986 = vpack.c.b16 %v3954, %v3952
    %v3987 = vpack.c.b16 %v3957, %v3955
    %v3988 = vpack.c.b16 %v3958, %v3956
    %v3989 = vpack.c.b16 %v3961, %v3959
    %v3990 = vpack.c.b16 %v3962, %v3960
    %v3991 = vpack.c.b16 %v3965, %v3963
    %v3992 = vpack.c.b16 %v3966, %v3964
    %v3993 = vpack.c.b16 %v3969, %v3967
    %v3994 = vpack.c.b16 %v3970, %v3968
    %4019 = vmatpush.bf16.msra.mxu0 %v3985
    %4020 = vmatpush.bf16.msra.mxu0 %v3983
    %4021 = vmatpush.bf16.msra.mxu0 %v3981
    %4022 = vmatpush.bf16.msra.mxu0 %v3979
    %4023 = vmatpush.bf16.msra.mxu0 %v3977
    %4024 = vmatpush.bf16.msra.mxu0 %v3975
    %4025 = vmatpush.bf16.msra.mxu0 %v3973
    %4026 = vmatpush.bf16.msra.mxu0 %v3971
    %4027 = vmatmul.bf16.gmra.mxu0 %v163
    %v4028 = vpop.f32.mrf.mxu0
    %v4029 = vadd.f32 %v3895, %v4028
    %v4030 = vpop.f32.mrf.mxu0
    %v4031 = vadd.f32 %v3895, %v4030
    %4032 = vdwg.mxu0
    %4033 = vmatpush.bf16.msra.mxu0 0
    %4034 = vmatpush.bf16.msra.mxu0 0
    %4035 = vmatpush.bf16.msra.mxu0 0
    %4036 = vmatpush.bf16.msra.mxu0 0
    %4037 = vmatpush.bf16.msra.mxu0 %v3993
    %4038 = vmatpush.bf16.msra.mxu0 %v3991
    %4039 = vmatpush.bf16.msra.mxu0 %v3989
    %4040 = vmatpush.bf16.msra.mxu0 %v3987
    %4041 = vmatmul.bf16.gmra.mxu0 %v288
    %v4042 = vpop.f32.mrf.mxu0
    %v4043 = vadd.f32 %v4029, %v4042
    %v4044 = vpop.f32.mrf.mxu0
    %v4045 = vadd.f32 %v4031, %v4044
    %4046 = vdwg.mxu0
    %4047 = vmatpush.bf16.msra.mxu0 %v3986
    %4048 = vmatpush.bf16.msra.mxu0 %v3984
    %4049 = vmatpush.bf16.msra.mxu0 %v3982
    %4050 = vmatpush.bf16.msra.mxu0 %v3980
    %4051 = vmatpush.bf16.msra.mxu0 %v3978
    %4052 = vmatpush.bf16.msra.mxu0 %v3976
    %4053 = vmatpush.bf16.msra.mxu0 %v3974
    %4054 = vmatpush.bf16.msra.mxu0 %v3972
    %4055 = vmatmul.bf16.gmra.mxu0 %v163
    %v4056 = vpop.f32.mrf.mxu0
    %v4057 = vadd.f32 %v3896, %v4056
    %v4058 = vpop.f32.mrf.mxu0
    %v4059 = vadd.f32 %v3896, %v4058
    %4060 = vdwg.mxu0
    %4061 = vmatpush.bf16.msra.mxu0 0
    %4062 = vmatpush.bf16.msra.mxu0 0
    %4063 = vmatpush.bf16.msra.mxu0 0
    %4064 = vmatpush.bf16.msra.mxu0 0
    %4065 = vmatpush.bf16.msra.mxu0 %v3994
    %4066 = vmatpush.bf16.msra.mxu0 %v3992
    %4067 = vmatpush.bf16.msra.mxu0 %v3990
    %4068 = vmatpush.bf16.msra.mxu0 %v3988
    %4069 = vmatmul.bf16.gmra.mxu0 %v288
    %v4070 = vpop.f32.mrf.mxu0
    %v4071 = vadd.f32 %v4057, %v4070
    %v4072 = vpop.f32.mrf.mxu0
    %v4073 = vadd.f32 %v4059, %v4072
    %4074 = vdwg.mxu0
    %v4075 = vpack.c.bf16 %v4071, %v4043
    %v4076 = vpack.c.bf16 %v4073, %v4045
    %s4077 = scalar_lea.vmem %s7, 40
    %4078 = vst [vmem:[%s4077] sm:$0xff] %v4075
    %4079 = vst [vmem:[%s4077 + $0x58] sm:$0xff] %v4076
    %v4080 = vld [vmem:[#allocation2] sm:$0xff]
    %v4081 = vld [vmem:[#allocation2 + $0x8] sm:$0xff]
    %v4082 = vld [vmem:[#allocation2 + $0x10] sm:$0xff]
    %v4083 = vld [vmem:[#allocation2 + $0x18] sm:$0xff]
    %v4084 = vld [vmem:[#allocation2 + $0x20] sm:$0xff]
    %v4085 = vld [vmem:[#allocation2 + $0x28] sm:$0xff]
    %v4086 = vld [vmem:[#allocation2 + $0x30] sm:$0xff]
    %v4087 = vld [vmem:[#allocation2 + $0x38] sm:$0xff]
    %s4088 = smul.u32 160, 4
    %s4089 = smul.addr %s4088, 4
    %s4090 = scalar_lea.vmem [#allocation7], %s4089
    %v4091 = vld [vmem:[%s4090] sm:$0xff]
    %v4092 = vld [vmem:[%s4090 + $0x8] sm:$0xff]
    %v4093 = vld [vmem:[%s4090 + $0x10] sm:$0xff]
    %v4094 = vld [vmem:[%s4090 + $0x18] sm:$0xff]
    %v4095 = vld [vmem:[%s4090 + $0x20] sm:$0xff]
    %v4096 = vld [vmem:[%s4090 + $0x28] sm:$0xff]
    %v4097 = vld [vmem:[%s4090 + $0x30] sm:$0xff]
    %v4098 = vld [vmem:[%s4090 + $0x38] sm:$0xff]
    %v4099 = vld [vmem:[%s4090 + $0x40] sm:$0xff]
    %v4100 = vld [vmem:[%s4090 + $0x48] sm:$0xff]
    %v4101 = vld [vmem:[%s4090 + $0x50] sm:$0xff]
    %v4102 = vld [vmem:[%s4090 + $0x58] sm:$0xff]
    %v4103 = vld [vmem:[%s4090 + $0x60] sm:$0xff]
    %v4104 = vld [vmem:[%s4090 + $0x68] sm:$0xff]
    %v4105 = vld [vmem:[%s4090 + $0x70] sm:$0xff]
    %v4106 = vld [vmem:[%s4090 + $0x78] sm:$0xff]
    %v4107 = vld [vmem:[%s4090 + $0x80] sm:$0xff]
    %v4108 = vld [vmem:[%s4090 + $0x88] sm:$0xff]
    %v4109 = vld [vmem:[%s4090 + $0x90] sm:$0xff]
    %v4110 = vld [vmem:[%s4090 + $0x98] sm:$0xff]
    %v4111 = vld [vmem:[%s4090 + $0xa0] sm:$0xff]
    %v4112 = vld [vmem:[%s4090 + $0xa8] sm:$0xff]
    %v4113 = vld [vmem:[%s4090 + $0xb0] sm:$0xff]
    %v4114 = vld [vmem:[%s4090 + $0xb8] sm:$0xff]
    %v4115 = vld [vmem:[%s4090 + $0xc0] sm:$0xff]
    %v4116 = vld [vmem:[%s4090 + $0xc8] sm:$0xff]
    %v4117 = vld [vmem:[%s4090 + $0xd0] sm:$0xff]
    %v4118 = vld [vmem:[%s4090 + $0xd8] sm:$0xff]
    %v4119 = vld [vmem:[%s4090 + $0xe0] sm:$0xff]
    %v4120 = vld [vmem:[%s4090 + $0xe8] sm:$0xff]
    %v4121 = vld [vmem:[%s4090 + $0xf0] sm:$0xff]
    %v4122 = vld [vmem:[%s4090 + $0xf8] sm:$0xff]
    %v4123 = vld [vmem:[%s4090 + $0x100] sm:$0xff]
    %v4124 = vld [vmem:[%s4090 + $0x108] sm:$0xff]
    %v4125 = vld [vmem:[%s4090 + $0x110] sm:$0xff]
    %v4126 = vld [vmem:[%s4090 + $0x118] sm:$0xff]
    %v4127 = vld [vmem:[%s4090 + $0x120] sm:$0xff]
    %v4128 = vld [vmem:[%s4090 + $0x128] sm:$0xff]
    %v4129 = vld [vmem:[%s4090 + $0x130] sm:$0xff]
    %v4130 = vld [vmem:[%s4090 + $0x138] sm:$0xff]
    %v4131 = vld [vmem:[%s4090 + $0x140] sm:$0xff]
    %v4132 = vld [vmem:[%s4090 + $0x148] sm:$0xff]
    %v4133 = vld [vmem:[%s4090 + $0x150] sm:$0xff]
    %v4134 = vld [vmem:[%s4090 + $0x158] sm:$0xff]
    %v4135 = vld [vmem:[%s4090 + $0x160] sm:$0xff]
    %v4136 = vld [vmem:[%s4090 + $0x168] sm:$0xff]
    %v4137 = vld [vmem:[%s4090 + $0x170] sm:$0xff]
    %v4138 = vld [vmem:[%s4090 + $0x178] sm:$0xff]
    %v4139 = vld [vmem:[%s4090 + $0x180] sm:$0xff]
    %v4140 = vld [vmem:[%s4090 + $0x188] sm:$0xff]
    %v4141 = vld [vmem:[%s4090 + $0x190] sm:$0xff]
    %v4142 = vld [vmem:[%s4090 + $0x198] sm:$0xff]
    %v4143 = vld [vmem:[%s4090 + $0x1a0] sm:$0xff]
    %v4144 = vld [vmem:[%s4090 + $0x1a8] sm:$0xff]
    %v4145 = vld [vmem:[%s4090 + $0x1b0] sm:$0xff]
    %v4146 = vld [vmem:[%s4090 + $0x1b8] sm:$0xff]
    %v4147 = vld [vmem:[%s4090 + $0x1c0] sm:$0xff]
    %v4148 = vld [vmem:[%s4090 + $0x1c8] sm:$0xff]
    %v4149 = vld [vmem:[%s4090 + $0x1d0] sm:$0xff]
    %v4150 = vld [vmem:[%s4090 + $0x1d8] sm:$0xff]
    %v4151 = vld [vmem:[%s4090 + $0x1e0] sm:$0xff]
    %v4152 = vld [vmem:[%s4090 + $0x1e8] sm:$0xff]
    %v4153 = vld [vmem:[%s4090 + $0x1f0] sm:$0xff]
    %v4154 = vld [vmem:[%s4090 + $0x1f8] sm:$0xff]
    %v4157 = vunpack.c.l.b16 %v4075
    %v4158 = vunpack.c.h.b16 %v4075
    %v4159 = vunpack.c.l.b16 %v4076
    %v4160 = vunpack.c.h.b16 %v4076
    %v4161 = vpack.c.b16 %v4159, %v4157
    %v4162 = vpack.c.b16 %v4160, %v4158
    %v4229 = vunpack.c.l.b16 %v4091
    %v4230 = vunpack.c.h.b16 %v4091
    %v4231 = vunpack.c.l.b16 %v4092
    %v4232 = vunpack.c.h.b16 %v4092
    %v4233 = vunpack.c.l.b16 %v4093
    %v4234 = vunpack.c.h.b16 %v4093
    %v4235 = vunpack.c.l.b16 %v4094
    %v4236 = vunpack.c.h.b16 %v4094
    %v4237 = vunpack.c.l.b16 %v4095
    %v4238 = vunpack.c.h.b16 %v4095
    %v4239 = vunpack.c.l.b16 %v4096
    %v4240 = vunpack.c.h.b16 %v4096
    %v4241 = vunpack.c.l.b16 %v4097
    %v4242 = vunpack.c.h.b16 %v4097
    %v4243 = vunpack.c.l.b16 %v4098
    %v4244 = vunpack.c.h.b16 %v4098
    %v4245 = vunpack.c.l.b16 %v4099
    %v4246 = vunpack.c.h.b16 %v4099
    %v4247 = vunpack.c.l.b16 %v4100
    %v4248 = vunpack.c.h.b16 %v4100
    %v4249 = vunpack.c.l.b16 %v4101
    %v4250 = vunpack.c.h.b16 %v4101
    %v4251 = vunpack.c.l.b16 %v4102
    %v4252 = vunpack.c.h.b16 %v4102
    %v4253 = vunpack.c.l.b16 %v4103
    %v4254 = vunpack.c.h.b16 %v4103
    %v4255 = vunpack.c.l.b16 %v4104
    %v4256 = vunpack.c.h.b16 %v4104
    %v4257 = vunpack.c.l.b16 %v4105
    %v4258 = vunpack.c.h.b16 %v4105
    %v4259 = vunpack.c.l.b16 %v4106
    %v4260 = vunpack.c.h.b16 %v4106
    %v4261 = vunpack.c.l.b16 %v4107
    %v4262 = vunpack.c.h.b16 %v4107
    %v4263 = vunpack.c.l.b16 %v4108
    %v4264 = vunpack.c.h.b16 %v4108
    %v4265 = vunpack.c.l.b16 %v4109
    %v4266 = vunpack.c.h.b16 %v4109
    %v4267 = vunpack.c.l.b16 %v4110
    %v4268 = vunpack.c.h.b16 %v4110
    %v4269 = vunpack.c.l.b16 %v4111
    %v4270 = vunpack.c.h.b16 %v4111
    %v4271 = vunpack.c.l.b16 %v4112
    %v4272 = vunpack.c.h.b16 %v4112
    %v4273 = vunpack.c.l.b16 %v4113
    %v4274 = vunpack.c.h.b16 %v4113
    %v4275 = vunpack.c.l.b16 %v4114
    %v4276 = vunpack.c.h.b16 %v4114
    %v4277 = vunpack.c.l.b16 %v4115
    %v4278 = vunpack.c.h.b16 %v4115
    %v4279 = vunpack.c.l.b16 %v4116
    %v4280 = vunpack.c.h.b16 %v4116
    %v4281 = vunpack.c.l.b16 %v4117
    %v4282 = vunpack.c.h.b16 %v4117
    %v4283 = vunpack.c.l.b16 %v4118
    %v4284 = vunpack.c.h.b16 %v4118
    %v4285 = vunpack.c.l.b16 %v4119
    %v4286 = vunpack.c.h.b16 %v4119
    %v4287 = vunpack.c.l.b16 %v4120
    %v4288 = vunpack.c.h.b16 %v4120
    %v4289 = vunpack.c.l.b16 %v4121
    %v4290 = vunpack.c.h.b16 %v4121
    %v4291 = vunpack.c.l.b16 %v4122
    %v4292 = vunpack.c.h.b16 %v4122
    %v4293 = vunpack.c.l.b16 %v4123
    %v4294 = vunpack.c.h.b16 %v4123
    %v4295 = vunpack.c.l.b16 %v4124
    %v4296 = vunpack.c.h.b16 %v4124
    %v4297 = vunpack.c.l.b16 %v4125
    %v4298 = vunpack.c.h.b16 %v4125
    %v4299 = vunpack.c.l.b16 %v4126
    %v4300 = vunpack.c.h.b16 %v4126
    %v4301 = vunpack.c.l.b16 %v4127
    %v4302 = vunpack.c.h.b16 %v4127
    %v4303 = vunpack.c.l.b16 %v4128
    %v4304 = vunpack.c.h.b16 %v4128
    %v4305 = vunpack.c.l.b16 %v4129
    %v4306 = vunpack.c.h.b16 %v4129
    %v4307 = vunpack.c.l.b16 %v4130
    %v4308 = vunpack.c.h.b16 %v4130
    %v4309 = vunpack.c.l.b16 %v4131
    %v4310 = vunpack.c.h.b16 %v4131
    %v4311 = vunpack.c.l.b16 %v4132
    %v4312 = vunpack.c.h.b16 %v4132
    %v4313 = vunpack.c.l.b16 %v4133
    %v4314 = vunpack.c.h.b16 %v4133
    %v4315 = vunpack.c.l.b16 %v4134
    %v4316 = vunpack.c.h.b16 %v4134
    %v4317 = vunpack.c.l.b16 %v4135
    %v4318 = vunpack.c.h.b16 %v4135
    %v4319 = vunpack.c.l.b16 %v4136
    %v4320 = vunpack.c.h.b16 %v4136
    %v4321 = vunpack.c.l.b16 %v4137
    %v4322 = vunpack.c.h.b16 %v4137
    %v4323 = vunpack.c.l.b16 %v4138
    %v4324 = vunpack.c.h.b16 %v4138
    %v4325 = vunpack.c.l.b16 %v4139
    %v4326 = vunpack.c.h.b16 %v4139
    %v4327 = vunpack.c.l.b16 %v4140
    %v4328 = vunpack.c.h.b16 %v4140
    %v4329 = vunpack.c.l.b16 %v4141
    %v4330 = vunpack.c.h.b16 %v4141
    %v4331 = vunpack.c.l.b16 %v4142
    %v4332 = vunpack.c.h.b16 %v4142
    %v4333 = vunpack.c.l.b16 %v4143
    %v4334 = vunpack.c.h.b16 %v4143
    %v4335 = vunpack.c.l.b16 %v4144
    %v4336 = vunpack.c.h.b16 %v4144
    %v4337 = vunpack.c.l.b16 %v4145
    %v4338 = vunpack.c.h.b16 %v4145
    %v4339 = vunpack.c.l.b16 %v4146
    %v4340 = vunpack.c.h.b16 %v4146
    %v4341 = vunpack.c.l.b16 %v4147
    %v4342 = vunpack.c.h.b16 %v4147
    %v4343 = vunpack.c.l.b16 %v4148
    %v4344 = vunpack.c.h.b16 %v4148
    %v4345 = vunpack.c.l.b16 %v4149
    %v4346 = vunpack.c.h.b16 %v4149
    %v4347 = vunpack.c.l.b16 %v4150
    %v4348 = vunpack.c.h.b16 %v4150
    %v4349 = vunpack.c.l.b16 %v4151
    %v4350 = vunpack.c.h.b16 %v4151
    %v4351 = vunpack.c.l.b16 %v4152
    %v4352 = vunpack.c.h.b16 %v4152
    %v4353 = vunpack.c.l.b16 %v4153
    %v4354 = vunpack.c.h.b16 %v4153
    %v4355 = vunpack.c.l.b16 %v4154
    %v4356 = vunpack.c.h.b16 %v4154
    %v4357 = vpack.c.b16 %v4233, %v4229
    %v4358 = vpack.c.b16 %v4234, %v4230
    %v4359 = vpack.c.b16 %v4235, %v4231
    %v4360 = vpack.c.b16 %v4236, %v4232
    %v4361 = vpack.c.b16 %v4241, %v4237
    %v4362 = vpack.c.b16 %v4242, %v4238
    %v4363 = vpack.c.b16 %v4243, %v4239
    %v4364 = vpack.c.b16 %v4244, %v4240
    %v4365 = vpack.c.b16 %v4249, %v4245
    %v4366 = vpack.c.b16 %v4250, %v4246
    %v4367 = vpack.c.b16 %v4251, %v4247
    %v4368 = vpack.c.b16 %v4252, %v4248
    %v4369 = vpack.c.b16 %v4257, %v4253
    %v4370 = vpack.c.b16 %v4258, %v4254
    %v4371 = vpack.c.b16 %v4259, %v4255
    %v4372 = vpack.c.b16 %v4260, %v4256
    %v4373 = vpack.c.b16 %v4265, %v4261
    %v4374 = vpack.c.b16 %v4266, %v4262
    %v4375 = vpack.c.b16 %v4267, %v4263
    %v4376 = vpack.c.b16 %v4268, %v4264
    %v4377 = vpack.c.b16 %v4273, %v4269
    %v4378 = vpack.c.b16 %v4274, %v4270
    %v4379 = vpack.c.b16 %v4275, %v4271
    %v4380 = vpack.c.b16 %v4276, %v4272
    %v4381 = vpack.c.b16 %v4281, %v4277
    %v4382 = vpack.c.b16 %v4282, %v4278
    %v4383 = vpack.c.b16 %v4283, %v4279
    %v4384 = vpack.c.b16 %v4284, %v4280
    %v4385 = vpack.c.b16 %v4289, %v4285
    %v4386 = vpack.c.b16 %v4290, %v4286
    %v4387 = vpack.c.b16 %v4291, %v4287
    %v4388 = vpack.c.b16 %v4292, %v4288
    %v4389 = vpack.c.b16 %v4297, %v4293
    %v4390 = vpack.c.b16 %v4298, %v4294
    %v4391 = vpack.c.b16 %v4299, %v4295
    %v4392 = vpack.c.b16 %v4300, %v4296
    %v4393 = vpack.c.b16 %v4305, %v4301
    %v4394 = vpack.c.b16 %v4306, %v4302
    %v4395 = vpack.c.b16 %v4307, %v4303
    %v4396 = vpack.c.b16 %v4308, %v4304
    %v4397 = vpack.c.b16 %v4313, %v4309
    %v4398 = vpack.c.b16 %v4314, %v4310
    %v4399 = vpack.c.b16 %v4315, %v4311
    %v4400 = vpack.c.b16 %v4316, %v4312
    %v4401 = vpack.c.b16 %v4321, %v4317
    %v4402 = vpack.c.b16 %v4322, %v4318
    %v4403 = vpack.c.b16 %v4323, %v4319
    %v4404 = vpack.c.b16 %v4324, %v4320
    %v4405 = vpack.c.b16 %v4329, %v4325
    %v4406 = vpack.c.b16 %v4330, %v4326
    %v4407 = vpack.c.b16 %v4331, %v4327
    %v4408 = vpack.c.b16 %v4332, %v4328
    %v4409 = vpack.c.b16 %v4337, %v4333
    %v4410 = vpack.c.b16 %v4338, %v4334
    %v4411 = vpack.c.b16 %v4339, %v4335
    %v4412 = vpack.c.b16 %v4340, %v4336
    %v4413 = vpack.c.b16 %v4345, %v4341
    %v4414 = vpack.c.b16 %v4346, %v4342
    %v4415 = vpack.c.b16 %v4347, %v4343
    %v4416 = vpack.c.b16 %v4348, %v4344
    %v4417 = vpack.c.b16 %v4353, %v4349
    %v4418 = vpack.c.b16 %v4354, %v4350
    %v4419 = vpack.c.b16 %v4355, %v4351
    %v4420 = vpack.c.b16 %v4356, %v4352
    %4485 = vmatpush.bf16.msra.mxu0 %v4385
    %4486 = vmatpush.bf16.msra.mxu0 %v4381
    %4487 = vmatpush.bf16.msra.mxu0 %v4377
    %4488 = vmatpush.bf16.msra.mxu0 %v4373
    %4489 = vmatpush.bf16.msra.mxu0 %v4369
    %4490 = vmatpush.bf16.msra.mxu0 %v4365
    %4491 = vmatpush.bf16.msra.mxu0 %v4361
    %4492 = vmatpush.bf16.msra.mxu0 %v4357
    %4493 = vmatmul.bf16.gmra.mxu0 %v4161
    %v4494 = vpop.f32.mrf.mxu0
    %v4495 = vadd.f32 0.0, %v4494
    %v4496 = vpop.f32.mrf.mxu0
    %v4497 = vadd.f32 0.0, %v4496
    %4498 = vdwg.mxu0
    %4499 = vmatpush.bf16.msra.mxu0 %v4417
    %4500 = vmatpush.bf16.msra.mxu0 %v4413
    %4501 = vmatpush.bf16.msra.mxu0 %v4409
    %4502 = vmatpush.bf16.msra.mxu0 %v4405
    %4503 = vmatpush.bf16.msra.mxu0 %v4401
    %4504 = vmatpush.bf16.msra.mxu0 %v4397
    %4505 = vmatpush.bf16.msra.mxu0 %v4393
    %4506 = vmatpush.bf16.msra.mxu0 %v4389
    %4507 = vmatmul.bf16.gmra.mxu0 %v4162
    %v4508 = vpop.f32.mrf.mxu0
    %v4509 = vadd.f32 %v4495, %v4508
    %v4510 = vpop.f32.mrf.mxu0
    %v4511 = vadd.f32 %v4497, %v4510
    %4512 = vdwg.mxu0
    %4513 = vmatpush.bf16.msra.mxu0 %v4386
    %4514 = vmatpush.bf16.msra.mxu0 %v4382
    %4515 = vmatpush.bf16.msra.mxu0 %v4378
    %4516 = vmatpush.bf16.msra.mxu0 %v4374
    %4517 = vmatpush.bf16.msra.mxu0 %v4370
    %4518 = vmatpush.bf16.msra.mxu0 %v4366
    %4519 = vmatpush.bf16.msra.mxu0 %v4362
    %4520 = vmatpush.bf16.msra.mxu0 %v4358
    %4521 = vmatmul.bf16.gmra.mxu0 %v4161
    %v4522 = vpop.f32.mrf.mxu0
    %v4523 = vadd.f32 0.0, %v4522
    %v4524 = vpop.f32.mrf.mxu0
    %v4525 = vadd.f32 0.0, %v4524
    %4526 = vdwg.mxu0
    %4527 = vmatpush.bf16.msra.mxu0 %v4418
    %4528 = vmatpush.bf16.msra.mxu0 %v4414
    %4529 = vmatpush.bf16.msra.mxu0 %v4410
    %4530 = vmatpush.bf16.msra.mxu0 %v4406
    %4531 = vmatpush.bf16.msra.mxu0 %v4402
    %4532 = vmatpush.bf16.msra.mxu0 %v4398
    %4533 = vmatpush.bf16.msra.mxu0 %v4394
    %4534 = vmatpush.bf16.msra.mxu0 %v4390
    %4535 = vmatmul.bf16.gmra.mxu0 %v4162
    %v4536 = vpop.f32.mrf.mxu0
    %v4537 = vadd.f32 %v4523, %v4536
    %v4538 = vpop.f32.mrf.mxu0
    %v4539 = vadd.f32 %v4525, %v4538
    %4540 = vdwg.mxu0
    %4541 = vmatpush.bf16.msra.mxu0 %v4387
    %4542 = vmatpush.bf16.msra.mxu0 %v4383
    %4543 = vmatpush.bf16.msra.mxu0 %v4379
    %4544 = vmatpush.bf16.msra.mxu0 %v4375
    %4545 = vmatpush.bf16.msra.mxu0 %v4371
    %4546 = vmatpush.bf16.msra.mxu0 %v4367
    %4547 = vmatpush.bf16.msra.mxu0 %v4363
    %4548 = vmatpush.bf16.msra.mxu0 %v4359
    %4549 = vmatmul.bf16.gmra.mxu0 %v4161
    %v4550 = vpop.f32.mrf.mxu0
    %v4551 = vadd.f32 0.0, %v4550
    %v4552 = vpop.f32.mrf.mxu0
    %v4553 = vadd.f32 0.0, %v4552
    %4554 = vdwg.mxu0
    %4555 = vmatpush.bf16.msra.mxu0 %v4419
    %4556 = vmatpush.bf16.msra.mxu0 %v4415
    %4557 = vmatpush.bf16.msra.mxu0 %v4411
    %4558 = vmatpush.bf16.msra.mxu0 %v4407
    %4559 = vmatpush.bf16.msra.mxu0 %v4403
    %4560 = vmatpush.bf16.msra.mxu0 %v4399
    %4561 = vmatpush.bf16.msra.mxu0 %v4395
    %4562 = vmatpush.bf16.msra.mxu0 %v4391
    %4563 = vmatmul.bf16.gmra.mxu0 %v4162
    %v4564 = vpop.f32.mrf.mxu0
    %v4565 = vadd.f32 %v4551, %v4564
    %v4566 = vpop.f32.mrf.mxu0
    %v4567 = vadd.f32 %v4553, %v4566
    %4568 = vdwg.mxu0
    %4569 = vmatpush.bf16.msra.mxu0 %v4388
    %4570 = vmatpush.bf16.msra.mxu0 %v4384
    %4571 = vmatpush.bf16.msra.mxu0 %v4380
    %4572 = vmatpush.bf16.msra.mxu0 %v4376
    %4573 = vmatpush.bf16.msra.mxu0 %v4372
    %4574 = vmatpush.bf16.msra.mxu0 %v4368
    %4575 = vmatpush.bf16.msra.mxu0 %v4364
    %4576 = vmatpush.bf16.msra.mxu0 %v4360
    %4577 = vmatmul.bf16.gmra.mxu0 %v4161
    %v4578 = vpop.f32.mrf.mxu0
    %v4579 = vadd.f32 0.0, %v4578
    %v4580 = vpop.f32.mrf.mxu0
    %v4581 = vadd.f32 0.0, %v4580
    %4582 = vdwg.mxu0
    %4583 = vmatpush.bf16.msra.mxu0 %v4420
    %4584 = vmatpush.bf16.msra.mxu0 %v4416
    %4585 = vmatpush.bf16.msra.mxu0 %v4412
    %4586 = vmatpush.bf16.msra.mxu0 %v4408
    %4587 = vmatpush.bf16.msra.mxu0 %v4404
    %4588 = vmatpush.bf16.msra.mxu0 %v4400
    %4589 = vmatpush.bf16.msra.mxu0 %v4396
    %4590 = vmatpush.bf16.msra.mxu0 %v4392
    %4591 = vmatmul.bf16.gmra.mxu0 %v4162
    %v4592 = vpop.f32.mrf.mxu0
    %v4593 = vadd.f32 %v4579, %v4592
    %v4594 = vpop.f32.mrf.mxu0
    %v4595 = vadd.f32 %v4581, %v4594
    %4596 = vdwg.mxu0
    %v4597 = vadd.f32 %v4080, %v4509
    %v4598 = vadd.f32 %v4081, %v4537
    %v4599 = vadd.f32 %v4082, %v4565
    %v4600 = vadd.f32 %v4083, %v4593
    %v4601 = vadd.f32 %v4084, %v4511
    %v4602 = vadd.f32 %v4085, %v4539
    %v4603 = vadd.f32 %v4086, %v4567
    %v4604 = vadd.f32 %v4087, %v4595
    %4605 = vst [vmem:[#allocation2] sm:$0xff] %v4597
    %4606 = vst [vmem:[#allocation2 + $0x8] sm:$0xff] %v4598
    %4607 = vst [vmem:[#allocation2 + $0x10] sm:$0xff] %v4599
    %4608 = vst [vmem:[#allocation2 + $0x18] sm:$0xff] %v4600
    %4609 = vst [vmem:[#allocation2 + $0x20] sm:$0xff] %v4601
    %4610 = vst [vmem:[#allocation2 + $0x28] sm:$0xff] %v4602
    %4611 = vst [vmem:[#allocation2 + $0x30] sm:$0xff] %v4603
    %4612 = vst [vmem:[#allocation2 + $0x38] sm:$0xff] %v4604
    %s4613 = scalar_lea.vmem [#allocation3], 48
    %v4614 = vld [vmem:[%s4613] sm:$0xff]
    %v4615 = vld [vmem:[%s4613 + $0x58] sm:$0xff]
    %v4616 = vld [vmem:[%s4613 + $0xb0] sm:$0xff]
    %v4617 = vld [vmem:[%s4613 + $0x108] sm:$0xff]
    %v4618 = vld [vmem:[%s4613 + $0x160] sm:$0xff]
    %v4619 = vld [vmem:[%s4613 + $0x1b8] sm:$0xff]
    %v4620 = vld [vmem:[%s4613 + $0x210] sm:$0xff]
    %v4621 = vld [vmem:[%s4613 + $0x268] sm:$0xff]
    %v4622 = vld [vmem:[%s4613 + $0x2c0] sm:$0xff]
    %v4623 = vld [vmem:[%s4613 + $0x318] sm:$0xff]
    %v4624 = vld [vmem:[%s4613 + $0x370] sm:$0xff]
    %v4625 = vld [vmem:[%s4613 + $0x3c8] sm:$0xff]
    %v4626 = vld [vmem:[%s4613 + $0x420] sm:$0xff]
    %v4627 = vld [vmem:[%s4613 + $0x478] sm:$0xff]
    %v4628 = vld [vmem:[%s4613 + $0x4d0] sm:$0xff]
    %v4629 = vld [vmem:[%s4613 + $0x528] sm:$0xff]
    %v4630 = vld [vmem:[%s4613 + $0x580] sm:$0xff]
    %v4631 = vld [vmem:[%s4613 + $0x5d8] sm:$0xff]
    %v4632 = vld [vmem:[%s4613 + $0x630] sm:$0xff]
    %v4633 = vld [vmem:[%s4613 + $0x688] sm:$0xff]
    %v4634 = vld [vmem:[%s4613 + $0x6e0] sm:$0xff]
    %v4635 = vld [vmem:[%s4613 + $0x738] sm:$0xff]
    %v4636 = vld [vmem:[%s4613 + $0x790] sm:$0xff]
    %v4637 = vld [vmem:[%s4613 + $0x7e8] sm:$0xff]
    %s4638 = scalar_lea.vmem [#allocation5], 12
    %v4639 = vld [vmem:[%s4638] sm:$0x3]
    %v4641 = vperm.slane %v4639, 0
    %v4642 = vperm.slane %v4639, 1
    %v4669 = vunpack.c.l.b16 %v4614
    %v4670 = vunpack.c.h.b16 %v4614
    %v4671 = vunpack.c.l.b16 %v4615
    %v4672 = vunpack.c.h.b16 %v4615
    %v4673 = vunpack.c.l.b16 %v4616
    %v4674 = vunpack.c.h.b16 %v4616
    %v4675 = vunpack.c.l.b16 %v4617
    %v4676 = vunpack.c.h.b16 %v4617
    %v4677 = vunpack.c.l.b16 %v4618
    %v4678 = vunpack.c.h.b16 %v4618
    %v4679 = vunpack.c.l.b16 %v4619
    %v4680 = vunpack.c.h.b16 %v4619
    %v4681 = vunpack.c.l.b16 %v4620
    %v4682 = vunpack.c.h.b16 %v4620
    %v4683 = vunpack.c.l.b16 %v4621
    %v4684 = vunpack.c.h.b16 %v4621
    %v4685 = vunpack.c.l.b16 %v4622
    %v4686 = vunpack.c.h.b16 %v4622
    %v4687 = vunpack.c.l.b16 %v4623
    %v4688 = vunpack.c.h.b16 %v4623
    %v4689 = vunpack.c.l.b16 %v4624
    %v4690 = vunpack.c.h.b16 %v4624
    %v4691 = vunpack.c.l.b16 %v4625
    %v4692 = vunpack.c.h.b16 %v4625
    %v4693 = vunpack.c.l.b16 %v4626
    %v4694 = vunpack.c.h.b16 %v4626
    %v4695 = vunpack.c.l.b16 %v4627
    %v4696 = vunpack.c.h.b16 %v4627
    %v4697 = vunpack.c.l.b16 %v4628
    %v4698 = vunpack.c.h.b16 %v4628
    %v4699 = vunpack.c.l.b16 %v4629
    %v4700 = vunpack.c.h.b16 %v4629
    %v4701 = vunpack.c.l.b16 %v4630
    %v4702 = vunpack.c.h.b16 %v4630
    %v4703 = vunpack.c.l.b16 %v4631
    %v4704 = vunpack.c.h.b16 %v4631
    %v4705 = vunpack.c.l.b16 %v4632
    %v4706 = vunpack.c.h.b16 %v4632
    %v4707 = vunpack.c.l.b16 %v4633
    %v4708 = vunpack.c.h.b16 %v4633
    %v4709 = vunpack.c.l.b16 %v4634
    %v4710 = vunpack.c.h.b16 %v4634
    %v4711 = vunpack.c.l.b16 %v4635
    %v4712 = vunpack.c.h.b16 %v4635
    %v4713 = vunpack.c.l.b16 %v4636
    %v4714 = vunpack.c.h.b16 %v4636
    %v4715 = vunpack.c.l.b16 %v4637
    %v4716 = vunpack.c.h.b16 %v4637
    %v4717 = vpack.c.b16 %v4671, %v4669
    %v4718 = vpack.c.b16 %v4672, %v4670
    %v4719 = vpack.c.b16 %v4675, %v4673
    %v4720 = vpack.c.b16 %v4676, %v4674
    %v4721 = vpack.c.b16 %v4679, %v4677
    %v4722 = vpack.c.b16 %v4680, %v4678
    %v4723 = vpack.c.b16 %v4683, %v4681
    %v4724 = vpack.c.b16 %v4684, %v4682
    %v4725 = vpack.c.b16 %v4687, %v4685
    %v4726 = vpack.c.b16 %v4688, %v4686
    %v4727 = vpack.c.b16 %v4691, %v4689
    %v4728 = vpack.c.b16 %v4692, %v4690
    %v4729 = vpack.c.b16 %v4695, %v4693
    %v4730 = vpack.c.b16 %v4696, %v4694
    %v4731 = vpack.c.b16 %v4699, %v4697
    %v4732 = vpack.c.b16 %v4700, %v4698
    %v4733 = vpack.c.b16 %v4703, %v4701
    %v4734 = vpack.c.b16 %v4704, %v4702
    %v4735 = vpack.c.b16 %v4707, %v4705
    %v4736 = vpack.c.b16 %v4708, %v4706
    %v4737 = vpack.c.b16 %v4711, %v4709
    %v4738 = vpack.c.b16 %v4712, %v4710
    %v4739 = vpack.c.b16 %v4715, %v4713
    %v4740 = vpack.c.b16 %v4716, %v4714
    %4765 = vmatpush.bf16.msra.mxu0 %v4731
    %4766 = vmatpush.bf16.msra.mxu0 %v4729
    %4767 = vmatpush.bf16.msra.mxu0 %v4727
    %4768 = vmatpush.bf16.msra.mxu0 %v4725
    %4769 = vmatpush.bf16.msra.mxu0 %v4723
    %4770 = vmatpush.bf16.msra.mxu0 %v4721
    %4771 = vmatpush.bf16.msra.mxu0 %v4719
    %4772 = vmatpush.bf16.msra.mxu0 %v4717
    %4773 = vmatmul.bf16.gmra.mxu0 %v163
    %v4774 = vpop.f32.mrf.mxu0
    %v4775 = vadd.f32 %v4641, %v4774
    %v4776 = vpop.f32.mrf.mxu0
    %v4777 = vadd.f32 %v4641, %v4776
    %4778 = vdwg.mxu0
    %4779 = vmatpush.bf16.msra.mxu0 0
    %4780 = vmatpush.bf16.msra.mxu0 0
    %4781 = vmatpush.bf16.msra.mxu0 0
    %4782 = vmatpush.bf16.msra.mxu0 0
    %4783 = vmatpush.bf16.msra.mxu0 %v4739
    %4784 = vmatpush.bf16.msra.mxu0 %v4737
    %4785 = vmatpush.bf16.msra.mxu0 %v4735
    %4786 = vmatpush.bf16.msra.mxu0 %v4733
    %4787 = vmatmul.bf16.gmra.mxu0 %v288
    %v4788 = vpop.f32.mrf.mxu0
    %v4789 = vadd.f32 %v4775, %v4788
    %v4790 = vpop.f32.mrf.mxu0
    %v4791 = vadd.f32 %v4777, %v4790
    %4792 = vdwg.mxu0
    %4793 = vmatpush.bf16.msra.mxu0 %v4732
    %4794 = vmatpush.bf16.msra.mxu0 %v4730
    %4795 = vmatpush.bf16.msra.mxu0 %v4728
    %4796 = vmatpush.bf16.msra.mxu0 %v4726
    %4797 = vmatpush.bf16.msra.mxu0 %v4724
    %4798 = vmatpush.bf16.msra.mxu0 %v4722
    %4799 = vmatpush.bf16.msra.mxu0 %v4720
    %4800 = vmatpush.bf16.msra.mxu0 %v4718
    %4801 = vmatmul.bf16.gmra.mxu0 %v163
    %v4802 = vpop.f32.mrf.mxu0
    %v4803 = vadd.f32 %v4642, %v4802
    %v4804 = vpop.f32.mrf.mxu0
    %v4805 = vadd.f32 %v4642, %v4804
    %4806 = vdwg.mxu0
    %4807 = vmatpush.bf16.msra.mxu0 0
    %4808 = vmatpush.bf16.msra.mxu0 0
    %4809 = vmatpush.bf16.msra.mxu0 0
    %4810 = vmatpush.bf16.msra.mxu0 0
    %4811 = vmatpush.bf16.msra.mxu0 %v4740
    %4812 = vmatpush.bf16.msra.mxu0 %v4738
    %4813 = vmatpush.bf16.msra.mxu0 %v4736
    %4814 = vmatpush.bf16.msra.mxu0 %v4734
    %4815 = vmatmul.bf16.gmra.mxu0 %v288
    %v4816 = vpop.f32.mrf.mxu0
    %v4817 = vadd.f32 %v4803, %v4816
    %v4818 = vpop.f32.mrf.mxu0
    %v4819 = vadd.f32 %v4805, %v4818
    %4820 = vdwg.mxu0
    %v4821 = vpack.c.bf16 %v4817, %v4789
    %v4822 = vpack.c.bf16 %v4819, %v4791
    %s4823 = scalar_lea.vmem %s7, 48
    %4824 = vst [vmem:[%s4823] sm:$0xff] %v4821
    %4825 = vst [vmem:[%s4823 + $0x58] sm:$0xff] %v4822
    %v4826 = vld [vmem:[#allocation2] sm:$0xff]
    %v4827 = vld [vmem:[#allocation2 + $0x8] sm:$0xff]
    %v4828 = vld [vmem:[#allocation2 + $0x10] sm:$0xff]
    %v4829 = vld [vmem:[#allocation2 + $0x18] sm:$0xff]
    %v4830 = vld [vmem:[#allocation2 + $0x20] sm:$0xff]
    %v4831 = vld [vmem:[#allocation2 + $0x28] sm:$0xff]
    %v4832 = vld [vmem:[#allocation2 + $0x30] sm:$0xff]
    %v4833 = vld [vmem:[#allocation2 + $0x38] sm:$0xff]
    %s4834 = smul.u32 192, 4
    %s4835 = smul.addr %s4834, 4
    %s4836 = scalar_lea.vmem [#allocation7], %s4835
    %v4837 = vld [vmem:[%s4836] sm:$0xff]
    %v4838 = vld [vmem:[%s4836 + $0x8] sm:$0xff]
    %v4839 = vld [vmem:[%s4836 + $0x10] sm:$0xff]
    %v4840 = vld [vmem:[%s4836 + $0x18] sm:$0xff]
    %v4841 = vld [vmem:[%s4836 + $0x20] sm:$0xff]
    %v4842 = vld [vmem:[%s4836 + $0x28] sm:$0xff]
    %v4843 = vld [vmem:[%s4836 + $0x30] sm:$0xff]
    %v4844 = vld [vmem:[%s4836 + $0x38] sm:$0xff]
    %v4845 = vld [vmem:[%s4836 + $0x40] sm:$0xff]
    %v4846 = vld [vmem:[%s4836 + $0x48] sm:$0xff]
    %v4847 = vld [vmem:[%s4836 + $0x50] sm:$0xff]
    %v4848 = vld [vmem:[%s4836 + $0x58] sm:$0xff]
    %v4849 = vld [vmem:[%s4836 + $0x60] sm:$0xff]
    %v4850 = vld [vmem:[%s4836 + $0x68] sm:$0xff]
    %v4851 = vld [vmem:[%s4836 + $0x70] sm:$0xff]
    %v4852 = vld [vmem:[%s4836 + $0x78] sm:$0xff]
    %v4853 = vld [vmem:[%s4836 + $0x80] sm:$0xff]
    %v4854 = vld [vmem:[%s4836 + $0x88] sm:$0xff]
    %v4855 = vld [vmem:[%s4836 + $0x90] sm:$0xff]
    %v4856 = vld [vmem:[%s4836 + $0x98] sm:$0xff]
    %v4857 = vld [vmem:[%s4836 + $0xa0] sm:$0xff]
    %v4858 = vld [vmem:[%s4836 + $0xa8] sm:$0xff]
    %v4859 = vld [vmem:[%s4836 + $0xb0] sm:$0xff]
    %v4860 = vld [vmem:[%s4836 + $0xb8] sm:$0xff]
    %v4861 = vld [vmem:[%s4836 + $0xc0] sm:$0xff]
    %v4862 = vld [vmem:[%s4836 + $0xc8] sm:$0xff]
    %v4863 = vld [vmem:[%s4836 + $0xd0] sm:$0xff]
    %v4864 = vld [vmem:[%s4836 + $0xd8] sm:$0xff]
    %v4865 = vld [vmem:[%s4836 + $0xe0] sm:$0xff]
    %v4866 = vld [vmem:[%s4836 + $0xe8] sm:$0xff]
    %v4867 = vld [vmem:[%s4836 + $0xf0] sm:$0xff]
    %v4868 = vld [vmem:[%s4836 + $0xf8] sm:$0xff]
    %v4869 = vld [vmem:[%s4836 + $0x100] sm:$0xff]
    %v4870 = vld [vmem:[%s4836 + $0x108] sm:$0xff]
    %v4871 = vld [vmem:[%s4836 + $0x110] sm:$0xff]
    %v4872 = vld [vmem:[%s4836 + $0x118] sm:$0xff]
    %v4873 = vld [vmem:[%s4836 + $0x120] sm:$0xff]
    %v4874 = vld [vmem:[%s4836 + $0x128] sm:$0xff]
    %v4875 = vld [vmem:[%s4836 + $0x130] sm:$0xff]
    %v4876 = vld [vmem:[%s4836 + $0x138] sm:$0xff]
    %v4877 = vld [vmem:[%s4836 + $0x140] sm:$0xff]
    %v4878 = vld [vmem:[%s4836 + $0x148] sm:$0xff]
    %v4879 = vld [vmem:[%s4836 + $0x150] sm:$0xff]
    %v4880 = vld [vmem:[%s4836 + $0x158] sm:$0xff]
    %v4881 = vld [vmem:[%s4836 + $0x160] sm:$0xff]
    %v4882 = vld [vmem:[%s4836 + $0x168] sm:$0xff]
    %v4883 = vld [vmem:[%s4836 + $0x170] sm:$0xff]
    %v4884 = vld [vmem:[%s4836 + $0x178] sm:$0xff]
    %v4885 = vld [vmem:[%s4836 + $0x180] sm:$0xff]
    %v4886 = vld [vmem:[%s4836 + $0x188] sm:$0xff]
    %v4887 = vld [vmem:[%s4836 + $0x190] sm:$0xff]
    %v4888 = vld [vmem:[%s4836 + $0x198] sm:$0xff]
    %v4889 = vld [vmem:[%s4836 + $0x1a0] sm:$0xff]
    %v4890 = vld [vmem:[%s4836 + $0x1a8] sm:$0xff]
    %v4891 = vld [vmem:[%s4836 + $0x1b0] sm:$0xff]
    %v4892 = vld [vmem:[%s4836 + $0x1b8] sm:$0xff]
    %v4893 = vld [vmem:[%s4836 + $0x1c0] sm:$0xff]
    %v4894 = vld [vmem:[%s4836 + $0x1c8] sm:$0xff]
    %v4895 = vld [vmem:[%s4836 + $0x1d0] sm:$0xff]
    %v4896 = vld [vmem:[%s4836 + $0x1d8] sm:$0xff]
    %v4897 = vld [vmem:[%s4836 + $0x1e0] sm:$0xff]
    %v4898 = vld [vmem:[%s4836 + $0x1e8] sm:$0xff]
    %v4899 = vld [vmem:[%s4836 + $0x1f0] sm:$0xff]
    %v4900 = vld [vmem:[%s4836 + $0x1f8] sm:$0xff]
    %v4903 = vunpack.c.l.b16 %v4821
    %v4904 = vunpack.c.h.b16 %v4821
    %v4905 = vunpack.c.l.b16 %v4822
    %v4906 = vunpack.c.h.b16 %v4822
    %v4907 = vpack.c.b16 %v4905, %v4903
    %v4908 = vpack.c.b16 %v4906, %v4904
    %v4975 = vunpack.c.l.b16 %v4837
    %v4976 = vunpack.c.h.b16 %v4837
    %v4977 = vunpack.c.l.b16 %v4838
    %v4978 = vunpack.c.h.b16 %v4838
    %v4979 = vunpack.c.l.b16 %v4839
    %v4980 = vunpack.c.h.b16 %v4839
    %v4981 = vunpack.c.l.b16 %v4840
    %v4982 = vunpack.c.h.b16 %v4840
    %v4983 = vunpack.c.l.b16 %v4841
    %v4984 = vunpack.c.h.b16 %v4841
    %v4985 = vunpack.c.l.b16 %v4842
    %v4986 = vunpack.c.h.b16 %v4842
    %v4987 = vunpack.c.l.b16 %v4843
    %v4988 = vunpack.c.h.b16 %v4843
    %v4989 = vunpack.c.l.b16 %v4844
    %v4990 = vunpack.c.h.b16 %v4844
    %v4991 = vunpack.c.l.b16 %v4845
    %v4992 = vunpack.c.h.b16 %v4845
    %v4993 = vunpack.c.l.b16 %v4846
    %v4994 = vunpack.c.h.b16 %v4846
    %v4995 = vunpack.c.l.b16 %v4847
    %v4996 = vunpack.c.h.b16 %v4847
    %v4997 = vunpack.c.l.b16 %v4848
    %v4998 = vunpack.c.h.b16 %v4848
    %v4999 = vunpack.c.l.b16 %v4849
    %v5000 = vunpack.c.h.b16 %v4849
    %v5001 = vunpack.c.l.b16 %v4850
    %v5002 = vunpack.c.h.b16 %v4850
    %v5003 = vunpack.c.l.b16 %v4851
    %v5004 = vunpack.c.h.b16 %v4851
    %v5005 = vunpack.c.l.b16 %v4852
    %v5006 = vunpack.c.h.b16 %v4852
    %v5007 = vunpack.c.l.b16 %v4853
    %v5008 = vunpack.c.h.b16 %v4853
    %v5009 = vunpack.c.l.b16 %v4854
    %v5010 = vunpack.c.h.b16 %v4854
    %v5011 = vunpack.c.l.b16 %v4855
    %v5012 = vunpack.c.h.b16 %v4855
    %v5013 = vunpack.c.l.b16 %v4856
    %v5014 = vunpack.c.h.b16 %v4856
    %v5015 = vunpack.c.l.b16 %v4857
    %v5016 = vunpack.c.h.b16 %v4857
    %v5017 = vunpack.c.l.b16 %v4858
    %v5018 = vunpack.c.h.b16 %v4858
    %v5019 = vunpack.c.l.b16 %v4859
    %v5020 = vunpack.c.h.b16 %v4859
    %v5021 = vunpack.c.l.b16 %v4860
    %v5022 = vunpack.c.h.b16 %v4860
    %v5023 = vunpack.c.l.b16 %v4861
    %v5024 = vunpack.c.h.b16 %v4861
    %v5025 = vunpack.c.l.b16 %v4862
    %v5026 = vunpack.c.h.b16 %v4862
    %v5027 = vunpack.c.l.b16 %v4863
    %v5028 = vunpack.c.h.b16 %v4863
    %v5029 = vunpack.c.l.b16 %v4864
    %v5030 = vunpack.c.h.b16 %v4864
    %v5031 = vunpack.c.l.b16 %v4865
    %v5032 = vunpack.c.h.b16 %v4865
    %v5033 = vunpack.c.l.b16 %v4866
    %v5034 = vunpack.c.h.b16 %v4866
    %v5035 = vunpack.c.l.b16 %v4867
    %v5036 = vunpack.c.h.b16 %v4867
    %v5037 = vunpack.c.l.b16 %v4868
    %v5038 = vunpack.c.h.b16 %v4868
    %v5039 = vunpack.c.l.b16 %v4869
    %v5040 = vunpack.c.h.b16 %v4869
    %v5041 = vunpack.c.l.b16 %v4870
    %v5042 = vunpack.c.h.b16 %v4870
    %v5043 = vunpack.c.l.b16 %v4871
    %v5044 = vunpack.c.h.b16 %v4871
    %v5045 = vunpack.c.l.b16 %v4872
    %v5046 = vunpack.c.h.b16 %v4872
    %v5047 = vunpack.c.l.b16 %v4873
    %v5048 = vunpack.c.h.b16 %v4873
    %v5049 = vunpack.c.l.b16 %v4874
    %v5050 = vunpack.c.h.b16 %v4874
    %v5051 = vunpack.c.l.b16 %v4875
    %v5052 = vunpack.c.h.b16 %v4875
    %v5053 = vunpack.c.l.b16 %v4876
    %v5054 = vunpack.c.h.b16 %v4876
    %v5055 = vunpack.c.l.b16 %v4877
    %v5056 = vunpack.c.h.b16 %v4877
    %v5057 = vunpack.c.l.b16 %v4878
    %v5058 = vunpack.c.h.b16 %v4878
    %v5059 = vunpack.c.l.b16 %v4879
    %v5060 = vunpack.c.h.b16 %v4879
    %v5061 = vunpack.c.l.b16 %v4880
    %v5062 = vunpack.c.h.b16 %v4880
    %v5063 = vunpack.c.l.b16 %v4881
    %v5064 = vunpack.c.h.b16 %v4881
    %v5065 = vunpack.c.l.b16 %v4882
    %v5066 = vunpack.c.h.b16 %v4882
    %v5067 = vunpack.c.l.b16 %v4883
    %v5068 = vunpack.c.h.b16 %v4883
    %v5069 = vunpack.c.l.b16 %v4884
    %v5070 = vunpack.c.h.b16 %v4884
    %v5071 = vunpack.c.l.b16 %v4885
    %v5072 = vunpack.c.h.b16 %v4885
    %v5073 = vunpack.c.l.b16 %v4886
    %v5074 = vunpack.c.h.b16 %v4886
    %v5075 = vunpack.c.l.b16 %v4887
    %v5076 = vunpack.c.h.b16 %v4887
    %v5077 = vunpack.c.l.b16 %v4888
    %v5078 = vunpack.c.h.b16 %v4888
    %v5079 = vunpack.c.l.b16 %v4889
    %v5080 = vunpack.c.h.b16 %v4889
    %v5081 = vunpack.c.l.b16 %v4890
    %v5082 = vunpack.c.h.b16 %v4890
    %v5083 = vunpack.c.l.b16 %v4891
    %v5084 = vunpack.c.h.b16 %v4891
    %v5085 = vunpack.c.l.b16 %v4892
    %v5086 = vunpack.c.h.b16 %v4892
    %v5087 = vunpack.c.l.b16 %v4893
    %v5088 = vunpack.c.h.b16 %v4893
    %v5089 = vunpack.c.l.b16 %v4894
    %v5090 = vunpack.c.h.b16 %v4894
    %v5091 = vunpack.c.l.b16 %v4895
    %v5092 = vunpack.c.h.b16 %v4895
    %v5093 = vunpack.c.l.b16 %v4896
    %v5094 = vunpack.c.h.b16 %v4896
    %v5095 = vunpack.c.l.b16 %v4897
    %v5096 = vunpack.c.h.b16 %v4897
    %v5097 = vunpack.c.l.b16 %v4898
    %v5098 = vunpack.c.h.b16 %v4898
    %v5099 = vunpack.c.l.b16 %v4899
    %v5100 = vunpack.c.h.b16 %v4899
    %v5101 = vunpack.c.l.b16 %v4900
    %v5102 = vunpack.c.h.b16 %v4900
    %v5103 = vpack.c.b16 %v4979, %v4975
    %v5104 = vpack.c.b16 %v4980, %v4976
    %v5105 = vpack.c.b16 %v4981, %v4977
    %v5106 = vpack.c.b16 %v4982, %v4978
    %v5107 = vpack.c.b16 %v4987, %v4983
    %v5108 = vpack.c.b16 %v4988, %v4984
    %v5109 = vpack.c.b16 %v4989, %v4985
    %v5110 = vpack.c.b16 %v4990, %v4986
    %v5111 = vpack.c.b16 %v4995, %v4991
    %v5112 = vpack.c.b16 %v4996, %v4992
    %v5113 = vpack.c.b16 %v4997, %v4993
    %v5114 = vpack.c.b16 %v4998, %v4994
    %v5115 = vpack.c.b16 %v5003, %v4999
    %v5116 = vpack.c.b16 %v5004, %v5000
    %v5117 = vpack.c.b16 %v5005, %v5001
    %v5118 = vpack.c.b16 %v5006, %v5002
    %v5119 = vpack.c.b16 %v5011, %v5007
    %v5120 = vpack.c.b16 %v5012, %v5008
    %v5121 = vpack.c.b16 %v5013, %v5009
    %v5122 = vpack.c.b16 %v5014, %v5010
    %v5123 = vpack.c.b16 %v5019, %v5015
    %v5124 = vpack.c.b16 %v5020, %v5016
    %v5125 = vpack.c.b16 %v5021, %v5017
    %v5126 = vpack.c.b16 %v5022, %v5018
    %v5127 = vpack.c.b16 %v5027, %v5023
    %v5128 = vpack.c.b16 %v5028, %v5024
    %v5129 = vpack.c.b16 %v5029, %v5025
    %v5130 = vpack.c.b16 %v5030, %v5026
    %v5131 = vpack.c.b16 %v5035, %v5031
    %v5132 = vpack.c.b16 %v5036, %v5032
    %v5133 = vpack.c.b16 %v5037, %v5033
    %v5134 = vpack.c.b16 %v5038, %v5034
    %v5135 = vpack.c.b16 %v5043, %v5039
    %v5136 = vpack.c.b16 %v5044, %v5040
    %v5137 = vpack.c.b16 %v5045, %v5041
    %v5138 = vpack.c.b16 %v5046, %v5042
    %v5139 = vpack.c.b16 %v5051, %v5047
    %v5140 = vpack.c.b16 %v5052, %v5048
    %v5141 = vpack.c.b16 %v5053, %v5049
    %v5142 = vpack.c.b16 %v5054, %v5050
    %v5143 = vpack.c.b16 %v5059, %v5055
    %v5144 = vpack.c.b16 %v5060, %v5056
    %v5145 = vpack.c.b16 %v5061, %v5057
    %v5146 = vpack.c.b16 %v5062, %v5058
    %v5147 = vpack.c.b16 %v5067, %v5063
    %v5148 = vpack.c.b16 %v5068, %v5064
    %v5149 = vpack.c.b16 %v5069, %v5065
    %v5150 = vpack.c.b16 %v5070, %v5066
    %v5151 = vpack.c.b16 %v5075, %v5071
    %v5152 = vpack.c.b16 %v5076, %v5072
    %v5153 = vpack.c.b16 %v5077, %v5073
    %v5154 = vpack.c.b16 %v5078, %v5074
    %v5155 = vpack.c.b16 %v5083, %v5079
    %v5156 = vpack.c.b16 %v5084, %v5080
    %v5157 = vpack.c.b16 %v5085, %v5081
    %v5158 = vpack.c.b16 %v5086, %v5082
    %v5159 = vpack.c.b16 %v5091, %v5087
    %v5160 = vpack.c.b16 %v5092, %v5088
    %v5161 = vpack.c.b16 %v5093, %v5089
    %v5162 = vpack.c.b16 %v5094, %v5090
    %v5163 = vpack.c.b16 %v5099, %v5095
    %v5164 = vpack.c.b16 %v5100, %v5096
    %v5165 = vpack.c.b16 %v5101, %v5097
    %v5166 = vpack.c.b16 %v5102, %v5098
    %5231 = vmatpush.bf16.msra.mxu0 %v5131
    %5232 = vmatpush.bf16.msra.mxu0 %v5127
    %5233 = vmatpush.bf16.msra.mxu0 %v5123
    %5234 = vmatpush.bf16.msra.mxu0 %v5119
    %5235 = vmatpush.bf16.msra.mxu0 %v5115
    %5236 = vmatpush.bf16.msra.mxu0 %v5111
    %5237 = vmatpush.bf16.msra.mxu0 %v5107
    %5238 = vmatpush.bf16.msra.mxu0 %v5103
    %5239 = vmatmul.bf16.gmra.mxu0 %v4907
    %v5240 = vpop.f32.mrf.mxu0
    %v5241 = vadd.f32 0.0, %v5240
    %v5242 = vpop.f32.mrf.mxu0
    %v5243 = vadd.f32 0.0, %v5242
    %5244 = vdwg.mxu0
    %5245 = vmatpush.bf16.msra.mxu0 %v5163
    %5246 = vmatpush.bf16.msra.mxu0 %v5159
    %5247 = vmatpush.bf16.msra.mxu0 %v5155
    %5248 = vmatpush.bf16.msra.mxu0 %v5151
    %5249 = vmatpush.bf16.msra.mxu0 %v5147
    %5250 = vmatpush.bf16.msra.mxu0 %v5143
    %5251 = vmatpush.bf16.msra.mxu0 %v5139
    %5252 = vmatpush.bf16.msra.mxu0 %v5135
    %5253 = vmatmul.bf16.gmra.mxu0 %v4908
    %v5254 = vpop.f32.mrf.mxu0
    %v5255 = vadd.f32 %v5241, %v5254
    %v5256 = vpop.f32.mrf.mxu0
    %v5257 = vadd.f32 %v5243, %v5256
    %5258 = vdwg.mxu0
    %5259 = vmatpush.bf16.msra.mxu0 %v5132
    %5260 = vmatpush.bf16.msra.mxu0 %v5128
    %5261 = vmatpush.bf16.msra.mxu0 %v5124
    %5262 = vmatpush.bf16.msra.mxu0 %v5120
    %5263 = vmatpush.bf16.msra.mxu0 %v5116
    %5264 = vmatpush.bf16.msra.mxu0 %v5112
    %5265 = vmatpush.bf16.msra.mxu0 %v5108
    %5266 = vmatpush.bf16.msra.mxu0 %v5104
    %5267 = vmatmul.bf16.gmra.mxu0 %v4907
    %v5268 = vpop.f32.mrf.mxu0
    %v5269 = vadd.f32 0.0, %v5268
    %v5270 = vpop.f32.mrf.mxu0
    %v5271 = vadd.f32 0.0, %v5270
    %5272 = vdwg.mxu0
    %5273 = vmatpush.bf16.msra.mxu0 %v5164
    %5274 = vmatpush.bf16.msra.mxu0 %v5160
    %5275 = vmatpush.bf16.msra.mxu0 %v5156
    %5276 = vmatpush.bf16.msra.mxu0 %v5152
    %5277 = vmatpush.bf16.msra.mxu0 %v5148
    %5278 = vmatpush.bf16.msra.mxu0 %v5144
    %5279 = vmatpush.bf16.msra.mxu0 %v5140
    %5280 = vmatpush.bf16.msra.mxu0 %v5136
    %5281 = vmatmul.bf16.gmra.mxu0 %v4908
    %v5282 = vpop.f32.mrf.mxu0
    %v5283 = vadd.f32 %v5269, %v5282
    %v5284 = vpop.f32.mrf.mxu0
    %v5285 = vadd.f32 %v5271, %v5284
    %5286 = vdwg.mxu0
    %5287 = vmatpush.bf16.msra.mxu0 %v5133
    %5288 = vmatpush.bf16.msra.mxu0 %v5129
    %5289 = vmatpush.bf16.msra.mxu0 %v5125
    %5290 = vmatpush.bf16.msra.mxu0 %v5121
    %5291 = vmatpush.bf16.msra.mxu0 %v5117
    %5292 = vmatpush.bf16.msra.mxu0 %v5113
    %5293 = vmatpush.bf16.msra.mxu0 %v5109
    %5294 = vmatpush.bf16.msra.mxu0 %v5105
    %5295 = vmatmul.bf16.gmra.mxu0 %v4907
    %v5296 = vpop.f32.mrf.mxu0
    %v5297 = vadd.f32 0.0, %v5296
    %v5298 = vpop.f32.mrf.mxu0
    %v5299 = vadd.f32 0.0, %v5298
    %5300 = vdwg.mxu0
    %5301 = vmatpush.bf16.msra.mxu0 %v5165
    %5302 = vmatpush.bf16.msra.mxu0 %v5161
    %5303 = vmatpush.bf16.msra.mxu0 %v5157
    %5304 = vmatpush.bf16.msra.mxu0 %v5153
    %5305 = vmatpush.bf16.msra.mxu0 %v5149
    %5306 = vmatpush.bf16.msra.mxu0 %v5145
    %5307 = vmatpush.bf16.msra.mxu0 %v5141
    %5308 = vmatpush.bf16.msra.mxu0 %v5137
    %5309 = vmatmul.bf16.gmra.mxu0 %v4908
    %v5310 = vpop.f32.mrf.mxu0
    %v5311 = vadd.f32 %v5297, %v5310
    %v5312 = vpop.f32.mrf.mxu0
    %v5313 = vadd.f32 %v5299, %v5312
    %5314 = vdwg.mxu0
    %5315 = vmatpush.bf16.msra.mxu0 %v5134
    %5316 = vmatpush.bf16.msra.mxu0 %v5130
    %5317 = vmatpush.bf16.msra.mxu0 %v5126
    %5318 = vmatpush.bf16.msra.mxu0 %v5122
    %5319 = vmatpush.bf16.msra.mxu0 %v5118
    %5320 = vmatpush.bf16.msra.mxu0 %v5114
    %5321 = vmatpush.bf16.msra.mxu0 %v5110
    %5322 = vmatpush.bf16.msra.mxu0 %v5106
    %5323 = vmatmul.bf16.gmra.mxu0 %v4907
    %v5324 = vpop.f32.mrf.mxu0
    %v5325 = vadd.f32 0.0, %v5324
    %v5326 = vpop.f32.mrf.mxu0
    %v5327 = vadd.f32 0.0, %v5326
    %5328 = vdwg.mxu0
    %5329 = vmatpush.bf16.msra.mxu0 %v5166
    %5330 = vmatpush.bf16.msra.mxu0 %v5162
    %5331 = vmatpush.bf16.msra.mxu0 %v5158
    %5332 = vmatpush.bf16.msra.mxu0 %v5154
    %5333 = vmatpush.bf16.msra.mxu0 %v5150
    %5334 = vmatpush.bf16.msra.mxu0 %v5146
    %5335 = vmatpush.bf16.msra.mxu0 %v5142
    %5336 = vmatpush.bf16.msra.mxu0 %v5138
    %5337 = vmatmul.bf16.gmra.mxu0 %v4908
    %v5338 = vpop.f32.mrf.mxu0
    %v5339 = vadd.f32 %v5325, %v5338
    %v5340 = vpop.f32.mrf.mxu0
    %v5341 = vadd.f32 %v5327, %v5340
    %5342 = vdwg.mxu0
    %v5343 = vadd.f32 %v4826, %v5255
    %v5344 = vadd.f32 %v4827, %v5283
    %v5345 = vadd.f32 %v4828, %v5311
    %v5346 = vadd.f32 %v4829, %v5339
    %v5347 = vadd.f32 %v4830, %v5257
    %v5348 = vadd.f32 %v4831, %v5285
    %v5349 = vadd.f32 %v4832, %v5313
    %v5350 = vadd.f32 %v4833, %v5341
    %5351 = vst [vmem:[#allocation2] sm:$0xff] %v5343
    %5352 = vst [vmem:[#allocation2 + $0x8] sm:$0xff] %v5344
    %5353 = vst [vmem:[#allocation2 + $0x10] sm:$0xff] %v5345
    %5354 = vst [vmem:[#allocation2 + $0x18] sm:$0xff] %v5346
    %5355 = vst [vmem:[#allocation2 + $0x20] sm:$0xff] %v5347
    %5356 = vst [vmem:[#allocation2 + $0x28] sm:$0xff] %v5348
    %5357 = vst [vmem:[#allocation2 + $0x30] sm:$0xff] %v5349
    %5358 = vst [vmem:[#allocation2 + $0x38] sm:$0xff] %v5350
    %s5359 = scalar_lea.vmem [#allocation3], 56
    %v5360 = vld [vmem:[%s5359] sm:$0xff]
    %v5361 = vld [vmem:[%s5359 + $0x58] sm:$0xff]
    %v5362 = vld [vmem:[%s5359 + $0xb0] sm:$0xff]
    %v5363 = vld [vmem:[%s5359 + $0x108] sm:$0xff]
    %v5364 = vld [vmem:[%s5359 + $0x160] sm:$0xff]
    %v5365 = vld [vmem:[%s5359 + $0x1b8] sm:$0xff]
    %v5366 = vld [vmem:[%s5359 + $0x210] sm:$0xff]
    %v5367 = vld [vmem:[%s5359 + $0x268] sm:$0xff]
    %v5368 = vld [vmem:[%s5359 + $0x2c0] sm:$0xff]
    %v5369 = vld [vmem:[%s5359 + $0x318] sm:$0xff]
    %v5370 = vld [vmem:[%s5359 + $0x370] sm:$0xff]
    %v5371 = vld [vmem:[%s5359 + $0x3c8] sm:$0xff]
    %v5372 = vld [vmem:[%s5359 + $0x420] sm:$0xff]
    %v5373 = vld [vmem:[%s5359 + $0x478] sm:$0xff]
    %v5374 = vld [vmem:[%s5359 + $0x4d0] sm:$0xff]
    %v5375 = vld [vmem:[%s5359 + $0x528] sm:$0xff]
    %v5376 = vld [vmem:[%s5359 + $0x580] sm:$0xff]
    %v5377 = vld [vmem:[%s5359 + $0x5d8] sm:$0xff]
    %v5378 = vld [vmem:[%s5359 + $0x630] sm:$0xff]
    %v5379 = vld [vmem:[%s5359 + $0x688] sm:$0xff]
    %v5380 = vld [vmem:[%s5359 + $0x6e0] sm:$0xff]
    %v5381 = vld [vmem:[%s5359 + $0x738] sm:$0xff]
    %v5382 = vld [vmem:[%s5359 + $0x790] sm:$0xff]
    %v5383 = vld [vmem:[%s5359 + $0x7e8] sm:$0xff]
    %s5384 = scalar_lea.vmem [#allocation5], 14
    %v5385 = vld [vmem:[%s5384] sm:$0x3]
    %v5387 = vperm.slane %v5385, 0
    %v5388 = vperm.slane %v5385, 1
    %v5415 = vunpack.c.l.b16 %v5360
    %v5416 = vunpack.c.h.b16 %v5360
    %v5417 = vunpack.c.l.b16 %v5361
    %v5418 = vunpack.c.h.b16 %v5361
    %v5419 = vunpack.c.l.b16 %v5362
    %v5420 = vunpack.c.h.b16 %v5362
    %v5421 = vunpack.c.l.b16 %v5363
    %v5422 = vunpack.c.h.b16 %v5363
    %v5423 = vunpack.c.l.b16 %v5364
    %v5424 = vunpack.c.h.b16 %v5364
    %v5425 = vunpack.c.l.b16 %v5365
    %v5426 = vunpack.c.h.b16 %v5365
    %v5427 = vunpack.c.l.b16 %v5366
    %v5428 = vunpack.c.h.b16 %v5366
    %v5429 = vunpack.c.l.b16 %v5367
    %v5430 = vunpack.c.h.b16 %v5367
    %v5431 = vunpack.c.l.b16 %v5368
    %v5432 = vunpack.c.h.b16 %v5368
    %v5433 = vunpack.c.l.b16 %v5369
    %v5434 = vunpack.c.h.b16 %v5369
    %v5435 = vunpack.c.l.b16 %v5370
    %v5436 = vunpack.c.h.b16 %v5370
    %v5437 = vunpack.c.l.b16 %v5371
    %v5438 = vunpack.c.h.b16 %v5371
    %v5439 = vunpack.c.l.b16 %v5372
    %v5440 = vunpack.c.h.b16 %v5372
    %v5441 = vunpack.c.l.b16 %v5373
    %v5442 = vunpack.c.h.b16 %v5373
    %v5443 = vunpack.c.l.b16 %v5374
    %v5444 = vunpack.c.h.b16 %v5374
    %v5445 = vunpack.c.l.b16 %v5375
    %v5446 = vunpack.c.h.b16 %v5375
    %v5447 = vunpack.c.l.b16 %v5376
    %v5448 = vunpack.c.h.b16 %v5376
    %v5449 = vunpack.c.l.b16 %v5377
    %v5450 = vunpack.c.h.b16 %v5377
    %v5451 = vunpack.c.l.b16 %v5378
    %v5452 = vunpack.c.h.b16 %v5378
    %v5453 = vunpack.c.l.b16 %v5379
    %v5454 = vunpack.c.h.b16 %v5379
    %v5455 = vunpack.c.l.b16 %v5380
    %v5456 = vunpack.c.h.b16 %v5380
    %v5457 = vunpack.c.l.b16 %v5381
    %v5458 = vunpack.c.h.b16 %v5381
    %v5459 = vunpack.c.l.b16 %v5382
    %v5460 = vunpack.c.h.b16 %v5382
    %v5461 = vunpack.c.l.b16 %v5383
    %v5462 = vunpack.c.h.b16 %v5383
    %v5463 = vpack.c.b16 %v5417, %v5415
    %v5464 = vpack.c.b16 %v5418, %v5416
    %v5465 = vpack.c.b16 %v5421, %v5419
    %v5466 = vpack.c.b16 %v5422, %v5420
    %v5467 = vpack.c.b16 %v5425, %v5423
    %v5468 = vpack.c.b16 %v5426, %v5424
    %v5469 = vpack.c.b16 %v5429, %v5427
    %v5470 = vpack.c.b16 %v5430, %v5428
    %v5471 = vpack.c.b16 %v5433, %v5431
    %v5472 = vpack.c.b16 %v5434, %v5432
    %v5473 = vpack.c.b16 %v5437, %v5435
    %v5474 = vpack.c.b16 %v5438, %v5436
    %v5475 = vpack.c.b16 %v5441, %v5439
    %v5476 = vpack.c.b16 %v5442, %v5440
    %v5477 = vpack.c.b16 %v5445, %v5443
    %v5478 = vpack.c.b16 %v5446, %v5444
    %v5479 = vpack.c.b16 %v5449, %v5447
    %v5480 = vpack.c.b16 %v5450, %v5448
    %v5481 = vpack.c.b16 %v5453, %v5451
    %v5482 = vpack.c.b16 %v5454, %v5452
    %v5483 = vpack.c.b16 %v5457, %v5455
    %v5484 = vpack.c.b16 %v5458, %v5456
    %v5485 = vpack.c.b16 %v5461, %v5459
    %v5486 = vpack.c.b16 %v5462, %v5460
    %5511 = vmatpush.bf16.msra.mxu0 %v5477
    %5512 = vmatpush.bf16.msra.mxu0 %v5475
    %5513 = vmatpush.bf16.msra.mxu0 %v5473
    %5514 = vmatpush.bf16.msra.mxu0 %v5471
    %5515 = vmatpush.bf16.msra.mxu0 %v5469
    %5516 = vmatpush.bf16.msra.mxu0 %v5467
    %5517 = vmatpush.bf16.msra.mxu0 %v5465
    %5518 = vmatpush.bf16.msra.mxu0 %v5463
    %5519 = vmatmul.bf16.gmra.mxu0 %v163
    %v5520 = vpop.f32.mrf.mxu0
    %v5521 = vadd.f32 %v5387, %v5520
    %v5522 = vpop.f32.mrf.mxu0
    %v5523 = vadd.f32 %v5387, %v5522
    %5524 = vdwg.mxu0
    %5525 = vmatpush.bf16.msra.mxu0 0
    %5526 = vmatpush.bf16.msra.mxu0 0
    %5527 = vmatpush.bf16.msra.mxu0 0
    %5528 = vmatpush.bf16.msra.mxu0 0
    %5529 = vmatpush.bf16.msra.mxu0 %v5485
    %5530 = vmatpush.bf16.msra.mxu0 %v5483
    %5531 = vmatpush.bf16.msra.mxu0 %v5481
    %5532 = vmatpush.bf16.msra.mxu0 %v5479
    %5533 = vmatmul.bf16.gmra.mxu0 %v288
    %v5534 = vpop.f32.mrf.mxu0
    %v5535 = vadd.f32 %v5521, %v5534
    %v5536 = vpop.f32.mrf.mxu0
    %v5537 = vadd.f32 %v5523, %v5536
    %5538 = vdwg.mxu0
    %5539 = vmatpush.bf16.msra.mxu0 %v5478
    %5540 = vmatpush.bf16.msra.mxu0 %v5476
    %5541 = vmatpush.bf16.msra.mxu0 %v5474
    %5542 = vmatpush.bf16.msra.mxu0 %v5472
    %5543 = vmatpush.bf16.msra.mxu0 %v5470
    %5544 = vmatpush.bf16.msra.mxu0 %v5468
    %5545 = vmatpush.bf16.msra.mxu0 %v5466
    %5546 = vmatpush.bf16.msra.mxu0 %v5464
    %5547 = vmatmul.bf16.gmra.mxu0 %v163
    %v5548 = vpop.f32.mrf.mxu0
    %v5549 = vadd.f32 %v5388, %v5548
    %v5550 = vpop.f32.mrf.mxu0
    %v5551 = vadd.f32 %v5388, %v5550
    %5552 = vdwg.mxu0
    %5553 = vmatpush.bf16.msra.mxu0 0
    %5554 = vmatpush.bf16.msra.mxu0 0
    %5555 = vmatpush.bf16.msra.mxu0 0
    %5556 = vmatpush.bf16.msra.mxu0 0
    %5557 = vmatpush.bf16.msra.mxu0 %v5486
    %5558 = vmatpush.bf16.msra.mxu0 %v5484
    %5559 = vmatpush.bf16.msra.mxu0 %v5482
    %5560 = vmatpush.bf16.msra.mxu0 %v5480
    %5561 = vmatmul.bf16.gmra.mxu0 %v288
    %v5562 = vpop.f32.mrf.mxu0
    %v5563 = vadd.f32 %v5549, %v5562
    %v5564 = vpop.f32.mrf.mxu0
    %v5565 = vadd.f32 %v5551, %v5564
    %5566 = vdwg.mxu0
    %v5567 = vpack.c.bf16 %v5563, %v5535
    %v5568 = vpack.c.bf16 %v5565, %v5537
    %s5569 = scalar_lea.vmem %s7, 56
    %5570 = vst [vmem:[%s5569] sm:$0xff] %v5567
    %5571 = vst [vmem:[%s5569 + $0x58] sm:$0xff] %v5568
    %v5572 = vld [vmem:[#allocation2] sm:$0xff]
    %v5573 = vld [vmem:[#allocation2 + $0x8] sm:$0xff]
    %v5574 = vld [vmem:[#allocation2 + $0x10] sm:$0xff]
    %v5575 = vld [vmem:[#allocation2 + $0x18] sm:$0xff]
    %v5576 = vld [vmem:[#allocation2 + $0x20] sm:$0xff]
    %v5577 = vld [vmem:[#allocation2 + $0x28] sm:$0xff]
    %v5578 = vld [vmem:[#allocation2 + $0x30] sm:$0xff]
    %v5579 = vld [vmem:[#allocation2 + $0x38] sm:$0xff]
    %s5580 = smul.u32 224, 4
    %s5581 = smul.addr %s5580, 4
    %s5582 = scalar_lea.vmem [#allocation7], %s5581
    %v5583 = vld [vmem:[%s5582] sm:$0xff]
    %v5584 = vld [vmem:[%s5582 + $0x8] sm:$0xff]
    %v5585 = vld [vmem:[%s5582 + $0x10] sm:$0xff]
    %v5586 = vld [vmem:[%s5582 + $0x18] sm:$0xff]
    %v5587 = vld [vmem:[%s5582 + $0x20] sm:$0xff]
    %v5588 = vld [vmem:[%s5582 + $0x28] sm:$0xff]
    %v5589 = vld [vmem:[%s5582 + $0x30] sm:$0xff]
    %v5590 = vld [vmem:[%s5582 + $0x38] sm:$0xff]
    %v5591 = vld [vmem:[%s5582 + $0x40] sm:$0xff]
    %v5592 = vld [vmem:[%s5582 + $0x48] sm:$0xff]
    %v5593 = vld [vmem:[%s5582 + $0x50] sm:$0xff]
    %v5594 = vld [vmem:[%s5582 + $0x58] sm:$0xff]
    %v5595 = vld [vmem:[%s5582 + $0x60] sm:$0xff]
    %v5596 = vld [vmem:[%s5582 + $0x68] sm:$0xff]
    %v5597 = vld [vmem:[%s5582 + $0x70] sm:$0xff]
    %v5598 = vld [vmem:[%s5582 + $0x78] sm:$0xff]
    %v5599 = vld [vmem:[%s5582 + $0x80] sm:$0xff]
    %v5600 = vld [vmem:[%s5582 + $0x88] sm:$0xff]
    %v5601 = vld [vmem:[%s5582 + $0x90] sm:$0xff]
    %v5602 = vld [vmem:[%s5582 + $0x98] sm:$0xff]
    %v5603 = vld [vmem:[%s5582 + $0xa0] sm:$0xff]
    %v5604 = vld [vmem:[%s5582 + $0xa8] sm:$0xff]
    %v5605 = vld [vmem:[%s5582 + $0xb0] sm:$0xff]
    %v5606 = vld [vmem:[%s5582 + $0xb8] sm:$0xff]
    %v5607 = vld [vmem:[%s5582 + $0xc0] sm:$0xff]
    %v5608 = vld [vmem:[%s5582 + $0xc8] sm:$0xff]
    %v5609 = vld [vmem:[%s5582 + $0xd0] sm:$0xff]
    %v5610 = vld [vmem:[%s5582 + $0xd8] sm:$0xff]
    %v5611 = vld [vmem:[%s5582 + $0xe0] sm:$0xff]
    %v5612 = vld [vmem:[%s5582 + $0xe8] sm:$0xff]
    %v5613 = vld [vmem:[%s5582 + $0xf0] sm:$0xff]
    %v5614 = vld [vmem:[%s5582 + $0xf8] sm:$0xff]
    %v5615 = vld [vmem:[%s5582 + $0x100] sm:$0xff]
    %v5616 = vld [vmem:[%s5582 + $0x108] sm:$0xff]
    %v5617 = vld [vmem:[%s5582 + $0x110] sm:$0xff]
    %v5618 = vld [vmem:[%s5582 + $0x118] sm:$0xff]
    %v5619 = vld [vmem:[%s5582 + $0x120] sm:$0xff]
    %v5620 = vld [vmem:[%s5582 + $0x128] sm:$0xff]
    %v5621 = vld [vmem:[%s5582 + $0x130] sm:$0xff]
    %v5622 = vld [vmem:[%s5582 + $0x138] sm:$0xff]
    %v5623 = vld [vmem:[%s5582 + $0x140] sm:$0xff]
    %v5624 = vld [vmem:[%s5582 + $0x148] sm:$0xff]
    %v5625 = vld [vmem:[%s5582 + $0x150] sm:$0xff]
    %v5626 = vld [vmem:[%s5582 + $0x158] sm:$0xff]
    %v5627 = vld [vmem:[%s5582 + $0x160] sm:$0xff]
    %v5628 = vld [vmem:[%s5582 + $0x168] sm:$0xff]
    %v5629 = vld [vmem:[%s5582 + $0x170] sm:$0xff]
    %v5630 = vld [vmem:[%s5582 + $0x178] sm:$0xff]
    %v5631 = vld [vmem:[%s5582 + $0x180] sm:$0xff]
    %v5632 = vld [vmem:[%s5582 + $0x188] sm:$0xff]
    %v5633 = vld [vmem:[%s5582 + $0x190] sm:$0xff]
    %v5634 = vld [vmem:[%s5582 + $0x198] sm:$0xff]
    %v5635 = vld [vmem:[%s5582 + $0x1a0] sm:$0xff]
    %v5636 = vld [vmem:[%s5582 + $0x1a8] sm:$0xff]
    %v5637 = vld [vmem:[%s5582 + $0x1b0] sm:$0xff]
    %v5638 = vld [vmem:[%s5582 + $0x1b8] sm:$0xff]
    %v5639 = vld [vmem:[%s5582 + $0x1c0] sm:$0xff]
    %v5640 = vld [vmem:[%s5582 + $0x1c8] sm:$0xff]
    %v5641 = vld [vmem:[%s5582 + $0x1d0] sm:$0xff]
    %v5642 = vld [vmem:[%s5582 + $0x1d8] sm:$0xff]
    %v5643 = vld [vmem:[%s5582 + $0x1e0] sm:$0xff]
    %v5644 = vld [vmem:[%s5582 + $0x1e8] sm:$0xff]
    %v5645 = vld [vmem:[%s5582 + $0x1f0] sm:$0xff]
    %v5646 = vld [vmem:[%s5582 + $0x1f8] sm:$0xff]
    %v5649 = vunpack.c.l.b16 %v5567
    %v5650 = vunpack.c.h.b16 %v5567
    %v5651 = vunpack.c.l.b16 %v5568
    %v5652 = vunpack.c.h.b16 %v5568
    %v5653 = vpack.c.b16 %v5651, %v5649
    %v5654 = vpack.c.b16 %v5652, %v5650
    %v5721 = vunpack.c.l.b16 %v5583
    %v5722 = vunpack.c.h.b16 %v5583
    %v5723 = vunpack.c.l.b16 %v5584
    %v5724 = vunpack.c.h.b16 %v5584
    %v5725 = vunpack.c.l.b16 %v5585
    %v5726 = vunpack.c.h.b16 %v5585
    %v5727 = vunpack.c.l.b16 %v5586
    %v5728 = vunpack.c.h.b16 %v5586
    %v5729 = vunpack.c.l.b16 %v5587
    %v5730 = vunpack.c.h.b16 %v5587
    %v5731 = vunpack.c.l.b16 %v5588
    %v5732 = vunpack.c.h.b16 %v5588
    %v5733 = vunpack.c.l.b16 %v5589
    %v5734 = vunpack.c.h.b16 %v5589
    %v5735 = vunpack.c.l.b16 %v5590
    %v5736 = vunpack.c.h.b16 %v5590
    %v5737 = vunpack.c.l.b16 %v5591
    %v5738 = vunpack.c.h.b16 %v5591
    %v5739 = vunpack.c.l.b16 %v5592
    %v5740 = vunpack.c.h.b16 %v5592
    %v5741 = vunpack.c.l.b16 %v5593
    %v5742 = vunpack.c.h.b16 %v5593
    %v5743 = vunpack.c.l.b16 %v5594
    %v5744 = vunpack.c.h.b16 %v5594
    %v5745 = vunpack.c.l.b16 %v5595
    %v5746 = vunpack.c.h.b16 %v5595
    %v5747 = vunpack.c.l.b16 %v5596
    %v5748 = vunpack.c.h.b16 %v5596
    %v5749 = vunpack.c.l.b16 %v5597
    %v5750 = vunpack.c.h.b16 %v5597
    %v5751 = vunpack.c.l.b16 %v5598
    %v5752 = vunpack.c.h.b16 %v5598
    %v5753 = vunpack.c.l.b16 %v5599
    %v5754 = vunpack.c.h.b16 %v5599
    %v5755 = vunpack.c.l.b16 %v5600
    %v5756 = vunpack.c.h.b16 %v5600
    %v5757 = vunpack.c.l.b16 %v5601
    %v5758 = vunpack.c.h.b16 %v5601
    %v5759 = vunpack.c.l.b16 %v5602
    %v5760 = vunpack.c.h.b16 %v5602
    %v5761 = vunpack.c.l.b16 %v5603
    %v5762 = vunpack.c.h.b16 %v5603
    %v5763 = vunpack.c.l.b16 %v5604
    %v5764 = vunpack.c.h.b16 %v5604
    %v5765 = vunpack.c.l.b16 %v5605
    %v5766 = vunpack.c.h.b16 %v5605
    %v5767 = vunpack.c.l.b16 %v5606
    %v5768 = vunpack.c.h.b16 %v5606
    %v5769 = vunpack.c.l.b16 %v5607
    %v5770 = vunpack.c.h.b16 %v5607
    %v5771 = vunpack.c.l.b16 %v5608
    %v5772 = vunpack.c.h.b16 %v5608
    %v5773 = vunpack.c.l.b16 %v5609
    %v5774 = vunpack.c.h.b16 %v5609
    %v5775 = vunpack.c.l.b16 %v5610
    %v5776 = vunpack.c.h.b16 %v5610
    %v5777 = vunpack.c.l.b16 %v5611
    %v5778 = vunpack.c.h.b16 %v5611
    %v5779 = vunpack.c.l.b16 %v5612
    %v5780 = vunpack.c.h.b16 %v5612
    %v5781 = vunpack.c.l.b16 %v5613
    %v5782 = vunpack.c.h.b16 %v5613
    %v5783 = vunpack.c.l.b16 %v5614
    %v5784 = vunpack.c.h.b16 %v5614
    %v5785 = vunpack.c.l.b16 %v5615
    %v5786 = vunpack.c.h.b16 %v5615
    %v5787 = vunpack.c.l.b16 %v5616
    %v5788 = vunpack.c.h.b16 %v5616
    %v5789 = vunpack.c.l.b16 %v5617
    %v5790 = vunpack.c.h.b16 %v5617
    %v5791 = vunpack.c.l.b16 %v5618
    %v5792 = vunpack.c.h.b16 %v5618
    %v5793 = vunpack.c.l.b16 %v5619
    %v5794 = vunpack.c.h.b16 %v5619
    %v5795 = vunpack.c.l.b16 %v5620
    %v5796 = vunpack.c.h.b16 %v5620
    %v5797 = vunpack.c.l.b16 %v5621
    %v5798 = vunpack.c.h.b16 %v5621
    %v5799 = vunpack.c.l.b16 %v5622
    %v5800 = vunpack.c.h.b16 %v5622
    %v5801 = vunpack.c.l.b16 %v5623
    %v5802 = vunpack.c.h.b16 %v5623
    %v5803 = vunpack.c.l.b16 %v5624
    %v5804 = vunpack.c.h.b16 %v5624
    %v5805 = vunpack.c.l.b16 %v5625
    %v5806 = vunpack.c.h.b16 %v5625
    %v5807 = vunpack.c.l.b16 %v5626
    %v5808 = vunpack.c.h.b16 %v5626
    %v5809 = vunpack.c.l.b16 %v5627
    %v5810 = vunpack.c.h.b16 %v5627
    %v5811 = vunpack.c.l.b16 %v5628
    %v5812 = vunpack.c.h.b16 %v5628
    %v5813 = vunpack.c.l.b16 %v5629
    %v5814 = vunpack.c.h.b16 %v5629
    %v5815 = vunpack.c.l.b16 %v5630
    %v5816 = vunpack.c.h.b16 %v5630
    %v5817 = vunpack.c.l.b16 %v5631
    %v5818 = vunpack.c.h.b16 %v5631
    %v5819 = vunpack.c.l.b16 %v5632
    %v5820 = vunpack.c.h.b16 %v5632
    %v5821 = vunpack.c.l.b16 %v5633
    %v5822 = vunpack.c.h.b16 %v5633
    %v5823 = vunpack.c.l.b16 %v5634
    %v5824 = vunpack.c.h.b16 %v5634
    %v5825 = vunpack.c.l.b16 %v5635
    %v5826 = vunpack.c.h.b16 %v5635
    %v5827 = vunpack.c.l.b16 %v5636
    %v5828 = vunpack.c.h.b16 %v5636
    %v5829 = vunpack.c.l.b16 %v5637
    %v5830 = vunpack.c.h.b16 %v5637
    %v5831 = vunpack.c.l.b16 %v5638
    %v5832 = vunpack.c.h.b16 %v5638
    %v5833 = vunpack.c.l.b16 %v5639
    %v5834 = vunpack.c.h.b16 %v5639
    %v5835 = vunpack.c.l.b16 %v5640
    %v5836 = vunpack.c.h.b16 %v5640
    %v5837 = vunpack.c.l.b16 %v5641
    %v5838 = vunpack.c.h.b16 %v5641
    %v5839 = vunpack.c.l.b16 %v5642
    %v5840 = vunpack.c.h.b16 %v5642
    %v5841 = vunpack.c.l.b16 %v5643
    %v5842 = vunpack.c.h.b16 %v5643
    %v5843 = vunpack.c.l.b16 %v5644
    %v5844 = vunpack.c.h.b16 %v5644
    %v5845 = vunpack.c.l.b16 %v5645
    %v5846 = vunpack.c.h.b16 %v5645
    %v5847 = vunpack.c.l.b16 %v5646
    %v5848 = vunpack.c.h.b16 %v5646
    %v5849 = vpack.c.b16 %v5725, %v5721
    %v5850 = vpack.c.b16 %v5726, %v5722
    %v5851 = vpack.c.b16 %v5727, %v5723
    %v5852 = vpack.c.b16 %v5728, %v5724
    %v5853 = vpack.c.b16 %v5733, %v5729
    %v5854 = vpack.c.b16 %v5734, %v5730
    %v5855 = vpack.c.b16 %v5735, %v5731
    %v5856 = vpack.c.b16 %v5736, %v5732
    %v5857 = vpack.c.b16 %v5741, %v5737
    %v5858 = vpack.c.b16 %v5742, %v5738
    %v5859 = vpack.c.b16 %v5743, %v5739
    %v5860 = vpack.c.b16 %v5744, %v5740
    %v5861 = vpack.c.b16 %v5749, %v5745
    %v5862 = vpack.c.b16 %v5750, %v5746
    %v5863 = vpack.c.b16 %v5751, %v5747
    %v5864 = vpack.c.b16 %v5752, %v5748
    %v5865 = vpack.c.b16 %v5757, %v5753
    %v5866 = vpack.c.b16 %v5758, %v5754
    %v5867 = vpack.c.b16 %v5759, %v5755
    %v5868 = vpack.c.b16 %v5760, %v5756
    %v5869 = vpack.c.b16 %v5765, %v5761
    %v5870 = vpack.c.b16 %v5766, %v5762
    %v5871 = vpack.c.b16 %v5767, %v5763
    %v5872 = vpack.c.b16 %v5768, %v5764
    %v5873 = vpack.c.b16 %v5773, %v5769
    %v5874 = vpack.c.b16 %v5774, %v5770
    %v5875 = vpack.c.b16 %v5775, %v5771
    %v5876 = vpack.c.b16 %v5776, %v5772
    %v5877 = vpack.c.b16 %v5781, %v5777
    %v5878 = vpack.c.b16 %v5782, %v5778
    %v5879 = vpack.c.b16 %v5783, %v5779
    %v5880 = vpack.c.b16 %v5784, %v5780
    %v5881 = vpack.c.b16 %v5789, %v5785
    %v5882 = vpack.c.b16 %v5790, %v5786
    %v5883 = vpack.c.b16 %v5791, %v5787
    %v5884 = vpack.c.b16 %v5792, %v5788
    %v5885 = vpack.c.b16 %v5797, %v5793
    %v5886 = vpack.c.b16 %v5798, %v5794
    %v5887 = vpack.c.b16 %v5799, %v5795
    %v5888 = vpack.c.b16 %v5800, %v5796
    %v5889 = vpack.c.b16 %v5805, %v5801
    %v5890 = vpack.c.b16 %v5806, %v5802
    %v5891 = vpack.c.b16 %v5807, %v5803
    %v5892 = vpack.c.b16 %v5808, %v5804
    %v5893 = vpack.c.b16 %v5813, %v5809
    %v5894 = vpack.c.b16 %v5814, %v5810
    %v5895 = vpack.c.b16 %v5815, %v5811
    %v5896 = vpack.c.b16 %v5816, %v5812
    %v5897 = vpack.c.b16 %v5821, %v5817
    %v5898 = vpack.c.b16 %v5822, %v5818
    %v5899 = vpack.c.b16 %v5823, %v5819
    %v5900 = vpack.c.b16 %v5824, %v5820
    %v5901 = vpack.c.b16 %v5829, %v5825
    %v5902 = vpack.c.b16 %v5830, %v5826
    %v5903 = vpack.c.b16 %v5831, %v5827
    %v5904 = vpack.c.b16 %v5832, %v5828
    %v5905 = vpack.c.b16 %v5837, %v5833
    %v5906 = vpack.c.b16 %v5838, %v5834
    %v5907 = vpack.c.b16 %v5839, %v5835
    %v5908 = vpack.c.b16 %v5840, %v5836
    %v5909 = vpack.c.b16 %v5845, %v5841
    %v5910 = vpack.c.b16 %v5846, %v5842
    %v5911 = vpack.c.b16 %v5847, %v5843
    %v5912 = vpack.c.b16 %v5848, %v5844
    %5977 = vmatpush.bf16.msra.mxu0 %v5877
    %5978 = vmatpush.bf16.msra.mxu0 %v5873
    %5979 = vmatpush.bf16.msra.mxu0 %v5869
    %5980 = vmatpush.bf16.msra.mxu0 %v5865
    %5981 = vmatpush.bf16.msra.mxu0 %v5861
    %5982 = vmatpush.bf16.msra.mxu0 %v5857
    %5983 = vmatpush.bf16.msra.mxu0 %v5853
    %5984 = vmatpush.bf16.msra.mxu0 %v5849
    %5985 = vmatmul.bf16.gmra.mxu0 %v5653
    %v5986 = vpop.f32.mrf.mxu0
    %v5987 = vadd.f32 0.0, %v5986
    %v5988 = vpop.f32.mrf.mxu0
    %v5989 = vadd.f32 0.0, %v5988
    %5990 = vdwg.mxu0
    %5991 = vmatpush.bf16.msra.mxu0 %v5909
    %5992 = vmatpush.bf16.msra.mxu0 %v5905
    %5993 = vmatpush.bf16.msra.mxu0 %v5901
    %5994 = vmatpush.bf16.msra.mxu0 %v5897
    %5995 = vmatpush.bf16.msra.mxu0 %v5893
    %5996 = vmatpush.bf16.msra.mxu0 %v5889
    %5997 = vmatpush.bf16.msra.mxu0 %v5885
    %5998 = vmatpush.bf16.msra.mxu0 %v5881
    %5999 = vmatmul.bf16.gmra.mxu0 %v5654
    %v6000 = vpop.f32.mrf.mxu0
    %v6001 = vadd.f32 %v5987, %v6000
    %v6002 = vpop.f32.mrf.mxu0
    %v6003 = vadd.f32 %v5989, %v6002
    %6004 = vdwg.mxu0
    %6005 = vmatpush.bf16.msra.mxu0 %v5878
    %6006 = vmatpush.bf16.msra.mxu0 %v5874
    %6007 = vmatpush.bf16.msra.mxu0 %v5870
    %6008 = vmatpush.bf16.msra.mxu0 %v5866
    %6009 = vmatpush.bf16.msra.mxu0 %v5862
    %6010 = vmatpush.bf16.msra.mxu0 %v5858
    %6011 = vmatpush.bf16.msra.mxu0 %v5854
    %6012 = vmatpush.bf16.msra.mxu0 %v5850
    %6013 = vmatmul.bf16.gmra.mxu0 %v5653
    %v6014 = vpop.f32.mrf.mxu0
    %v6015 = vadd.f32 0.0, %v6014
    %v6016 = vpop.f32.mrf.mxu0
    %v6017 = vadd.f32 0.0, %v6016
    %6018 = vdwg.mxu0
    %6019 = vmatpush.bf16.msra.mxu0 %v5910
    %6020 = vmatpush.bf16.msra.mxu0 %v5906
    %6021 = vmatpush.bf16.msra.mxu0 %v5902
    %6022 = vmatpush.bf16.msra.mxu0 %v5898
    %6023 = vmatpush.bf16.msra.mxu0 %v5894
    %6024 = vmatpush.bf16.msra.mxu0 %v5890
    %6025 = vmatpush.bf16.msra.mxu0 %v5886
    %6026 = vmatpush.bf16.msra.mxu0 %v5882
    %6027 = vmatmul.bf16.gmra.mxu0 %v5654
    %v6028 = vpop.f32.mrf.mxu0
    %v6029 = vadd.f32 %v6015, %v6028
    %v6030 = vpop.f32.mrf.mxu0
    %v6031 = vadd.f32 %v6017, %v6030
    %6032 = vdwg.mxu0
    %6033 = vmatpush.bf16.msra.mxu0 %v5879
    %6034 = vmatpush.bf16.msra.mxu0 %v5875
    %6035 = vmatpush.bf16.msra.mxu0 %v5871
    %6036 = vmatpush.bf16.msra.mxu0 %v5867
    %6037 = vmatpush.bf16.msra.mxu0 %v5863
    %6038 = vmatpush.bf16.msra.mxu0 %v5859
    %6039 = vmatpush.bf16.msra.mxu0 %v5855
    %6040 = vmatpush.bf16.msra.mxu0 %v5851
    %6041 = vmatmul.bf16.gmra.mxu0 %v5653
    %v6042 = vpop.f32.mrf.mxu0
    %v6043 = vadd.f32 0.0, %v6042
    %v6044 = vpop.f32.mrf.mxu0
    %v6045 = vadd.f32 0.0, %v6044
    %6046 = vdwg.mxu0
    %6047 = vmatpush.bf16.msra.mxu0 %v5911
    %6048 = vmatpush.bf16.msra.mxu0 %v5907
    %6049 = vmatpush.bf16.msra.mxu0 %v5903
    %6050 = vmatpush.bf16.msra.mxu0 %v5899
    %6051 = vmatpush.bf16.msra.mxu0 %v5895
    %6052 = vmatpush.bf16.msra.mxu0 %v5891
    %6053 = vmatpush.bf16.msra.mxu0 %v5887
    %6054 = vmatpush.bf16.msra.mxu0 %v5883
    %6055 = vmatmul.bf16.gmra.mxu0 %v5654
    %v6056 = vpop.f32.mrf.mxu0
    %v6057 = vadd.f32 %v6043, %v6056
    %v6058 = vpop.f32.mrf.mxu0
    %v6059 = vadd.f32 %v6045, %v6058
    %6060 = vdwg.mxu0
    %6061 = vmatpush.bf16.msra.mxu0 %v5880
    %6062 = vmatpush.bf16.msra.mxu0 %v5876
    %6063 = vmatpush.bf16.msra.mxu0 %v5872
    %6064 = vmatpush.bf16.msra.mxu0 %v5868
    %6065 = vmatpush.bf16.msra.mxu0 %v5864
    %6066 = vmatpush.bf16.msra.mxu0 %v5860
    %6067 = vmatpush.bf16.msra.mxu0 %v5856
    %6068 = vmatpush.bf16.msra.mxu0 %v5852
    %6069 = vmatmul.bf16.gmra.mxu0 %v5653
    %v6070 = vpop.f32.mrf.mxu0
    %v6071 = vadd.f32 0.0, %v6070
    %v6072 = vpop.f32.mrf.mxu0
    %v6073 = vadd.f32 0.0, %v6072
    %6074 = vdwg.mxu0
    %6075 = vmatpush.bf16.msra.mxu0 %v5912
    %6076 = vmatpush.bf16.msra.mxu0 %v5908
    %6077 = vmatpush.bf16.msra.mxu0 %v5904
    %6078 = vmatpush.bf16.msra.mxu0 %v5900
    %6079 = vmatpush.bf16.msra.mxu0 %v5896
    %6080 = vmatpush.bf16.msra.mxu0 %v5892
    %6081 = vmatpush.bf16.msra.mxu0 %v5888
    %6082 = vmatpush.bf16.msra.mxu0 %v5884
    %6083 = vmatmul.bf16.gmra.mxu0 %v5654
    %v6084 = vpop.f32.mrf.mxu0
    %v6085 = vadd.f32 %v6071, %v6084
    %v6086 = vpop.f32.mrf.mxu0
    %v6087 = vadd.f32 %v6073, %v6086
    %6088 = vdwg.mxu0
    %v6089 = vadd.f32 %v5572, %v6001
    %v6090 = vadd.f32 %v5573, %v6029
    %v6091 = vadd.f32 %v5574, %v6057
    %v6092 = vadd.f32 %v5575, %v6085
    %v6093 = vadd.f32 %v5576, %v6003
    %v6094 = vadd.f32 %v5577, %v6031
    %v6095 = vadd.f32 %v5578, %v6059
    %v6096 = vadd.f32 %v5579, %v6087
    %6097 = vst [vmem:[#allocation2] sm:$0xff] %v6089
    %6098 = vst [vmem:[#allocation2 + $0x8] sm:$0xff] %v6090
    %6099 = vst [vmem:[#allocation2 + $0x10] sm:$0xff] %v6091
    %6100 = vst [vmem:[#allocation2 + $0x18] sm:$0xff] %v6092
    %6101 = vst [vmem:[#allocation2 + $0x20] sm:$0xff] %v6093
    %6102 = vst [vmem:[#allocation2 + $0x28] sm:$0xff] %v6094
    %6103 = vst [vmem:[#allocation2 + $0x30] sm:$0xff] %v6095
    %6104 = vst [vmem:[#allocation2 + $0x38] sm:$0xff] %v6096
    %s6105 = scalar_lea.vmem [#allocation3], 64
    %v6106 = vld [vmem:[%s6105] sm:$0xff]
    %v6107 = vld [vmem:[%s6105 + $0x58] sm:$0xff]
    %v6108 = vld [vmem:[%s6105 + $0xb0] sm:$0xff]
    %v6109 = vld [vmem:[%s6105 + $0x108] sm:$0xff]
    %v6110 = vld [vmem:[%s6105 + $0x160] sm:$0xff]
    %v6111 = vld [vmem:[%s6105 + $0x1b8] sm:$0xff]
    %v6112 = vld [vmem:[%s6105 + $0x210] sm:$0xff]
    %v6113 = vld [vmem:[%s6105 + $0x268] sm:$0xff]
    %v6114 = vld [vmem:[%s6105 + $0x2c0] sm:$0xff]
    %v6115 = vld [vmem:[%s6105 + $0x318] sm:$0xff]
    %v6116 = vld [vmem:[%s6105 + $0x370] sm:$0xff]
    %v6117 = vld [vmem:[%s6105 + $0x3c8] sm:$0xff]
    %v6118 = vld [vmem:[%s6105 + $0x420] sm:$0xff]
    %v6119 = vld [vmem:[%s6105 + $0x478] sm:$0xff]
    %v6120 = vld [vmem:[%s6105 + $0x4d0] sm:$0xff]
    %v6121 = vld [vmem:[%s6105 + $0x528] sm:$0xff]
    %v6122 = vld [vmem:[%s6105 + $0x580] sm:$0xff]
    %v6123 = vld [vmem:[%s6105 + $0x5d8] sm:$0xff]
    %v6124 = vld [vmem:[%s6105 + $0x630] sm:$0xff]
    %v6125 = vld [vmem:[%s6105 + $0x688] sm:$0xff]
    %v6126 = vld [vmem:[%s6105 + $0x6e0] sm:$0xff]
    %v6127 = vld [vmem:[%s6105 + $0x738] sm:$0xff]
    %v6128 = vld [vmem:[%s6105 + $0x790] sm:$0xff]
    %v6129 = vld [vmem:[%s6105 + $0x7e8] sm:$0xff]
    %s6130 = scalar_lea.vmem [#allocation5], 16
    %v6131 = vld [vmem:[%s6130] sm:$0x3]
    %v6133 = vperm.slane %v6131, 0
    %v6134 = vperm.slane %v6131, 1
    %v6161 = vunpack.c.l.b16 %v6106
    %v6162 = vunpack.c.h.b16 %v6106
    %v6163 = vunpack.c.l.b16 %v6107
    %v6164 = vunpack.c.h.b16 %v6107
    %v6165 = vunpack.c.l.b16 %v6108
    %v6166 = vunpack.c.h.b16 %v6108
    %v6167 = vunpack.c.l.b16 %v6109
    %v6168 = vunpack.c.h.b16 %v6109
    %v6169 = vunpack.c.l.b16 %v6110
    %v6170 = vunpack.c.h.b16 %v6110
    %v6171 = vunpack.c.l.b16 %v6111
    %v6172 = vunpack.c.h.b16 %v6111
    %v6173 = vunpack.c.l.b16 %v6112
    %v6174 = vunpack.c.h.b16 %v6112
    %v6175 = vunpack.c.l.b16 %v6113
    %v6176 = vunpack.c.h.b16 %v6113
    %v6177 = vunpack.c.l.b16 %v6114
    %v6178 = vunpack.c.h.b16 %v6114
    %v6179 = vunpack.c.l.b16 %v6115
    %v6180 = vunpack.c.h.b16 %v6115
    %v6181 = vunpack.c.l.b16 %v6116
    %v6182 = vunpack.c.h.b16 %v6116
    %v6183 = vunpack.c.l.b16 %v6117
    %v6184 = vunpack.c.h.b16 %v6117
    %v6185 = vunpack.c.l.b16 %v6118
    %v6186 = vunpack.c.h.b16 %v6118
    %v6187 = vunpack.c.l.b16 %v6119
    %v6188 = vunpack.c.h.b16 %v6119
    %v6189 = vunpack.c.l.b16 %v6120
    %v6190 = vunpack.c.h.b16 %v6120
    %v6191 = vunpack.c.l.b16 %v6121
    %v6192 = vunpack.c.h.b16 %v6121
    %v6193 = vunpack.c.l.b16 %v6122
    %v6194 = vunpack.c.h.b16 %v6122
    %v6195 = vunpack.c.l.b16 %v6123
    %v6196 = vunpack.c.h.b16 %v6123
    %v6197 = vunpack.c.l.b16 %v6124
    %v6198 = vunpack.c.h.b16 %v6124
    %v6199 = vunpack.c.l.b16 %v6125
    %v6200 = vunpack.c.h.b16 %v6125
    %v6201 = vunpack.c.l.b16 %v6126
    %v6202 = vunpack.c.h.b16 %v6126
    %v6203 = vunpack.c.l.b16 %v6127
    %v6204 = vunpack.c.h.b16 %v6127
    %v6205 = vunpack.c.l.b16 %v6128
    %v6206 = vunpack.c.h.b16 %v6128
    %v6207 = vunpack.c.l.b16 %v6129
    %v6208 = vunpack.c.h.b16 %v6129
    %v6209 = vpack.c.b16 %v6163, %v6161
    %v6210 = vpack.c.b16 %v6164, %v6162
    %v6211 = vpack.c.b16 %v6167, %v6165
    %v6212 = vpack.c.b16 %v6168, %v6166
    %v6213 = vpack.c.b16 %v6171, %v6169
    %v6214 = vpack.c.b16 %v6172, %v6170
    %v6215 = vpack.c.b16 %v6175, %v6173
    %v6216 = vpack.c.b16 %v6176, %v6174
    %v6217 = vpack.c.b16 %v6179, %v6177
    %v6218 = vpack.c.b16 %v6180, %v6178
    %v6219 = vpack.c.b16 %v6183, %v6181
    %v6220 = vpack.c.b16 %v6184, %v6182
    %v6221 = vpack.c.b16 %v6187, %v6185
    %v6222 = vpack.c.b16 %v6188, %v6186
    %v6223 = vpack.c.b16 %v6191, %v6189
    %v6224 = vpack.c.b16 %v6192, %v6190
    %v6225 = vpack.c.b16 %v6195, %v6193
    %v6226 = vpack.c.b16 %v6196, %v6194
    %v6227 = vpack.c.b16 %v6199, %v6197
    %v6228 = vpack.c.b16 %v6200, %v6198
    %v6229 = vpack.c.b16 %v6203, %v6201
    %v6230 = vpack.c.b16 %v6204, %v6202
    %v6231 = vpack.c.b16 %v6207, %v6205
    %v6232 = vpack.c.b16 %v6208, %v6206
    %6257 = vmatpush.bf16.msra.mxu0 %v6223
    %6258 = vmatpush.bf16.msra.mxu0 %v6221
    %6259 = vmatpush.bf16.msra.mxu0 %v6219
    %6260 = vmatpush.bf16.msra.mxu0 %v6217
    %6261 = vmatpush.bf16.msra.mxu0 %v6215
    %6262 = vmatpush.bf16.msra.mxu0 %v6213
    %6263 = vmatpush.bf16.msra.mxu0 %v6211
    %6264 = vmatpush.bf16.msra.mxu0 %v6209
    %6265 = vmatmul.bf16.gmra.mxu0 %v163
    %v6266 = vpop.f32.mrf.mxu0
    %v6267 = vadd.f32 %v6133, %v6266
    %v6268 = vpop.f32.mrf.mxu0
    %v6269 = vadd.f32 %v6133, %v6268
    %6270 = vdwg.mxu0
    %6271 = vmatpush.bf16.msra.mxu0 0
    %6272 = vmatpush.bf16.msra.mxu0 0
    %6273 = vmatpush.bf16.msra.mxu0 0
    %6274 = vmatpush.bf16.msra.mxu0 0
    %6275 = vmatpush.bf16.msra.mxu0 %v6231
    %6276 = vmatpush.bf16.msra.mxu0 %v6229
    %6277 = vmatpush.bf16.msra.mxu0 %v6227
    %6278 = vmatpush.bf16.msra.mxu0 %v6225
    %6279 = vmatmul.bf16.gmra.mxu0 %v288
    %v6280 = vpop.f32.mrf.mxu0
    %v6281 = vadd.f32 %v6267, %v6280
    %v6282 = vpop.f32.mrf.mxu0
    %v6283 = vadd.f32 %v6269, %v6282
    %6284 = vdwg.mxu0
    %6285 = vmatpush.bf16.msra.mxu0 %v6224
    %6286 = vmatpush.bf16.msra.mxu0 %v6222
    %6287 = vmatpush.bf16.msra.mxu0 %v6220
    %6288 = vmatpush.bf16.msra.mxu0 %v6218
    %6289 = vmatpush.bf16.msra.mxu0 %v6216
    %6290 = vmatpush.bf16.msra.mxu0 %v6214
    %6291 = vmatpush.bf16.msra.mxu0 %v6212
    %6292 = vmatpush.bf16.msra.mxu0 %v6210
    %6293 = vmatmul.bf16.gmra.mxu0 %v163
    %v6294 = vpop.f32.mrf.mxu0
    %v6295 = vadd.f32 %v6134, %v6294
    %v6296 = vpop.f32.mrf.mxu0
    %v6297 = vadd.f32 %v6134, %v6296
    %6298 = vdwg.mxu0
    %6299 = vmatpush.bf16.msra.mxu0 0
    %6300 = vmatpush.bf16.msra.mxu0 0
    %6301 = vmatpush.bf16.msra.mxu0 0
    %6302 = vmatpush.bf16.msra.mxu0 0
    %6303 = vmatpush.bf16.msra.mxu0 %v6232
    %6304 = vmatpush.bf16.msra.mxu0 %v6230
    %6305 = vmatpush.bf16.msra.mxu0 %v6228
    %6306 = vmatpush.bf16.msra.mxu0 %v6226
    %6307 = vmatmul.bf16.gmra.mxu0 %v288
    %v6308 = vpop.f32.mrf.mxu0
    %v6309 = vadd.f32 %v6295, %v6308
    %v6310 = vpop.f32.mrf.mxu0
    %v6311 = vadd.f32 %v6297, %v6310
    %6312 = vdwg.mxu0
    %v6313 = vpack.c.bf16 %v6309, %v6281
    %v6314 = vpack.c.bf16 %v6311, %v6283
    %s6315 = scalar_lea.vmem %s7, 64
    %6316 = vst [vmem:[%s6315] sm:$0xff] %v6313
    %6317 = vst [vmem:[%s6315 + $0x58] sm:$0xff] %v6314
    %v6318 = vld [vmem:[#allocation2] sm:$0xff]
    %v6319 = vld [vmem:[#allocation2 + $0x8] sm:$0xff]
    %v6320 = vld [vmem:[#allocation2 + $0x10] sm:$0xff]
    %v6321 = vld [vmem:[#allocation2 + $0x18] sm:$0xff]
    %v6322 = vld [vmem:[#allocation2 + $0x20] sm:$0xff]
    %v6323 = vld [vmem:[#allocation2 + $0x28] sm:$0xff]
    %v6324 = vld [vmem:[#allocation2 + $0x30] sm:$0xff]
    %v6325 = vld [vmem:[#allocation2 + $0x38] sm:$0xff]
    %s6326 = smul.u32 256, 4
    %s6327 = smul.addr %s6326, 4
    %s6328 = scalar_lea.vmem [#allocation7], %s6327
    %v6329 = vld [vmem:[%s6328] sm:$0xff]
    %v6330 = vld [vmem:[%s6328 + $0x8] sm:$0xff]
    %v6331 = vld [vmem:[%s6328 + $0x10] sm:$0xff]
    %v6332 = vld [vmem:[%s6328 + $0x18] sm:$0xff]
    %v6333 = vld [vmem:[%s6328 + $0x20] sm:$0xff]
    %v6334 = vld [vmem:[%s6328 + $0x28] sm:$0xff]
    %v6335 = vld [vmem:[%s6328 + $0x30] sm:$0xff]
    %v6336 = vld [vmem:[%s6328 + $0x38] sm:$0xff]
    %v6337 = vld [vmem:[%s6328 + $0x40] sm:$0xff]
    %v6338 = vld [vmem:[%s6328 + $0x48] sm:$0xff]
    %v6339 = vld [vmem:[%s6328 + $0x50] sm:$0xff]
    %v6340 = vld [vmem:[%s6328 + $0x58] sm:$0xff]
    %v6341 = vld [vmem:[%s6328 + $0x60] sm:$0xff]
    %v6342 = vld [vmem:[%s6328 + $0x68] sm:$0xff]
    %v6343 = vld [vmem:[%s6328 + $0x70] sm:$0xff]
    %v6344 = vld [vmem:[%s6328 + $0x78] sm:$0xff]
    %v6345 = vld [vmem:[%s6328 + $0x80] sm:$0xff]
    %v6346 = vld [vmem:[%s6328 + $0x88] sm:$0xff]
    %v6347 = vld [vmem:[%s6328 + $0x90] sm:$0xff]
    %v6348 = vld [vmem:[%s6328 + $0x98] sm:$0xff]
    %v6349 = vld [vmem:[%s6328 + $0xa0] sm:$0xff]
    %v6350 = vld [vmem:[%s6328 + $0xa8] sm:$0xff]
    %v6351 = vld [vmem:[%s6328 + $0xb0] sm:$0xff]
    %v6352 = vld [vmem:[%s6328 + $0xb8] sm:$0xff]
    %v6353 = vld [vmem:[%s6328 + $0xc0] sm:$0xff]
    %v6354 = vld [vmem:[%s6328 + $0xc8] sm:$0xff]
    %v6355 = vld [vmem:[%s6328 + $0xd0] sm:$0xff]
    %v6356 = vld [vmem:[%s6328 + $0xd8] sm:$0xff]
    %v6357 = vld [vmem:[%s6328 + $0xe0] sm:$0xff]
    %v6358 = vld [vmem:[%s6328 + $0xe8] sm:$0xff]
    %v6359 = vld [vmem:[%s6328 + $0xf0] sm:$0xff]
    %v6360 = vld [vmem:[%s6328 + $0xf8] sm:$0xff]
    %v6361 = vld [vmem:[%s6328 + $0x100] sm:$0xff]
    %v6362 = vld [vmem:[%s6328 + $0x108] sm:$0xff]
    %v6363 = vld [vmem:[%s6328 + $0x110] sm:$0xff]
    %v6364 = vld [vmem:[%s6328 + $0x118] sm:$0xff]
    %v6365 = vld [vmem:[%s6328 + $0x120] sm:$0xff]
    %v6366 = vld [vmem:[%s6328 + $0x128] sm:$0xff]
    %v6367 = vld [vmem:[%s6328 + $0x130] sm:$0xff]
    %v6368 = vld [vmem:[%s6328 + $0x138] sm:$0xff]
    %v6369 = vld [vmem:[%s6328 + $0x140] sm:$0xff]
    %v6370 = vld [vmem:[%s6328 + $0x148] sm:$0xff]
    %v6371 = vld [vmem:[%s6328 + $0x150] sm:$0xff]
    %v6372 = vld [vmem:[%s6328 + $0x158] sm:$0xff]
    %v6373 = vld [vmem:[%s6328 + $0x160] sm:$0xff]
    %v6374 = vld [vmem:[%s6328 + $0x168] sm:$0xff]
    %v6375 = vld [vmem:[%s6328 + $0x170] sm:$0xff]
    %v6376 = vld [vmem:[%s6328 + $0x178] sm:$0xff]
    %v6377 = vld [vmem:[%s6328 + $0x180] sm:$0xff]
    %v6378 = vld [vmem:[%s6328 + $0x188] sm:$0xff]
    %v6379 = vld [vmem:[%s6328 + $0x190] sm:$0xff]
    %v6380 = vld [vmem:[%s6328 + $0x198] sm:$0xff]
    %v6381 = vld [vmem:[%s6328 + $0x1a0] sm:$0xff]
    %v6382 = vld [vmem:[%s6328 + $0x1a8] sm:$0xff]
    %v6383 = vld [vmem:[%s6328 + $0x1b0] sm:$0xff]
    %v6384 = vld [vmem:[%s6328 + $0x1b8] sm:$0xff]
    %v6385 = vld [vmem:[%s6328 + $0x1c0] sm:$0xff]
    %v6386 = vld [vmem:[%s6328 + $0x1c8] sm:$0xff]
    %v6387 = vld [vmem:[%s6328 + $0x1d0] sm:$0xff]
    %v6388 = vld [vmem:[%s6328 + $0x1d8] sm:$0xff]
    %v6389 = vld [vmem:[%s6328 + $0x1e0] sm:$0xff]
    %v6390 = vld [vmem:[%s6328 + $0x1e8] sm:$0xff]
    %v6391 = vld [vmem:[%s6328 + $0x1f0] sm:$0xff]
    %v6392 = vld [vmem:[%s6328 + $0x1f8] sm:$0xff]
    %v6395 = vunpack.c.l.b16 %v6313
    %v6396 = vunpack.c.h.b16 %v6313
    %v6397 = vunpack.c.l.b16 %v6314
    %v6398 = vunpack.c.h.b16 %v6314
    %v6399 = vpack.c.b16 %v6397, %v6395
    %v6400 = vpack.c.b16 %v6398, %v6396
    %v6467 = vunpack.c.l.b16 %v6329
    %v6468 = vunpack.c.h.b16 %v6329
    %v6469 = vunpack.c.l.b16 %v6330
    %v6470 = vunpack.c.h.b16 %v6330
    %v6471 = vunpack.c.l.b16 %v6331
    %v6472 = vunpack.c.h.b16 %v6331
    %v6473 = vunpack.c.l.b16 %v6332
    %v6474 = vunpack.c.h.b16 %v6332
    %v6475 = vunpack.c.l.b16 %v6333
    %v6476 = vunpack.c.h.b16 %v6333
    %v6477 = vunpack.c.l.b16 %v6334
    %v6478 = vunpack.c.h.b16 %v6334
    %v6479 = vunpack.c.l.b16 %v6335
    %v6480 = vunpack.c.h.b16 %v6335
    %v6481 = vunpack.c.l.b16 %v6336
    %v6482 = vunpack.c.h.b16 %v6336
    %v6483 = vunpack.c.l.b16 %v6337
    %v6484 = vunpack.c.h.b16 %v6337
    %v6485 = vunpack.c.l.b16 %v6338
    %v6486 = vunpack.c.h.b16 %v6338
    %v6487 = vunpack.c.l.b16 %v6339
    %v6488 = vunpack.c.h.b16 %v6339
    %v6489 = vunpack.c.l.b16 %v6340
    %v6490 = vunpack.c.h.b16 %v6340
    %v6491 = vunpack.c.l.b16 %v6341
    %v6492 = vunpack.c.h.b16 %v6341
    %v6493 = vunpack.c.l.b16 %v6342
    %v6494 = vunpack.c.h.b16 %v6342
    %v6495 = vunpack.c.l.b16 %v6343
    %v6496 = vunpack.c.h.b16 %v6343
    %v6497 = vunpack.c.l.b16 %v6344
    %v6498 = vunpack.c.h.b16 %v6344
    %v6499 = vunpack.c.l.b16 %v6345
    %v6500 = vunpack.c.h.b16 %v6345
    %v6501 = vunpack.c.l.b16 %v6346
    %v6502 = vunpack.c.h.b16 %v6346
    %v6503 = vunpack.c.l.b16 %v6347
    %v6504 = vunpack.c.h.b16 %v6347
    %v6505 = vunpack.c.l.b16 %v6348
    %v6506 = vunpack.c.h.b16 %v6348
    %v6507 = vunpack.c.l.b16 %v6349
    %v6508 = vunpack.c.h.b16 %v6349
    %v6509 = vunpack.c.l.b16 %v6350
    %v6510 = vunpack.c.h.b16 %v6350
    %v6511 = vunpack.c.l.b16 %v6351
    %v6512 = vunpack.c.h.b16 %v6351
    %v6513 = vunpack.c.l.b16 %v6352
    %v6514 = vunpack.c.h.b16 %v6352
    %v6515 = vunpack.c.l.b16 %v6353
    %v6516 = vunpack.c.h.b16 %v6353
    %v6517 = vunpack.c.l.b16 %v6354
    %v6518 = vunpack.c.h.b16 %v6354
    %v6519 = vunpack.c.l.b16 %v6355
    %v6520 = vunpack.c.h.b16 %v6355
    %v6521 = vunpack.c.l.b16 %v6356
    %v6522 = vunpack.c.h.b16 %v6356
    %v6523 = vunpack.c.l.b16 %v6357
    %v6524 = vunpack.c.h.b16 %v6357
    %v6525 = vunpack.c.l.b16 %v6358
    %v6526 = vunpack.c.h.b16 %v6358
    %v6527 = vunpack.c.l.b16 %v6359
    %v6528 = vunpack.c.h.b16 %v6359
    %v6529 = vunpack.c.l.b16 %v6360
    %v6530 = vunpack.c.h.b16 %v6360
    %v6531 = vunpack.c.l.b16 %v6361
    %v6532 = vunpack.c.h.b16 %v6361
    %v6533 = vunpack.c.l.b16 %v6362
    %v6534 = vunpack.c.h.b16 %v6362
    %v6535 = vunpack.c.l.b16 %v6363
    %v6536 = vunpack.c.h.b16 %v6363
    %v6537 = vunpack.c.l.b16 %v6364
    %v6538 = vunpack.c.h.b16 %v6364
    %v6539 = vunpack.c.l.b16 %v6365
    %v6540 = vunpack.c.h.b16 %v6365
    %v6541 = vunpack.c.l.b16 %v6366
    %v6542 = vunpack.c.h.b16 %v6366
    %v6543 = vunpack.c.l.b16 %v6367
    %v6544 = vunpack.c.h.b16 %v6367
    %v6545 = vunpack.c.l.b16 %v6368
    %v6546 = vunpack.c.h.b16 %v6368
    %v6547 = vunpack.c.l.b16 %v6369
    %v6548 = vunpack.c.h.b16 %v6369
    %v6549 = vunpack.c.l.b16 %v6370
    %v6550 = vunpack.c.h.b16 %v6370
    %v6551 = vunpack.c.l.b16 %v6371
    %v6552 = vunpack.c.h.b16 %v6371
    %v6553 = vunpack.c.l.b16 %v6372
    %v6554 = vunpack.c.h.b16 %v6372
    %v6555 = vunpack.c.l.b16 %v6373
    %v6556 = vunpack.c.h.b16 %v6373
    %v6557 = vunpack.c.l.b16 %v6374
    %v6558 = vunpack.c.h.b16 %v6374
    %v6559 = vunpack.c.l.b16 %v6375
    %v6560 = vunpack.c.h.b16 %v6375
    %v6561 = vunpack.c.l.b16 %v6376
    %v6562 = vunpack.c.h.b16 %v6376
    %v6563 = vunpack.c.l.b16 %v6377
    %v6564 = vunpack.c.h.b16 %v6377
    %v6565 = vunpack.c.l.b16 %v6378
    %v6566 = vunpack.c.h.b16 %v6378
    %v6567 = vunpack.c.l.b16 %v6379
    %v6568 = vunpack.c.h.b16 %v6379
    %v6569 = vunpack.c.l.b16 %v6380
    %v6570 = vunpack.c.h.b16 %v6380
    %v6571 = vunpack.c.l.b16 %v6381
    %v6572 = vunpack.c.h.b16 %v6381
    %v6573 = vunpack.c.l.b16 %v6382
    %v6574 = vunpack.c.h.b16 %v6382
    %v6575 = vunpack.c.l.b16 %v6383
    %v6576 = vunpack.c.h.b16 %v6383
    %v6577 = vunpack.c.l.b16 %v6384
    %v6578 = vunpack.c.h.b16 %v6384
    %v6579 = vunpack.c.l.b16 %v6385
    %v6580 = vunpack.c.h.b16 %v6385
    %v6581 = vunpack.c.l.b16 %v6386
    %v6582 = vunpack.c.h.b16 %v6386
    %v6583 = vunpack.c.l.b16 %v6387
    %v6584 = vunpack.c.h.b16 %v6387
    %v6585 = vunpack.c.l.b16 %v6388
    %v6586 = vunpack.c.h.b16 %v6388
    %v6587 = vunpack.c.l.b16 %v6389
    %v6588 = vunpack.c.h.b16 %v6389
    %v6589 = vunpack.c.l.b16 %v6390
    %v6590 = vunpack.c.h.b16 %v6390
    %v6591 = vunpack.c.l.b16 %v6391
    %v6592 = vunpack.c.h.b16 %v6391
    %v6593 = vunpack.c.l.b16 %v6392
    %v6594 = vunpack.c.h.b16 %v6392
    %v6595 = vpack.c.b16 %v6471, %v6467
    %v6596 = vpack.c.b16 %v6472, %v6468
    %v6597 = vpack.c.b16 %v6473, %v6469
    %v6598 = vpack.c.b16 %v6474, %v6470
    %v6599 = vpack.c.b16 %v6479, %v6475
    %v6600 = vpack.c.b16 %v6480, %v6476
    %v6601 = vpack.c.b16 %v6481, %v6477
    %v6602 = vpack.c.b16 %v6482, %v6478
    %v6603 = vpack.c.b16 %v6487, %v6483
    %v6604 = vpack.c.b16 %v6488, %v6484
    %v6605 = vpack.c.b16 %v6489, %v6485
    %v6606 = vpack.c.b16 %v6490, %v6486
    %v6607 = vpack.c.b16 %v6495, %v6491
    %v6608 = vpack.c.b16 %v6496, %v6492
    %v6609 = vpack.c.b16 %v6497, %v6493
    %v6610 = vpack.c.b16 %v6498, %v6494
    %v6611 = vpack.c.b16 %v6503, %v6499
    %v6612 = vpack.c.b16 %v6504, %v6500
    %v6613 = vpack.c.b16 %v6505, %v6501
    %v6614 = vpack.c.b16 %v6506, %v6502
    %v6615 = vpack.c.b16 %v6511, %v6507
    %v6616 = vpack.c.b16 %v6512, %v6508
    %v6617 = vpack.c.b16 %v6513, %v6509
    %v6618 = vpack.c.b16 %v6514, %v6510
    %v6619 = vpack.c.b16 %v6519, %v6515
    %v6620 = vpack.c.b16 %v6520, %v6516
    %v6621 = vpack.c.b16 %v6521, %v6517
    %v6622 = vpack.c.b16 %v6522, %v6518
    %v6623 = vpack.c.b16 %v6527, %v6523
    %v6624 = vpack.c.b16 %v6528, %v6524
    %v6625 = vpack.c.b16 %v6529, %v6525
    %v6626 = vpack.c.b16 %v6530, %v6526
    %v6627 = vpack.c.b16 %v6535, %v6531
    %v6628 = vpack.c.b16 %v6536, %v6532
    %v6629 = vpack.c.b16 %v6537, %v6533
    %v6630 = vpack.c.b16 %v6538, %v6534
    %v6631 = vpack.c.b16 %v6543, %v6539
    %v6632 = vpack.c.b16 %v6544, %v6540
    %v6633 = vpack.c.b16 %v6545, %v6541
    %v6634 = vpack.c.b16 %v6546, %v6542
    %v6635 = vpack.c.b16 %v6551, %v6547
    %v6636 = vpack.c.b16 %v6552, %v6548
    %v6637 = vpack.c.b16 %v6553, %v6549
    %v6638 = vpack.c.b16 %v6554, %v6550
    %v6639 = vpack.c.b16 %v6559, %v6555
    %v6640 = vpack.c.b16 %v6560, %v6556
    %v6641 = vpack.c.b16 %v6561, %v6557
    %v6642 = vpack.c.b16 %v6562, %v6558
    %v6643 = vpack.c.b16 %v6567, %v6563
    %v6644 = vpack.c.b16 %v6568, %v6564
    %v6645 = vpack.c.b16 %v6569, %v6565
    %v6646 = vpack.c.b16 %v6570, %v6566
    %v6647 = vpack.c.b16 %v6575, %v6571
    %v6648 = vpack.c.b16 %v6576, %v6572
    %v6649 = vpack.c.b16 %v6577, %v6573
    %v6650 = vpack.c.b16 %v6578, %v6574
    %v6651 = vpack.c.b16 %v6583, %v6579
    %v6652 = vpack.c.b16 %v6584, %v6580
    %v6653 = vpack.c.b16 %v6585, %v6581
    %v6654 = vpack.c.b16 %v6586, %v6582
    %v6655 = vpack.c.b16 %v6591, %v6587
    %v6656 = vpack.c.b16 %v6592, %v6588
    %v6657 = vpack.c.b16 %v6593, %v6589
    %v6658 = vpack.c.b16 %v6594, %v6590
    %6723 = vmatpush.bf16.msra.mxu0 %v6623
    %6724 = vmatpush.bf16.msra.mxu0 %v6619
    %6725 = vmatpush.bf16.msra.mxu0 %v6615
    %6726 = vmatpush.bf16.msra.mxu0 %v6611
    %6727 = vmatpush.bf16.msra.mxu0 %v6607
    %6728 = vmatpush.bf16.msra.mxu0 %v6603
    %6729 = vmatpush.bf16.msra.mxu0 %v6599
    %6730 = vmatpush.bf16.msra.mxu0 %v6595
    %6731 = vmatmul.bf16.gmra.mxu0 %v6399
    %v6732 = vpop.f32.mrf.mxu0
    %v6733 = vadd.f32 0.0, %v6732
    %v6734 = vpop.f32.mrf.mxu0
    %v6735 = vadd.f32 0.0, %v6734
    %6736 = vdwg.mxu0
    %6737 = vmatpush.bf16.msra.mxu0 %v6655
    %6738 = vmatpush.bf16.msra.mxu0 %v6651
    %6739 = vmatpush.bf16.msra.mxu0 %v6647
    %6740 = vmatpush.bf16.msra.mxu0 %v6643
    %6741 = vmatpush.bf16.msra.mxu0 %v6639
    %6742 = vmatpush.bf16.msra.mxu0 %v6635
    %6743 = vmatpush.bf16.msra.mxu0 %v6631
    %6744 = vmatpush.bf16.msra.mxu0 %v6627
    %6745 = vmatmul.bf16.gmra.mxu0 %v6400
    %v6746 = vpop.f32.mrf.mxu0
    %v6747 = vadd.f32 %v6733, %v6746
    %v6748 = vpop.f32.mrf.mxu0
    %v6749 = vadd.f32 %v6735, %v6748
    %6750 = vdwg.mxu0
    %6751 = vmatpush.bf16.msra.mxu0 %v6624
    %6752 = vmatpush.bf16.msra.mxu0 %v6620
    %6753 = vmatpush.bf16.msra.mxu0 %v6616
    %6754 = vmatpush.bf16.msra.mxu0 %v6612
    %6755 = vmatpush.bf16.msra.mxu0 %v6608
    %6756 = vmatpush.bf16.msra.mxu0 %v6604
    %6757 = vmatpush.bf16.msra.mxu0 %v6600
    %6758 = vmatpush.bf16.msra.mxu0 %v6596
    %6759 = vmatmul.bf16.gmra.mxu0 %v6399
    %v6760 = vpop.f32.mrf.mxu0
    %v6761 = vadd.f32 0.0, %v6760
    %v6762 = vpop.f32.mrf.mxu0
    %v6763 = vadd.f32 0.0, %v6762
    %6764 = vdwg.mxu0
    %6765 = vmatpush.bf16.msra.mxu0 %v6656
    %6766 = vmatpush.bf16.msra.mxu0 %v6652
    %6767 = vmatpush.bf16.msra.mxu0 %v6648
    %6768 = vmatpush.bf16.msra.mxu0 %v6644
    %6769 = vmatpush.bf16.msra.mxu0 %v6640
    %6770 = vmatpush.bf16.msra.mxu0 %v6636
    %6771 = vmatpush.bf16.msra.mxu0 %v6632
    %6772 = vmatpush.bf16.msra.mxu0 %v6628
    %6773 = vmatmul.bf16.gmra.mxu0 %v6400
    %v6774 = vpop.f32.mrf.mxu0
    %v6775 = vadd.f32 %v6761, %v6774
    %v6776 = vpop.f32.mrf.mxu0
    %v6777 = vadd.f32 %v6763, %v6776
    %6778 = vdwg.mxu0
    %6779 = vmatpush.bf16.msra.mxu0 %v6625
    %6780 = vmatpush.bf16.msra.mxu0 %v6621
    %6781 = vmatpush.bf16.msra.mxu0 %v6617
    %6782 = vmatpush.bf16.msra.mxu0 %v6613
    %6783 = vmatpush.bf16.msra.mxu0 %v6609
    %6784 = vmatpush.bf16.msra.mxu0 %v6605
    %6785 = vmatpush.bf16.msra.mxu0 %v6601
    %6786 = vmatpush.bf16.msra.mxu0 %v6597
    %6787 = vmatmul.bf16.gmra.mxu0 %v6399
    %v6788 = vpop.f32.mrf.mxu0
    %v6789 = vadd.f32 0.0, %v6788
    %v6790 = vpop.f32.mrf.mxu0
    %v6791 = vadd.f32 0.0, %v6790
    %6792 = vdwg.mxu0
    %6793 = vmatpush.bf16.msra.mxu0 %v6657
    %6794 = vmatpush.bf16.msra.mxu0 %v6653
    %6795 = vmatpush.bf16.msra.mxu0 %v6649
    %6796 = vmatpush.bf16.msra.mxu0 %v6645
    %6797 = vmatpush.bf16.msra.mxu0 %v6641
    %6798 = vmatpush.bf16.msra.mxu0 %v6637
    %6799 = vmatpush.bf16.msra.mxu0 %v6633
    %6800 = vmatpush.bf16.msra.mxu0 %v6629
    %6801 = vmatmul.bf16.gmra.mxu0 %v6400
    %v6802 = vpop.f32.mrf.mxu0
    %v6803 = vadd.f32 %v6789, %v6802
    %v6804 = vpop.f32.mrf.mxu0
    %v6805 = vadd.f32 %v6791, %v6804
    %6806 = vdwg.mxu0
    %6807 = vmatpush.bf16.msra.mxu0 %v6626
    %6808 = vmatpush.bf16.msra.mxu0 %v6622
    %6809 = vmatpush.bf16.msra.mxu0 %v6618
    %6810 = vmatpush.bf16.msra.mxu0 %v6614
    %6811 = vmatpush.bf16.msra.mxu0 %v6610
    %6812 = vmatpush.bf16.msra.mxu0 %v6606
    %6813 = vmatpush.bf16.msra.mxu0 %v6602
    %6814 = vmatpush.bf16.msra.mxu0 %v6598
    %6815 = vmatmul.bf16.gmra.mxu0 %v6399
    %v6816 = vpop.f32.mrf.mxu0
    %v6817 = vadd.f32 0.0, %v6816
    %v6818 = vpop.f32.mrf.mxu0
    %v6819 = vadd.f32 0.0, %v6818
    %6820 = vdwg.mxu0
    %6821 = vmatpush.bf16.msra.mxu0 %v6658
    %6822 = vmatpush.bf16.msra.mxu0 %v6654
    %6823 = vmatpush.bf16.msra.mxu0 %v6650
    %6824 = vmatpush.bf16.msra.mxu0 %v6646
    %6825 = vmatpush.bf16.msra.mxu0 %v6642
    %6826 = vmatpush.bf16.msra.mxu0 %v6638
    %6827 = vmatpush.bf16.msra.mxu0 %v6634
    %6828 = vmatpush.bf16.msra.mxu0 %v6630
    %6829 = vmatmul.bf16.gmra.mxu0 %v6400
    %v6830 = vpop.f32.mrf.mxu0
    %v6831 = vadd.f32 %v6817, %v6830
    %v6832 = vpop.f32.mrf.mxu0
    %v6833 = vadd.f32 %v6819, %v6832
    %6834 = vdwg.mxu0
    %v6835 = vadd.f32 %v6318, %v6747
    %v6836 = vadd.f32 %v6319, %v6775
    %v6837 = vadd.f32 %v6320, %v6803
    %v6838 = vadd.f32 %v6321, %v6831
    %v6839 = vadd.f32 %v6322, %v6749
    %v6840 = vadd.f32 %v6323, %v6777
    %v6841 = vadd.f32 %v6324, %v6805
    %v6842 = vadd.f32 %v6325, %v6833
    %6843 = vst [vmem:[#allocation2] sm:$0xff] %v6835
    %6844 = vst [vmem:[#allocation2 + $0x8] sm:$0xff] %v6836
    %6845 = vst [vmem:[#allocation2 + $0x10] sm:$0xff] %v6837
    %6846 = vst [vmem:[#allocation2 + $0x18] sm:$0xff] %v6838
    %6847 = vst [vmem:[#allocation2 + $0x20] sm:$0xff] %v6839
    %6848 = vst [vmem:[#allocation2 + $0x28] sm:$0xff] %v6840
    %6849 = vst [vmem:[#allocation2 + $0x30] sm:$0xff] %v6841
    %6850 = vst [vmem:[#allocation2 + $0x38] sm:$0xff] %v6842
    %s6851 = scalar_lea.vmem [#allocation3], 72
    %v6852 = vld [vmem:[%s6851] sm:$0xff]
    %v6853 = vld [vmem:[%s6851 + $0x58] sm:$0xff]
    %v6854 = vld [vmem:[%s6851 + $0xb0] sm:$0xff]
    %v6855 = vld [vmem:[%s6851 + $0x108] sm:$0xff]
    %v6856 = vld [vmem:[%s6851 + $0x160] sm:$0xff]
    %v6857 = vld [vmem:[%s6851 + $0x1b8] sm:$0xff]
    %v6858 = vld [vmem:[%s6851 + $0x210] sm:$0xff]
    %v6859 = vld [vmem:[%s6851 + $0x268] sm:$0xff]
    %v6860 = vld [vmem:[%s6851 + $0x2c0] sm:$0xff]
    %v6861 = vld [vmem:[%s6851 + $0x318] sm:$0xff]
    %v6862 = vld [vmem:[%s6851 + $0x370] sm:$0xff]
    %v6863 = vld [vmem:[%s6851 + $0x3c8] sm:$0xff]
    %v6864 = vld [vmem:[%s6851 + $0x420] sm:$0xff]
    %v6865 = vld [vmem:[%s6851 + $0x478] sm:$0xff]
    %v6866 = vld [vmem:[%s6851 + $0x4d0] sm:$0xff]
    %v6867 = vld [vmem:[%s6851 + $0x528] sm:$0xff]
    %v6868 = vld [vmem:[%s6851 + $0x580] sm:$0xff]
    %v6869 = vld [vmem:[%s6851 + $0x5d8] sm:$0xff]
    %v6870 = vld [vmem:[%s6851 + $0x630] sm:$0xff]
    %v6871 = vld [vmem:[%s6851 + $0x688] sm:$0xff]
    %v6872 = vld [vmem:[%s6851 + $0x6e0] sm:$0xff]
    %v6873 = vld [vmem:[%s6851 + $0x738] sm:$0xff]
    %v6874 = vld [vmem:[%s6851 + $0x790] sm:$0xff]
    %v6875 = vld [vmem:[%s6851 + $0x7e8] sm:$0xff]
    %s6876 = scalar_lea.vmem [#allocation5], 18
    %v6877 = vld [vmem:[%s6876] sm:$0x3]
    %v6879 = vperm.slane %v6877, 0
    %v6880 = vperm.slane %v6877, 1
    %v6907 = vunpack.c.l.b16 %v6852
    %v6908 = vunpack.c.h.b16 %v6852
    %v6909 = vunpack.c.l.b16 %v6853
    %v6910 = vunpack.c.h.b16 %v6853
    %v6911 = vunpack.c.l.b16 %v6854
    %v6912 = vunpack.c.h.b16 %v6854
    %v6913 = vunpack.c.l.b16 %v6855
    %v6914 = vunpack.c.h.b16 %v6855
    %v6915 = vunpack.c.l.b16 %v6856
    %v6916 = vunpack.c.h.b16 %v6856
    %v6917 = vunpack.c.l.b16 %v6857
    %v6918 = vunpack.c.h.b16 %v6857
    %v6919 = vunpack.c.l.b16 %v6858
    %v6920 = vunpack.c.h.b16 %v6858
    %v6921 = vunpack.c.l.b16 %v6859
    %v6922 = vunpack.c.h.b16 %v6859
    %v6923 = vunpack.c.l.b16 %v6860
    %v6924 = vunpack.c.h.b16 %v6860
    %v6925 = vunpack.c.l.b16 %v6861
    %v6926 = vunpack.c.h.b16 %v6861
    %v6927 = vunpack.c.l.b16 %v6862
    %v6928 = vunpack.c.h.b16 %v6862
    %v6929 = vunpack.c.l.b16 %v6863
    %v6930 = vunpack.c.h.b16 %v6863
    %v6931 = vunpack.c.l.b16 %v6864
    %v6932 = vunpack.c.h.b16 %v6864
    %v6933 = vunpack.c.l.b16 %v6865
    %v6934 = vunpack.c.h.b16 %v6865
    %v6935 = vunpack.c.l.b16 %v6866
    %v6936 = vunpack.c.h.b16 %v6866
    %v6937 = vunpack.c.l.b16 %v6867
    %v6938 = vunpack.c.h.b16 %v6867
    %v6939 = vunpack.c.l.b16 %v6868
    %v6940 = vunpack.c.h.b16 %v6868
    %v6941 = vunpack.c.l.b16 %v6869
    %v6942 = vunpack.c.h.b16 %v6869
    %v6943 = vunpack.c.l.b16 %v6870
    %v6944 = vunpack.c.h.b16 %v6870
    %v6945 = vunpack.c.l.b16 %v6871
    %v6946 = vunpack.c.h.b16 %v6871
    %v6947 = vunpack.c.l.b16 %v6872
    %v6948 = vunpack.c.h.b16 %v6872
    %v6949 = vunpack.c.l.b16 %v6873
    %v6950 = vunpack.c.h.b16 %v6873
    %v6951 = vunpack.c.l.b16 %v6874
    %v6952 = vunpack.c.h.b16 %v6874
    %v6953 = vunpack.c.l.b16 %v6875
    %v6954 = vunpack.c.h.b16 %v6875
    %v6955 = vpack.c.b16 %v6909, %v6907
    %v6956 = vpack.c.b16 %v6910, %v6908
    %v6957 = vpack.c.b16 %v6913, %v6911
    %v6958 = vpack.c.b16 %v6914, %v6912
    %v6959 = vpack.c.b16 %v6917, %v6915
    %v6960 = vpack.c.b16 %v6918, %v6916
    %v6961 = vpack.c.b16 %v6921, %v6919
    %v6962 = vpack.c.b16 %v6922, %v6920
    %v6963 = vpack.c.b16 %v6925, %v6923
    %v6964 = vpack.c.b16 %v6926, %v6924
    %v6965 = vpack.c.b16 %v6929, %v6927
    %v6966 = vpack.c.b16 %v6930, %v6928
    %v6967 = vpack.c.b16 %v6933, %v6931
    %v6968 = vpack.c.b16 %v6934, %v6932
    %v6969 = vpack.c.b16 %v6937, %v6935
    %v6970 = vpack.c.b16 %v6938, %v6936
    %v6971 = vpack.c.b16 %v6941, %v6939
    %v6972 = vpack.c.b16 %v6942, %v6940
    %v6973 = vpack.c.b16 %v6945, %v6943
    %v6974 = vpack.c.b16 %v6946, %v6944
    %v6975 = vpack.c.b16 %v6949, %v6947
    %v6976 = vpack.c.b16 %v6950, %v6948
    %v6977 = vpack.c.b16 %v6953, %v6951
    %v6978 = vpack.c.b16 %v6954, %v6952
    %7003 = vmatpush.bf16.msra.mxu0 %v6969
    %7004 = vmatpush.bf16.msra.mxu0 %v6967
    %7005 = vmatpush.bf16.msra.mxu0 %v6965
    %7006 = vmatpush.bf16.msra.mxu0 %v6963
    %7007 = vmatpush.bf16.msra.mxu0 %v6961
    %7008 = vmatpush.bf16.msra.mxu0 %v6959
    %7009 = vmatpush.bf16.msra.mxu0 %v6957
    %7010 = vmatpush.bf16.msra.mxu0 %v6955
    %7011 = vmatmul.bf16.gmra.mxu0 %v163
    %v7012 = vpop.f32.mrf.mxu0
    %v7013 = vadd.f32 %v6879, %v7012
    %v7014 = vpop.f32.mrf.mxu0
    %v7015 = vadd.f32 %v6879, %v7014
    %7016 = vdwg.mxu0
    %7017 = vmatpush.bf16.msra.mxu0 0
    %7018 = vmatpush.bf16.msra.mxu0 0
    %7019 = vmatpush.bf16.msra.mxu0 0
    %7020 = vmatpush.bf16.msra.mxu0 0
    %7021 = vmatpush.bf16.msra.mxu0 %v6977
    %7022 = vmatpush.bf16.msra.mxu0 %v6975
    %7023 = vmatpush.bf16.msra.mxu0 %v6973
    %7024 = vmatpush.bf16.msra.mxu0 %v6971
    %7025 = vmatmul.bf16.gmra.mxu0 %v288
    %v7026 = vpop.f32.mrf.mxu0
    %v7027 = vadd.f32 %v7013, %v7026
    %v7028 = vpop.f32.mrf.mxu0
    %v7029 = vadd.f32 %v7015, %v7028
    %7030 = vdwg.mxu0
    %7031 = vmatpush.bf16.msra.mxu0 %v6970
    %7032 = vmatpush.bf16.msra.mxu0 %v6968
    %7033 = vmatpush.bf16.msra.mxu0 %v6966
    %7034 = vmatpush.bf16.msra.mxu0 %v6964
    %7035 = vmatpush.bf16.msra.mxu0 %v6962
    %7036 = vmatpush.bf16.msra.mxu0 %v6960
    %7037 = vmatpush.bf16.msra.mxu0 %v6958
    %7038 = vmatpush.bf16.msra.mxu0 %v6956
    %7039 = vmatmul.bf16.gmra.mxu0 %v163
    %v7040 = vpop.f32.mrf.mxu0
    %v7041 = vadd.f32 %v6880, %v7040
    %v7042 = vpop.f32.mrf.mxu0
    %v7043 = vadd.f32 %v6880, %v7042
    %7044 = vdwg.mxu0
    %7045 = vmatpush.bf16.msra.mxu0 0
    %7046 = vmatpush.bf16.msra.mxu0 0
    %7047 = vmatpush.bf16.msra.mxu0 0
    %7048 = vmatpush.bf16.msra.mxu0 0
    %7049 = vmatpush.bf16.msra.mxu0 %v6978
    %7050 = vmatpush.bf16.msra.mxu0 %v6976
    %7051 = vmatpush.bf16.msra.mxu0 %v6974
    %7052 = vmatpush.bf16.msra.mxu0 %v6972
    %7053 = vmatmul.bf16.gmra.mxu0 %v288
    %v7054 = vpop.f32.mrf.mxu0
    %v7055 = vadd.f32 %v7041, %v7054
    %v7056 = vpop.f32.mrf.mxu0
    %v7057 = vadd.f32 %v7043, %v7056
    %7058 = vdwg.mxu0
    %v7059 = vpack.c.bf16 %v7055, %v7027
    %v7060 = vpack.c.bf16 %v7057, %v7029
    %s7061 = scalar_lea.vmem %s7, 72
    %7062 = vst [vmem:[%s7061] sm:$0xff] %v7059
    %7063 = vst [vmem:[%s7061 + $0x58] sm:$0xff] %v7060
    %v7064 = vld [vmem:[#allocation2] sm:$0xff]
    %v7065 = vld [vmem:[#allocation2 + $0x8] sm:$0xff]
    %v7066 = vld [vmem:[#allocation2 + $0x10] sm:$0xff]
    %v7067 = vld [vmem:[#allocation2 + $0x18] sm:$0xff]
    %v7068 = vld [vmem:[#allocation2 + $0x20] sm:$0xff]
    %v7069 = vld [vmem:[#allocation2 + $0x28] sm:$0xff]
    %v7070 = vld [vmem:[#allocation2 + $0x30] sm:$0xff]
    %v7071 = vld [vmem:[#allocation2 + $0x38] sm:$0xff]
    %s7072 = smul.u32 288, 4
    %s7073 = smul.addr %s7072, 4
    %s7074 = scalar_lea.vmem [#allocation7], %s7073
    %v7075 = vld [vmem:[%s7074] sm:$0xff]
    %v7076 = vld [vmem:[%s7074 + $0x8] sm:$0xff]
    %v7077 = vld [vmem:[%s7074 + $0x10] sm:$0xff]
    %v7078 = vld [vmem:[%s7074 + $0x18] sm:$0xff]
    %v7079 = vld [vmem:[%s7074 + $0x20] sm:$0xff]
    %v7080 = vld [vmem:[%s7074 + $0x28] sm:$0xff]
    %v7081 = vld [vmem:[%s7074 + $0x30] sm:$0xff]
    %v7082 = vld [vmem:[%s7074 + $0x38] sm:$0xff]
    %v7083 = vld [vmem:[%s7074 + $0x40] sm:$0xff]
    %v7084 = vld [vmem:[%s7074 + $0x48] sm:$0xff]
    %v7085 = vld [vmem:[%s7074 + $0x50] sm:$0xff]
    %v7086 = vld [vmem:[%s7074 + $0x58] sm:$0xff]
    %v7087 = vld [vmem:[%s7074 + $0x60] sm:$0xff]
    %v7088 = vld [vmem:[%s7074 + $0x68] sm:$0xff]
    %v7089 = vld [vmem:[%s7074 + $0x70] sm:$0xff]
    %v7090 = vld [vmem:[%s7074 + $0x78] sm:$0xff]
    %v7091 = vld [vmem:[%s7074 + $0x80] sm:$0xff]
    %v7092 = vld [vmem:[%s7074 + $0x88] sm:$0xff]
    %v7093 = vld [vmem:[%s7074 + $0x90] sm:$0xff]
    %v7094 = vld [vmem:[%s7074 + $0x98] sm:$0xff]
    %v7095 = vld [vmem:[%s7074 + $0xa0] sm:$0xff]
    %v7096 = vld [vmem:[%s7074 + $0xa8] sm:$0xff]
    %v7097 = vld [vmem:[%s7074 + $0xb0] sm:$0xff]
    %v7098 = vld [vmem:[%s7074 + $0xb8] sm:$0xff]
    %v7099 = vld [vmem:[%s7074 + $0xc0] sm:$0xff]
    %v7100 = vld [vmem:[%s7074 + $0xc8] sm:$0xff]
    %v7101 = vld [vmem:[%s7074 + $0xd0] sm:$0xff]
    %v7102 = vld [vmem:[%s7074 + $0xd8] sm:$0xff]
    %v7103 = vld [vmem:[%s7074 + $0xe0] sm:$0xff]
    %v7104 = vld [vmem:[%s7074 + $0xe8] sm:$0xff]
    %v7105 = vld [vmem:[%s7074 + $0xf0] sm:$0xff]
    %v7106 = vld [vmem:[%s7074 + $0xf8] sm:$0xff]
    %v7107 = vld [vmem:[%s7074 + $0x100] sm:$0xff]
    %v7108 = vld [vmem:[%s7074 + $0x108] sm:$0xff]
    %v7109 = vld [vmem:[%s7074 + $0x110] sm:$0xff]
    %v7110 = vld [vmem:[%s7074 + $0x118] sm:$0xff]
    %v7111 = vld [vmem:[%s7074 + $0x120] sm:$0xff]
    %v7112 = vld [vmem:[%s7074 + $0x128] sm:$0xff]
    %v7113 = vld [vmem:[%s7074 + $0x130] sm:$0xff]
    %v7114 = vld [vmem:[%s7074 + $0x138] sm:$0xff]
    %v7115 = vld [vmem:[%s7074 + $0x140] sm:$0xff]
    %v7116 = vld [vmem:[%s7074 + $0x148] sm:$0xff]
    %v7117 = vld [vmem:[%s7074 + $0x150] sm:$0xff]
    %v7118 = vld [vmem:[%s7074 + $0x158] sm:$0xff]
    %v7119 = vld [vmem:[%s7074 + $0x160] sm:$0xff]
    %v7120 = vld [vmem:[%s7074 + $0x168] sm:$0xff]
    %v7121 = vld [vmem:[%s7074 + $0x170] sm:$0xff]
    %v7122 = vld [vmem:[%s7074 + $0x178] sm:$0xff]
    %v7123 = vld [vmem:[%s7074 + $0x180] sm:$0xff]
    %v7124 = vld [vmem:[%s7074 + $0x188] sm:$0xff]
    %v7125 = vld [vmem:[%s7074 + $0x190] sm:$0xff]
    %v7126 = vld [vmem:[%s7074 + $0x198] sm:$0xff]
    %v7127 = vld [vmem:[%s7074 + $0x1a0] sm:$0xff]
    %v7128 = vld [vmem:[%s7074 + $0x1a8] sm:$0xff]
    %v7129 = vld [vmem:[%s7074 + $0x1b0] sm:$0xff]
    %v7130 = vld [vmem:[%s7074 + $0x1b8] sm:$0xff]
    %v7131 = vld [vmem:[%s7074 + $0x1c0] sm:$0xff]
    %v7132 = vld [vmem:[%s7074 + $0x1c8] sm:$0xff]
    %v7133 = vld [vmem:[%s7074 + $0x1d0] sm:$0xff]
    %v7134 = vld [vmem:[%s7074 + $0x1d8] sm:$0xff]
    %v7135 = vld [vmem:[%s7074 + $0x1e0] sm:$0xff]
    %v7136 = vld [vmem:[%s7074 + $0x1e8] sm:$0xff]
    %v7137 = vld [vmem:[%s7074 + $0x1f0] sm:$0xff]
    %v7138 = vld [vmem:[%s7074 + $0x1f8] sm:$0xff]
    %v7141 = vunpack.c.l.b16 %v7059
    %v7142 = vunpack.c.h.b16 %v7059
    %v7143 = vunpack.c.l.b16 %v7060
    %v7144 = vunpack.c.h.b16 %v7060
    %v7145 = vpack.c.b16 %v7143, %v7141
    %v7146 = vpack.c.b16 %v7144, %v7142
    %v7213 = vunpack.c.l.b16 %v7075
    %v7214 = vunpack.c.h.b16 %v7075
    %v7215 = vunpack.c.l.b16 %v7076
    %v7216 = vunpack.c.h.b16 %v7076
    %v7217 = vunpack.c.l.b16 %v7077
    %v7218 = vunpack.c.h.b16 %v7077
    %v7219 = vunpack.c.l.b16 %v7078
    %v7220 = vunpack.c.h.b16 %v7078
    %v7221 = vunpack.c.l.b16 %v7079
    %v7222 = vunpack.c.h.b16 %v7079
    %v7223 = vunpack.c.l.b16 %v7080
    %v7224 = vunpack.c.h.b16 %v7080
    %v7225 = vunpack.c.l.b16 %v7081
    %v7226 = vunpack.c.h.b16 %v7081
    %v7227 = vunpack.c.l.b16 %v7082
    %v7228 = vunpack.c.h.b16 %v7082
    %v7229 = vunpack.c.l.b16 %v7083
    %v7230 = vunpack.c.h.b16 %v7083
    %v7231 = vunpack.c.l.b16 %v7084
    %v7232 = vunpack.c.h.b16 %v7084
    %v7233 = vunpack.c.l.b16 %v7085
    %v7234 = vunpack.c.h.b16 %v7085
    %v7235 = vunpack.c.l.b16 %v7086
    %v7236 = vunpack.c.h.b16 %v7086
    %v7237 = vunpack.c.l.b16 %v7087
    %v7238 = vunpack.c.h.b16 %v7087
    %v7239 = vunpack.c.l.b16 %v7088
    %v7240 = vunpack.c.h.b16 %v7088
    %v7241 = vunpack.c.l.b16 %v7089
    %v7242 = vunpack.c.h.b16 %v7089
    %v7243 = vunpack.c.l.b16 %v7090
    %v7244 = vunpack.c.h.b16 %v7090
    %v7245 = vunpack.c.l.b16 %v7091
    %v7246 = vunpack.c.h.b16 %v7091
    %v7247 = vunpack.c.l.b16 %v7092
    %v7248 = vunpack.c.h.b16 %v7092
    %v7249 = vunpack.c.l.b16 %v7093
    %v7250 = vunpack.c.h.b16 %v7093
    %v7251 = vunpack.c.l.b16 %v7094
    %v7252 = vunpack.c.h.b16 %v7094
    %v7253 = vunpack.c.l.b16 %v7095
    %v7254 = vunpack.c.h.b16 %v7095
    %v7255 = vunpack.c.l.b16 %v7096
    %v7256 = vunpack.c.h.b16 %v7096
    %v7257 = vunpack.c.l.b16 %v7097
    %v7258 = vunpack.c.h.b16 %v7097
    %v7259 = vunpack.c.l.b16 %v7098
    %v7260 = vunpack.c.h.b16 %v7098
    %v7261 = vunpack.c.l.b16 %v7099
    %v7262 = vunpack.c.h.b16 %v7099
    %v7263 = vunpack.c.l.b16 %v7100
    %v7264 = vunpack.c.h.b16 %v7100
    %v7265 = vunpack.c.l.b16 %v7101
    %v7266 = vunpack.c.h.b16 %v7101
    %v7267 = vunpack.c.l.b16 %v7102
    %v7268 = vunpack.c.h.b16 %v7102
    %v7269 = vunpack.c.l.b16 %v7103
    %v7270 = vunpack.c.h.b16 %v7103
    %v7271 = vunpack.c.l.b16 %v7104
    %v7272 = vunpack.c.h.b16 %v7104
    %v7273 = vunpack.c.l.b16 %v7105
    %v7274 = vunpack.c.h.b16 %v7105
    %v7275 = vunpack.c.l.b16 %v7106
    %v7276 = vunpack.c.h.b16 %v7106
    %v7277 = vunpack.c.l.b16 %v7107
    %v7278 = vunpack.c.h.b16 %v7107
    %v7279 = vunpack.c.l.b16 %v7108
    %v7280 = vunpack.c.h.b16 %v7108
    %v7281 = vunpack.c.l.b16 %v7109
    %v7282 = vunpack.c.h.b16 %v7109
    %v7283 = vunpack.c.l.b16 %v7110
    %v7284 = vunpack.c.h.b16 %v7110
    %v7285 = vunpack.c.l.b16 %v7111
    %v7286 = vunpack.c.h.b16 %v7111
    %v7287 = vunpack.c.l.b16 %v7112
    %v7288 = vunpack.c.h.b16 %v7112
    %v7289 = vunpack.c.l.b16 %v7113
    %v7290 = vunpack.c.h.b16 %v7113
    %v7291 = vunpack.c.l.b16 %v7114
    %v7292 = vunpack.c.h.b16 %v7114
    %v7293 = vunpack.c.l.b16 %v7115
    %v7294 = vunpack.c.h.b16 %v7115
    %v7295 = vunpack.c.l.b16 %v7116
    %v7296 = vunpack.c.h.b16 %v7116
    %v7297 = vunpack.c.l.b16 %v7117
    %v7298 = vunpack.c.h.b16 %v7117
    %v7299 = vunpack.c.l.b16 %v7118
    %v7300 = vunpack.c.h.b16 %v7118
    %v7301 = vunpack.c.l.b16 %v7119
    %v7302 = vunpack.c.h.b16 %v7119
    %v7303 = vunpack.c.l.b16 %v7120
    %v7304 = vunpack.c.h.b16 %v7120
    %v7305 = vunpack.c.l.b16 %v7121
    %v7306 = vunpack.c.h.b16 %v7121
    %v7307 = vunpack.c.l.b16 %v7122
    %v7308 = vunpack.c.h.b16 %v7122
    %v7309 = vunpack.c.l.b16 %v7123
    %v7310 = vunpack.c.h.b16 %v7123
    %v7311 = vunpack.c.l.b16 %v7124
    %v7312 = vunpack.c.h.b16 %v7124
    %v7313 = vunpack.c.l.b16 %v7125
    %v7314 = vunpack.c.h.b16 %v7125
    %v7315 = vunpack.c.l.b16 %v7126
    %v7316 = vunpack.c.h.b16 %v7126
    %v7317 = vunpack.c.l.b16 %v7127
    %v7318 = vunpack.c.h.b16 %v7127
    %v7319 = vunpack.c.l.b16 %v7128
    %v7320 = vunpack.c.h.b16 %v7128
    %v7321 = vunpack.c.l.b16 %v7129
    %v7322 = vunpack.c.h.b16 %v7129
    %v7323 = vunpack.c.l.b16 %v7130
    %v7324 = vunpack.c.h.b16 %v7130
    %v7325 = vunpack.c.l.b16 %v7131
    %v7326 = vunpack.c.h.b16 %v7131
    %v7327 = vunpack.c.l.b16 %v7132
    %v7328 = vunpack.c.h.b16 %v7132
    %v7329 = vunpack.c.l.b16 %v7133
    %v7330 = vunpack.c.h.b16 %v7133
    %v7331 = vunpack.c.l.b16 %v7134
    %v7332 = vunpack.c.h.b16 %v7134
    %v7333 = vunpack.c.l.b16 %v7135
    %v7334 = vunpack.c.h.b16 %v7135
    %v7335 = vunpack.c.l.b16 %v7136
    %v7336 = vunpack.c.h.b16 %v7136
    %v7337 = vunpack.c.l.b16 %v7137
    %v7338 = vunpack.c.h.b16 %v7137
    %v7339 = vunpack.c.l.b16 %v7138
    %v7340 = vunpack.c.h.b16 %v7138
    %v7341 = vpack.c.b16 %v7217, %v7213
    %v7342 = vpack.c.b16 %v7218, %v7214
    %v7343 = vpack.c.b16 %v7219, %v7215
    %v7344 = vpack.c.b16 %v7220, %v7216
    %v7345 = vpack.c.b16 %v7225, %v7221
    %v7346 = vpack.c.b16 %v7226, %v7222
    %v7347 = vpack.c.b16 %v7227, %v7223
    %v7348 = vpack.c.b16 %v7228, %v7224
    %v7349 = vpack.c.b16 %v7233, %v7229
    %v7350 = vpack.c.b16 %v7234, %v7230
    %v7351 = vpack.c.b16 %v7235, %v7231
    %v7352 = vpack.c.b16 %v7236, %v7232
    %v7353 = vpack.c.b16 %v7241, %v7237
    %v7354 = vpack.c.b16 %v7242, %v7238
    %v7355 = vpack.c.b16 %v7243, %v7239
    %v7356 = vpack.c.b16 %v7244, %v7240
    %v7357 = vpack.c.b16 %v7249, %v7245
    %v7358 = vpack.c.b16 %v7250, %v7246
    %v7359 = vpack.c.b16 %v7251, %v7247
    %v7360 = vpack.c.b16 %v7252, %v7248
    %v7361 = vpack.c.b16 %v7257, %v7253
    %v7362 = vpack.c.b16 %v7258, %v7254
    %v7363 = vpack.c.b16 %v7259, %v7255
    %v7364 = vpack.c.b16 %v7260, %v7256
    %v7365 = vpack.c.b16 %v7265, %v7261
    %v7366 = vpack.c.b16 %v7266, %v7262
    %v7367 = vpack.c.b16 %v7267, %v7263
    %v7368 = vpack.c.b16 %v7268, %v7264
    %v7369 = vpack.c.b16 %v7273, %v7269
    %v7370 = vpack.c.b16 %v7274, %v7270
    %v7371 = vpack.c.b16 %v7275, %v7271
    %v7372 = vpack.c.b16 %v7276, %v7272
    %v7373 = vpack.c.b16 %v7281, %v7277
    %v7374 = vpack.c.b16 %v7282, %v7278
    %v7375 = vpack.c.b16 %v7283, %v7279
    %v7376 = vpack.c.b16 %v7284, %v7280
    %v7377 = vpack.c.b16 %v7289, %v7285
    %v7378 = vpack.c.b16 %v7290, %v7286
    %v7379 = vpack.c.b16 %v7291, %v7287
    %v7380 = vpack.c.b16 %v7292, %v7288
    %v7381 = vpack.c.b16 %v7297, %v7293
    %v7382 = vpack.c.b16 %v7298, %v7294
    %v7383 = vpack.c.b16 %v7299, %v7295
    %v7384 = vpack.c.b16 %v7300, %v7296
    %v7385 = vpack.c.b16 %v7305, %v7301
    %v7386 = vpack.c.b16 %v7306, %v7302
    %v7387 = vpack.c.b16 %v7307, %v7303
    %v7388 = vpack.c.b16 %v7308, %v7304
    %v7389 = vpack.c.b16 %v7313, %v7309
    %v7390 = vpack.c.b16 %v7314, %v7310
    %v7391 = vpack.c.b16 %v7315, %v7311
    %v7392 = vpack.c.b16 %v7316, %v7312
    %v7393 = vpack.c.b16 %v7321, %v7317
    %v7394 = vpack.c.b16 %v7322, %v7318
    %v7395 = vpack.c.b16 %v7323, %v7319
    %v7396 = vpack.c.b16 %v7324, %v7320
    %v7397 = vpack.c.b16 %v7329, %v7325
    %v7398 = vpack.c.b16 %v7330, %v7326
    %v7399 = vpack.c.b16 %v7331, %v7327
    %v7400 = vpack.c.b16 %v7332, %v7328
    %v7401 = vpack.c.b16 %v7337, %v7333
    %v7402 = vpack.c.b16 %v7338, %v7334
    %v7403 = vpack.c.b16 %v7339, %v7335
    %v7404 = vpack.c.b16 %v7340, %v7336
    %7469 = vmatpush.bf16.msra.mxu0 %v7369
    %7470 = vmatpush.bf16.msra.mxu0 %v7365
    %7471 = vmatpush.bf16.msra.mxu0 %v7361
    %7472 = vmatpush.bf16.msra.mxu0 %v7357
    %7473 = vmatpush.bf16.msra.mxu0 %v7353
    %7474 = vmatpush.bf16.msra.mxu0 %v7349
    %7475 = vmatpush.bf16.msra.mxu0 %v7345
    %7476 = vmatpush.bf16.msra.mxu0 %v7341
    %7477 = vmatmul.bf16.gmra.mxu0 %v7145
    %v7478 = vpop.f32.mrf.mxu0
    %v7479 = vadd.f32 0.0, %v7478
    %v7480 = vpop.f32.mrf.mxu0
    %v7481 = vadd.f32 0.0, %v7480
    %7482 = vdwg.mxu0
    %7483 = vmatpush.bf16.msra.mxu0 %v7401
    %7484 = vmatpush.bf16.msra.mxu0 %v7397
    %7485 = vmatpush.bf16.msra.mxu0 %v7393
    %7486 = vmatpush.bf16.msra.mxu0 %v7389
    %7487 = vmatpush.bf16.msra.mxu0 %v7385
    %7488 = vmatpush.bf16.msra.mxu0 %v7381
    %7489 = vmatpush.bf16.msra.mxu0 %v7377
    %7490 = vmatpush.bf16.msra.mxu0 %v7373
    %7491 = vmatmul.bf16.gmra.mxu0 %v7146
    %v7492 = vpop.f32.mrf.mxu0
    %v7493 = vadd.f32 %v7479, %v7492
    %v7494 = vpop.f32.mrf.mxu0
    %v7495 = vadd.f32 %v7481, %v7494
    %7496 = vdwg.mxu0
    %7497 = vmatpush.bf16.msra.mxu0 %v7370
    %7498 = vmatpush.bf16.msra.mxu0 %v7366
    %7499 = vmatpush.bf16.msra.mxu0 %v7362
    %7500 = vmatpush.bf16.msra.mxu0 %v7358
    %7501 = vmatpush.bf16.msra.mxu0 %v7354
    %7502 = vmatpush.bf16.msra.mxu0 %v7350
    %7503 = vmatpush.bf16.msra.mxu0 %v7346
    %7504 = vmatpush.bf16.msra.mxu0 %v7342
    %7505 = vmatmul.bf16.gmra.mxu0 %v7145
    %v7506 = vpop.f32.mrf.mxu0
    %v7507 = vadd.f32 0.0, %v7506
    %v7508 = vpop.f32.mrf.mxu0
    %v7509 = vadd.f32 0.0, %v7508
    %7510 = vdwg.mxu0
    %7511 = vmatpush.bf16.msra.mxu0 %v7402
    %7512 = vmatpush.bf16.msra.mxu0 %v7398
    %7513 = vmatpush.bf16.msra.mxu0 %v7394
    %7514 = vmatpush.bf16.msra.mxu0 %v7390
    %7515 = vmatpush.bf16.msra.mxu0 %v7386
    %7516 = vmatpush.bf16.msra.mxu0 %v7382
    %7517 = vmatpush.bf16.msra.mxu0 %v7378
    %7518 = vmatpush.bf16.msra.mxu0 %v7374
    %7519 = vmatmul.bf16.gmra.mxu0 %v7146
    %v7520 = vpop.f32.mrf.mxu0
    %v7521 = vadd.f32 %v7507, %v7520
    %v7522 = vpop.f32.mrf.mxu0
    %v7523 = vadd.f32 %v7509, %v7522
    %7524 = vdwg.mxu0
    %7525 = vmatpush.bf16.msra.mxu0 %v7371
    %7526 = vmatpush.bf16.msra.mxu0 %v7367
    %7527 = vmatpush.bf16.msra.mxu0 %v7363
    %7528 = vmatpush.bf16.msra.mxu0 %v7359
    %7529 = vmatpush.bf16.msra.mxu0 %v7355
    %7530 = vmatpush.bf16.msra.mxu0 %v7351
    %7531 = vmatpush.bf16.msra.mxu0 %v7347
    %7532 = vmatpush.bf16.msra.mxu0 %v7343
    %7533 = vmatmul.bf16.gmra.mxu0 %v7145
    %v7534 = vpop.f32.mrf.mxu0
    %v7535 = vadd.f32 0.0, %v7534
    %v7536 = vpop.f32.mrf.mxu0
    %v7537 = vadd.f32 0.0, %v7536
    %7538 = vdwg.mxu0
    %7539 = vmatpush.bf16.msra.mxu0 %v7403
    %7540 = vmatpush.bf16.msra.mxu0 %v7399
    %7541 = vmatpush.bf16.msra.mxu0 %v7395
    %7542 = vmatpush.bf16.msra.mxu0 %v7391
    %7543 = vmatpush.bf16.msra.mxu0 %v7387
    %7544 = vmatpush.bf16.msra.mxu0 %v7383
    %7545 = vmatpush.bf16.msra.mxu0 %v7379
    %7546 = vmatpush.bf16.msra.mxu0 %v7375
    %7547 = vmatmul.bf16.gmra.mxu0 %v7146
    %v7548 = vpop.f32.mrf.mxu0
    %v7549 = vadd.f32 %v7535, %v7548
    %v7550 = vpop.f32.mrf.mxu0
    %v7551 = vadd.f32 %v7537, %v7550
    %7552 = vdwg.mxu0
    %7553 = vmatpush.bf16.msra.mxu0 %v7372
    %7554 = vmatpush.bf16.msra.mxu0 %v7368
    %7555 = vmatpush.bf16.msra.mxu0 %v7364
    %7556 = vmatpush.bf16.msra.mxu0 %v7360
    %7557 = vmatpush.bf16.msra.mxu0 %v7356
    %7558 = vmatpush.bf16.msra.mxu0 %v7352
    %7559 = vmatpush.bf16.msra.mxu0 %v7348
    %7560 = vmatpush.bf16.msra.mxu0 %v7344
    %7561 = vmatmul.bf16.gmra.mxu0 %v7145
    %v7562 = vpop.f32.mrf.mxu0
    %v7563 = vadd.f32 0.0, %v7562
    %v7564 = vpop.f32.mrf.mxu0
    %v7565 = vadd.f32 0.0, %v7564
    %7566 = vdwg.mxu0
    %7567 = vmatpush.bf16.msra.mxu0 %v7404
    %7568 = vmatpush.bf16.msra.mxu0 %v7400
    %7569 = vmatpush.bf16.msra.mxu0 %v7396
    %7570 = vmatpush.bf16.msra.mxu0 %v7392
    %7571 = vmatpush.bf16.msra.mxu0 %v7388
    %7572 = vmatpush.bf16.msra.mxu0 %v7384
    %7573 = vmatpush.bf16.msra.mxu0 %v7380
    %7574 = vmatpush.bf16.msra.mxu0 %v7376
    %7575 = vmatmul.bf16.gmra.mxu0 %v7146
    %v7576 = vpop.f32.mrf.mxu0
    %v7577 = vadd.f32 %v7563, %v7576
    %v7578 = vpop.f32.mrf.mxu0
    %v7579 = vadd.f32 %v7565, %v7578
    %7580 = vdwg.mxu0
    %v7581 = vadd.f32 %v7064, %v7493
    %v7582 = vadd.f32 %v7065, %v7521
    %v7583 = vadd.f32 %v7066, %v7549
    %v7584 = vadd.f32 %v7067, %v7577
    %v7585 = vadd.f32 %v7068, %v7495
    %v7586 = vadd.f32 %v7069, %v7523
    %v7587 = vadd.f32 %v7070, %v7551
    %v7588 = vadd.f32 %v7071, %v7579
    %7589 = vst [vmem:[#allocation2] sm:$0xff] %v7581
    %7590 = vst [vmem:[#allocation2 + $0x8] sm:$0xff] %v7582
    %7591 = vst [vmem:[#allocation2 + $0x10] sm:$0xff] %v7583
    %7592 = vst [vmem:[#allocation2 + $0x18] sm:$0xff] %v7584
    %7593 = vst [vmem:[#allocation2 + $0x20] sm:$0xff] %v7585
    %7594 = vst [vmem:[#allocation2 + $0x28] sm:$0xff] %v7586
    %7595 = vst [vmem:[#allocation2 + $0x30] sm:$0xff] %v7587
    %7596 = vst [vmem:[#allocation2 + $0x38] sm:$0xff] %v7588
    %s7597 = scalar_lea.vmem [#allocation3], 80
    %v7598 = vld [vmem:[%s7597] sm:$0xff]
    %v7599 = vld [vmem:[%s7597 + $0x58] sm:$0xff]
    %v7600 = vld [vmem:[%s7597 + $0xb0] sm:$0xff]
    %v7601 = vld [vmem:[%s7597 + $0x108] sm:$0xff]
    %v7602 = vld [vmem:[%s7597 + $0x160] sm:$0xff]
    %v7603 = vld [vmem:[%s7597 + $0x1b8] sm:$0xff]
    %v7604 = vld [vmem:[%s7597 + $0x210] sm:$0xff]
    %v7605 = vld [vmem:[%s7597 + $0x268] sm:$0xff]
    %v7606 = vld [vmem:[%s7597 + $0x2c0] sm:$0xff]
    %v7607 = vld [vmem:[%s7597 + $0x318] sm:$0xff]
    %v7608 = vld [vmem:[%s7597 + $0x370] sm:$0xff]
    %v7609 = vld [vmem:[%s7597 + $0x3c8] sm:$0xff]
    %v7610 = vld [vmem:[%s7597 + $0x420] sm:$0xff]
    %v7611 = vld [vmem:[%s7597 + $0x478] sm:$0xff]
    %v7612 = vld [vmem:[%s7597 + $0x4d0] sm:$0xff]
    %v7613 = vld [vmem:[%s7597 + $0x528] sm:$0xff]
    %v7614 = vld [vmem:[%s7597 + $0x580] sm:$0xff]
    %v7615 = vld [vmem:[%s7597 + $0x5d8] sm:$0xff]
    %v7616 = vld [vmem:[%s7597 + $0x630] sm:$0xff]
    %v7617 = vld [vmem:[%s7597 + $0x688] sm:$0xff]
    %v7618 = vld [vmem:[%s7597 + $0x6e0] sm:$0xff]
    %v7619 = vld [vmem:[%s7597 + $0x738] sm:$0xff]
    %v7620 = vld [vmem:[%s7597 + $0x790] sm:$0xff]
    %v7621 = vld [vmem:[%s7597 + $0x7e8] sm:$0xff]
    %s7622 = scalar_lea.vmem [#allocation5], 20
    %v7623 = vld [vmem:[%s7622] sm:$0x3]
    %v7625 = vperm.slane %v7623, 0
    %v7626 = vperm.slane %v7623, 1
    %v7653 = vunpack.c.l.b16 %v7598
    %v7654 = vunpack.c.h.b16 %v7598
    %v7655 = vunpack.c.l.b16 %v7599
    %v7656 = vunpack.c.h.b16 %v7599
    %v7657 = vunpack.c.l.b16 %v7600
    %v7658 = vunpack.c.h.b16 %v7600
    %v7659 = vunpack.c.l.b16 %v7601
    %v7660 = vunpack.c.h.b16 %v7601
    %v7661 = vunpack.c.l.b16 %v7602
    %v7662 = vunpack.c.h.b16 %v7602
    %v7663 = vunpack.c.l.b16 %v7603
    %v7664 = vunpack.c.h.b16 %v7603
    %v7665 = vunpack.c.l.b16 %v7604
    %v7666 = vunpack.c.h.b16 %v7604
    %v7667 = vunpack.c.l.b16 %v7605
    %v7668 = vunpack.c.h.b16 %v7605
    %v7669 = vunpack.c.l.b16 %v7606
    %v7670 = vunpack.c.h.b16 %v7606
    %v7671 = vunpack.c.l.b16 %v7607
    %v7672 = vunpack.c.h.b16 %v7607
    %v7673 = vunpack.c.l.b16 %v7608
    %v7674 = vunpack.c.h.b16 %v7608
    %v7675 = vunpack.c.l.b16 %v7609
    %v7676 = vunpack.c.h.b16 %v7609
    %v7677 = vunpack.c.l.b16 %v7610
    %v7678 = vunpack.c.h.b16 %v7610
    %v7679 = vunpack.c.l.b16 %v7611
    %v7680 = vunpack.c.h.b16 %v7611
    %v7681 = vunpack.c.l.b16 %v7612
    %v7682 = vunpack.c.h.b16 %v7612
    %v7683 = vunpack.c.l.b16 %v7613
    %v7684 = vunpack.c.h.b16 %v7613
    %v7685 = vunpack.c.l.b16 %v7614
    %v7686 = vunpack.c.h.b16 %v7614
    %v7687 = vunpack.c.l.b16 %v7615
    %v7688 = vunpack.c.h.b16 %v7615
    %v7689 = vunpack.c.l.b16 %v7616
    %v7690 = vunpack.c.h.b16 %v7616
    %v7691 = vunpack.c.l.b16 %v7617
    %v7692 = vunpack.c.h.b16 %v7617
    %v7693 = vunpack.c.l.b16 %v7618
    %v7694 = vunpack.c.h.b16 %v7618
    %v7695 = vunpack.c.l.b16 %v7619
    %v7696 = vunpack.c.h.b16 %v7619
    %v7697 = vunpack.c.l.b16 %v7620
    %v7698 = vunpack.c.h.b16 %v7620
    %v7699 = vunpack.c.l.b16 %v7621
    %v7700 = vunpack.c.h.b16 %v7621
    %v7701 = vpack.c.b16 %v7655, %v7653
    %v7702 = vpack.c.b16 %v7656, %v7654
    %v7703 = vpack.c.b16 %v7659, %v7657
    %v7704 = vpack.c.b16 %v7660, %v7658
    %v7705 = vpack.c.b16 %v7663, %v7661
    %v7706 = vpack.c.b16 %v7664, %v7662
    %v7707 = vpack.c.b16 %v7667, %v7665
    %v7708 = vpack.c.b16 %v7668, %v7666
    %v7709 = vpack.c.b16 %v7671, %v7669
    %v7710 = vpack.c.b16 %v7672, %v7670
    %v7711 = vpack.c.b16 %v7675, %v7673
    %v7712 = vpack.c.b16 %v7676, %v7674
    %v7713 = vpack.c.b16 %v7679, %v7677
    %v7714 = vpack.c.b16 %v7680, %v7678
    %v7715 = vpack.c.b16 %v7683, %v7681
    %v7716 = vpack.c.b16 %v7684, %v7682
    %v7717 = vpack.c.b16 %v7687, %v7685
    %v7718 = vpack.c.b16 %v7688, %v7686
    %v7719 = vpack.c.b16 %v7691, %v7689
    %v7720 = vpack.c.b16 %v7692, %v7690
    %v7721 = vpack.c.b16 %v7695, %v7693
    %v7722 = vpack.c.b16 %v7696, %v7694
    %v7723 = vpack.c.b16 %v7699, %v7697
    %v7724 = vpack.c.b16 %v7700, %v7698
    %7749 = vmatpush.bf16.msra.mxu0 %v7715
    %7750 = vmatpush.bf16.msra.mxu0 %v7713
    %7751 = vmatpush.bf16.msra.mxu0 %v7711
    %7752 = vmatpush.bf16.msra.mxu0 %v7709
    %7753 = vmatpush.bf16.msra.mxu0 %v7707
    %7754 = vmatpush.bf16.msra.mxu0 %v7705
    %7755 = vmatpush.bf16.msra.mxu0 %v7703
    %7756 = vmatpush.bf16.msra.mxu0 %v7701
    %7757 = vmatmul.bf16.gmra.mxu0 %v163
    %v7758 = vpop.f32.mrf.mxu0
    %v7759 = vadd.f32 %v7625, %v7758
    %v7760 = vpop.f32.mrf.mxu0
    %v7761 = vadd.f32 %v7625, %v7760
    %7762 = vdwg.mxu0
    %7763 = vmatpush.bf16.msra.mxu0 0
    %7764 = vmatpush.bf16.msra.mxu0 0
    %7765 = vmatpush.bf16.msra.mxu0 0
    %7766 = vmatpush.bf16.msra.mxu0 0
    %7767 = vmatpush.bf16.msra.mxu0 %v7723
    %7768 = vmatpush.bf16.msra.mxu0 %v7721
    %7769 = vmatpush.bf16.msra.mxu0 %v7719
    %7770 = vmatpush.bf16.msra.mxu0 %v7717
    %7771 = vmatmul.bf16.gmra.mxu0 %v288
    %v7772 = vpop.f32.mrf.mxu0
    %v7773 = vadd.f32 %v7759, %v7772
    %v7774 = vpop.f32.mrf.mxu0
    %v7775 = vadd.f32 %v7761, %v7774
    %7776 = vdwg.mxu0
    %7777 = vmatpush.bf16.msra.mxu0 %v7716
    %7778 = vmatpush.bf16.msra.mxu0 %v7714
    %7779 = vmatpush.bf16.msra.mxu0 %v7712
    %7780 = vmatpush.bf16.msra.mxu0 %v7710
    %7781 = vmatpush.bf16.msra.mxu0 %v7708
    %7782 = vmatpush.bf16.msra.mxu0 %v7706
    %7783 = vmatpush.bf16.msra.mxu0 %v7704
    %7784 = vmatpush.bf16.msra.mxu0 %v7702
    %7785 = vmatmul.bf16.gmra.mxu0 %v163
    %v7786 = vpop.f32.mrf.mxu0
    %v7787 = vadd.f32 %v7626, %v7786
    %v7788 = vpop.f32.mrf.mxu0
    %v7789 = vadd.f32 %v7626, %v7788
    %7790 = vdwg.mxu0
    %7791 = vmatpush.bf16.msra.mxu0 0
    %7792 = vmatpush.bf16.msra.mxu0 0
    %7793 = vmatpush.bf16.msra.mxu0 0
    %7794 = vmatpush.bf16.msra.mxu0 0
    %7795 = vmatpush.bf16.msra.mxu0 %v7724
    %7796 = vmatpush.bf16.msra.mxu0 %v7722
    %7797 = vmatpush.bf16.msra.mxu0 %v7720
    %7798 = vmatpush.bf16.msra.mxu0 %v7718
    %7799 = vmatmul.bf16.gmra.mxu0 %v288
    %v7800 = vpop.f32.mrf.mxu0
    %v7801 = vadd.f32 %v7787, %v7800
    %v7802 = vpop.f32.mrf.mxu0
    %v7803 = vadd.f32 %v7789, %v7802
    %7804 = vdwg.mxu0
    %v7805 = vpack.c.bf16 %v7801, %v7773
    %v7806 = vpack.c.bf16 %v7803, %v7775
    %s7807 = scalar_lea.vmem %s7, 80
    %7808 = vst [vmem:[%s7807] sm:$0xff] %v7805
    %7809 = vst [vmem:[%s7807 + $0x58] sm:$0xff] %v7806
    %v7810 = vld [vmem:[#allocation2] sm:$0xff]
    %v7811 = vld [vmem:[#allocation2 + $0x8] sm:$0xff]
    %v7812 = vld [vmem:[#allocation2 + $0x10] sm:$0xff]
    %v7813 = vld [vmem:[#allocation2 + $0x18] sm:$0xff]
    %v7814 = vld [vmem:[#allocation2 + $0x20] sm:$0xff]
    %v7815 = vld [vmem:[#allocation2 + $0x28] sm:$0xff]
    %v7816 = vld [vmem:[#allocation2 + $0x30] sm:$0xff]
    %v7817 = vld [vmem:[#allocation2 + $0x38] sm:$0xff]
    %s7818 = smul.u32 320, 4
    %s7819 = smul.addr %s7818, 4
    %s7820 = scalar_lea.vmem [#allocation7], %s7819
    %v7821 = vld [vmem:[%s7820] sm:$0xff]
    %v7822 = vld [vmem:[%s7820 + $0x8] sm:$0xff]
    %v7823 = vld [vmem:[%s7820 + $0x10] sm:$0xff]
    %v7824 = vld [vmem:[%s7820 + $0x18] sm:$0xff]
    %v7825 = vld [vmem:[%s7820 + $0x20] sm:$0xff]
    %v7826 = vld [vmem:[%s7820 + $0x28] sm:$0xff]
    %v7827 = vld [vmem:[%s7820 + $0x30] sm:$0xff]
    %v7828 = vld [vmem:[%s7820 + $0x38] sm:$0xff]
    %v7829 = vld [vmem:[%s7820 + $0x40] sm:$0xff]
    %v7830 = vld [vmem:[%s7820 + $0x48] sm:$0xff]
    %v7831 = vld [vmem:[%s7820 + $0x50] sm:$0xff]
    %v7832 = vld [vmem:[%s7820 + $0x58] sm:$0xff]
    %v7833 = vld [vmem:[%s7820 + $0x60] sm:$0xff]
    %v7834 = vld [vmem:[%s7820 + $0x68] sm:$0xff]
    %v7835 = vld [vmem:[%s7820 + $0x70] sm:$0xff]
    %v7836 = vld [vmem:[%s7820 + $0x78] sm:$0xff]
    %v7837 = vld [vmem:[%s7820 + $0x80] sm:$0xff]
    %v7838 = vld [vmem:[%s7820 + $0x88] sm:$0xff]
    %v7839 = vld [vmem:[%s7820 + $0x90] sm:$0xff]
    %v7840 = vld [vmem:[%s7820 + $0x98] sm:$0xff]
    %v7841 = vld [vmem:[%s7820 + $0xa0] sm:$0xff]
    %v7842 = vld [vmem:[%s7820 + $0xa8] sm:$0xff]
    %v7843 = vld [vmem:[%s7820 + $0xb0] sm:$0xff]
    %v7844 = vld [vmem:[%s7820 + $0xb8] sm:$0xff]
    %v7845 = vld [vmem:[%s7820 + $0xc0] sm:$0xff]
    %v7846 = vld [vmem:[%s7820 + $0xc8] sm:$0xff]
    %v7847 = vld [vmem:[%s7820 + $0xd0] sm:$0xff]
    %v7848 = vld [vmem:[%s7820 + $0xd8] sm:$0xff]
    %v7849 = vld [vmem:[%s7820 + $0xe0] sm:$0xff]
    %v7850 = vld [vmem:[%s7820 + $0xe8] sm:$0xff]
    %v7851 = vld [vmem:[%s7820 + $0xf0] sm:$0xff]
    %v7852 = vld [vmem:[%s7820 + $0xf8] sm:$0xff]
    %v7853 = vld [vmem:[%s7820 + $0x100] sm:$0xff]
    %v7854 = vld [vmem:[%s7820 + $0x108] sm:$0xff]
    %v7855 = vld [vmem:[%s7820 + $0x110] sm:$0xff]
    %v7856 = vld [vmem:[%s7820 + $0x118] sm:$0xff]
    %v7857 = vld [vmem:[%s7820 + $0x120] sm:$0xff]
    %v7858 = vld [vmem:[%s7820 + $0x128] sm:$0xff]
    %v7859 = vld [vmem:[%s7820 + $0x130] sm:$0xff]
    %v7860 = vld [vmem:[%s7820 + $0x138] sm:$0xff]
    %v7861 = vld [vmem:[%s7820 + $0x140] sm:$0xff]
    %v7862 = vld [vmem:[%s7820 + $0x148] sm:$0xff]
    %v7863 = vld [vmem:[%s7820 + $0x150] sm:$0xff]
    %v7864 = vld [vmem:[%s7820 + $0x158] sm:$0xff]
    %v7865 = vld [vmem:[%s7820 + $0x160] sm:$0xff]
    %v7866 = vld [vmem:[%s7820 + $0x168] sm:$0xff]
    %v7867 = vld [vmem:[%s7820 + $0x170] sm:$0xff]
    %v7868 = vld [vmem:[%s7820 + $0x178] sm:$0xff]
    %v7869 = vld [vmem:[%s7820 + $0x180] sm:$0xff]
    %v7870 = vld [vmem:[%s7820 + $0x188] sm:$0xff]
    %v7871 = vld [vmem:[%s7820 + $0x190] sm:$0xff]
    %v7872 = vld [vmem:[%s7820 + $0x198] sm:$0xff]
    %v7873 = vld [vmem:[%s7820 + $0x1a0] sm:$0xff]
    %v7874 = vld [vmem:[%s7820 + $0x1a8] sm:$0xff]
    %v7875 = vld [vmem:[%s7820 + $0x1b0] sm:$0xff]
    %v7876 = vld [vmem:[%s7820 + $0x1b8] sm:$0xff]
    %v7877 = vld [vmem:[%s7820 + $0x1c0] sm:$0xff]
    %v7878 = vld [vmem:[%s7820 + $0x1c8] sm:$0xff]
    %v7879 = vld [vmem:[%s7820 + $0x1d0] sm:$0xff]
    %v7880 = vld [vmem:[%s7820 + $0x1d8] sm:$0xff]
    %v7881 = vld [vmem:[%s7820 + $0x1e0] sm:$0xff]
    %v7882 = vld [vmem:[%s7820 + $0x1e8] sm:$0xff]
    %v7883 = vld [vmem:[%s7820 + $0x1f0] sm:$0xff]
    %v7884 = vld [vmem:[%s7820 + $0x1f8] sm:$0xff]
    %v7887 = vunpack.c.l.b16 %v7805
    %v7888 = vunpack.c.h.b16 %v7805
    %v7889 = vunpack.c.l.b16 %v7806
    %v7890 = vunpack.c.h.b16 %v7806
    %v7891 = vpack.c.b16 %v7889, %v7887
    %v7892 = vpack.c.b16 %v7890, %v7888
    %v7959 = vunpack.c.l.b16 %v7821
    %v7960 = vunpack.c.h.b16 %v7821
    %v7961 = vunpack.c.l.b16 %v7822
    %v7962 = vunpack.c.h.b16 %v7822
    %v7963 = vunpack.c.l.b16 %v7823
    %v7964 = vunpack.c.h.b16 %v7823
    %v7965 = vunpack.c.l.b16 %v7824
    %v7966 = vunpack.c.h.b16 %v7824
    %v7967 = vunpack.c.l.b16 %v7825
    %v7968 = vunpack.c.h.b16 %v7825
    %v7969 = vunpack.c.l.b16 %v7826
    %v7970 = vunpack.c.h.b16 %v7826
    %v7971 = vunpack.c.l.b16 %v7827
    %v7972 = vunpack.c.h.b16 %v7827
    %v7973 = vunpack.c.l.b16 %v7828
    %v7974 = vunpack.c.h.b16 %v7828
    %v7975 = vunpack.c.l.b16 %v7829
    %v7976 = vunpack.c.h.b16 %v7829
    %v7977 = vunpack.c.l.b16 %v7830
    %v7978 = vunpack.c.h.b16 %v7830
    %v7979 = vunpack.c.l.b16 %v7831
    %v7980 = vunpack.c.h.b16 %v7831
    %v7981 = vunpack.c.l.b16 %v7832
    %v7982 = vunpack.c.h.b16 %v7832
    %v7983 = vunpack.c.l.b16 %v7833
    %v7984 = vunpack.c.h.b16 %v7833
    %v7985 = vunpack.c.l.b16 %v7834
    %v7986 = vunpack.c.h.b16 %v7834
    %v7987 = vunpack.c.l.b16 %v7835
    %v7988 = vunpack.c.h.b16 %v7835
    %v7989 = vunpack.c.l.b16 %v7836
    %v7990 = vunpack.c.h.b16 %v7836
    %v7991 = vunpack.c.l.b16 %v7837
    %v7992 = vunpack.c.h.b16 %v7837
    %v7993 = vunpack.c.l.b16 %v7838
    %v7994 = vunpack.c.h.b16 %v7838
    %v7995 = vunpack.c.l.b16 %v7839
    %v7996 = vunpack.c.h.b16 %v7839
    %v7997 = vunpack.c.l.b16 %v7840
    %v7998 = vunpack.c.h.b16 %v7840
    %v7999 = vunpack.c.l.b16 %v7841
    %v8000 = vunpack.c.h.b16 %v7841
    %v8001 = vunpack.c.l.b16 %v7842
    %v8002 = vunpack.c.h.b16 %v7842
    %v8003 = vunpack.c.l.b16 %v7843
    %v8004 = vunpack.c.h.b16 %v7843
    %v8005 = vunpack.c.l.b16 %v7844
    %v8006 = vunpack.c.h.b16 %v7844
    %v8007 = vunpack.c.l.b16 %v7845
    %v8008 = vunpack.c.h.b16 %v7845
    %v8009 = vunpack.c.l.b16 %v7846
    %v8010 = vunpack.c.h.b16 %v7846
    %v8011 = vunpack.c.l.b16 %v7847
    %v8012 = vunpack.c.h.b16 %v7847
    %v8013 = vunpack.c.l.b16 %v7848
    %v8014 = vunpack.c.h.b16 %v7848
    %v8015 = vunpack.c.l.b16 %v7849
    %v8016 = vunpack.c.h.b16 %v7849
    %v8017 = vunpack.c.l.b16 %v7850
    %v8018 = vunpack.c.h.b16 %v7850
    %v8019 = vunpack.c.l.b16 %v7851
    %v8020 = vunpack.c.h.b16 %v7851
    %v8021 = vunpack.c.l.b16 %v7852
    %v8022 = vunpack.c.h.b16 %v7852
    %v8023 = vunpack.c.l.b16 %v7853
    %v8024 = vunpack.c.h.b16 %v7853
    %v8025 = vunpack.c.l.b16 %v7854
    %v8026 = vunpack.c.h.b16 %v7854
    %v8027 = vunpack.c.l.b16 %v7855
    %v8028 = vunpack.c.h.b16 %v7855
    %v8029 = vunpack.c.l.b16 %v7856
    %v8030 = vunpack.c.h.b16 %v7856
    %v8031 = vunpack.c.l.b16 %v7857
    %v8032 = vunpack.c.h.b16 %v7857
    %v8033 = vunpack.c.l.b16 %v7858
    %v8034 = vunpack.c.h.b16 %v7858
    %v8035 = vunpack.c.l.b16 %v7859
    %v8036 = vunpack.c.h.b16 %v7859
    %v8037 = vunpack.c.l.b16 %v7860
    %v8038 = vunpack.c.h.b16 %v7860
    %v8039 = vunpack.c.l.b16 %v7861
    %v8040 = vunpack.c.h.b16 %v7861
    %v8041 = vunpack.c.l.b16 %v7862
    %v8042 = vunpack.c.h.b16 %v7862
    %v8043 = vunpack.c.l.b16 %v7863
    %v8044 = vunpack.c.h.b16 %v7863
    %v8045 = vunpack.c.l.b16 %v7864
    %v8046 = vunpack.c.h.b16 %v7864
    %v8047 = vunpack.c.l.b16 %v7865
    %v8048 = vunpack.c.h.b16 %v7865
    %v8049 = vunpack.c.l.b16 %v7866
    %v8050 = vunpack.c.h.b16 %v7866
    %v8051 = vunpack.c.l.b16 %v7867
    %v8052 = vunpack.c.h.b16 %v7867
    %v8053 = vunpack.c.l.b16 %v7868
    %v8054 = vunpack.c.h.b16 %v7868
    %v8055 = vunpack.c.l.b16 %v7869
    %v8056 = vunpack.c.h.b16 %v7869
    %v8057 = vunpack.c.l.b16 %v7870
    %v8058 = vunpack.c.h.b16 %v7870
    %v8059 = vunpack.c.l.b16 %v7871
    %v8060 = vunpack.c.h.b16 %v7871
    %v8061 = vunpack.c.l.b16 %v7872
    %v8062 = vunpack.c.h.b16 %v7872
    %v8063 = vunpack.c.l.b16 %v7873
    %v8064 = vunpack.c.h.b16 %v7873
    %v8065 = vunpack.c.l.b16 %v7874
    %v8066 = vunpack.c.h.b16 %v7874
    %v8067 = vunpack.c.l.b16 %v7875
    %v8068 = vunpack.c.h.b16 %v7875
    %v8069 = vunpack.c.l.b16 %v7876
    %v8070 = vunpack.c.h.b16 %v7876
    %v8071 = vunpack.c.l.b16 %v7877
    %v8072 = vunpack.c.h.b16 %v7877
    %v8073 = vunpack.c.l.b16 %v7878
    %v8074 = vunpack.c.h.b16 %v7878
    %v8075 = vunpack.c.l.b16 %v7879
    %v8076 = vunpack.c.h.b16 %v7879
    %v8077 = vunpack.c.l.b16 %v7880
    %v8078 = vunpack.c.h.b16 %v7880
    %v8079 = vunpack.c.l.b16 %v7881
    %v8080 = vunpack.c.h.b16 %v7881
    %v8081 = vunpack.c.l.b16 %v7882
    %v8082 = vunpack.c.h.b16 %v7882
    %v8083 = vunpack.c.l.b16 %v7883
    %v8084 = vunpack.c.h.b16 %v7883
    %v8085 = vunpack.c.l.b16 %v7884
    %v8086 = vunpack.c.h.b16 %v7884
    %v8087 = vpack.c.b16 %v7963, %v7959
    %v8088 = vpack.c.b16 %v7964, %v7960
    %v8089 = vpack.c.b16 %v7965, %v7961
    %v8090 = vpack.c.b16 %v7966, %v7962
    %v8091 = vpack.c.b16 %v7971, %v7967
    %v8092 = vpack.c.b16 %v7972, %v7968
    %v8093 = vpack.c.b16 %v7973, %v7969
    %v8094 = vpack.c.b16 %v7974, %v7970
    %v8095 = vpack.c.b16 %v7979, %v7975
    %v8096 = vpack.c.b16 %v7980, %v7976
    %v8097 = vpack.c.b16 %v7981, %v7977
    %v8098 = vpack.c.b16 %v7982, %v7978
    %v8099 = vpack.c.b16 %v7987, %v7983
    %v8100 = vpack.c.b16 %v7988, %v7984
    %v8101 = vpack.c.b16 %v7989, %v7985
    %v8102 = vpack.c.b16 %v7990, %v7986
    %v8103 = vpack.c.b16 %v7995, %v7991
    %v8104 = vpack.c.b16 %v7996, %v7992
    %v8105 = vpack.c.b16 %v7997, %v7993
    %v8106 = vpack.c.b16 %v7998, %v7994
    %v8107 = vpack.c.b16 %v8003, %v7999
    %v8108 = vpack.c.b16 %v8004, %v8000
    %v8109 = vpack.c.b16 %v8005, %v8001
    %v8110 = vpack.c.b16 %v8006, %v8002
    %v8111 = vpack.c.b16 %v8011, %v8007
    %v8112 = vpack.c.b16 %v8012, %v8008
    %v8113 = vpack.c.b16 %v8013, %v8009
    %v8114 = vpack.c.b16 %v8014, %v8010
    %v8115 = vpack.c.b16 %v8019, %v8015
    %v8116 = vpack.c.b16 %v8020, %v8016
    %v8117 = vpack.c.b16 %v8021, %v8017
    %v8118 = vpack.c.b16 %v8022, %v8018
    %v8119 = vpack.c.b16 %v8027, %v8023
    %v8120 = vpack.c.b16 %v8028, %v8024
    %v8121 = vpack.c.b16 %v8029, %v8025
    %v8122 = vpack.c.b16 %v8030, %v8026
    %v8123 = vpack.c.b16 %v8035, %v8031
    %v8124 = vpack.c.b16 %v8036, %v8032
    %v8125 = vpack.c.b16 %v8037, %v8033
    %v8126 = vpack.c.b16 %v8038, %v8034
    %v8127 = vpack.c.b16 %v8043, %v8039
    %v8128 = vpack.c.b16 %v8044, %v8040
    %v8129 = vpack.c.b16 %v8045, %v8041
    %v8130 = vpack.c.b16 %v8046, %v8042
    %v8131 = vpack.c.b16 %v8051, %v8047
    %v8132 = vpack.c.b16 %v8052, %v8048
    %v8133 = vpack.c.b16 %v8053, %v8049
    %v8134 = vpack.c.b16 %v8054, %v8050
    %v8135 = vpack.c.b16 %v8059, %v8055
    %v8136 = vpack.c.b16 %v8060, %v8056
    %v8137 = vpack.c.b16 %v8061, %v8057
    %v8138 = vpack.c.b16 %v8062, %v8058
    %v8139 = vpack.c.b16 %v8067, %v8063
    %v8140 = vpack.c.b16 %v8068, %v8064
    %v8141 = vpack.c.b16 %v8069, %v8065
    %v8142 = vpack.c.b16 %v8070, %v8066
    %v8143 = vpack.c.b16 %v8075, %v8071
    %v8144 = vpack.c.b16 %v8076, %v8072
    %v8145 = vpack.c.b16 %v8077, %v8073
    %v8146 = vpack.c.b16 %v8078, %v8074
    %v8147 = vpack.c.b16 %v8083, %v8079
    %v8148 = vpack.c.b16 %v8084, %v8080
    %v8149 = vpack.c.b16 %v8085, %v8081
    %v8150 = vpack.c.b16 %v8086, %v8082
    %8215 = vmatpush.bf16.msra.mxu0 %v8115
    %8216 = vmatpush.bf16.msra.mxu0 %v8111
    %8217 = vmatpush.bf16.msra.mxu0 %v8107
    %8218 = vmatpush.bf16.msra.mxu0 %v8103
    %8219 = vmatpush.bf16.msra.mxu0 %v8099
    %8220 = vmatpush.bf16.msra.mxu0 %v8095
    %8221 = vmatpush.bf16.msra.mxu0 %v8091
    %8222 = vmatpush.bf16.msra.mxu0 %v8087
    %8223 = vmatmul.bf16.gmra.mxu0 %v7891
    %v8224 = vpop.f32.mrf.mxu0
    %v8225 = vadd.f32 0.0, %v8224
    %v8226 = vpop.f32.mrf.mxu0
    %v8227 = vadd.f32 0.0, %v8226
    %8228 = vdwg.mxu0
    %8229 = vmatpush.bf16.msra.mxu0 %v8147
    %8230 = vmatpush.bf16.msra.mxu0 %v8143
    %8231 = vmatpush.bf16.msra.mxu0 %v8139
    %8232 = vmatpush.bf16.msra.mxu0 %v8135
    %8233 = vmatpush.bf16.msra.mxu0 %v8131
    %8234 = vmatpush.bf16.msra.mxu0 %v8127
    %8235 = vmatpush.bf16.msra.mxu0 %v8123
    %8236 = vmatpush.bf16.msra.mxu0 %v8119
    %8237 = vmatmul.bf16.gmra.mxu0 %v7892
    %v8238 = vpop.f32.mrf.mxu0
    %v8239 = vadd.f32 %v8225, %v8238
    %v8240 = vpop.f32.mrf.mxu0
    %v8241 = vadd.f32 %v8227, %v8240
    %8242 = vdwg.mxu0
    %8243 = vmatpush.bf16.msra.mxu0 %v8116
    %8244 = vmatpush.bf16.msra.mxu0 %v8112
    %8245 = vmatpush.bf16.msra.mxu0 %v8108
    %8246 = vmatpush.bf16.msra.mxu0 %v8104
    %8247 = vmatpush.bf16.msra.mxu0 %v8100
    %8248 = vmatpush.bf16.msra.mxu0 %v8096
    %8249 = vmatpush.bf16.msra.mxu0 %v8092
    %8250 = vmatpush.bf16.msra.mxu0 %v8088
    %8251 = vmatmul.bf16.gmra.mxu0 %v7891
    %v8252 = vpop.f32.mrf.mxu0
    %v8253 = vadd.f32 0.0, %v8252
    %v8254 = vpop.f32.mrf.mxu0
    %v8255 = vadd.f32 0.0, %v8254
    %8256 = vdwg.mxu0
    %8257 = vmatpush.bf16.msra.mxu0 %v8148
    %8258 = vmatpush.bf16.msra.mxu0 %v8144
    %8259 = vmatpush.bf16.msra.mxu0 %v8140
    %8260 = vmatpush.bf16.msra.mxu0 %v8136
    %8261 = vmatpush.bf16.msra.mxu0 %v8132
    %8262 = vmatpush.bf16.msra.mxu0 %v8128
    %8263 = vmatpush.bf16.msra.mxu0 %v8124
    %8264 = vmatpush.bf16.msra.mxu0 %v8120
    %8265 = vmatmul.bf16.gmra.mxu0 %v7892
    %v8266 = vpop.f32.mrf.mxu0
    %v8267 = vadd.f32 %v8253, %v8266
    %v8268 = vpop.f32.mrf.mxu0
    %v8269 = vadd.f32 %v8255, %v8268
    %8270 = vdwg.mxu0
    %8271 = vmatpush.bf16.msra.mxu0 %v8117
    %8272 = vmatpush.bf16.msra.mxu0 %v8113
    %8273 = vmatpush.bf16.msra.mxu0 %v8109
    %8274 = vmatpush.bf16.msra.mxu0 %v8105
    %8275 = vmatpush.bf16.msra.mxu0 %v8101
    %8276 = vmatpush.bf16.msra.mxu0 %v8097
    %8277 = vmatpush.bf16.msra.mxu0 %v8093
    %8278 = vmatpush.bf16.msra.mxu0 %v8089
    %8279 = vmatmul.bf16.gmra.mxu0 %v7891
    %v8280 = vpop.f32.mrf.mxu0
    %v8281 = vadd.f32 0.0, %v8280
    %v8282 = vpop.f32.mrf.mxu0
    %v8283 = vadd.f32 0.0, %v8282
    %8284 = vdwg.mxu0
    %8285 = vmatpush.bf16.msra.mxu0 %v8149
    %8286 = vmatpush.bf16.msra.mxu0 %v8145
    %8287 = vmatpush.bf16.msra.mxu0 %v8141
    %8288 = vmatpush.bf16.msra.mxu0 %v8137
    %8289 = vmatpush.bf16.msra.mxu0 %v8133
    %8290 = vmatpush.bf16.msra.mxu0 %v8129
    %8291 = vmatpush.bf16.msra.mxu0 %v8125
    %8292 = vmatpush.bf16.msra.mxu0 %v8121
    %8293 = vmatmul.bf16.gmra.mxu0 %v7892
    %v8294 = vpop.f32.mrf.mxu0
    %v8295 = vadd.f32 %v8281, %v8294
    %v8296 = vpop.f32.mrf.mxu0
    %v8297 = vadd.f32 %v8283, %v8296
    %8298 = vdwg.mxu0
    %8299 = vmatpush.bf16.msra.mxu0 %v8118
    %8300 = vmatpush.bf16.msra.mxu0 %v8114
    %8301 = vmatpush.bf16.msra.mxu0 %v8110
    %8302 = vmatpush.bf16.msra.mxu0 %v8106
    %8303 = vmatpush.bf16.msra.mxu0 %v8102
    %8304 = vmatpush.bf16.msra.mxu0 %v8098
    %8305 = vmatpush.bf16.msra.mxu0 %v8094
    %8306 = vmatpush.bf16.msra.mxu0 %v8090
    %8307 = vmatmul.bf16.gmra.mxu0 %v7891
    %v8308 = vpop.f32.mrf.mxu0
    %v8309 = vadd.f32 0.0, %v8308
    %v8310 = vpop.f32.mrf.mxu0
    %v8311 = vadd.f32 0.0, %v8310
    %8312 = vdwg.mxu0
    %8313 = vmatpush.bf16.msra.mxu0 %v8150
    %8314 = vmatpush.bf16.msra.mxu0 %v8146
    %8315 = vmatpush.bf16.msra.mxu0 %v8142
    %8316 = vmatpush.bf16.msra.mxu0 %v8138
    %8317 = vmatpush.bf16.msra.mxu0 %v8134
    %8318 = vmatpush.bf16.msra.mxu0 %v8130
    %8319 = vmatpush.bf16.msra.mxu0 %v8126
    %8320 = vmatpush.bf16.msra.mxu0 %v8122
    %8321 = vmatmul.bf16.gmra.mxu0 %v7892
    %v8322 = vpop.f32.mrf.mxu0
    %v8323 = vadd.f32 %v8309, %v8322
    %v8324 = vpop.f32.mrf.mxu0
    %v8325 = vadd.f32 %v8311, %v8324
    %8326 = vdwg.mxu0
    %v8327 = vadd.f32 %v7810, %v8239
    %v8328 = vadd.f32 %v7811, %v8267
    %v8329 = vadd.f32 %v7812, %v8295
    %v8330 = vadd.f32 %v7813, %v8323
    %v8331 = vadd.f32 %v7814, %v8241
    %v8332 = vadd.f32 %v7815, %v8269
    %v8333 = vadd.f32 %v7816, %v8297
    %v8334 = vadd.f32 %v7817, %v8325
    %8335 = vst [vmem:[#allocation2] sm:$0xff] %v8327
    %8336 = vst [vmem:[#allocation2 + $0x8] sm:$0xff] %v8328
    %8337 = vst [vmem:[#allocation2 + $0x10] sm:$0xff] %v8329
    %8338 = vst [vmem:[#allocation2 + $0x18] sm:$0xff] %v8330
    %8339 = vst [vmem:[#allocation2 + $0x20] sm:$0xff] %v8331
    %8340 = vst [vmem:[#allocation2 + $0x28] sm:$0xff] %v8332
    %8341 = vst [vmem:[#allocation2 + $0x30] sm:$0xff] %v8333
    %8342 = vst [vmem:[#allocation2 + $0x38] sm:$0xff] %v8334
    %v8343 = vld [vmem:[#allocation2] sm:$0xff]
    %v8344 = vld [vmem:[#allocation2 + $0x8] sm:$0xff]
    %v8345 = vld [vmem:[#allocation2 + $0x10] sm:$0xff]
    %v8346 = vld [vmem:[#allocation2 + $0x18] sm:$0xff]
    %v8347 = vld [vmem:[#allocation2 + $0x20] sm:$0xff]
    %v8348 = vld [vmem:[#allocation2 + $0x28] sm:$0xff]
    %v8349 = vld [vmem:[#allocation2 + $0x30] sm:$0xff]
    %v8350 = vld [vmem:[#allocation2 + $0x38] sm:$0xff]
    %v8351 = vld [vmem:[#allocation8] sm:$0xf]
    %v8353 = vperm.slane %v8351, 0
    %v8354 = vperm.slane %v8351, 1
    %v8355 = vperm.slane %v8351, 2
    %v8356 = vperm.slane %v8351, 3
    %v8361 = vadd.f32 %v8343, %v8353
    %v8362 = vadd.f32 %v8344, %v8354
    %v8363 = vadd.f32 %v8345, %v8355
    %v8364 = vadd.f32 %v8346, %v8356
    %v8365 = vadd.f32 %v8347, %v8353
    %v8366 = vadd.f32 %v8348, %v8354
    %v8367 = vadd.f32 %v8349, %v8355
    %v8368 = vadd.f32 %v8350, %v8356
    %v8369 = vmax.f32 %v8361, 0.0
    %v8370 = vmax.f32 %v8362, 0.0
    %v8371 = vmax.f32 %v8363, 0.0
    %v8372 = vmax.f32 %v8364, 0.0
    %v8373 = vmax.f32 %v8365, 0.0
    %v8374 = vmax.f32 %v8366, 0.0
    %v8375 = vmax.f32 %v8367, 0.0
    %v8376 = vmax.f32 %v8368, 0.0
    %v8377 = vpack.c.bf16 %v8373, %v8369
    %v8378 = vpack.c.bf16 %v8374, %v8370
    %v8379 = vpack.c.bf16 %v8375, %v8371
    %v8380 = vpack.c.bf16 %v8376, %v8372
    %v8381 = vld [vmem:[#allocation10] sm:$0xff]
    %v8382 = vld [vmem:[#allocation10 + $0x8] sm:$0xff]
    %v8383 = vld [vmem:[#allocation10 + $0x10] sm:$0xff]
    %v8384 = vld [vmem:[#allocation10 + $0x18] sm:$0xff]
    %v8385 = vld [vmem:[#allocation10 + $0x20] sm:$0xff]
    %v8386 = vld [vmem:[#allocation10 + $0x28] sm:$0xff]
    %v8387 = vld [vmem:[#allocation10 + $0x30] sm:$0xff]
    %v8388 = vld [vmem:[#allocation10 + $0x38] sm:$0xff]
    %v8389 = vld [vmem:[#allocation10 + $0x40] sm:$0xff]
    %v8390 = vld [vmem:[#allocation10 + $0x48] sm:$0xff]
    %v8391 = vld [vmem:[#allocation10 + $0x50] sm:$0xff]
    %v8392 = vld [vmem:[#allocation10 + $0x58] sm:$0xff]
    %v8393 = vld [vmem:[#allocation10 + $0x60] sm:$0xff]
    %v8394 = vld [vmem:[#allocation10 + $0x68] sm:$0xff]
    %v8395 = vld [vmem:[#allocation10 + $0x70] sm:$0xff]
    %v8396 = vld [vmem:[#allocation10 + $0x78] sm:$0xff]
    %v8397 = vld [vmem:[#allocation10 + $0x80] sm:$0xff]
    %v8398 = vld [vmem:[#allocation10 + $0x88] sm:$0xff]
    %v8399 = vld [vmem:[#allocation10 + $0x90] sm:$0xff]
    %v8400 = vld [vmem:[#allocation10 + $0x98] sm:$0xff]
    %v8401 = vld [vmem:[#allocation10 + $0xa0] sm:$0xff]
    %v8402 = vld [vmem:[#allocation10 + $0xa8] sm:$0xff]
    %v8403 = vld [vmem:[#allocation10 + $0xb0] sm:$0xff]
    %v8404 = vld [vmem:[#allocation10 + $0xb8] sm:$0xff]
    %v8405 = vld [vmem:[#allocation10 + $0xc0] sm:$0xff]
    %v8406 = vld [vmem:[#allocation10 + $0xc8] sm:$0xff]
    %v8407 = vld [vmem:[#allocation10 + $0xd0] sm:$0xff]
    %v8408 = vld [vmem:[#allocation10 + $0xd8] sm:$0xff]
    %v8409 = vld [vmem:[#allocation10 + $0xe0] sm:$0xff]
    %v8410 = vld [vmem:[#allocation10 + $0xe8] sm:$0xff]
    %v8411 = vld [vmem:[#allocation10 + $0xf0] sm:$0xff]
    %v8412 = vld [vmem:[#allocation10 + $0xf8] sm:$0xff]
    %v8413 = vld [vmem:[#allocation10 + $0x100] sm:$0xff]
    %v8414 = vld [vmem:[#allocation10 + $0x108] sm:$0xff]
    %v8415 = vld [vmem:[#allocation10 + $0x110] sm:$0xff]
    %v8416 = vld [vmem:[#allocation10 + $0x118] sm:$0xff]
    %v8417 = vld [vmem:[#allocation10 + $0x120] sm:$0xff]
    %v8418 = vld [vmem:[#allocation10 + $0x128] sm:$0xff]
    %v8419 = vld [vmem:[#allocation10 + $0x130] sm:$0xff]
    %v8420 = vld [vmem:[#allocation10 + $0x138] sm:$0xff]
    %v8421 = vld [vmem:[#allocation10 + $0x140] sm:$0xff]
    %v8422 = vld [vmem:[#allocation10 + $0x148] sm:$0xff]
    %v8423 = vld [vmem:[#allocation10 + $0x150] sm:$0xff]
    %v8424 = vld [vmem:[#allocation10 + $0x158] sm:$0xff]
    %v8425 = vld [vmem:[#allocation10 + $0x160] sm:$0xff]
    %v8426 = vld [vmem:[#allocation10 + $0x168] sm:$0xff]
    %v8427 = vld [vmem:[#allocation10 + $0x170] sm:$0xff]
    %v8428 = vld [vmem:[#allocation10 + $0x178] sm:$0xff]
    %v8429 = vld [vmem:[#allocation10 + $0x180] sm:$0xff]
    %v8430 = vld [vmem:[#allocation10 + $0x188] sm:$0xff]
    %v8431 = vld [vmem:[#allocation10 + $0x190] sm:$0xff]
    %v8432 = vld [vmem:[#allocation10 + $0x198] sm:$0xff]
    %v8433 = vld [vmem:[#allocation10 + $0x1a0] sm:$0xff]
    %v8434 = vld [vmem:[#allocation10 + $0x1a8] sm:$0xff]
    %v8435 = vld [vmem:[#allocation10 + $0x1b0] sm:$0xff]
    %v8436 = vld [vmem:[#allocation10 + $0x1b8] sm:$0xff]
    %v8437 = vld [vmem:[#allocation10 + $0x1c0] sm:$0xff]
    %v8438 = vld [vmem:[#allocation10 + $0x1c8] sm:$0xff]
    %v8439 = vld [vmem:[#allocation10 + $0x1d0] sm:$0xff]
    %v8440 = vld [vmem:[#allocation10 + $0x1d8] sm:$0xff]
    %v8441 = vld [vmem:[#allocation10 + $0x1e0] sm:$0xff]
    %v8442 = vld [vmem:[#allocation10 + $0x1e8] sm:$0xff]
    %v8443 = vld [vmem:[#allocation10 + $0x1f0] sm:$0xff]
    %v8444 = vld [vmem:[#allocation10 + $0x1f8] sm:$0xff]
    %v8445 = vld [vmem:[#allocation11] sm:$0x3]
    %v8447 = vperm.slane %v8445, 0
    %v8448 = vperm.slane %v8445, 1
    %v8515 = vunpack.c.l.b16 %v8381
    %v8516 = vunpack.c.h.b16 %v8381
    %v8517 = vunpack.c.l.b16 %v8382
    %v8518 = vunpack.c.h.b16 %v8382
    %v8519 = vunpack.c.l.b16 %v8383
    %v8520 = vunpack.c.h.b16 %v8383
    %v8521 = vunpack.c.l.b16 %v8384
    %v8522 = vunpack.c.h.b16 %v8384
    %v8523 = vunpack.c.l.b16 %v8385
    %v8524 = vunpack.c.h.b16 %v8385
    %v8525 = vunpack.c.l.b16 %v8386
    %v8526 = vunpack.c.h.b16 %v8386
    %v8527 = vunpack.c.l.b16 %v8387
    %v8528 = vunpack.c.h.b16 %v8387
    %v8529 = vunpack.c.l.b16 %v8388
    %v8530 = vunpack.c.h.b16 %v8388
    %v8531 = vunpack.c.l.b16 %v8389
    %v8532 = vunpack.c.h.b16 %v8389
    %v8533 = vunpack.c.l.b16 %v8390
    %v8534 = vunpack.c.h.b16 %v8390
    %v8535 = vunpack.c.l.b16 %v8391
    %v8536 = vunpack.c.h.b16 %v8391
    %v8537 = vunpack.c.l.b16 %v8392
    %v8538 = vunpack.c.h.b16 %v8392
    %v8539 = vunpack.c.l.b16 %v8393
    %v8540 = vunpack.c.h.b16 %v8393
    %v8541 = vunpack.c.l.b16 %v8394
    %v8542 = vunpack.c.h.b16 %v8394
    %v8543 = vunpack.c.l.b16 %v8395
    %v8544 = vunpack.c.h.b16 %v8395
    %v8545 = vunpack.c.l.b16 %v8396
    %v8546 = vunpack.c.h.b16 %v8396
    %v8547 = vunpack.c.l.b16 %v8397
    %v8548 = vunpack.c.h.b16 %v8397
    %v8549 = vunpack.c.l.b16 %v8398
    %v8550 = vunpack.c.h.b16 %v8398
    %v8551 = vunpack.c.l.b16 %v8399
    %v8552 = vunpack.c.h.b16 %v8399
    %v8553 = vunpack.c.l.b16 %v8400
    %v8554 = vunpack.c.h.b16 %v8400
    %v8555 = vunpack.c.l.b16 %v8401
    %v8556 = vunpack.c.h.b16 %v8401
    %v8557 = vunpack.c.l.b16 %v8402
    %v8558 = vunpack.c.h.b16 %v8402
    %v8559 = vunpack.c.l.b16 %v8403
    %v8560 = vunpack.c.h.b16 %v8403
    %v8561 = vunpack.c.l.b16 %v8404
    %v8562 = vunpack.c.h.b16 %v8404
    %v8563 = vunpack.c.l.b16 %v8405
    %v8564 = vunpack.c.h.b16 %v8405
    %v8565 = vunpack.c.l.b16 %v8406
    %v8566 = vunpack.c.h.b16 %v8406
    %v8567 = vunpack.c.l.b16 %v8407
    %v8568 = vunpack.c.h.b16 %v8407
    %v8569 = vunpack.c.l.b16 %v8408
    %v8570 = vunpack.c.h.b16 %v8408
    %v8571 = vunpack.c.l.b16 %v8409
    %v8572 = vunpack.c.h.b16 %v8409
    %v8573 = vunpack.c.l.b16 %v8410
    %v8574 = vunpack.c.h.b16 %v8410
    %v8575 = vunpack.c.l.b16 %v8411
    %v8576 = vunpack.c.h.b16 %v8411
    %v8577 = vunpack.c.l.b16 %v8412
    %v8578 = vunpack.c.h.b16 %v8412
    %v8579 = vunpack.c.l.b16 %v8413
    %v8580 = vunpack.c.h.b16 %v8413
    %v8581 = vunpack.c.l.b16 %v8414
    %v8582 = vunpack.c.h.b16 %v8414
    %v8583 = vunpack.c.l.b16 %v8415
    %v8584 = vunpack.c.h.b16 %v8415
    %v8585 = vunpack.c.l.b16 %v8416
    %v8586 = vunpack.c.h.b16 %v8416
    %v8587 = vunpack.c.l.b16 %v8417
    %v8588 = vunpack.c.h.b16 %v8417
    %v8589 = vunpack.c.l.b16 %v8418
    %v8590 = vunpack.c.h.b16 %v8418
    %v8591 = vunpack.c.l.b16 %v8419
    %v8592 = vunpack.c.h.b16 %v8419
    %v8593 = vunpack.c.l.b16 %v8420
    %v8594 = vunpack.c.h.b16 %v8420
    %v8595 = vunpack.c.l.b16 %v8421
    %v8596 = vunpack.c.h.b16 %v8421
    %v8597 = vunpack.c.l.b16 %v8422
    %v8598 = vunpack.c.h.b16 %v8422
    %v8599 = vunpack.c.l.b16 %v8423
    %v8600 = vunpack.c.h.b16 %v8423
    %v8601 = vunpack.c.l.b16 %v8424
    %v8602 = vunpack.c.h.b16 %v8424
    %v8603 = vunpack.c.l.b16 %v8425
    %v8604 = vunpack.c.h.b16 %v8425
    %v8605 = vunpack.c.l.b16 %v8426
    %v8606 = vunpack.c.h.b16 %v8426
    %v8607 = vunpack.c.l.b16 %v8427
    %v8608 = vunpack.c.h.b16 %v8427
    %v8609 = vunpack.c.l.b16 %v8428
    %v8610 = vunpack.c.h.b16 %v8428
    %v8611 = vunpack.c.l.b16 %v8429
    %v8612 = vunpack.c.h.b16 %v8429
    %v8613 = vunpack.c.l.b16 %v8430
    %v8614 = vunpack.c.h.b16 %v8430
    %v8615 = vunpack.c.l.b16 %v8431
    %v8616 = vunpack.c.h.b16 %v8431
    %v8617 = vunpack.c.l.b16 %v8432
    %v8618 = vunpack.c.h.b16 %v8432
    %v8619 = vunpack.c.l.b16 %v8433
    %v8620 = vunpack.c.h.b16 %v8433
    %v8621 = vunpack.c.l.b16 %v8434
    %v8622 = vunpack.c.h.b16 %v8434
    %v8623 = vunpack.c.l.b16 %v8435
    %v8624 = vunpack.c.h.b16 %v8435
    %v8625 = vunpack.c.l.b16 %v8436
    %v8626 = vunpack.c.h.b16 %v8436
    %v8627 = vunpack.c.l.b16 %v8437
    %v8628 = vunpack.c.h.b16 %v8437
    %v8629 = vunpack.c.l.b16 %v8438
    %v8630 = vunpack.c.h.b16 %v8438
    %v8631 = vunpack.c.l.b16 %v8439
    %v8632 = vunpack.c.h.b16 %v8439
    %v8633 = vunpack.c.l.b16 %v8440
    %v8634 = vunpack.c.h.b16 %v8440
    %v8635 = vunpack.c.l.b16 %v8441
    %v8636 = vunpack.c.h.b16 %v8441
    %v8637 = vunpack.c.l.b16 %v8442
    %v8638 = vunpack.c.h.b16 %v8442
    %v8639 = vunpack.c.l.b16 %v8443
    %v8640 = vunpack.c.h.b16 %v8443
    %v8641 = vunpack.c.l.b16 %v8444
    %v8642 = vunpack.c.h.b16 %v8444
    %v8643 = vpack.c.b16 %v8517, %v8515
    %v8644 = vpack.c.b16 %v8518, %v8516
    %v8645 = vpack.c.b16 %v8521, %v8519
    %v8646 = vpack.c.b16 %v8522, %v8520
    %v8647 = vpack.c.b16 %v8525, %v8523
    %v8648 = vpack.c.b16 %v8526, %v8524
    %v8649 = vpack.c.b16 %v8529, %v8527
    %v8650 = vpack.c.b16 %v8530, %v8528
    %v8651 = vpack.c.b16 %v8533, %v8531
    %v8652 = vpack.c.b16 %v8534, %v8532
    %v8653 = vpack.c.b16 %v8537, %v8535
    %v8654 = vpack.c.b16 %v8538, %v8536
    %v8655 = vpack.c.b16 %v8541, %v8539
    %v8656 = vpack.c.b16 %v8542, %v8540
    %v8657 = vpack.c.b16 %v8545, %v8543
    %v8658 = vpack.c.b16 %v8546, %v8544
    %v8659 = vpack.c.b16 %v8549, %v8547
    %v8660 = vpack.c.b16 %v8550, %v8548
    %v8661 = vpack.c.b16 %v8553, %v8551
    %v8662 = vpack.c.b16 %v8554, %v8552
    %v8663 = vpack.c.b16 %v8557, %v8555
    %v8664 = vpack.c.b16 %v8558, %v8556
    %v8665 = vpack.c.b16 %v8561, %v8559
    %v8666 = vpack.c.b16 %v8562, %v8560
    %v8667 = vpack.c.b16 %v8565, %v8563
    %v8668 = vpack.c.b16 %v8566, %v8564
    %v8669 = vpack.c.b16 %v8569, %v8567
    %v8670 = vpack.c.b16 %v8570, %v8568
    %v8671 = vpack.c.b16 %v8573, %v8571
    %v8672 = vpack.c.b16 %v8574, %v8572
    %v8673 = vpack.c.b16 %v8577, %v8575
    %v8674 = vpack.c.b16 %v8578, %v8576
    %v8675 = vpack.c.b16 %v8581, %v8579
    %v8676 = vpack.c.b16 %v8582, %v8580
    %v8677 = vpack.c.b16 %v8585, %v8583
    %v8678 = vpack.c.b16 %v8586, %v8584
    %v8679 = vpack.c.b16 %v8589, %v8587
    %v8680 = vpack.c.b16 %v8590, %v8588
    %v8681 = vpack.c.b16 %v8593, %v8591
    %v8682 = vpack.c.b16 %v8594, %v8592
    %v8683 = vpack.c.b16 %v8597, %v8595
    %v8684 = vpack.c.b16 %v8598, %v8596
    %v8685 = vpack.c.b16 %v8601, %v8599
    %v8686 = vpack.c.b16 %v8602, %v8600
    %v8687 = vpack.c.b16 %v8605, %v8603
    %v8688 = vpack.c.b16 %v8606, %v8604
    %v8689 = vpack.c.b16 %v8609, %v8607
    %v8690 = vpack.c.b16 %v8610, %v8608
    %v8691 = vpack.c.b16 %v8613, %v8611
    %v8692 = vpack.c.b16 %v8614, %v8612
    %v8693 = vpack.c.b16 %v8617, %v8615
    %v8694 = vpack.c.b16 %v8618, %v8616
    %v8695 = vpack.c.b16 %v8621, %v8619
    %v8696 = vpack.c.b16 %v8622, %v8620
    %v8697 = vpack.c.b16 %v8625, %v8623
    %v8698 = vpack.c.b16 %v8626, %v8624
    %v8699 = vpack.c.b16 %v8629, %v8627
    %v8700 = vpack.c.b16 %v8630, %v8628
    %v8701 = vpack.c.b16 %v8633, %v8631
    %v8702 = vpack.c.b16 %v8634, %v8632
    %v8703 = vpack.c.b16 %v8637, %v8635
    %v8704 = vpack.c.b16 %v8638, %v8636
    %v8705 = vpack.c.b16 %v8641, %v8639
    %v8706 = vpack.c.b16 %v8642, %v8640
    %8771 = vmatpush.bf16.msra.mxu0 %v8657
    %8772 = vmatpush.bf16.msra.mxu0 %v8655
    %8773 = vmatpush.bf16.msra.mxu0 %v8653
    %8774 = vmatpush.bf16.msra.mxu0 %v8651
    %8775 = vmatpush.bf16.msra.mxu0 %v8649
    %8776 = vmatpush.bf16.msra.mxu0 %v8647
    %8777 = vmatpush.bf16.msra.mxu0 %v8645
    %8778 = vmatpush.bf16.msra.mxu0 %v8643
    %8779 = vmatmul.bf16.gmra.mxu0 %v8377
    %v8780 = vpop.f32.mrf.mxu0
    %v8781 = vadd.f32 %v8447, %v8780
    %v8782 = vpop.f32.mrf.mxu0
    %v8783 = vadd.f32 %v8447, %v8782
    %8784 = vdwg.mxu0
    %8785 = vmatpush.bf16.msra.mxu0 %v8673
    %8786 = vmatpush.bf16.msra.mxu0 %v8671
    %8787 = vmatpush.bf16.msra.mxu0 %v8669
    %8788 = vmatpush.bf16.msra.mxu0 %v8667
    %8789 = vmatpush.bf16.msra.mxu0 %v8665
    %8790 = vmatpush.bf16.msra.mxu0 %v8663
    %8791 = vmatpush.bf16.msra.mxu0 %v8661
    %8792 = vmatpush.bf16.msra.mxu0 %v8659
    %8793 = vmatmul.bf16.gmra.mxu0 %v8378
    %v8794 = vpop.f32.mrf.mxu0
    %v8795 = vadd.f32 %v8781, %v8794
    %v8796 = vpop.f32.mrf.mxu0
    %v8797 = vadd.f32 %v8783, %v8796
    %8798 = vdwg.mxu0
    %8799 = vmatpush.bf16.msra.mxu0 %v8689
    %8800 = vmatpush.bf16.msra.mxu0 %v8687
    %8801 = vmatpush.bf16.msra.mxu0 %v8685
    %8802 = vmatpush.bf16.msra.mxu0 %v8683
    %8803 = vmatpush.bf16.msra.mxu0 %v8681
    %8804 = vmatpush.bf16.msra.mxu0 %v8679
    %8805 = vmatpush.bf16.msra.mxu0 %v8677
    %8806 = vmatpush.bf16.msra.mxu0 %v8675
    %8807 = vmatmul.bf16.gmra.mxu0 %v8379
    %v8808 = vpop.f32.mrf.mxu0
    %v8809 = vadd.f32 %v8795, %v8808
    %v8810 = vpop.f32.mrf.mxu0
    %v8811 = vadd.f32 %v8797, %v8810
    %8812 = vdwg.mxu0
    %8813 = vmatpush.bf16.msra.mxu0 %v8705
    %8814 = vmatpush.bf16.msra.mxu0 %v8703
    %8815 = vmatpush.bf16.msra.mxu0 %v8701
    %8816 = vmatpush.bf16.msra.mxu0 %v8699
    %8817 = vmatpush.bf16.msra.mxu0 %v8697
    %8818 = vmatpush.bf16.msra.mxu0 %v8695
    %8819 = vmatpush.bf16.msra.mxu0 %v8693
    %8820 = vmatpush.bf16.msra.mxu0 %v8691
    %8821 = vmatmul.bf16.gmra.mxu0 %v8380
    %v8822 = vpop.f32.mrf.mxu0
    %v8823 = vadd.f32 %v8809, %v8822
    %v8824 = vpop.f32.mrf.mxu0
    %v8825 = vadd.f32 %v8811, %v8824
    %8826 = vdwg.mxu0
    %8827 = vmatpush.bf16.msra.mxu0 %v8658
    %8828 = vmatpush.bf16.msra.mxu0 %v8656
    %8829 = vmatpush.bf16.msra.mxu0 %v8654
    %8830 = vmatpush.bf16.msra.mxu0 %v8652
    %8831 = vmatpush.bf16.msra.mxu0 %v8650
    %8832 = vmatpush.bf16.msra.mxu0 %v8648
    %8833 = vmatpush.bf16.msra.mxu0 %v8646
    %8834 = vmatpush.bf16.msra.mxu0 %v8644
    %8835 = vmatmul.bf16.gmra.mxu0 %v8377
    %v8836 = vpop.f32.mrf.mxu0
    %v8837 = vadd.f32 %v8448, %v8836
    %v8838 = vpop.f32.mrf.mxu0
    %v8839 = vadd.f32 %v8448, %v8838
    %8840 = vdwg.mxu0
    %8841 = vmatpush.bf16.msra.mxu0 %v8674
    %8842 = vmatpush.bf16.msra.mxu0 %v8672
    %8843 = vmatpush.bf16.msra.mxu0 %v8670
    %8844 = vmatpush.bf16.msra.mxu0 %v8668
    %8845 = vmatpush.bf16.msra.mxu0 %v8666
    %8846 = vmatpush.bf16.msra.mxu0 %v8664
    %8847 = vmatpush.bf16.msra.mxu0 %v8662
    %8848 = vmatpush.bf16.msra.mxu0 %v8660
    %8849 = vmatmul.bf16.gmra.mxu0 %v8378
    %v8850 = vpop.f32.mrf.mxu0
    %v8851 = vadd.f32 %v8837, %v8850
    %v8852 = vpop.f32.mrf.mxu0
    %v8853 = vadd.f32 %v8839, %v8852
    %8854 = vdwg.mxu0
    %8855 = vmatpush.bf16.msra.mxu0 %v8690
    %8856 = vmatpush.bf16.msra.mxu0 %v8688
    %8857 = vmatpush.bf16.msra.mxu0 %v8686
    %8858 = vmatpush.bf16.msra.mxu0 %v8684
    %8859 = vmatpush.bf16.msra.mxu0 %v8682
    %8860 = vmatpush.bf16.msra.mxu0 %v8680
    %8861 = vmatpush.bf16.msra.mxu0 %v8678
    %8862 = vmatpush.bf16.msra.mxu0 %v8676
    %8863 = vmatmul.bf16.gmra.mxu0 %v8379
    %v8864 = vpop.f32.mrf.mxu0
    %v8865 = vadd.f32 %v8851, %v8864
    %v8866 = vpop.f32.mrf.mxu0
    %v8867 = vadd.f32 %v8853, %v8866
    %8868 = vdwg.mxu0
    %8869 = vmatpush.bf16.msra.mxu0 %v8706
    %8870 = vmatpush.bf16.msra.mxu0 %v8704
    %8871 = vmatpush.bf16.msra.mxu0 %v8702
    %8872 = vmatpush.bf16.msra.mxu0 %v8700
    %8873 = vmatpush.bf16.msra.mxu0 %v8698
    %8874 = vmatpush.bf16.msra.mxu0 %v8696
    %8875 = vmatpush.bf16.msra.mxu0 %v8694
    %8876 = vmatpush.bf16.msra.mxu0 %v8692
    %8877 = vmatmul.bf16.gmra.mxu0 %v8380
    %v8878 = vpop.f32.mrf.mxu0
    %v8879 = vadd.f32 %v8865, %v8878
    %v8880 = vpop.f32.mrf.mxu0
    %v8881 = vadd.f32 %v8867, %v8880
    %8882 = vdwg.mxu0
    %8883 = vst [vmem:[%s8] sm:$0xff] %v8823
    %8884 = vst [vmem:[%s8 + $0x8] sm:$0xff] %v8879
    %8885 = vst [vmem:[%s8 + $0x10] sm:$0xff] %v8825
    %8886 = vst [vmem:[%s8 + $0x18] sm:$0xff] %v8881
    // Predicated region
    $region54: #{vh_ae_forward.1} parent=1 // pred_check
      _
    $region55: #{vh_ae_forward.1} parent=1 // pred_check_branch
      %8888 = sbr.rel (0) target = $region57
    $region56: #{vh_ae_forward.1} parent=1 // pred_region
      _
    $region57: #{vh_ae_forward.1} parent=1 // pred_fallthru
      _
    // Predicated region
    $region58: #{vh_ae_forward.1} parent=1 // pred_check
      _
    $region59: #{vh_ae_forward.1} parent=1 // pred_check_branch
      %8890 = sbr.rel (0) target = $region61
    $region60: #{vh_ae_forward.1} parent=1 // pred_region
      _
    $region61: #{vh_ae_forward.1} parent=1 // pred_fallthru
      _
    // Predicated region
    $region62: #{vh_ae_forward.1} parent=1 // pred_check
      _
    $region63: #{vh_ae_forward.1} parent=1 // pred_check_branch
      %8892 = sbr.rel (0) target = $region65
    $region64: #{vh_ae_forward.1} parent=1 // pred_region
      _
    $region65: #{vh_ae_forward.1} parent=1 // pred_fallthru
      _
    // Predicated region
    $region66: #{vh_ae_forward.1} parent=1 // pred_check
      _
    $region67: #{vh_ae_forward.1} parent=1 // pred_check_branch
      %8894 = sbr.rel (0) target = $region69
    $region68: #{vh_ae_forward.1} parent=1 // pred_region
      _
    $region69: #{vh_ae_forward.1} parent=1 // pred_fallthru
      _
    %8895 = vsyncpa [#allocation4], 1
    %8896 = vsyncpa [#allocation6], 1
    %8897 = vsyncpa [#allocation9], 1
    %8898 = vsyncpa [#allocation12], 1

</llo_original>
